<compile_context>
chip_gen: v5e
topology: v5e:2x2
jax: 0.10.0
libtpu: 0.0.40
codegen_flags: <defaults>
</compile_context>

<pallas_src>
import jax
import jax.numpy as jnp
from jax.experimental import pallas as pl
from jax.experimental.pallas import tpu as pltpu

EPS = 1e-5          # nn.BatchNorm2d default eps
NEG_SLOPE = 0.2     # F.leaky_relu(x, 0.2)


# ------------------------------ small helpers -------------------------------

def _round_up(x, m):
    return (x + m - 1) // m * m


def _tile_m(M, target=256):
    """Row-tile size: <=~256 rows, multiple of 16 (bf16 sublane packing)."""
    if M <= target:
        return _round_up(M, 16)
    nt = -(-M // target)
    return _round_up(-(-M // nt), 16)


def _tile_k(K):
    """Contraction-tile size: multiple of 128; tile at 512 for large K."""
    k128 = _round_up(K, 128)
    return k128 if k128 <= 1024 else 512


# ------------------------------ Pallas kernels -------------------------------

def _mm_stats_kernel(p_ref, w_ref, y_ref, st_ref):
    """Grouped, tiled matmul.  y accumulates in f32 in the resident output block.
    On the last K step, emit this (group, M-tile)'s partial per-channel row-sum and
    row-sum-of-squares (cross-tile BatchNorm reduction is finished in glue)."""
    k = pl.program_id(2)

    @pl.when(k == 0)
    def _():
        y_ref[...] = jnp.zeros_like(y_ref)

    y_ref[...] += jnp.dot(p_ref[...], w_ref[...],
                          preferred_element_type=jnp.float32)

    @pl.when(k == pl.num_programs(2) - 1)
    def _():
        y = y_ref[...]
        s = jnp.sum(y, axis=0, keepdims=True)
        sq = jnp.sum(y * y, axis=0, keepdims=True)
        st_ref[...] = jnp.concatenate([s, sq], axis=0)[None]


def _mm_bias_tanh_kernel(p_ref, w_ref, b_ref, o_ref):
    """Tiled matmul + bias + tanh (final layer)."""
    k = pl.program_id(1)

    @pl.when(k == 0)
    def _():
        o_ref[...] = jnp.zeros_like(o_ref)

    o_ref[...] += jnp.dot(p_ref[...], w_ref[...],
                          preferred_element_type=jnp.float32)

    @pl.when(k == pl.num_programs(1) - 1)
    def _():
        o_ref[...] = jnp.tanh(o_ref[...] + b_ref[...])


def _bn_lrelu_kernel(y_ref, sc_ref, sh_ref, o_ref):
    """Apply the already-reduced BatchNorm scale/shift + LeakyReLU(0.2)."""
    y = y_ref[...] * sc_ref[...] + sh_ref[...]
    o_ref[...] = jnp.where(y >= 0.0, y, NEG_SLOPE * y).astype(o_ref.dtype)


# --------------------------- pallas_call wrappers ----------------------------

def _matmul_stats(patches, weights):
    """patches (G, M, K), weights (G, K, C) ->
         y  (G, Mp, C)  f32
         st (G, n_m_tiles, 2, C) f32  (partial row-sum / row-sumsq per tile)."""
    G, M, K = patches.shape
    C = weights.shape[-1]
    tm, tk = _tile_m(M), _tile_k(K)
    Mp, Kp = _round_up(M, tm), _round_up(K, tk)
    p = jnp.pad(patches.astype(jnp.bfloat16), ((0, 0), (0, Mp - M), (0, Kp - K)))
    w = jnp.pad(weights.astype(jnp.bfloat16), ((0, 0), (0, Kp - K), (0, 0)))
    nm, nk = Mp // tm, Kp // tk
    y, st = pl.pallas_call(
        _mm_stats_kernel,
        out_shape=(jax.ShapeDtypeStruct((G, Mp, C), jnp.float32),
                   jax.ShapeDtypeStruct((G, nm, 2, C), jnp.float32)),
        grid=(G, nm, nk),
        in_specs=[pl.BlockSpec((None, tm, tk), lambda g, m, k: (g, m, k)),
                  pl.BlockSpec((None, tk, C), lambda g, m, k: (g, k, 0))],
        out_specs=(pl.BlockSpec((None, tm, C), lambda g, m, k: (g, m, 0)),
                   pl.BlockSpec((None, 1, 2, C), lambda g, m, k: (g, m, 0, 0))),
        compiler_params=pltpu.CompilerParams(
            dimension_semantics=("parallel", "parallel", "arbitrary")),
    )(p, w)
    return y, st


def _matmul_bias_tanh(patches, weights, bias_row):
    """patches (M, K), weights (K, C), bias (C,) -> tanh(patches @ weights + bias)."""
    M, K = patches.shape
    C = weights.shape[-1]
    tm, tk = _tile_m(M), _tile_k(K)
    Mp, Kp = _round_up(M, tm), _round_up(K, tk)
    p = jnp.pad(patches.astype(jnp.bfloat16), ((0, Mp - M), (0, Kp - K)))
    w = jnp.pad(weights.astype(jnp.bfloat16), ((0, Kp - K), (0, 0)))
    out = pl.pallas_call(
        _mm_bias_tanh_kernel,
        out_shape=jax.ShapeDtypeStruct((Mp, C), jnp.float32),
        grid=(Mp // tm, Kp // tk),
        in_specs=[pl.BlockSpec((tm, tk), lambda m, k: (m, k)),
                  pl.BlockSpec((tk, C), lambda m, k: (k, 0)),
                  pl.BlockSpec((1, C), lambda m, k: (0, 0))],
        out_specs=pl.BlockSpec((tm, C), lambda m, k: (m, 0)),
        compiler_params=pltpu.CompilerParams(
            dimension_semantics=("parallel", "arbitrary")),
    )(p, w, bias_row.astype(jnp.float32).reshape(1, C))
    return out[:M]


def _bn_lrelu(rows, count, gamma, beta, ch_sum, ch_sumsq):
    """rows (M, C) f32; training-mode BatchNorm (batch stats over `count` real rows,
    biased variance like PyTorch) followed by LeakyReLU(0.2).  Returns bf16 (M, C)."""
    mean = ch_sum / count
    var = jnp.maximum(ch_sumsq / count - mean * mean, 0.0)
    scale = gamma * jax.lax.rsqrt(var + EPS)
    shift = beta - mean * scale
    M, C = rows.shape
    tm = _tile_m(M)
    Mp = _round_up(M, tm)
    yp = jnp.pad(rows, ((0, Mp - M), (0, 0)))
    out = pl.pallas_call(
        _bn_lrelu_kernel,
        out_shape=jax.ShapeDtypeStruct((Mp, C), jnp.bfloat16),
        grid=(Mp // tm,),
        in_specs=[pl.BlockSpec((tm, C), lambda m: (m, 0)),
                  pl.BlockSpec((1, C), lambda m: (0, 0)),
                  pl.BlockSpec((1, C), lambda m: (0, 0))],
        out_specs=pl.BlockSpec((tm, C), lambda m: (m, 0)),
        compiler_params=pltpu.CompilerParams(dimension_semantics=("parallel",)),
    )(yp, scale.reshape(1, C), shift.reshape(1, C))
    return out[:M]


# ------------------------------ layer functions ------------------------------

def _layer1_1x1_deconv(x2d, w_mat, gamma, beta):
    """ConvTranspose2d(100, C, 5, 2, 1) on a 1x1 input is exactly
    (N, 100) @ (100, 9*C) with the kernel cropped to its central 3x3 (cols ordered
    (oy, ox, co)), followed by BatchNorm + LeakyReLU.  Returns (N, 3, 3, C)."""
    N = x2d.shape[0]
    C = gamma.shape[0]
    y, st = _matmul_stats(x2d[None], w_mat[None])           # (1,Mp,9C), (1,nm,2,9C)
    rows = y[0, :N].reshape(N * 9, C)                       # rows ordered (n, oy, ox)
    s = st.sum(axis=(0, 1)).reshape(2, 9, C).sum(axis=1)    # fold spatial into channel
    a = _bn_lrelu(rows, N * 9, gamma, beta, s[0], s[1])
    return a.reshape(N, 3, 3, C)


def _deconv_s2_bn_lrelu(x, w_sub, gamma, beta, k):
    """ConvTranspose2d(stride=2, padding=1, even k) + BatchNorm + LeakyReLU via
    sub-pixel decomposition: 4 output-parity classes, each a dense GEMM over
    K = C_in*(k/2)^2 non-zero taps only."""
    N, H, W, Cin = x.shape
    kh = k // 2
    P = kh - 1
    Ho, Wo = 2 * H + k - 4, 2 * W + k - 4
    Hq, Wq = Ho // 2, Wo // 2
    C = gamma.shape[0]

    xp = jnp.pad(x, ((0, 0), (P, P), (P, P), (0, 0)))
    groups = []
    for ry in (0, 1):
        for rx in (0, 1):
            taps = []
            for a in range(kh):
                sy = P - a + ry
                for b in range(kh):
                    sx = P - b + rx
                    taps.append(xp[:, sy:sy + Hq, sx:sx + Wq, :])
            g = jnp.stack(taps, axis=3)                      # (N, Hq, Wq, kh*kh, Cin)
            groups.append(g.reshape(N * Hq * Wq, kh * kh * Cin))
    patches = jnp.stack(groups, axis=0)                      # (4, Mq, K)

    y, st = _matmul_stats(patches, w_sub)                    # (4, Mqp, C)
    Mq, Mqp = N * Hq * Wq, y.shape[1]
    s = st.sum(axis=(0, 1))                                  # (2, C) cross-tile reduce
    a = _bn_lrelu(y.reshape(4 * Mqp, C), 4 * Mq, gamma, beta, s[0], s[1])
    a = a.reshape(4, Mqp, C)[:, :Mq]
    # interleave the 4 parity sub-grids back into (N, Ho, Wo, C)
    a = a.reshape(2, 2, N, Hq, Wq, C).transpose(2, 3, 0, 4, 1, 5)
    return a.reshape(N, Ho, Wo, C)


def _deconv_s1_tanh(x, w_mat, bias_row, k, c_real):
    """ConvTranspose2d(stride=1, padding=0) + tanh == regular convolution of the
    (k-1)-padded input with the spatially flipped kernel."""
    N, H, W, Cin = x.shape
    Ho, Wo = H + k - 1, W + k - 1
    xp = jnp.pad(x, ((0, 0), (k - 1, k - 1), (k - 1, k - 1), (0, 0)))
    taps = []
    for ty in range(k):
        for tx in range(k):
            taps.append(xp[:, ty:ty + Ho, tx:tx + Wo, :])
    patches = jnp.stack(taps, axis=3).reshape(N * Ho * Wo, k * k * Cin)
    y = _matmul_bias_tanh(patches, w_mat, bias_row)          # (M, C_pad) f32
    return y[:, :c_real].reshape(N, Ho, Wo, c_real)


def _generator_forward(x, params):
    N = x.shape[0]
    h = _layer1_1x1_deconv(x.reshape(N, 100), params[0]['w'],
                           params[0]['gamma'], params[0]['beta'])
    h = _deconv_s2_bn_lrelu(h, params[1]['w'], params[1]['gamma'], params[1]['beta'], k=4)
    h = _deconv_s2_bn_lrelu(h, params[2]['w'], params[2]['gamma'], params[2]['beta'], k=6)
    h = _deconv_s2_bn_lrelu(h, params[3]['w'], params[3]['gamma'], params[3]['beta'], k=4)
    out = _deconv_s1_tanh(h, params[4]['w'], params[4]['b'], k=4, c_real=1)
    return out.transpose(0, 3, 1, 2)                         # NCHW at the boundary only


# -------------------------------- Generator ----------------------------------

class GeneratorPallas:
    """Pallas mirror of the PyTorch Generator(d) forward pass (weight_init(0.0, 0.02)).
    Weight matrices (crop / sub-pixel split / flip, bf16 cast) are built once here."""

    def __init__(self, d=16, key=jax.random.PRNGKey(42)):
        def conv_t_weight(k_, cin, cout, ksz):
            return jax.random.normal(k_, (cin, cout, ksz, ksz), jnp.float32) * 0.02

        keys = jax.random.split(key, 5)
        params = []

        # layer 1: ConvTranspose2d(100, 8d, 5, 2, 1) on a 1x1 input.
        c1 = 8 * d
        w1 = conv_t_weight(keys[0], 100, c1, 5)
        w1_mat = w1[:, :, 1:4, 1:4].transpose(0, 2, 3, 1).reshape(100, 9 * c1)
        params.append(dict(w=w1_mat.astype(jnp.bfloat16),
                           gamma=jnp.ones((c1,), jnp.float32),
                           beta=jnp.zeros((c1,), jnp.float32)))
        # NOTE: conv biases are omitted on BN layers -- they cancel exactly in
        # training-mode BatchNorm (and are zeroed by normal_init anyway).

        def subpixel_weights(w, ksz):
            cin, cout = w.shape[0], w.shape[1]
            kh = ksz // 2
            mats = []
            for ry in (0, 1):
                ky = [2 * a + (1 - ry) for a in range(kh)]
                for rx in (0, 1):
                    kx = [2 * b + (1 - rx) for b in range(kh)]
                    ws = w[:, :, ky, :][:, :, :, kx]          # (cin, cout, kh, kh)
                    mats.append(ws.transpose(2, 3, 0, 1).reshape(kh * kh * cin, cout))
            return jnp.stack(mats, axis=0)                    # (4, K, cout)

        # layers 2-4: stride-2, padding-1 ConvTranspose2d -> 4 sub-pixel weight mats.
        for key_i, (cin, cout, ksz) in zip(
                keys[1:4], [(8 * d, 4 * d, 4), (4 * d, 2 * d, 6), (2 * d, d, 4)]):
            w = conv_t_weight(key_i, cin, cout, ksz)
            params.append(dict(w=subpixel_weights(w, ksz).astype(jnp.bfloat16),
                               gamma=jnp.ones((cout,), jnp.float32),
                               beta=jnp.zeros((cout,), jnp.float32)))

        # layer 5: ConvTranspose2d(d, 1, 4, 1, 0) + tanh; pad C_out 1 -> 128 lanes so
        # the output store is lane-dense (real channel sliced back in glue).
        w5 = conv_t_weight(keys[4], d, 1, 4)
        w5_mat = w5[:, :, ::-1, ::-1].transpose(2, 3, 0, 1).reshape(16 * d, 1)
        c_pad = 128
        params.append(dict(w=jnp.pad(w5_mat, ((0, 0), (0, c_pad - 1))).astype(jnp.bfloat16),
                           b=jnp.zeros((c_pad,), jnp.float32)))   # bias zeroed (normal_init)

        self.params = params
        self._fwd = jax.jit(_generator_forward)

    def __call__(self, x):
        return self._fwd(x, self.params)


# ------------------------------ Demo / main -----------------------------------

if __name__ == "__main__":
    d = 16          # small d for the example (module default is 128)
    batch = 2
    # DCGAN-style latent input: (N, 100, 1, 1) NCHW
    x = jax.random.normal(jax.random.PRNGKey(0), (batch, 100, 1, 1), jnp.float32)

    gen = GeneratorPallas(d=d, key=jax.random.PRNGKey(42))
    out = jax.block_until_ready(gen(x))

    # spatial trace: 1 -> 3 -> 6 -> 14 -> 28 -> 31
    assert out.shape == (batch, 1, 31, 31), out.shape
    assert bool(jnp.all(jnp.isfinite(out)))
    print("KERNEL_OK")
</pallas_src>

<mosaic_0001>
module attributes {stable_mosaic.version = 11 : i64} {
  func.func @_bn_lrelu_kernel(%arg0: i32, %arg1: memref<32x128xf32, #tpu.memory_space<vmem>>, %arg2: memref<1x128xf32, #tpu.memory_space<vmem>>, %arg3: memref<1x128xf32, #tpu.memory_space<vmem>>, %arg4: memref<32x128xbf16, #tpu.memory_space<vmem>>) attributes {dimension_semantics = [#tpu.dimension_semantics<parallel>], iteration_bounds = array<i64: 1>, scalar_prefetch = 0 : i64, scratch_operands = 0 : i64, tpu.core_type = #tpu.core_type<tc>, window_params = [{transform_indices = @transform_0, window_bounds = array<i64: 32, 128>}, {pipeline_mode = #tpu.pipeline_mode<synchronous>, transform_indices = @transform_1, window_bounds = array<i64: 1, 128>}, {pipeline_mode = #tpu.pipeline_mode<synchronous>, transform_indices = @transform_2, window_bounds = array<i64: 1, 128>}, {transform_indices = @transform_3, window_bounds = array<i64: 32, 128>}]} {
    %c0 = arith.constant 0 : index
    %c0_0 = arith.constant 0 : index
    %0 = vector.load %arg1[%c0, %c0_0] : memref<32x128xf32, #tpu.memory_space<vmem>>, vector<32x128xf32>
    %c0_1 = arith.constant 0 : index
    %c0_2 = arith.constant 0 : index
    %1 = vector.load %arg2[%c0_1, %c0_2] : memref<1x128xf32, #tpu.memory_space<vmem>>, vector<1x128xf32>
    %2 = vector.broadcast %1 : vector<1x128xf32> to vector<32x128xf32>
    %3 = arith.mulf %0, %2 : vector<32x128xf32>
    %c0_3 = arith.constant 0 : index
    %c0_4 = arith.constant 0 : index
    %4 = vector.load %arg3[%c0_3, %c0_4] : memref<1x128xf32, #tpu.memory_space<vmem>>, vector<1x128xf32>
    %5 = vector.broadcast %4 : vector<1x128xf32> to vector<32x128xf32>
    %6 = arith.addf %3, %5 : vector<32x128xf32>
    %cst = arith.constant 0.000000e+00 : f32
    %7 = vector.broadcast %cst : f32 to vector<32x128xf32>
    %8 = arith.cmpf oge, %6, %7 : vector<32x128xf32>
    %cst_5 = arith.constant 2.000000e-01 : f32
    %9 = vector.broadcast %cst_5 : f32 to vector<32x128xf32>
    %10 = arith.mulf %9, %6 : vector<32x128xf32>
    %11 = arith.select %8, %6, %10 : vector<32x128xi1>, vector<32x128xf32>
    %12 = arith.truncf %11 : vector<32x128xf32> to vector<32x128xbf16>
    %c0_6 = arith.constant 0 : index
    %c0_7 = arith.constant 0 : index
    %13 = vector.load %arg4[%c0_6, %c0_7] : memref<32x128xbf16, #tpu.memory_space<vmem>>, vector<32x128xbf16>
    tpu.vector_store %arg4[%c0_6, %c0_7], %12 {strides = array<i32>} : memref<32x128xbf16, #tpu.memory_space<vmem>>, vector<32x128xbf16>,
    return
  }
  func.func @transform_0(%arg0: i32) -> (i32, i32) {
    %c0_i32 = arith.constant 0 : i32
    %c0_i32_0 = arith.constant 0 : i32
    return %arg0, %c0_i32 : i32, i32
  }
  func.func @transform_1(%arg0: i32) -> (i32, i32) {
    %c0_i32 = arith.constant 0 : i32
    %c0_i32_0 = arith.constant 0 : i32
    %c0_i32_1 = arith.constant 0 : i32
    return %c0_i32, %c0_i32_0 : i32, i32
  }
  func.func @transform_2(%arg0: i32) -> (i32, i32) {
    %c0_i32 = arith.constant 0 : i32
    %c0_i32_0 = arith.constant 0 : i32
    %c0_i32_1 = arith.constant 0 : i32
    return %c0_i32, %c0_i32_0 : i32, i32
  }
  func.func @transform_3(%arg0: i32) -> (i32, i32) {
    %c0_i32 = arith.constant 0 : i32
    %c0_i32_0 = arith.constant 0 : i32
    return %arg0, %c0_i32 : i32, i32
  }
}

module attributes {stable_mosaic.version = 11 : i64} {
  func.func @_mm_stats_kernel(%arg0: i32, %arg1: i32, %arg2: i32, %arg3: memref<1x16x128xbf16, #tpu.memory_space<vmem>>, %arg4: memref<1x128x1152xbf16, #tpu.memory_space<vmem>>, %arg5: memref<1x16x1152xf32, #tpu.memory_space<vmem>>, %arg6: memref<1x1x2x1152xf32, #tpu.memory_space<vmem>>) attributes {dimension_semantics = [#tpu.dimension_semantics<parallel>, #tpu.dimension_semantics<parallel>, #tpu.dimension_semantics<arbitrary>], iteration_bounds = array<i64: 1, 1, 1>, scalar_prefetch = 0 : i64, scratch_operands = 0 : i64, tpu.core_type = #tpu.core_type<tc>, window_params = [{transform_indices = @transform_0, window_bounds = array<i64: 1, 16, 128>}, {transform_indices = @transform_1, window_bounds = array<i64: 1, 128, 1152>}, {transform_indices = @transform_2, window_bounds = array<i64: 1, 16, 1152>}, {transform_indices = @transform_3, window_bounds = array<i64: 1, 1, 2, 1152>}]} {
    %c0_i32 = arith.constant 0 : i32
    %0 = arith.cmpi eq, %arg2, %c0_i32 : i32
    %1 = arith.extui %0 : i1 to i32
    %c0_i32_0 = arith.constant 0 : i32
    %2 = arith.cmpi ne, %1, %c0_i32_0 : i32
    scf.if %2 {
      %cst_14 = arith.constant 0.000000e+00 : f32
      %17 = vector.broadcast %cst_14 : f32 to vector<16x1152xf32>
      %c0_15 = arith.constant 0 : index
      %c0_16 = arith.constant 0 : index
      %c0_17 = arith.constant 0 : index
      %18 = vector.load %arg5[%c0_15, %c0_16, %c0_17] : memref<1x16x1152xf32, #tpu.memory_space<vmem>>, vector<1x16x1152xf32>
      %19 = vector.shape_cast %18 : vector<1x16x1152xf32> to vector<16x1152xf32>
      %20 = vector.shape_cast %17 : vector<16x1152xf32> to vector<1x16x1152xf32>
      tpu.vector_store %arg5[%c0_15, %c0_16, %c0_17], %20 {strides = array<i32>} : memref<1x16x1152xf32, #tpu.memory_space<vmem>>, vector<1x16x1152xf32>,
    } else {
    }
    %c0 = arith.constant 0 : index
    %c0_1 = arith.constant 0 : index
    %c0_2 = arith.constant 0 : index
    %3 = vector.load %arg5[%c0, %c0_1, %c0_2] : memref<1x16x1152xf32, #tpu.memory_space<vmem>>, vector<1x16x1152xf32>
    %4 = vector.shape_cast %3 : vector<1x16x1152xf32> to vector<16x1152xf32>
    %c0_3 = arith.constant 0 : index
    %c0_4 = arith.constant 0 : index
    %c0_5 = arith.constant 0 : index
    %5 = vector.load %arg3[%c0_3, %c0_4, %c0_5] : memref<1x16x128xbf16, #tpu.memory_space<vmem>>, vector<1x16x128xbf16>
    %6 = vector.shape_cast %5 : vector<1x16x128xbf16> to vector<16x128xbf16>
    %c0_6 = arith.constant 0 : index
    %c0_7 = arith.constant 0 : index
    %c0_8 = arith.constant 0 : index
    %7 = vector.load %arg4[%c0_6, %c0_7, %c0_8] : memref<1x128x1152xbf16, #tpu.memory_space<vmem>>, vector<1x128x1152xbf16>
    %8 = vector.shape_cast %7 : vector<1x128x1152xbf16> to vector<128x1152xbf16>
    %cst = arith.constant dense<0.000000e+00> : vector<16x1152xf32>
    %9 = tpu.matmul %6, %8, %cst {dimension_numbers = #tpu.dot_dimension_numbers<[1], [0], [0], [1], [0, 0, 1, 1], [], []>} : vector<16x128xbf16>, vector<128x1152xbf16>, vector<16x1152xf32> -> vector<16x1152xf32>
    %10 = arith.addf %4, %9 : vector<16x1152xf32>
    %c0_9 = arith.constant 0 : index
    %c0_10 = arith.constant 0 : index
    %c0_11 = arith.constant 0 : index
    %11 = vector.load %arg5[%c0_9, %c0_10, %c0_11] : memref<1x16x1152xf32, #tpu.memory_space<vmem>>, vector<1x16x1152xf32>
    %12 = vector.shape_cast %11 : vector<1x16x1152xf32> to vector<16x1152xf32>
    %13 = vector.shape_cast %10 : vector<16x1152xf32> to vector<1x16x1152xf32>
    tpu.vector_store %arg5[%c0_9, %c0_10, %c0_11], %13 {strides = array<i32>} : memref<1x16x1152xf32, #tpu.memory_space<vmem>>, vector<1x16x1152xf32>,
    %c0_i32_12 = arith.constant 0 : i32
    %14 = arith.cmpi eq, %arg2, %c0_i32_12 : i32
    %15 = arith.extui %14 : i1 to i32
    %c0_i32_13 = arith.constant 0 : i32
    %16 = arith.cmpi ne, %15, %c0_i32_13 : i32
    scf.if %16 {
      %c0_14 = arith.constant 0 : index
      %c0_15 = arith.constant 0 : index
      %c0_16 = arith.constant 0 : index
      %17 = vector.load %arg5[%c0_14, %c0_15, %c0_16] : memref<1x16x1152xf32, #tpu.memory_space<vmem>>, vector<1x16x1152xf32>
      %18 = vector.shape_cast %17 : vector<1x16x1152xf32> to vector<16x1152xf32>
      %cst_17 = arith.constant dense<0.000000e+00> : vector<1152xf32>
      %19 = vector.multi_reduction <add>, %18, %cst_17 [0] : vector<16x1152xf32> to vector<1152xf32>
      %20 = vector.shape_cast %19 : vector<1152xf32> to vector<1x1152xf32>
      %21 = arith.mulf %18, %18 : vector<16x1152xf32>
      %cst_18 = arith.constant dense<0.000000e+00> : vector<1152xf32>
      %22 = vector.multi_reduction <add>, %21, %cst_18 [0] : vector<16x1152xf32> to vector<1152xf32>
      %23 = vector.shape_cast %22 : vector<1152xf32> to vector<1x1152xf32>
      %24 = tpu.concatenate %20, %23 in 0 : vector<1x1152xf32>, vector<1x1152xf32> -> vector<2x1152xf32>
      %25 = vector.shape_cast %24 : vector<2x1152xf32> to vector<1x2x1152xf32>
      %c0_19 = arith.constant 0 : index
      %c0_20 = arith.constant 0 : index
      %c0_21 = arith.constant 0 : index
      %c0_22 = arith.constant 0 : index
      %26 = vector.load %arg6[%c0_19, %c0_20, %c0_21, %c0_22] : memref<1x1x2x1152xf32, #tpu.memory_space<vmem>>, vector<1x1x2x1152xf32>
      %27 = vector.shape_cast %26 : vector<1x1x2x1152xf32> to vector<1x2x1152xf32>
      %28 = vector.shape_cast %25 : vector<1x2x1152xf32> to vector<1x1x2x1152xf32>
      tpu.vector_store %arg6[%c0_19, %c0_20, %c0_21, %c0_22], %28 {strides = array<i32>} : memref<1x1x2x1152xf32, #tpu.memory_space<vmem>>, vector<1x1x2x1152xf32>,
    } else {
    }
    return
  }
  func.func @transform_0(%arg0: i32, %arg1: i32, %arg2: i32) -> (i32, i32, i32) {
    %c0_i32 = arith.constant 0 : i32
    return %arg0, %arg1, %arg2 : i32, i32, i32
  }
  func.func @transform_1(%arg0: i32, %arg1: i32, %arg2: i32) -> (i32, i32, i32) {
    %c0_i32 = arith.constant 0 : i32
    %c0_i32_0 = arith.constant 0 : i32
    return %arg0, %arg2, %c0_i32 : i32, i32, i32
  }
  func.func @transform_2(%arg0: i32, %arg1: i32, %arg2: i32) -> (i32, i32, i32) {
    %c0_i32 = arith.constant 0 : i32
    %c0_i32_0 = arith.constant 0 : i32
    return %arg0, %arg1, %c0_i32 : i32, i32, i32
  }
  func.func @transform_3(%arg0: i32, %arg1: i32, %arg2: i32) -> (i32, i32, i32, i32) {
    %c0_i32 = arith.constant 0 : i32
    %c0_i32_0 = arith.constant 0 : i32
    %c0_i32_1 = arith.constant 0 : i32
    return %arg0, %arg1, %c0_i32, %c0_i32_0 : i32, i32, i32, i32
  }
}

module attributes {stable_mosaic.version = 11 : i64} {
  func.func @_mm_stats_kernel(%arg0: i32, %arg1: i32, %arg2: i32, %arg3: memref<1x32x512xbf16, #tpu.memory_space<vmem>>, %arg4: memref<1x512x64xbf16, #tpu.memory_space<vmem>>, %arg5: memref<1x32x64xf32, #tpu.memory_space<vmem>>, %arg6: memref<1x1x2x64xf32, #tpu.memory_space<vmem>>) attributes {dimension_semantics = [#tpu.dimension_semantics<parallel>, #tpu.dimension_semantics<parallel>, #tpu.dimension_semantics<arbitrary>], iteration_bounds = array<i64: 4, 1, 1>, scalar_prefetch = 0 : i64, scratch_operands = 0 : i64, tpu.core_type = #tpu.core_type<tc>, window_params = [{transform_indices = @transform_0, window_bounds = array<i64: 1, 32, 512>}, {transform_indices = @transform_1, window_bounds = array<i64: 1, 512, 64>}, {transform_indices = @transform_2, window_bounds = array<i64: 1, 32, 64>}, {transform_indices = @transform_3, window_bounds = array<i64: 1, 1, 2, 64>}]} {
    %c0_i32 = arith.constant 0 : i32
    %0 = arith.cmpi eq, %arg2, %c0_i32 : i32
    %1 = arith.extui %0 : i1 to i32
    %c0_i32_0 = arith.constant 0 : i32
    %2 = arith.cmpi ne, %1, %c0_i32_0 : i32
    scf.if %2 {
      %cst_14 = arith.constant 0.000000e+00 : f32
      %17 = vector.broadcast %cst_14 : f32 to vector<32x64xf32>
      %c0_15 = arith.constant 0 : index
      %c0_16 = arith.constant 0 : index
      %c0_17 = arith.constant 0 : index
      %18 = vector.load %arg5[%c0_15, %c0_16, %c0_17] : memref<1x32x64xf32, #tpu.memory_space<vmem>>, vector<1x32x64xf32>
      %19 = vector.shape_cast %18 : vector<1x32x64xf32> to vector<32x64xf32>
      %20 = vector.shape_cast %17 : vector<32x64xf32> to vector<1x32x64xf32>
      tpu.vector_store %arg5[%c0_15, %c0_16, %c0_17], %20 {strides = array<i32>} : memref<1x32x64xf32, #tpu.memory_space<vmem>>, vector<1x32x64xf32>,
    } else {
    }
    %c0 = arith.constant 0 : index
    %c0_1 = arith.constant 0 : index
    %c0_2 = arith.constant 0 : index
    %3 = vector.load %arg5[%c0, %c0_1, %c0_2] : memref<1x32x64xf32, #tpu.memory_space<vmem>>, vector<1x32x64xf32>
    %4 = vector.shape_cast %3 : vector<1x32x64xf32> to vector<32x64xf32>
    %c0_3 = arith.constant 0 : index
    %c0_4 = arith.constant 0 : index
    %c0_5 = arith.constant 0 : index
    %5 = vector.load %arg3[%c0_3, %c0_4, %c0_5] : memref<1x32x512xbf16, #tpu.memory_space<vmem>>, vector<1x32x512xbf16>
    %6 = vector.shape_cast %5 : vector<1x32x512xbf16> to vector<32x512xbf16>
    %c0_6 = arith.constant 0 : index
    %c0_7 = arith.constant 0 : index
    %c0_8 = arith.constant 0 : index
    %7 = vector.load %arg4[%c0_6, %c0_7, %c0_8] : memref<1x512x64xbf16, #tpu.memory_space<vmem>>, vector<1x512x64xbf16>
    %8 = vector.shape_cast %7 : vector<1x512x64xbf16> to vector<512x64xbf16>
    %cst = arith.constant dense<0.000000e+00> : vector<32x64xf32>
    %9 = tpu.matmul %6, %8, %cst {dimension_numbers = #tpu.dot_dimension_numbers<[1], [0], [0], [1], [0, 0, 1, 1], [], []>} : vector<32x512xbf16>, vector<512x64xbf16>, vector<32x64xf32> -> vector<32x64xf32>
    %10 = arith.addf %4, %9 : vector<32x64xf32>
    %c0_9 = arith.constant 0 : index
    %c0_10 = arith.constant 0 : index
    %c0_11 = arith.constant 0 : index
    %11 = vector.load %arg5[%c0_9, %c0_10, %c0_11] : memref<1x32x64xf32, #tpu.memory_space<vmem>>, vector<1x32x64xf32>
    %12 = vector.shape_cast %11 : vector<1x32x64xf32> to vector<32x64xf32>
    %13 = vector.shape_cast %10 : vector<32x64xf32> to vector<1x32x64xf32>
    tpu.vector_store %arg5[%c0_9, %c0_10, %c0_11], %13 {strides = array<i32>} : memref<1x32x64xf32, #tpu.memory_space<vmem>>, vector<1x32x64xf32>,
    %c0_i32_12 = arith.constant 0 : i32
    %14 = arith.cmpi eq, %arg2, %c0_i32_12 : i32
    %15 = arith.extui %14 : i1 to i32
    %c0_i32_13 = arith.constant 0 : i32
    %16 = arith.cmpi ne, %15, %c0_i32_13 : i32
    scf.if %16 {
      %c0_14 = arith.constant 0 : index
      %c0_15 = arith.constant 0 : index
      %c0_16 = arith.constant 0 : index
      %17 = vector.load %arg5[%c0_14, %c0_15, %c0_16] : memref<1x32x64xf32, #tpu.memory_space<vmem>>, vector<1x32x64xf32>
      %18 = vector.shape_cast %17 : vector<1x32x64xf32> to vector<32x64xf32>
      %cst_17 = arith.constant dense<0.000000e+00> : vector<64xf32>
      %19 = vector.multi_reduction <add>, %18, %cst_17 [0] : vector<32x64xf32> to vector<64xf32>
      %20 = vector.shape_cast %19 : vector<64xf32> to vector<1x64xf32>
      %21 = arith.mulf %18, %18 : vector<32x64xf32>
      %cst_18 = arith.constant dense<0.000000e+00> : vector<64xf32>
      %22 = vector.multi_reduction <add>, %21, %cst_18 [0] : vector<32x64xf32> to vector<64xf32>
      %23 = vector.shape_cast %22 : vector<64xf32> to vector<1x64xf32>
      %24 = tpu.concatenate %20, %23 in 0 : vector<1x64xf32>, vector<1x64xf32> -> vector<2x64xf32>
      %25 = vector.shape_cast %24 : vector<2x64xf32> to vector<1x2x64xf32>
      %c0_19 = arith.constant 0 : index
      %c0_20 = arith.constant 0 : index
      %c0_21 = arith.constant 0 : index
      %c0_22 = arith.constant 0 : index
      %26 = vector.load %arg6[%c0_19, %c0_20, %c0_21, %c0_22] : memref<1x1x2x64xf32, #tpu.memory_space<vmem>>, vector<1x1x2x64xf32>
      %27 = vector.shape_cast %26 : vector<1x1x2x64xf32> to vector<1x2x64xf32>
      %28 = vector.shape_cast %25 : vector<1x2x64xf32> to vector<1x1x2x64xf32>
      tpu.vector_store %arg6[%c0_19, %c0_20, %c0_21, %c0_22], %28 {strides = array<i32>} : memref<1x1x2x64xf32, #tpu.memory_space<vmem>>, vector<1x1x2x64xf32>,
    } else {
    }
    return
  }
  func.func @transform_0(%arg0: i32, %arg1: i32, %arg2: i32) -> (i32, i32, i32) {
    %c0_i32 = arith.constant 0 : i32
    return %arg0, %arg1, %arg2 : i32, i32, i32
  }
  func.func @transform_1(%arg0: i32, %arg1: i32, %arg2: i32) -> (i32, i32, i32) {
    %c0_i32 = arith.constant 0 : i32
    %c0_i32_0 = arith.constant 0 : i32
    return %arg0, %arg2, %c0_i32 : i32, i32, i32
  }
  func.func @transform_2(%arg0: i32, %arg1: i32, %arg2: i32) -> (i32, i32, i32) {
    %c0_i32 = arith.constant 0 : i32
    %c0_i32_0 = arith.constant 0 : i32
    return %arg0, %arg1, %c0_i32 : i32, i32, i32
  }
  func.func @transform_3(%arg0: i32, %arg1: i32, %arg2: i32) -> (i32, i32, i32, i32) {
    %c0_i32 = arith.constant 0 : i32
    %c0_i32_0 = arith.constant 0 : i32
    %c0_i32_1 = arith.constant 0 : i32
    return %arg0, %arg1, %c0_i32, %c0_i32_0 : i32, i32, i32, i32
  }
}

module attributes {stable_mosaic.version = 11 : i64} {
  func.func @_bn_lrelu_kernel(%arg0: i32, %arg1: memref<128x64xf32, #tpu.memory_space<vmem>>, %arg2: memref<1x64xf32, #tpu.memory_space<vmem>>, %arg3: memref<1x64xf32, #tpu.memory_space<vmem>>, %arg4: memref<128x64xbf16, #tpu.memory_space<vmem>>) attributes {dimension_semantics = [#tpu.dimension_semantics<parallel>], iteration_bounds = array<i64: 1>, scalar_prefetch = 0 : i64, scratch_operands = 0 : i64, tpu.core_type = #tpu.core_type<tc>, window_params = [{transform_indices = @transform_0, window_bounds = array<i64: 128, 64>}, {pipeline_mode = #tpu.pipeline_mode<synchronous>, transform_indices = @transform_1, window_bounds = array<i64: 1, 64>}, {pipeline_mode = #tpu.pipeline_mode<synchronous>, transform_indices = @transform_2, window_bounds = array<i64: 1, 64>}, {transform_indices = @transform_3, window_bounds = array<i64: 128, 64>}]} {
    %c0 = arith.constant 0 : index
    %c0_0 = arith.constant 0 : index
    %0 = vector.load %arg1[%c0, %c0_0] : memref<128x64xf32, #tpu.memory_space<vmem>>, vector<128x64xf32>
    %c0_1 = arith.constant 0 : index
    %c0_2 = arith.constant 0 : index
    %1 = vector.load %arg2[%c0_1, %c0_2] : memref<1x64xf32, #tpu.memory_space<vmem>>, vector<1x64xf32>
    %2 = vector.broadcast %1 : vector<1x64xf32> to vector<128x64xf32>
    %3 = arith.mulf %0, %2 : vector<128x64xf32>
    %c0_3 = arith.constant 0 : index
    %c0_4 = arith.constant 0 : index
    %4 = vector.load %arg3[%c0_3, %c0_4] : memref<1x64xf32, #tpu.memory_space<vmem>>, vector<1x64xf32>
    %5 = vector.broadcast %4 : vector<1x64xf32> to vector<128x64xf32>
    %6 = arith.addf %3, %5 : vector<128x64xf32>
    %cst = arith.constant 0.000000e+00 : f32
    %7 = vector.broadcast %cst : f32 to vector<128x64xf32>
    %8 = arith.cmpf oge, %6, %7 : vector<128x64xf32>
    %cst_5 = arith.constant 2.000000e-01 : f32
    %9 = vector.broadcast %cst_5 : f32 to vector<128x64xf32>
    %10 = arith.mulf %9, %6 : vector<128x64xf32>
    %11 = arith.select %8, %6, %10 : vector<128x64xi1>, vector<128x64xf32>
    %12 = arith.truncf %11 : vector<128x64xf32> to vector<128x64xbf16>
    %c0_6 = arith.constant 0 : index
    %c0_7 = arith.constant 0 : index
    %13 = vector.load %arg4[%c0_6, %c0_7] : memref<128x64xbf16, #tpu.memory_space<vmem>>, vector<128x64xbf16>
    tpu.vector_store %arg4[%c0_6, %c0_7], %12 {strides = array<i32>} : memref<128x64xbf16, #tpu.memory_space<vmem>>, vector<128x64xbf16>,
    return
  }
  func.func @transform_0(%arg0: i32) -> (i32, i32) {
    %c0_i32 = arith.constant 0 : i32
    %c0_i32_0 = arith.constant 0 : i32
    return %arg0, %c0_i32 : i32, i32
  }
  func.func @transform_1(%arg0: i32) -> (i32, i32) {
    %c0_i32 = arith.constant 0 : i32
    %c0_i32_0 = arith.constant 0 : i32
    %c0_i32_1 = arith.constant 0 : i32
    return %c0_i32, %c0_i32_0 : i32, i32
  }
  func.func @transform_2(%arg0: i32) -> (i32, i32) {
    %c0_i32 = arith.constant 0 : i32
    %c0_i32_0 = arith.constant 0 : i32
    %c0_i32_1 = arith.constant 0 : i32
    return %c0_i32, %c0_i32_0 : i32, i32
  }
  func.func @transform_3(%arg0: i32) -> (i32, i32) {
    %c0_i32 = arith.constant 0 : i32
    %c0_i32_0 = arith.constant 0 : i32
    return %arg0, %c0_i32 : i32, i32
  }
}

module attributes {stable_mosaic.version = 11 : i64} {
  func.func @_mm_stats_kernel(%arg0: i32, %arg1: i32, %arg2: i32, %arg3: memref<1x112x640xbf16, #tpu.memory_space<vmem>>, %arg4: memref<1x640x32xbf16, #tpu.memory_space<vmem>>, %arg5: memref<1x112x32xf32, #tpu.memory_space<vmem>>, %arg6: memref<1x1x2x32xf32, #tpu.memory_space<vmem>>) attributes {dimension_semantics = [#tpu.dimension_semantics<parallel>, #tpu.dimension_semantics<parallel>, #tpu.dimension_semantics<arbitrary>], iteration_bounds = array<i64: 4, 1, 1>, scalar_prefetch = 0 : i64, scratch_operands = 0 : i64, tpu.core_type = #tpu.core_type<tc>, window_params = [{transform_indices = @transform_0, window_bounds = array<i64: 1, 112, 640>}, {transform_indices = @transform_1, window_bounds = array<i64: 1, 640, 32>}, {transform_indices = @transform_2, window_bounds = array<i64: 1, 112, 32>}, {transform_indices = @transform_3, window_bounds = array<i64: 1, 1, 2, 32>}]} {
    %c0_i32 = arith.constant 0 : i32
    %0 = arith.cmpi eq, %arg2, %c0_i32 : i32
    %1 = arith.extui %0 : i1 to i32
    %c0_i32_0 = arith.constant 0 : i32
    %2 = arith.cmpi ne, %1, %c0_i32_0 : i32
    scf.if %2 {
      %cst_14 = arith.constant 0.000000e+00 : f32
      %17 = vector.broadcast %cst_14 : f32 to vector<112x32xf32>
      %c0_15 = arith.constant 0 : index
      %c0_16 = arith.constant 0 : index
      %c0_17 = arith.constant 0 : index
      %18 = vector.load %arg5[%c0_15, %c0_16, %c0_17] : memref<1x112x32xf32, #tpu.memory_space<vmem>>, vector<1x112x32xf32>
      %19 = vector.shape_cast %18 : vector<1x112x32xf32> to vector<112x32xf32>
      %20 = vector.shape_cast %17 : vector<112x32xf32> to vector<1x112x32xf32>
      tpu.vector_store %arg5[%c0_15, %c0_16, %c0_17], %20 {strides = array<i32>} : memref<1x112x32xf32, #tpu.memory_space<vmem>>, vector<1x112x32xf32>,
    } else {
    }
    %c0 = arith.constant 0 : index
    %c0_1 = arith.constant 0 : index
    %c0_2 = arith.constant 0 : index
    %3 = vector.load %arg5[%c0, %c0_1, %c0_2] : memref<1x112x32xf32, #tpu.memory_space<vmem>>, vector<1x112x32xf32>
    %4 = vector.shape_cast %3 : vector<1x112x32xf32> to vector<112x32xf32>
    %c0_3 = arith.constant 0 : index
    %c0_4 = arith.constant 0 : index
    %c0_5 = arith.constant 0 : index
    %5 = vector.load %arg3[%c0_3, %c0_4, %c0_5] : memref<1x112x640xbf16, #tpu.memory_space<vmem>>, vector<1x112x640xbf16>
    %6 = vector.shape_cast %5 : vector<1x112x640xbf16> to vector<112x640xbf16>
    %c0_6 = arith.constant 0 : index
    %c0_7 = arith.constant 0 : index
    %c0_8 = arith.constant 0 : index
    %7 = vector.load %arg4[%c0_6, %c0_7, %c0_8] : memref<1x640x32xbf16, #tpu.memory_space<vmem>>, vector<1x640x32xbf16>
    %8 = vector.shape_cast %7 : vector<1x640x32xbf16> to vector<640x32xbf16>
    %cst = arith.constant dense<0.000000e+00> : vector<112x32xf32>
    %9 = tpu.matmul %6, %8, %cst {dimension_numbers = #tpu.dot_dimension_numbers<[1], [0], [0], [1], [0, 0, 1, 1], [], []>} : vector<112x640xbf16>, vector<640x32xbf16>, vector<112x32xf32> -> vector<112x32xf32>
    %10 = arith.addf %4, %9 : vector<112x32xf32>
    %c0_9 = arith.constant 0 : index
    %c0_10 = arith.constant 0 : index
    %c0_11 = arith.constant 0 : index
    %11 = vector.load %arg5[%c0_9, %c0_10, %c0_11] : memref<1x112x32xf32, #tpu.memory_space<vmem>>, vector<1x112x32xf32>
    %12 = vector.shape_cast %11 : vector<1x112x32xf32> to vector<112x32xf32>
    %13 = vector.shape_cast %10 : vector<112x32xf32> to vector<1x112x32xf32>
    tpu.vector_store %arg5[%c0_9, %c0_10, %c0_11], %13 {strides = array<i32>} : memref<1x112x32xf32, #tpu.memory_space<vmem>>, vector<1x112x32xf32>,
    %c0_i32_12 = arith.constant 0 : i32
    %14 = arith.cmpi eq, %arg2, %c0_i32_12 : i32
    %15 = arith.extui %14 : i1 to i32
    %c0_i32_13 = arith.constant 0 : i32
    %16 = arith.cmpi ne, %15, %c0_i32_13 : i32
    scf.if %16 {
      %c0_14 = arith.constant 0 : index
      %c0_15 = arith.constant 0 : index
      %c0_16 = arith.constant 0 : index
      %17 = vector.load %arg5[%c0_14, %c0_15, %c0_16] : memref<1x112x32xf32, #tpu.memory_space<vmem>>, vector<1x112x32xf32>
      %18 = vector.shape_cast %17 : vector<1x112x32xf32> to vector<112x32xf32>
      %cst_17 = arith.constant dense<0.000000e+00> : vector<32xf32>
      %19 = vector.multi_reduction <add>, %18, %cst_17 [0] : vector<112x32xf32> to vector<32xf32>
      %20 = vector.shape_cast %19 : vector<32xf32> to vector<1x32xf32>
      %21 = arith.mulf %18, %18 : vector<112x32xf32>
      %cst_18 = arith.constant dense<0.000000e+00> : vector<32xf32>
      %22 = vector.multi_reduction <add>, %21, %cst_18 [0] : vector<112x32xf32> to vector<32xf32>
      %23 = vector.shape_cast %22 : vector<32xf32> to vector<1x32xf32>
      %24 = tpu.concatenate %20, %23 in 0 : vector<1x32xf32>, vector<1x32xf32> -> vector<2x32xf32>
      %25 = vector.shape_cast %24 : vector<2x32xf32> to vector<1x2x32xf32>
      %c0_19 = arith.constant 0 : index
      %c0_20 = arith.constant 0 : index
      %c0_21 = arith.constant 0 : index
      %c0_22 = arith.constant 0 : index
      %26 = vector.load %arg6[%c0_19, %c0_20, %c0_21, %c0_22] : memref<1x1x2x32xf32, #tpu.memory_space<vmem>>, vector<1x1x2x32xf32>
      %27 = vector.shape_cast %26 : vector<1x1x2x32xf32> to vector<1x2x32xf32>
      %28 = vector.shape_cast %25 : vector<1x2x32xf32> to vector<1x1x2x32xf32>
      tpu.vector_store %arg6[%c0_19, %c0_20, %c0_21, %c0_22], %28 {strides = array<i32>} : memref<1x1x2x32xf32, #tpu.memory_space<vmem>>, vector<1x1x2x32xf32>,
    } else {
    }
    return
  }
  func.func @transform_0(%arg0: i32, %arg1: i32, %arg2: i32) -> (i32, i32, i32) {
    %c0_i32 = arith.constant 0 : i32
    return %arg0, %arg1, %arg2 : i32, i32, i32
  }
  func.func @transform_1(%arg0: i32, %arg1: i32, %arg2: i32) -> (i32, i32, i32) {
    %c0_i32 = arith.constant 0 : i32
    %c0_i32_0 = arith.constant 0 : i32
    return %arg0, %arg2, %c0_i32 : i32, i32, i32
  }
  func.func @transform_2(%arg0: i32, %arg1: i32, %arg2: i32) -> (i32, i32, i32) {
    %c0_i32 = arith.constant 0 : i32
    %c0_i32_0 = arith.constant 0 : i32
    return %arg0, %arg1, %c0_i32 : i32, i32, i32
  }
  func.func @transform_3(%arg0: i32, %arg1: i32, %arg2: i32) -> (i32, i32, i32, i32) {
    %c0_i32 = arith.constant 0 : i32
    %c0_i32_0 = arith.constant 0 : i32
    %c0_i32_1 = arith.constant 0 : i32
    return %arg0, %arg1, %c0_i32, %c0_i32_0 : i32, i32, i32, i32
  }
}

module attributes {stable_mosaic.version = 11 : i64} {
  func.func @_bn_lrelu_kernel(%arg0: i32, %arg1: memref<224x32xf32, #tpu.memory_space<vmem>>, %arg2: memref<1x32xf32, #tpu.memory_space<vmem>>, %arg3: memref<1x32xf32, #tpu.memory_space<vmem>>, %arg4: memref<224x32xbf16, #tpu.memory_space<vmem>>) attributes {dimension_semantics = [#tpu.dimension_semantics<parallel>], iteration_bounds = array<i64: 2>, scalar_prefetch = 0 : i64, scratch_operands = 0 : i64, tpu.core_type = #tpu.core_type<tc>, window_params = [{transform_indices = @transform_0, window_bounds = array<i64: 224, 32>}, {pipeline_mode = #tpu.pipeline_mode<synchronous>, transform_indices = @transform_1, window_bounds = array<i64: 1, 32>}, {pipeline_mode = #tpu.pipeline_mode<synchronous>, transform_indices = @transform_2, window_bounds = array<i64: 1, 32>}, {transform_indices = @transform_3, window_bounds = array<i64: 224, 32>}]} {
    %c0 = arith.constant 0 : index
    %c0_0 = arith.constant 0 : index
    %0 = vector.load %arg1[%c0, %c0_0] : memref<224x32xf32, #tpu.memory_space<vmem>>, vector<224x32xf32>
    %c0_1 = arith.constant 0 : index
    %c0_2 = arith.constant 0 : index
    %1 = vector.load %arg2[%c0_1, %c0_2] : memref<1x32xf32, #tpu.memory_space<vmem>>, vector<1x32xf32>
    %2 = vector.broadcast %1 : vector<1x32xf32> to vector<224x32xf32>
    %3 = arith.mulf %0, %2 : vector<224x32xf32>
    %c0_3 = arith.constant 0 : index
    %c0_4 = arith.constant 0 : index
    %4 = vector.load %arg3[%c0_3, %c0_4] : memref<1x32xf32, #tpu.memory_space<vmem>>, vector<1x32xf32>
    %5 = vector.broadcast %4 : vector<1x32xf32> to vector<224x32xf32>
    %6 = arith.addf %3, %5 : vector<224x32xf32>
    %cst = arith.constant 0.000000e+00 : f32
    %7 = vector.broadcast %cst : f32 to vector<224x32xf32>
    %8 = arith.cmpf oge, %6, %7 : vector<224x32xf32>
    %cst_5 = arith.constant 2.000000e-01 : f32
    %9 = vector.broadcast %cst_5 : f32 to vector<224x32xf32>
    %10 = arith.mulf %9, %6 : vector<224x32xf32>
    %11 = arith.select %8, %6, %10 : vector<224x32xi1>, vector<224x32xf32>
    %12 = arith.truncf %11 : vector<224x32xf32> to vector<224x32xbf16>
    %c0_6 = arith.constant 0 : index
    %c0_7 = arith.constant 0 : index
    %13 = vector.load %arg4[%c0_6, %c0_7] : memref<224x32xbf16, #tpu.memory_space<vmem>>, vector<224x32xbf16>
    tpu.vector_store %arg4[%c0_6, %c0_7], %12 {strides = array<i32>} : memref<224x32xbf16, #tpu.memory_space<vmem>>, vector<224x32xbf16>,
    return
  }
  func.func @transform_0(%arg0: i32) -> (i32, i32) {
    %c0_i32 = arith.constant 0 : i32
    %c0_i32_0 = arith.constant 0 : i32
    return %arg0, %c0_i32 : i32, i32
  }
  func.func @transform_1(%arg0: i32) -> (i32, i32) {
    %c0_i32 = arith.constant 0 : i32
    %c0_i32_0 = arith.constant 0 : i32
    %c0_i32_1 = arith.constant 0 : i32
    return %c0_i32, %c0_i32_0 : i32, i32
  }
  func.func @transform_2(%arg0: i32) -> (i32, i32) {
    %c0_i32 = arith.constant 0 : i32
    %c0_i32_0 = arith.constant 0 : i32
    %c0_i32_1 = arith.constant 0 : i32
    return %c0_i32, %c0_i32_0 : i32, i32
  }
  func.func @transform_3(%arg0: i32) -> (i32, i32) {
    %c0_i32 = arith.constant 0 : i32
    %c0_i32_0 = arith.constant 0 : i32
    return %arg0, %c0_i32 : i32, i32
  }
}

module attributes {stable_mosaic.version = 11 : i64} {
  func.func @_mm_stats_kernel(%arg0: i32, %arg1: i32, %arg2: i32, %arg3: memref<1x208x128xbf16, #tpu.memory_space<vmem>>, %arg4: memref<1x128x16xbf16, #tpu.memory_space<vmem>>, %arg5: memref<1x208x16xf32, #tpu.memory_space<vmem>>, %arg6: memref<1x1x2x16xf32, #tpu.memory_space<vmem>>) attributes {dimension_semantics = [#tpu.dimension_semantics<parallel>, #tpu.dimension_semantics<parallel>, #tpu.dimension_semantics<arbitrary>], iteration_bounds = array<i64: 4, 2, 1>, scalar_prefetch = 0 : i64, scratch_operands = 0 : i64, tpu.core_type = #tpu.core_type<tc>, window_params = [{transform_indices = @transform_0, window_bounds = array<i64: 1, 208, 128>}, {transform_indices = @transform_1, window_bounds = array<i64: 1, 128, 16>}, {transform_indices = @transform_2, window_bounds = array<i64: 1, 208, 16>}, {transform_indices = @transform_3, window_bounds = array<i64: 1, 1, 2, 16>}]} {
    %c0_i32 = arith.constant 0 : i32
    %0 = arith.cmpi eq, %arg2, %c0_i32 : i32
    %1 = arith.extui %0 : i1 to i32
    %c0_i32_0 = arith.constant 0 : i32
    %2 = arith.cmpi ne, %1, %c0_i32_0 : i32
    scf.if %2 {
      %cst_14 = arith.constant 0.000000e+00 : f32
      %17 = vector.broadcast %cst_14 : f32 to vector<208x16xf32>
      %c0_15 = arith.constant 0 : index
      %c0_16 = arith.constant 0 : index
      %c0_17 = arith.constant 0 : index
      %18 = vector.load %arg5[%c0_15, %c0_16, %c0_17] : memref<1x208x16xf32, #tpu.memory_space<vmem>>, vector<1x208x16xf32>
      %19 = vector.shape_cast %18 : vector<1x208x16xf32> to vector<208x16xf32>
      %20 = vector.shape_cast %17 : vector<208x16xf32> to vector<1x208x16xf32>
      tpu.vector_store %arg5[%c0_15, %c0_16, %c0_17], %20 {strides = array<i32>} : memref<1x208x16xf32, #tpu.memory_space<vmem>>, vector<1x208x16xf32>,
    } else {
    }
    %c0 = arith.constant 0 : index
    %c0_1 = arith.constant 0 : index
    %c0_2 = arith.constant 0 : index
    %3 = vector.load %arg5[%c0, %c0_1, %c0_2] : memref<1x208x16xf32, #tpu.memory_space<vmem>>, vector<1x208x16xf32>
    %4 = vector.shape_cast %3 : vector<1x208x16xf32> to vector<208x16xf32>
    %c0_3 = arith.constant 0 : index
    %c0_4 = arith.constant 0 : index
    %c0_5 = arith.constant 0 : index
    %5 = vector.load %arg3[%c0_3, %c0_4, %c0_5] : memref<1x208x128xbf16, #tpu.memory_space<vmem>>, vector<1x208x128xbf16>
    %6 = vector.shape_cast %5 : vector<1x208x128xbf16> to vector<208x128xbf16>
    %c0_6 = arith.constant 0 : index
    %c0_7 = arith.constant 0 : index
    %c0_8 = arith.constant 0 : index
    %7 = vector.load %arg4[%c0_6, %c0_7, %c0_8] : memref<1x128x16xbf16, #tpu.memory_space<vmem>>, vector<1x128x16xbf16>
    %8 = vector.shape_cast %7 : vector<1x128x16xbf16> to vector<128x16xbf16>
    %cst = arith.constant dense<0.000000e+00> : vector<208x16xf32>
    %9 = tpu.matmul %6, %8, %cst {dimension_numbers = #tpu.dot_dimension_numbers<[1], [0], [0], [1], [0, 0, 1, 1], [], []>} : vector<208x128xbf16>, vector<128x16xbf16>, vector<208x16xf32> -> vector<208x16xf32>
    %10 = arith.addf %4, %9 : vector<208x16xf32>
    %c0_9 = arith.constant 0 : index
    %c0_10 = arith.constant 0 : index
    %c0_11 = arith.constant 0 : index
    %11 = vector.load %arg5[%c0_9, %c0_10, %c0_11] : memref<1x208x16xf32, #tpu.memory_space<vmem>>, vector<1x208x16xf32>
    %12 = vector.shape_cast %11 : vector<1x208x16xf32> to vector<208x16xf32>
    %13 = vector.shape_cast %10 : vector<208x16xf32> to vector<1x208x16xf32>
    tpu.vector_store %arg5[%c0_9, %c0_10, %c0_11], %13 {strides = array<i32>} : memref<1x208x16xf32, #tpu.memory_space<vmem>>, vector<1x208x16xf32>,
    %c0_i32_12 = arith.constant 0 : i32
    %14 = arith.cmpi eq, %arg2, %c0_i32_12 : i32
    %15 = arith.extui %14 : i1 to i32
    %c0_i32_13 = arith.constant 0 : i32
    %16 = arith.cmpi ne, %15, %c0_i32_13 : i32
    scf.if %16 {
      %c0_14 = arith.constant 0 : index
      %c0_15 = arith.constant 0 : index
      %c0_16 = arith.constant 0 : index
      %17 = vector.load %arg5[%c0_14, %c0_15, %c0_16] : memref<1x208x16xf32, #tpu.memory_space<vmem>>, vector<1x208x16xf32>
      %18 = vector.shape_cast %17 : vector<1x208x16xf32> to vector<208x16xf32>
      %cst_17 = arith.constant dense<0.000000e+00> : vector<16xf32>
      %19 = vector.multi_reduction <add>, %18, %cst_17 [0] : vector<208x16xf32> to vector<16xf32>
      %20 = vector.shape_cast %19 : vector<16xf32> to vector<1x16xf32>
      %21 = arith.mulf %18, %18 : vector<208x16xf32>
      %cst_18 = arith.constant dense<0.000000e+00> : vector<16xf32>
      %22 = vector.multi_reduction <add>, %21, %cst_18 [0] : vector<208x16xf32> to vector<16xf32>
      %23 = vector.shape_cast %22 : vector<16xf32> to vector<1x16xf32>
      %24 = tpu.concatenate %20, %23 in 0 : vector<1x16xf32>, vector<1x16xf32> -> vector<2x16xf32>
      %25 = vector.shape_cast %24 : vector<2x16xf32> to vector<1x2x16xf32>
      %c0_19 = arith.constant 0 : index
      %c0_20 = arith.constant 0 : index
      %c0_21 = arith.constant 0 : index
      %c0_22 = arith.constant 0 : index
      %26 = vector.load %arg6[%c0_19, %c0_20, %c0_21, %c0_22] : memref<1x1x2x16xf32, #tpu.memory_space<vmem>>, vector<1x1x2x16xf32>
      %27 = vector.shape_cast %26 : vector<1x1x2x16xf32> to vector<1x2x16xf32>
      %28 = vector.shape_cast %25 : vector<1x2x16xf32> to vector<1x1x2x16xf32>
      tpu.vector_store %arg6[%c0_19, %c0_20, %c0_21, %c0_22], %28 {strides = array<i32>} : memref<1x1x2x16xf32, #tpu.memory_space<vmem>>, vector<1x1x2x16xf32>,
    } else {
    }
    return
  }
  func.func @transform_0(%arg0: i32, %arg1: i32, %arg2: i32) -> (i32, i32, i32) {
    %c0_i32 = arith.constant 0 : i32
    return %arg0, %arg1, %arg2 : i32, i32, i32
  }
  func.func @transform_1(%arg0: i32, %arg1: i32, %arg2: i32) -> (i32, i32, i32) {
    %c0_i32 = arith.constant 0 : i32
    %c0_i32_0 = arith.constant 0 : i32
    return %arg0, %arg2, %c0_i32 : i32, i32, i32
  }
  func.func @transform_2(%arg0: i32, %arg1: i32, %arg2: i32) -> (i32, i32, i32) {
    %c0_i32 = arith.constant 0 : i32
    %c0_i32_0 = arith.constant 0 : i32
    return %arg0, %arg1, %c0_i32 : i32, i32, i32
  }
  func.func @transform_3(%arg0: i32, %arg1: i32, %arg2: i32) -> (i32, i32, i32, i32) {
    %c0_i32 = arith.constant 0 : i32
    %c0_i32_0 = arith.constant 0 : i32
    %c0_i32_1 = arith.constant 0 : i32
    return %arg0, %arg1, %c0_i32, %c0_i32_0 : i32, i32, i32, i32
  }
}

module attributes {stable_mosaic.version = 11 : i64} {
  func.func @_bn_lrelu_kernel(%arg0: i32, %arg1: memref<240x16xf32, #tpu.memory_space<vmem>>, %arg2: memref<1x16xf32, #tpu.memory_space<vmem>>, %arg3: memref<1x16xf32, #tpu.memory_space<vmem>>, %arg4: memref<240x16xbf16, #tpu.memory_space<vmem>>) attributes {dimension_semantics = [#tpu.dimension_semantics<parallel>], iteration_bounds = array<i64: 7>, scalar_prefetch = 0 : i64, scratch_operands = 0 : i64, tpu.core_type = #tpu.core_type<tc>, window_params = [{transform_indices = @transform_0, window_bounds = array<i64: 240, 16>}, {pipeline_mode = #tpu.pipeline_mode<synchronous>, transform_indices = @transform_1, window_bounds = array<i64: 1, 16>}, {pipeline_mode = #tpu.pipeline_mode<synchronous>, transform_indices = @transform_2, window_bounds = array<i64: 1, 16>}, {transform_indices = @transform_3, window_bounds = array<i64: 240, 16>}]} {
    %c0 = arith.constant 0 : index
    %c0_0 = arith.constant 0 : index
    %0 = vector.load %arg1[%c0, %c0_0] : memref<240x16xf32, #tpu.memory_space<vmem>>, vector<240x16xf32>
    %c0_1 = arith.constant 0 : index
    %c0_2 = arith.constant 0 : index
    %1 = vector.load %arg2[%c0_1, %c0_2] : memref<1x16xf32, #tpu.memory_space<vmem>>, vector<1x16xf32>
    %2 = vector.broadcast %1 : vector<1x16xf32> to vector<240x16xf32>
    %3 = arith.mulf %0, %2 : vector<240x16xf32>
    %c0_3 = arith.constant 0 : index
    %c0_4 = arith.constant 0 : index
    %4 = vector.load %arg3[%c0_3, %c0_4] : memref<1x16xf32, #tpu.memory_space<vmem>>, vector<1x16xf32>
    %5 = vector.broadcast %4 : vector<1x16xf32> to vector<240x16xf32>
    %6 = arith.addf %3, %5 : vector<240x16xf32>
    %cst = arith.constant 0.000000e+00 : f32
    %7 = vector.broadcast %cst : f32 to vector<240x16xf32>
    %8 = arith.cmpf oge, %6, %7 : vector<240x16xf32>
    %cst_5 = arith.constant 2.000000e-01 : f32
    %9 = vector.broadcast %cst_5 : f32 to vector<240x16xf32>
    %10 = arith.mulf %9, %6 : vector<240x16xf32>
    %11 = arith.select %8, %6, %10 : vector<240x16xi1>, vector<240x16xf32>
    %12 = arith.truncf %11 : vector<240x16xf32> to vector<240x16xbf16>
    %c0_6 = arith.constant 0 : index
    %c0_7 = arith.constant 0 : index
    %13 = vector.load %arg4[%c0_6, %c0_7] : memref<240x16xbf16, #tpu.memory_space<vmem>>, vector<240x16xbf16>
    tpu.vector_store %arg4[%c0_6, %c0_7], %12 {strides = array<i32>} : memref<240x16xbf16, #tpu.memory_space<vmem>>, vector<240x16xbf16>,
    return
  }
  func.func @transform_0(%arg0: i32) -> (i32, i32) {
    %c0_i32 = arith.constant 0 : i32
    %c0_i32_0 = arith.constant 0 : i32
    return %arg0, %c0_i32 : i32, i32
  }
  func.func @transform_1(%arg0: i32) -> (i32, i32) {
    %c0_i32 = arith.constant 0 : i32
    %c0_i32_0 = arith.constant 0 : i32
    %c0_i32_1 = arith.constant 0 : i32
    return %c0_i32, %c0_i32_0 : i32, i32
  }
  func.func @transform_2(%arg0: i32) -> (i32, i32) {
    %c0_i32 = arith.constant 0 : i32
    %c0_i32_0 = arith.constant 0 : i32
    %c0_i32_1 = arith.constant 0 : i32
    return %c0_i32, %c0_i32_0 : i32, i32
  }
  func.func @transform_3(%arg0: i32) -> (i32, i32) {
    %c0_i32 = arith.constant 0 : i32
    %c0_i32_0 = arith.constant 0 : i32
    return %arg0, %c0_i32 : i32, i32
  }
}

module attributes {stable_mosaic.version = 11 : i64} {
  func.func @_mm_bias_tanh_kernel(%arg0: i32, %arg1: i32, %arg2: memref<256x256xbf16, #tpu.memory_space<vmem>>, %arg3: memref<256x128xbf16, #tpu.memory_space<vmem>>, %arg4: memref<1x128xf32, #tpu.memory_space<vmem>>, %arg5: memref<256x128xf32, #tpu.memory_space<vmem>>) attributes {dimension_semantics = [#tpu.dimension_semantics<parallel>, #tpu.dimension_semantics<arbitrary>], iteration_bounds = array<i64: 8, 1>, scalar_prefetch = 0 : i64, scratch_operands = 0 : i64, tpu.core_type = #tpu.core_type<tc>, window_params = [{transform_indices = @transform_0, window_bounds = array<i64: 256, 256>}, {transform_indices = @transform_1, window_bounds = array<i64: 256, 128>}, {pipeline_mode = #tpu.pipeline_mode<synchronous>, transform_indices = @transform_2, window_bounds = array<i64: 1, 128>}, {transform_indices = @transform_3, window_bounds = array<i64: 256, 128>}]} {
    %c0_i32 = arith.constant 0 : i32
    %0 = arith.cmpi eq, %arg1, %c0_i32 : i32
    %1 = arith.extui %0 : i1 to i32
    %c0_i32_0 = arith.constant 0 : i32
    %2 = arith.cmpi ne, %1, %c0_i32_0 : i32
    scf.if %2 {
      %cst_10 = arith.constant 0.000000e+00 : f32
      %12 = vector.broadcast %cst_10 : f32 to vector<256x128xf32>
      %c0_11 = arith.constant 0 : index
      %c0_12 = arith.constant 0 : index
      %13 = vector.load %arg5[%c0_11, %c0_12] : memref<256x128xf32, #tpu.memory_space<vmem>>, vector<256x128xf32>
      tpu.vector_store %arg5[%c0_11, %c0_12], %12 {strides = array<i32>} : memref<256x128xf32, #tpu.memory_space<vmem>>, vector<256x128xf32>,
    } else {
    }
    %c0 = arith.constant 0 : index
    %c0_1 = arith.constant 0 : index
    %3 = vector.load %arg5[%c0, %c0_1] : memref<256x128xf32, #tpu.memory_space<vmem>>, vector<256x128xf32>
    %c0_2 = arith.constant 0 : index
    %c0_3 = arith.constant 0 : index
    %4 = vector.load %arg2[%c0_2, %c0_3] : memref<256x256xbf16, #tpu.memory_space<vmem>>, vector<256x256xbf16>
    %c0_4 = arith.constant 0 : index
    %c0_5 = arith.constant 0 : index
    %5 = vector.load %arg3[%c0_4, %c0_5] : memref<256x128xbf16, #tpu.memory_space<vmem>>, vector<256x128xbf16>
    %cst = arith.constant dense<0.000000e+00> : vector<256x128xf32>
    %6 = tpu.matmul %4, %5, %cst {dimension_numbers = #tpu.dot_dimension_numbers<[1], [0], [0], [1], [0, 0, 1, 1], [], []>} : vector<256x256xbf16>, vector<256x128xbf16>, vector<256x128xf32> -> vector<256x128xf32>
    %7 = arith.addf %3, %6 : vector<256x128xf32>
    %c0_6 = arith.constant 0 : index
    %c0_7 = arith.constant 0 : index
    %8 = vector.load %arg5[%c0_6, %c0_7] : memref<256x128xf32, #tpu.memory_space<vmem>>, vector<256x128xf32>
    tpu.vector_store %arg5[%c0_6, %c0_7], %7 {strides = array<i32>} : memref<256x128xf32, #tpu.memory_space<vmem>>, vector<256x128xf32>,
    %c0_i32_8 = arith.constant 0 : i32
    %9 = arith.cmpi eq, %arg1, %c0_i32_8 : i32
    %10 = arith.extui %9 : i1 to i32
    %c0_i32_9 = arith.constant 0 : i32
    %11 = arith.cmpi ne, %10, %c0_i32_9 : i32
    scf.if %11 {
      %c0_10 = arith.constant 0 : index
      %c0_11 = arith.constant 0 : index
      %12 = vector.load %arg5[%c0_10, %c0_11] : memref<256x128xf32, #tpu.memory_space<vmem>>, vector<256x128xf32>
      %c0_12 = arith.constant 0 : index
      %c0_13 = arith.constant 0 : index
      %13 = vector.load %arg4[%c0_12, %c0_13] : memref<1x128xf32, #tpu.memory_space<vmem>>, vector<1x128xf32>
      %14 = vector.broadcast %13 : vector<1x128xf32> to vector<256x128xf32>
      %15 = arith.addf %12, %14 : vector<256x128xf32>
      %16 = math.tanh %15 : vector<256x128xf32>
      %c0_14 = arith.constant 0 : index
      %c0_15 = arith.constant 0 : index
      %17 = vector.load %arg5[%c0_14, %c0_15] : memref<256x128xf32, #tpu.memory_space<vmem>>, vector<256x128xf32>
      tpu.vector_store %arg5[%c0_14, %c0_15], %16 {strides = array<i32>} : memref<256x128xf32, #tpu.memory_space<vmem>>, vector<256x128xf32>,
    } else {
    }
    return
  }
  func.func @transform_0(%arg0: i32, %arg1: i32) -> (i32, i32) {
    %c0_i32 = arith.constant 0 : i32
    return %arg0, %arg1 : i32, i32
  }
  func.func @transform_1(%arg0: i32, %arg1: i32) -> (i32, i32) {
    %c0_i32 = arith.constant 0 : i32
    %c0_i32_0 = arith.constant 0 : i32
    return %arg1, %c0_i32 : i32, i32
  }
  func.func @transform_2(%arg0: i32, %arg1: i32) -> (i32, i32) {
    %c0_i32 = arith.constant 0 : i32
    %c0_i32_0 = arith.constant 0 : i32
    %c0_i32_1 = arith.constant 0 : i32
    return %c0_i32, %c0_i32_0 : i32, i32
  }
  func.func @transform_3(%arg0: i32, %arg1: i32) -> (i32, i32) {
    %c0_i32 = arith.constant 0 : i32
    %c0_i32_0 = arith.constant 0 : i32
    return %arg0, %c0_i32 : i32, i32
  }
}

</mosaic_0001>

<llo_original>
// kernel: squeeze.9
$region0: #{squeeze.9}
  %s0 = inlined_call_operand.vmem [shape: f32[1,2,1152], index: 0, kind: input, shape index: {}]
  %s1 = inlined_call_operand.vmem [shape: f32[18,128], index: 1, kind: output, shape index: {}]
  $region1: #{squeeze.9} parent=0
    #allocation0 [shape = 'u8[36864]{0}', space=vmem, size = 0x9000, scoped, tag = 'scoped mem for input reshape']
    %s3 = ssub.s32 4, 1
    %s4 = scalar_lea.vmem %s0, 16
    %v5 = vld [vmem:[%s4] sm:%s3]
    %s6 = scalar_lea.vmem [#allocation0], 64
    %7 = vst [vmem:[%s6] sm:%s3] %v5
    %s8 = scalar_lea.vmem %s0, 14
    %v9 = vld [vmem:[%s8] sm:%s3]
    %s10 = scalar_lea.vmem [#allocation0], 56
    %11 = vst [vmem:[%s10] sm:%s3] %v9
    %s12 = scalar_lea.vmem %s0, 12
    %v13 = vld [vmem:[%s12] sm:%s3]
    %s14 = scalar_lea.vmem [#allocation0], 48
    %15 = vst [vmem:[%s14] sm:%s3] %v13
    %s16 = scalar_lea.vmem %s0, 10
    %v17 = vld [vmem:[%s16] sm:%s3]
    %s18 = scalar_lea.vmem [#allocation0], 40
    %19 = vst [vmem:[%s18] sm:%s3] %v17
    %s20 = scalar_lea.vmem %s0, 8
    %v21 = vld [vmem:[%s20] sm:%s3]
    %s22 = scalar_lea.vmem [#allocation0], 32
    %23 = vst [vmem:[%s22] sm:%s3] %v21
    %s24 = scalar_lea.vmem %s0, 6
    %v25 = vld [vmem:[%s24] sm:%s3]
    %s26 = scalar_lea.vmem [#allocation0], 24
    %27 = vst [vmem:[%s26] sm:%s3] %v25
    %s28 = scalar_lea.vmem %s0, 4
    %v29 = vld [vmem:[%s28] sm:%s3]
    %s30 = scalar_lea.vmem [#allocation0], 16
    %31 = vst [vmem:[%s30] sm:%s3] %v29
    %s32 = scalar_lea.vmem %s0, 2
    %v33 = vld [vmem:[%s32] sm:%s3]
    %s34 = scalar_lea.vmem [#allocation0], 8
    %35 = vst [vmem:[%s34] sm:%s3] %v33
    %v36 = vld [vmem:[%s0] sm:%s3]
    %37 = vst [vmem:[#allocation0] sm:%s3] %v36
    %v38 = vld [vmem:[#allocation0] sm:$0x3]
    %39 = vst [vmem:[%s1] ss:$9 sm:$0x3] %v38
    %s40 = scalar_lea.vmem [#allocation0], 8
    %v41 = vld [vmem:[%s40] sm:$0x3]
    %s42 = scalar_lea.vmem %s1, 1
    %43 = vst [vmem:[%s42] ss:$9 sm:$0x3] %v41
    %s44 = scalar_lea.vmem [#allocation0], 16
    %v45 = vld [vmem:[%s44] sm:$0x3]
    %s46 = scalar_lea.vmem %s1, 2
    %47 = vst [vmem:[%s46] ss:$9 sm:$0x3] %v45
    %s48 = scalar_lea.vmem [#allocation0], 24
    %v49 = vld [vmem:[%s48] sm:$0x3]
    %s50 = scalar_lea.vmem %s1, 3
    %51 = vst [vmem:[%s50] ss:$9 sm:$0x3] %v49
    %s52 = scalar_lea.vmem [#allocation0], 32
    %v53 = vld [vmem:[%s52] sm:$0x3]
    %s54 = scalar_lea.vmem %s1, 4
    %55 = vst [vmem:[%s54] ss:$9 sm:$0x3] %v53
    %s56 = scalar_lea.vmem [#allocation0], 40
    %v57 = vld [vmem:[%s56] sm:$0x3]
    %s58 = scalar_lea.vmem %s1, 5
    %59 = vst [vmem:[%s58] ss:$9 sm:$0x3] %v57
    %s60 = scalar_lea.vmem [#allocation0], 48
    %v61 = vld [vmem:[%s60] sm:$0x3]
    %s62 = scalar_lea.vmem %s1, 6
    %63 = vst [vmem:[%s62] ss:$9 sm:$0x3] %v61
    %s64 = scalar_lea.vmem [#allocation0], 56
    %v65 = vld [vmem:[%s64] sm:$0x3]
    %s66 = scalar_lea.vmem %s1, 7
    %67 = vst [vmem:[%s66] ss:$9 sm:$0x3] %v65
    %s68 = scalar_lea.vmem [#allocation0], 64
    %v69 = vld [vmem:[%s68] sm:$0x3]
    %s70 = scalar_lea.vmem %s1, 8
    %71 = vst [vmem:[%s70] ss:$9 sm:$0x3] %v69

// kernel: _generator_forward.10
$region0: #{_generator_forward.10}
  #allocation0 [shape = 'u32[]', space=smem, size = 0x4, offset = 0x4, fixed_abs, tag = 'smem constant byte address 0x4 - core index']
  #allocation1 [shape = 'u32[72,128]{1,0:T(1,128)}', space=vmem, size = 0x9000, scoped, tag = 'internal scratch']
  %s0 = inlined_call_operand.vmem [shape: f32[32,128], index: 0, kind: input, shape index: {}]
  %s1 = inlined_call_operand.vmem [shape: f32[1,128], index: 1, kind: input, shape index: {}]
  %s2 = inlined_call_operand.vmem [shape: f32[1,128], index: 2, kind: input, shape index: {}]
  %s3 = inlined_call_operand.vmem [shape: bf16[32,128], index: 3, kind: output, shape index: {}]
  %s4 = sld [smem:[#allocation0]]
  $region22: #{_generator_forward.10} parent=0
    _
  %s6 = ssub.s32 1, %s4
  %s7 = scalar_select 0, %s6, %s4
  // Predicated region
  $region2: #{_generator_forward.10} parent=0 // pred_check
    _
  $region3: #{_generator_forward.10} parent=0 // pred_check_branch
    %9 = sbr.rel (0) target = $region5
  $region4: #{_generator_forward.10} parent=0 // pred_region
    _
  $region5: #{_generator_forward.10} parent=0 // pred_fallthru
    _
  // Predicated region
  $region6: #{_generator_forward.10} parent=0 // pred_check
    _
  $region7: #{_generator_forward.10} parent=0 // pred_check_branch
    %11 = sbr.rel (0) target = $region9
  $region8: #{_generator_forward.10} parent=0 // pred_region
    _
  $region9: #{_generator_forward.10} parent=0 // pred_fallthru
    _
  // Predicated region
  $region10: #{_generator_forward.10} parent=0 // pred_check
    _
  $region11: #{_generator_forward.10} parent=0 // pred_check_branch
    %13 = sbr.rel (0) target = $region13
  $region12: #{_generator_forward.10} parent=0 // pred_region
    _
  $region13: #{_generator_forward.10} parent=0 // pred_fallthru
    _
  %v14 = vld [vmem:[%s0] sm:$0xff]
  %v15 = vld [vmem:[%s0 + $0x8] sm:$0xff]
  %v16 = vld [vmem:[%s0 + $0x10] sm:$0xff]
  %v17 = vld [vmem:[%s0 + $0x18] sm:$0xff]
  %v18 = vld [vmem:[%s1] sm:$0x1]
  %v20 = vperm.slane %v18, 0
  %v22 = vmul.f32 %v14, %v20
  %v23 = vmul.f32 %v15, %v20
  %v24 = vmul.f32 %v16, %v20
  %v25 = vmul.f32 %v17, %v20
  %v26 = vld [vmem:[%s2] sm:$0x1]
  %v28 = vperm.slane %v26, 0
  %v30 = vadd.f32 %v22, %v28
  %v31 = vadd.f32 %v23, %v28
  %v32 = vadd.f32 %v24, %v28
  %v33 = vadd.f32 %v25, %v28
  %vm34 = vcmp.ge.f32.partialorder %v30, 0.0
  %vm35 = vcmp.ge.f32.partialorder %v31, 0.0
  %vm36 = vcmp.ge.f32.partialorder %v32, 0.0
  %vm37 = vcmp.ge.f32.partialorder %v33, 0.0
  %v38 = vmul.f32 %v30, 0.2
  %v39 = vmul.f32 %v31, 0.2
  %v40 = vmul.f32 %v32, 0.2
  %v41 = vmul.f32 %v33, 0.2
  %v42 = vsel %vm34, %v30, %v38
  %v43 = vsel %vm35, %v31, %v39
  %v44 = vsel %vm36, %v32, %v40
  %v45 = vsel %vm37, %v33, %v41
  %v46 = vpack.c.bf16 %v42, %v42
  %v47 = vpack.c.bf16 %v43, %v43
  %v48 = vpack.c.bf16 %v44, %v44
  %v49 = vpack.c.bf16 %v45, %v45
  %50 = vst [vmem:[%s3] sm:$0xf] %v46
  %51 = vst [vmem:[%s3 + $0x4] sm:$0xf] %v47
  %52 = vst [vmem:[%s3 + $0x8] sm:$0xf] %v48
  %53 = vst [vmem:[%s3 + $0xc] sm:$0xf] %v49
  // Predicated region
  $region14: #{_generator_forward.10} parent=0 // pred_check
    _
  $region15: #{_generator_forward.10} parent=0 // pred_check_branch
    %55 = sbr.rel (0) target = $region17
  $region16: #{_generator_forward.10} parent=0 // pred_region
    _
  $region17: #{_generator_forward.10} parent=0 // pred_fallthru
    _
  // Predicated region
  $region18: #{_generator_forward.10} parent=0 // pred_check
    _
  $region19: #{_generator_forward.10} parent=0 // pred_check_branch
    %57 = sbr.rel (0) target = $region21
  $region20: #{_generator_forward.10} parent=0 // pred_region
    _
  $region21: #{_generator_forward.10} parent=0 // pred_fallthru
    _

// kernel: _generator_forward.9
$region0: #{_generator_forward.9}
  #allocation0 [shape = 'u32[]', space=smem, size = 0x4, offset = 0x4, fixed_abs, tag = 'smem constant byte address 0x4 - core index']
  #allocation1 [shape = 'u32[72,128]{1,0:T(1,128)}', space=vmem, size = 0x9000, scoped, tag = 'internal scratch']
  %s0 = inlined_call_operand.vmem [shape: bf16[1,16,128], index: 0, kind: input, shape index: {}]
  %s1 = inlined_call_operand.vmem [shape: bf16[1,128,1152], index: 1, kind: input, shape index: {}]
  %s2 = inlined_call_operand.vmem [shape: f32[1,16,1152], index: 2, kind: output, shape index: {0}]
  %s3 = inlined_call_operand.vmem [shape: f32[1,1,2,1152], index: 3, kind: output, shape index: {1}]
  %4 = xla_tuple %s2, %s3
  %s5 = sld [smem:[#allocation0]]
  $region34: #{_generator_forward.9} parent=0
    _
  %s7 = ssub.s32 1, %s5
  %s8 = scalar_select 0, %s7, %s5
  // Predicated region
  $region2: #{_generator_forward.9} parent=0 // pred_check
    _
  $region3: #{_generator_forward.9} parent=0 // pred_check_branch
    %10 = sbr.rel (0) target = $region5
  $region4: #{_generator_forward.9} parent=0 // pred_region
    _
  $region5: #{_generator_forward.9} parent=0 // pred_fallthru
    _
  // Predicated region
  $region6: #{_generator_forward.9} parent=0 // pred_check
    _
  $region7: #{_generator_forward.9} parent=0 // pred_check_branch
    %12 = sbr.rel (0) target = $region9
  $region8: #{_generator_forward.9} parent=0 // pred_region
    _
  $region9: #{_generator_forward.9} parent=0 // pred_fallthru
    _
  %p13 = scmp.eq.s32.totalorder 0, 0
  // Predicated region
  $region10: #{_generator_forward.9} parent=0 // pred_check
    %p14 = pneg %p13
  $region11: #{_generator_forward.9} parent=0 // pred_check_branch
    %16 = sbr.rel (%p14) target = $region13
  $region12: #{_generator_forward.9} parent=0 // pred_region
    %17 = vst [vmem:[%s2] sm:$0xff] 0.0
    %18 = vst [vmem:[%s2 + $0x8] sm:$0xff] 0.0
    %19 = vst [vmem:[%s2 + $0x10] sm:$0xff] 0.0
    %20 = vst [vmem:[%s2 + $0x18] sm:$0xff] 0.0
    %21 = vst [vmem:[%s2 + $0x20] sm:$0xff] 0.0
    %22 = vst [vmem:[%s2 + $0x28] sm:$0xff] 0.0
    %23 = vst [vmem:[%s2 + $0x30] sm:$0xff] 0.0
    %24 = vst [vmem:[%s2 + $0x38] sm:$0xff] 0.0
    %25 = vst [vmem:[%s2 + $0x40] sm:$0xff] 0.0
    %26 = vst [vmem:[%s2 + $0x48] sm:$0xff] 0.0
    %27 = vst [vmem:[%s2 + $0x50] sm:$0xff] 0.0
    %28 = vst [vmem:[%s2 + $0x58] sm:$0xff] 0.0
    %29 = vst [vmem:[%s2 + $0x60] sm:$0xff] 0.0
    %30 = vst [vmem:[%s2 + $0x68] sm:$0xff] 0.0
    %31 = vst [vmem:[%s2 + $0x70] sm:$0xff] 0.0
    %32 = vst [vmem:[%s2 + $0x78] sm:$0xff] 0.0
    %33 = vst [vmem:[%s2 + $0x80] sm:$0xff] 0.0
    %34 = vst [vmem:[%s2 + $0x88] sm:$0xff] 0.0
  $region13: #{_generator_forward.9} parent=0 // pred_fallthru
    _
  %v35 = vld [vmem:[%s2] sm:$0xff]
  %v36 = vld [vmem:[%s2 + $0x8] sm:$0xff]
  %v37 = vld [vmem:[%s2 + $0x10] sm:$0xff]
  %v38 = vld [vmem:[%s2 + $0x18] sm:$0xff]
  %v39 = vld [vmem:[%s2 + $0x20] sm:$0xff]
  %v40 = vld [vmem:[%s2 + $0x28] sm:$0xff]
  %v41 = vld [vmem:[%s2 + $0x30] sm:$0xff]
  %v42 = vld [vmem:[%s2 + $0x38] sm:$0xff]
  %v43 = vld [vmem:[%s2 + $0x40] sm:$0xff]
  %v44 = vld [vmem:[%s2 + $0x48] sm:$0xff]
  %v45 = vld [vmem:[%s2 + $0x50] sm:$0xff]
  %v46 = vld [vmem:[%s2 + $0x58] sm:$0xff]
  %v47 = vld [vmem:[%s2 + $0x60] sm:$0xff]
  %v48 = vld [vmem:[%s2 + $0x68] sm:$0xff]
  %v49 = vld [vmem:[%s2 + $0x70] sm:$0xff]
  %v50 = vld [vmem:[%s2 + $0x78] sm:$0xff]
  %v51 = vld [vmem:[%s2 + $0x80] sm:$0xff]
  %v52 = vld [vmem:[%s2 + $0x88] sm:$0xff]
  %v53 = vld [vmem:[%s0] sm:$0xf]
  %v54 = vld [vmem:[%s0 + $0x4] sm:$0xf]
  %v55 = vld [vmem:[%s1] sm:$0xff]
  %v56 = vld [vmem:[%s1 + $0x8] sm:$0xff]
  %v57 = vld [vmem:[%s1 + $0x10] sm:$0xff]
  %v58 = vld [vmem:[%s1 + $0x18] sm:$0xff]
  %v59 = vld [vmem:[%s1 + $0x20] sm:$0xf]
  %v60 = vld [vmem:[%s1 + $0x24] sm:$0xff]
  %v61 = vld [vmem:[%s1 + $0x2c] sm:$0xff]
  %v62 = vld [vmem:[%s1 + $0x34] sm:$0xff]
  %v63 = vld [vmem:[%s1 + $0x3c] sm:$0xff]
  %v64 = vld [vmem:[%s1 + $0x44] sm:$0xf]
  %v65 = vld [vmem:[%s1 + $0x48] sm:$0xff]
  %v66 = vld [vmem:[%s1 + $0x50] sm:$0xff]
  %v67 = vld [vmem:[%s1 + $0x58] sm:$0xff]
  %v68 = vld [vmem:[%s1 + $0x60] sm:$0xff]
  %v69 = vld [vmem:[%s1 + $0x68] sm:$0xf]
  %v70 = vld [vmem:[%s1 + $0x6c] sm:$0xff]
  %v71 = vld [vmem:[%s1 + $0x74] sm:$0xff]
  %v72 = vld [vmem:[%s1 + $0x7c] sm:$0xff]
  %v73 = vld [vmem:[%s1 + $0x84] sm:$0xff]
  %v74 = vld [vmem:[%s1 + $0x8c] sm:$0xf]
  %v75 = vld [vmem:[%s1 + $0x90] sm:$0xff]
  %v76 = vld [vmem:[%s1 + $0x98] sm:$0xff]
  %v77 = vld [vmem:[%s1 + $0xa0] sm:$0xff]
  %v78 = vld [vmem:[%s1 + $0xa8] sm:$0xff]
  %v79 = vld [vmem:[%s1 + $0xb0] sm:$0xf]
  %v80 = vld [vmem:[%s1 + $0xb4] sm:$0xff]
  %v81 = vld [vmem:[%s1 + $0xbc] sm:$0xff]
  %v82 = vld [vmem:[%s1 + $0xc4] sm:$0xff]
  %v83 = vld [vmem:[%s1 + $0xcc] sm:$0xff]
  %v84 = vld [vmem:[%s1 + $0xd4] sm:$0xf]
  %v85 = vld [vmem:[%s1 + $0xd8] sm:$0xff]
  %v86 = vld [vmem:[%s1 + $0xe0] sm:$0xff]
  %v87 = vld [vmem:[%s1 + $0xe8] sm:$0xff]
  %v88 = vld [vmem:[%s1 + $0xf0] sm:$0xff]
  %v89 = vld [vmem:[%s1 + $0xf8] sm:$0xf]
  %v90 = vld [vmem:[%s1 + $0xfc] sm:$0xff]
  %v91 = vld [vmem:[%s1 + $0x104] sm:$0xff]
  %v92 = vld [vmem:[%s1 + $0x10c] sm:$0xff]
  %v93 = vld [vmem:[%s1 + $0x114] sm:$0xff]
  %v94 = vld [vmem:[%s1 + $0x11c] sm:$0xf]
  %v95 = vld [vmem:[%s1 + $0x120] sm:$0xff]
  %v96 = vld [vmem:[%s1 + $0x128] sm:$0xff]
  %v97 = vld [vmem:[%s1 + $0x130] sm:$0xff]
  %v98 = vld [vmem:[%s1 + $0x138] sm:$0xff]
  %v99 = vld [vmem:[%s1 + $0x140] sm:$0xf]
  %v100 = vld [vmem:[%s1 + $0x144] sm:$0xff]
  %v101 = vld [vmem:[%s1 + $0x14c] sm:$0xff]
  %v102 = vld [vmem:[%s1 + $0x154] sm:$0xff]
  %v103 = vld [vmem:[%s1 + $0x15c] sm:$0xff]
  %v104 = vld [vmem:[%s1 + $0x164] sm:$0xf]
  %v105 = vld [vmem:[%s1 + $0x168] sm:$0xff]
  %v106 = vld [vmem:[%s1 + $0x170] sm:$0xff]
  %v107 = vld [vmem:[%s1 + $0x178] sm:$0xff]
  %v108 = vld [vmem:[%s1 + $0x180] sm:$0xff]
  %v109 = vld [vmem:[%s1 + $0x188] sm:$0xf]
  %v110 = vld [vmem:[%s1 + $0x18c] sm:$0xff]
  %v111 = vld [vmem:[%s1 + $0x194] sm:$0xff]
  %v112 = vld [vmem:[%s1 + $0x19c] sm:$0xff]
  %v113 = vld [vmem:[%s1 + $0x1a4] sm:$0xff]
  %v114 = vld [vmem:[%s1 + $0x1ac] sm:$0xf]
  %v115 = vld [vmem:[%s1 + $0x1b0] sm:$0xff]
  %v116 = vld [vmem:[%s1 + $0x1b8] sm:$0xff]
  %v117 = vld [vmem:[%s1 + $0x1c0] sm:$0xff]
  %v118 = vld [vmem:[%s1 + $0x1c8] sm:$0xff]
  %v119 = vld [vmem:[%s1 + $0x1d0] sm:$0xf]
  %v120 = vld [vmem:[%s1 + $0x1d4] sm:$0xff]
  %v121 = vld [vmem:[%s1 + $0x1dc] sm:$0xff]
  %v122 = vld [vmem:[%s1 + $0x1e4] sm:$0xff]
  %v123 = vld [vmem:[%s1 + $0x1ec] sm:$0xff]
  %v124 = vld [vmem:[%s1 + $0x1f4] sm:$0xf]
  %v125 = vld [vmem:[%s1 + $0x1f8] sm:$0xff]
  %v126 = vld [vmem:[%s1 + $0x200] sm:$0xff]
  %v127 = vld [vmem:[%s1 + $0x208] sm:$0xff]
  %v128 = vld [vmem:[%s1 + $0x210] sm:$0xff]
  %v129 = vld [vmem:[%s1 + $0x218] sm:$0xf]
  %v130 = vld [vmem:[%s1 + $0x21c] sm:$0xff]
  %v131 = vld [vmem:[%s1 + $0x224] sm:$0xff]
  %v132 = vld [vmem:[%s1 + $0x22c] sm:$0xff]
  %v133 = vld [vmem:[%s1 + $0x234] sm:$0xff]
  %v134 = vld [vmem:[%s1 + $0x23c] sm:$0xf]
  %v137 = vunpack.c.l.b16 %v53
  %v138 = vunpack.c.l.b16 %v54
  %v139 = vpack.c.b16 %v138, %v137
  %v221 = vunpack.c.l.b16 %v55
  %v222 = vunpack.c.h.b16 %v55
  %v223 = vunpack.c.l.b16 %v56
  %v224 = vunpack.c.h.b16 %v56
  %v225 = vunpack.c.l.b16 %v57
  %v226 = vunpack.c.h.b16 %v57
  %v227 = vunpack.c.l.b16 %v58
  %v228 = vunpack.c.h.b16 %v58
  %v229 = vunpack.c.l.b16 %v59
  %v230 = vunpack.c.l.b16 %v60
  %v231 = vunpack.c.h.b16 %v60
  %v232 = vunpack.c.l.b16 %v61
  %v233 = vunpack.c.h.b16 %v61
  %v234 = vunpack.c.l.b16 %v62
  %v235 = vunpack.c.h.b16 %v62
  %v236 = vunpack.c.l.b16 %v63
  %v237 = vunpack.c.h.b16 %v63
  %v238 = vunpack.c.l.b16 %v64
  %v239 = vunpack.c.l.b16 %v65
  %v240 = vunpack.c.h.b16 %v65
  %v241 = vunpack.c.l.b16 %v66
  %v242 = vunpack.c.h.b16 %v66
  %v243 = vunpack.c.l.b16 %v67
  %v244 = vunpack.c.h.b16 %v67
  %v245 = vunpack.c.l.b16 %v68
  %v246 = vunpack.c.h.b16 %v68
  %v247 = vunpack.c.l.b16 %v69
  %v248 = vunpack.c.l.b16 %v70
  %v249 = vunpack.c.h.b16 %v70
  %v250 = vunpack.c.l.b16 %v71
  %v251 = vunpack.c.h.b16 %v71
  %v252 = vunpack.c.l.b16 %v72
  %v253 = vunpack.c.h.b16 %v72
  %v254 = vunpack.c.l.b16 %v73
  %v255 = vunpack.c.h.b16 %v73
  %v256 = vunpack.c.l.b16 %v74
  %v257 = vunpack.c.l.b16 %v75
  %v258 = vunpack.c.h.b16 %v75
  %v259 = vunpack.c.l.b16 %v76
  %v260 = vunpack.c.h.b16 %v76
  %v261 = vunpack.c.l.b16 %v77
  %v262 = vunpack.c.h.b16 %v77
  %v263 = vunpack.c.l.b16 %v78
  %v264 = vunpack.c.h.b16 %v78
  %v265 = vunpack.c.l.b16 %v79
  %v266 = vunpack.c.l.b16 %v80
  %v267 = vunpack.c.h.b16 %v80
  %v268 = vunpack.c.l.b16 %v81
  %v269 = vunpack.c.h.b16 %v81
  %v270 = vunpack.c.l.b16 %v82
  %v271 = vunpack.c.h.b16 %v82
  %v272 = vunpack.c.l.b16 %v83
  %v273 = vunpack.c.h.b16 %v83
  %v274 = vunpack.c.l.b16 %v84
  %v275 = vunpack.c.l.b16 %v85
  %v276 = vunpack.c.h.b16 %v85
  %v277 = vunpack.c.l.b16 %v86
  %v278 = vunpack.c.h.b16 %v86
  %v279 = vunpack.c.l.b16 %v87
  %v280 = vunpack.c.h.b16 %v87
  %v281 = vunpack.c.l.b16 %v88
  %v282 = vunpack.c.h.b16 %v88
  %v283 = vunpack.c.l.b16 %v89
  %v284 = vunpack.c.l.b16 %v90
  %v285 = vunpack.c.h.b16 %v90
  %v286 = vunpack.c.l.b16 %v91
  %v287 = vunpack.c.h.b16 %v91
  %v288 = vunpack.c.l.b16 %v92
  %v289 = vunpack.c.h.b16 %v92
  %v290 = vunpack.c.l.b16 %v93
  %v291 = vunpack.c.h.b16 %v93
  %v292 = vunpack.c.l.b16 %v94
  %v293 = vunpack.c.l.b16 %v95
  %v294 = vunpack.c.h.b16 %v95
  %v295 = vunpack.c.l.b16 %v96
  %v296 = vunpack.c.h.b16 %v96
  %v297 = vunpack.c.l.b16 %v97
  %v298 = vunpack.c.h.b16 %v97
  %v299 = vunpack.c.l.b16 %v98
  %v300 = vunpack.c.h.b16 %v98
  %v301 = vunpack.c.l.b16 %v99
  %v302 = vunpack.c.l.b16 %v100
  %v303 = vunpack.c.h.b16 %v100
  %v304 = vunpack.c.l.b16 %v101
  %v305 = vunpack.c.h.b16 %v101
  %v306 = vunpack.c.l.b16 %v102
  %v307 = vunpack.c.h.b16 %v102
  %v308 = vunpack.c.l.b16 %v103
  %v309 = vunpack.c.h.b16 %v103
  %v310 = vunpack.c.l.b16 %v104
  %v311 = vunpack.c.l.b16 %v105
  %v312 = vunpack.c.h.b16 %v105
  %v313 = vunpack.c.l.b16 %v106
  %v314 = vunpack.c.h.b16 %v106
  %v315 = vunpack.c.l.b16 %v107
  %v316 = vunpack.c.h.b16 %v107
  %v317 = vunpack.c.l.b16 %v108
  %v318 = vunpack.c.h.b16 %v108
  %v319 = vunpack.c.l.b16 %v109
  %v320 = vunpack.c.l.b16 %v110
  %v321 = vunpack.c.h.b16 %v110
  %v322 = vunpack.c.l.b16 %v111
  %v323 = vunpack.c.h.b16 %v111
  %v324 = vunpack.c.l.b16 %v112
  %v325 = vunpack.c.h.b16 %v112
  %v326 = vunpack.c.l.b16 %v113
  %v327 = vunpack.c.h.b16 %v113
  %v328 = vunpack.c.l.b16 %v114
  %v329 = vunpack.c.l.b16 %v115
  %v330 = vunpack.c.h.b16 %v115
  %v331 = vunpack.c.l.b16 %v116
  %v332 = vunpack.c.h.b16 %v116
  %v333 = vunpack.c.l.b16 %v117
  %v334 = vunpack.c.h.b16 %v117
  %v335 = vunpack.c.l.b16 %v118
  %v336 = vunpack.c.h.b16 %v118
  %v337 = vunpack.c.l.b16 %v119
  %v338 = vunpack.c.l.b16 %v120
  %v339 = vunpack.c.h.b16 %v120
  %v340 = vunpack.c.l.b16 %v121
  %v341 = vunpack.c.h.b16 %v121
  %v342 = vunpack.c.l.b16 %v122
  %v343 = vunpack.c.h.b16 %v122
  %v344 = vunpack.c.l.b16 %v123
  %v345 = vunpack.c.h.b16 %v123
  %v346 = vunpack.c.l.b16 %v124
  %v347 = vunpack.c.l.b16 %v125
  %v348 = vunpack.c.h.b16 %v125
  %v349 = vunpack.c.l.b16 %v126
  %v350 = vunpack.c.h.b16 %v126
  %v351 = vunpack.c.l.b16 %v127
  %v352 = vunpack.c.h.b16 %v127
  %v353 = vunpack.c.l.b16 %v128
  %v354 = vunpack.c.h.b16 %v128
  %v355 = vunpack.c.l.b16 %v129
  %v356 = vunpack.c.l.b16 %v130
  %v357 = vunpack.c.h.b16 %v130
  %v358 = vunpack.c.l.b16 %v131
  %v359 = vunpack.c.h.b16 %v131
  %v360 = vunpack.c.l.b16 %v132
  %v361 = vunpack.c.h.b16 %v132
  %v362 = vunpack.c.l.b16 %v133
  %v363 = vunpack.c.h.b16 %v133
  %v364 = vunpack.c.l.b16 %v134
  %v365 = vpack.c.b16 %v230, %v221
  %v366 = vpack.c.b16 %v231, %v222
  %v367 = vpack.c.b16 %v232, %v223
  %v368 = vpack.c.b16 %v233, %v224
  %v369 = vpack.c.b16 %v234, %v225
  %v370 = vpack.c.b16 %v235, %v226
  %v371 = vpack.c.b16 %v236, %v227
  %v372 = vpack.c.b16 %v237, %v228
  %v373 = vpack.c.b16 %v238, %v229
  %v374 = vpack.c.b16 %v248, %v239
  %v375 = vpack.c.b16 %v249, %v240
  %v376 = vpack.c.b16 %v250, %v241
  %v377 = vpack.c.b16 %v251, %v242
  %v378 = vpack.c.b16 %v252, %v243
  %v379 = vpack.c.b16 %v253, %v244
  %v380 = vpack.c.b16 %v254, %v245
  %v381 = vpack.c.b16 %v255, %v246
  %v382 = vpack.c.b16 %v256, %v247
  %v383 = vpack.c.b16 %v266, %v257
  %v384 = vpack.c.b16 %v267, %v258
  %v385 = vpack.c.b16 %v268, %v259
  %v386 = vpack.c.b16 %v269, %v260
  %v387 = vpack.c.b16 %v270, %v261
  %v388 = vpack.c.b16 %v271, %v262
  %v389 = vpack.c.b16 %v272, %v263
  %v390 = vpack.c.b16 %v273, %v264
  %v391 = vpack.c.b16 %v274, %v265
  %v392 = vpack.c.b16 %v284, %v275
  %v393 = vpack.c.b16 %v285, %v276
  %v394 = vpack.c.b16 %v286, %v277
  %v395 = vpack.c.b16 %v287, %v278
  %v396 = vpack.c.b16 %v288, %v279
  %v397 = vpack.c.b16 %v289, %v280
  %v398 = vpack.c.b16 %v290, %v281
  %v399 = vpack.c.b16 %v291, %v282
  %v400 = vpack.c.b16 %v292, %v283
  %v401 = vpack.c.b16 %v302, %v293
  %v402 = vpack.c.b16 %v303, %v294
  %v403 = vpack.c.b16 %v304, %v295
  %v404 = vpack.c.b16 %v305, %v296
  %v405 = vpack.c.b16 %v306, %v297
  %v406 = vpack.c.b16 %v307, %v298
  %v407 = vpack.c.b16 %v308, %v299
  %v408 = vpack.c.b16 %v309, %v300
  %v409 = vpack.c.b16 %v310, %v301
  %v410 = vpack.c.b16 %v320, %v311
  %v411 = vpack.c.b16 %v321, %v312
  %v412 = vpack.c.b16 %v322, %v313
  %v413 = vpack.c.b16 %v323, %v314
  %v414 = vpack.c.b16 %v324, %v315
  %v415 = vpack.c.b16 %v325, %v316
  %v416 = vpack.c.b16 %v326, %v317
  %v417 = vpack.c.b16 %v327, %v318
  %v418 = vpack.c.b16 %v328, %v319
  %v419 = vpack.c.b16 %v338, %v329
  %v420 = vpack.c.b16 %v339, %v330
  %v421 = vpack.c.b16 %v340, %v331
  %v422 = vpack.c.b16 %v341, %v332
  %v423 = vpack.c.b16 %v342, %v333
  %v424 = vpack.c.b16 %v343, %v334
  %v425 = vpack.c.b16 %v344, %v335
  %v426 = vpack.c.b16 %v345, %v336
  %v427 = vpack.c.b16 %v346, %v337
  %v428 = vpack.c.b16 %v356, %v347
  %v429 = vpack.c.b16 %v357, %v348
  %v430 = vpack.c.b16 %v358, %v349
  %v431 = vpack.c.b16 %v359, %v350
  %v432 = vpack.c.b16 %v360, %v351
  %v433 = vpack.c.b16 %v361, %v352
  %v434 = vpack.c.b16 %v362, %v353
  %v435 = vpack.c.b16 %v363, %v354
  %v436 = vpack.c.b16 %v364, %v355
  %509 = vmatpush.bf16.msra.mxu0 %v428
  %510 = vmatpush.bf16.msra.mxu0 %v419
  %511 = vmatpush.bf16.msra.mxu0 %v410
  %512 = vmatpush.bf16.msra.mxu0 %v401
  %513 = vmatpush.bf16.msra.mxu0 %v392
  %514 = vmatpush.bf16.msra.mxu0 %v383
  %515 = vmatpush.bf16.msra.mxu0 %v374
  %516 = vmatpush.bf16.msra.mxu0 %v365
  %517 = vmatmul.bf16.gmra.mxu0 %v139
  %v518 = vpop.f32.mrf.mxu0
  %v519 = vadd.f32 0.0, %v518
  %v520 = vpop.f32.mrf.mxu0
  %v521 = vadd.f32 0.0, %v520
  %522 = vdwg.mxu0
  %523 = vmatpush.bf16.msra.mxu0 %v429
  %524 = vmatpush.bf16.msra.mxu0 %v420
  %525 = vmatpush.bf16.msra.mxu0 %v411
  %526 = vmatpush.bf16.msra.mxu0 %v402
  %527 = vmatpush.bf16.msra.mxu0 %v393
  %528 = vmatpush.bf16.msra.mxu0 %v384
  %529 = vmatpush.bf16.msra.mxu0 %v375
  %530 = vmatpush.bf16.msra.mxu0 %v366
  %531 = vmatmul.bf16.gmra.mxu0 %v139
  %v532 = vpop.f32.mrf.mxu0
  %v533 = vadd.f32 0.0, %v532
  %v534 = vpop.f32.mrf.mxu0
  %v535 = vadd.f32 0.0, %v534
  %536 = vdwg.mxu0
  %537 = vmatpush.bf16.msra.mxu0 %v430
  %538 = vmatpush.bf16.msra.mxu0 %v421
  %539 = vmatpush.bf16.msra.mxu0 %v412
  %540 = vmatpush.bf16.msra.mxu0 %v403
  %541 = vmatpush.bf16.msra.mxu0 %v394
  %542 = vmatpush.bf16.msra.mxu0 %v385
  %543 = vmatpush.bf16.msra.mxu0 %v376
  %544 = vmatpush.bf16.msra.mxu0 %v367
  %545 = vmatmul.bf16.gmra.mxu0 %v139
  %v546 = vpop.f32.mrf.mxu0
  %v547 = vadd.f32 0.0, %v546
  %v548 = vpop.f32.mrf.mxu0
  %v549 = vadd.f32 0.0, %v548
  %550 = vdwg.mxu0
  %551 = vmatpush.bf16.msra.mxu0 %v431
  %552 = vmatpush.bf16.msra.mxu0 %v422
  %553 = vmatpush.bf16.msra.mxu0 %v413
  %554 = vmatpush.bf16.msra.mxu0 %v404
  %555 = vmatpush.bf16.msra.mxu0 %v395
  %556 = vmatpush.bf16.msra.mxu0 %v386
  %557 = vmatpush.bf16.msra.mxu0 %v377
  %558 = vmatpush.bf16.msra.mxu0 %v368
  %559 = vmatmul.bf16.gmra.mxu0 %v139
  %v560 = vpop.f32.mrf.mxu0
  %v561 = vadd.f32 0.0, %v560
  %v562 = vpop.f32.mrf.mxu0
  %v563 = vadd.f32 0.0, %v562
  %564 = vdwg.mxu0
  %565 = vmatpush.bf16.msra.mxu0 %v432
  %566 = vmatpush.bf16.msra.mxu0 %v423
  %567 = vmatpush.bf16.msra.mxu0 %v414
  %568 = vmatpush.bf16.msra.mxu0 %v405
  %569 = vmatpush.bf16.msra.mxu0 %v396
  %570 = vmatpush.bf16.msra.mxu0 %v387
  %571 = vmatpush.bf16.msra.mxu0 %v378
  %572 = vmatpush.bf16.msra.mxu0 %v369
  %573 = vmatmul.bf16.gmra.mxu0 %v139
  %v574 = vpop.f32.mrf.mxu0
  %v575 = vadd.f32 0.0, %v574
  %v576 = vpop.f32.mrf.mxu0
  %v577 = vadd.f32 0.0, %v576
  %578 = vdwg.mxu0
  %579 = vmatpush.bf16.msra.mxu0 %v433
  %580 = vmatpush.bf16.msra.mxu0 %v424
  %581 = vmatpush.bf16.msra.mxu0 %v415
  %582 = vmatpush.bf16.msra.mxu0 %v406
  %583 = vmatpush.bf16.msra.mxu0 %v397
  %584 = vmatpush.bf16.msra.mxu0 %v388
  %585 = vmatpush.bf16.msra.mxu0 %v379
  %586 = vmatpush.bf16.msra.mxu0 %v370
  %587 = vmatmul.bf16.gmra.mxu0 %v139
  %v588 = vpop.f32.mrf.mxu0
  %v589 = vadd.f32 0.0, %v588
  %v590 = vpop.f32.mrf.mxu0
  %v591 = vadd.f32 0.0, %v590
  %592 = vdwg.mxu0
  %593 = vmatpush.bf16.msra.mxu0 %v434
  %594 = vmatpush.bf16.msra.mxu0 %v425
  %595 = vmatpush.bf16.msra.mxu0 %v416
  %596 = vmatpush.bf16.msra.mxu0 %v407
  %597 = vmatpush.bf16.msra.mxu0 %v398
  %598 = vmatpush.bf16.msra.mxu0 %v389
  %599 = vmatpush.bf16.msra.mxu0 %v380
  %600 = vmatpush.bf16.msra.mxu0 %v371
  %601 = vmatmul.bf16.gmra.mxu0 %v139
  %v602 = vpop.f32.mrf.mxu0
  %v603 = vadd.f32 0.0, %v602
  %v604 = vpop.f32.mrf.mxu0
  %v605 = vadd.f32 0.0, %v604
  %606 = vdwg.mxu0
  %607 = vmatpush.bf16.msra.mxu0 %v435
  %608 = vmatpush.bf16.msra.mxu0 %v426
  %609 = vmatpush.bf16.msra.mxu0 %v417
  %610 = vmatpush.bf16.msra.mxu0 %v408
  %611 = vmatpush.bf16.msra.mxu0 %v399
  %612 = vmatpush.bf16.msra.mxu0 %v390
  %613 = vmatpush.bf16.msra.mxu0 %v381
  %614 = vmatpush.bf16.msra.mxu0 %v372
  %615 = vmatmul.bf16.gmra.mxu0 %v139
  %v616 = vpop.f32.mrf.mxu0
  %v617 = vadd.f32 0.0, %v616
  %v618 = vpop.f32.mrf.mxu0
  %v619 = vadd.f32 0.0, %v618
  %620 = vdwg.mxu0
  %621 = vmatpush.bf16.msra.mxu0 %v436
  %622 = vmatpush.bf16.msra.mxu0 %v427
  %623 = vmatpush.bf16.msra.mxu0 %v418
  %624 = vmatpush.bf16.msra.mxu0 %v409
  %625 = vmatpush.bf16.msra.mxu0 %v400
  %626 = vmatpush.bf16.msra.mxu0 %v391
  %627 = vmatpush.bf16.msra.mxu0 %v382
  %628 = vmatpush.bf16.msra.mxu0 %v373
  %629 = vmatmul.bf16.gmra.mxu0 %v139
  %v630 = vpop.f32.mrf.mxu0
  %v631 = vadd.f32 0.0, %v630
  %v632 = vpop.f32.mrf.mxu0
  %v633 = vadd.f32 0.0, %v632
  %634 = vdwg.mxu0
  %v635 = vadd.f32 %v35, %v519
  %v636 = vadd.f32 %v36, %v533
  %v637 = vadd.f32 %v37, %v547
  %v638 = vadd.f32 %v38, %v561
  %v639 = vadd.f32 %v39, %v575
  %v640 = vadd.f32 %v40, %v589
  %v641 = vadd.f32 %v41, %v603
  %v642 = vadd.f32 %v42, %v617
  %v643 = vadd.f32 %v43, %v631
  %v644 = vadd.f32 %v44, %v521
  %v645 = vadd.f32 %v45, %v535
  %v646 = vadd.f32 %v46, %v549
  %v647 = vadd.f32 %v47, %v563
  %v648 = vadd.f32 %v48, %v577
  %v649 = vadd.f32 %v49, %v591
  %v650 = vadd.f32 %v50, %v605
  %v651 = vadd.f32 %v51, %v619
  %v652 = vadd.f32 %v52, %v633
  %653 = vst [vmem:[%s2] sm:$0xff] %v635
  %654 = vst [vmem:[%s2 + $0x8] sm:$0xff] %v636
  %655 = vst [vmem:[%s2 + $0x10] sm:$0xff] %v637
  %656 = vst [vmem:[%s2 + $0x18] sm:$0xff] %v638
  %657 = vst [vmem:[%s2 + $0x20] sm:$0xff] %v639
  %658 = vst [vmem:[%s2 + $0x28] sm:$0xff] %v640
  %659 = vst [vmem:[%s2 + $0x30] sm:$0xff] %v641
  %660 = vst [vmem:[%s2 + $0x38] sm:$0xff] %v642
  %661 = vst [vmem:[%s2 + $0x40] sm:$0xff] %v643
  %662 = vst [vmem:[%s2 + $0x48] sm:$0xff] %v644
  %663 = vst [vmem:[%s2 + $0x50] sm:$0xff] %v645
  %664 = vst [vmem:[%s2 + $0x58] sm:$0xff] %v646
  %665 = vst [vmem:[%s2 + $0x60] sm:$0xff] %v647
  %666 = vst [vmem:[%s2 + $0x68] sm:$0xff] %v648
  %667 = vst [vmem:[%s2 + $0x70] sm:$0xff] %v649
  %668 = vst [vmem:[%s2 + $0x78] sm:$0xff] %v650
  %669 = vst [vmem:[%s2 + $0x80] sm:$0xff] %v651
  %670 = vst [vmem:[%s2 + $0x88] sm:$0xff] %v652
  // Predicated region
  $region14: #{_generator_forward.9} parent=0 // pred_check
    %p671 = pneg %p13
  $region15: #{_generator_forward.9} parent=0 // pred_check_branch
    %673 = sbr.rel (%p671) target = $region17
  $region16: #{_generator_forward.9} parent=0 // pred_region
    %v674 = vld [vmem:[%s2] sm:$0xff]
    %v675 = vld [vmem:[%s2 + $0x8] sm:$0xff]
    %v676 = vld [vmem:[%s2 + $0x10] sm:$0xff]
    %v677 = vld [vmem:[%s2 + $0x18] sm:$0xff]
    %v678 = vld [vmem:[%s2 + $0x20] sm:$0xff]
    %v679 = vld [vmem:[%s2 + $0x28] sm:$0xff]
    %v680 = vld [vmem:[%s2 + $0x30] sm:$0xff]
    %v681 = vld [vmem:[%s2 + $0x38] sm:$0xff]
    %v682 = vld [vmem:[%s2 + $0x40] sm:$0xff]
    %v683 = vld [vmem:[%s2 + $0x48] sm:$0xff]
    %v684 = vld [vmem:[%s2 + $0x50] sm:$0xff]
    %v685 = vld [vmem:[%s2 + $0x58] sm:$0xff]
    %v686 = vld [vmem:[%s2 + $0x60] sm:$0xff]
    %v687 = vld [vmem:[%s2 + $0x68] sm:$0xff]
    %v688 = vld [vmem:[%s2 + $0x70] sm:$0xff]
    %v689 = vld [vmem:[%s2 + $0x78] sm:$0xff]
    %v690 = vld [vmem:[%s2 + $0x80] sm:$0xff]
    %v691 = vld [vmem:[%s2 + $0x88] sm:$0xff]
    %v692 = vadd.f32 %v674, %v683
    %v693 = vrot.slane %v692, 4
    %v694 = vadd.f32 %v692, %v693
    %v695 = vrot.slane %v694, 2
    %v696 = vadd.f32 %v694, %v695
    %v697 = vrot.slane %v696, 1
    %v698 = vadd.f32 %v696, %v697
    %v699 = vadd.f32 %v675, %v684
    %v700 = vrot.slane %v699, 4
    %v701 = vadd.f32 %v699, %v700
    %v702 = vrot.slane %v701, 2
    %v703 = vadd.f32 %v701, %v702
    %v704 = vrot.slane %v703, 1
    %v705 = vadd.f32 %v703, %v704
    %v706 = vadd.f32 %v676, %v685
    %v707 = vrot.slane %v706, 4
    %v708 = vadd.f32 %v706, %v707
    %v709 = vrot.slane %v708, 2
    %v710 = vadd.f32 %v708, %v709
    %v711 = vrot.slane %v710, 1
    %v712 = vadd.f32 %v710, %v711
    %v713 = vadd.f32 %v677, %v686
    %v714 = vrot.slane %v713, 4
    %v715 = vadd.f32 %v713, %v714
    %v716 = vrot.slane %v715, 2
    %v717 = vadd.f32 %v715, %v716
    %v718 = vrot.slane %v717, 1
    %v719 = vadd.f32 %v717, %v718
    %v720 = vadd.f32 %v678, %v687
    %v721 = vrot.slane %v720, 4
    %v722 = vadd.f32 %v720, %v721
    %v723 = vrot.slane %v722, 2
    %v724 = vadd.f32 %v722, %v723
    %v725 = vrot.slane %v724, 1
    %v726 = vadd.f32 %v724, %v725
    %v727 = vadd.f32 %v679, %v688
    %v728 = vrot.slane %v727, 4
    %v729 = vadd.f32 %v727, %v728
    %v730 = vrot.slane %v729, 2
    %v731 = vadd.f32 %v729, %v730
    %v732 = vrot.slane %v731, 1
    %v733 = vadd.f32 %v731, %v732
    %v734 = vadd.f32 %v680, %v689
    %v735 = vrot.slane %v734, 4
    %v736 = vadd.f32 %v734, %v735
    %v737 = vrot.slane %v736, 2
    %v738 = vadd.f32 %v736, %v737
    %v739 = vrot.slane %v738, 1
    %v740 = vadd.f32 %v738, %v739
    %v741 = vadd.f32 %v681, %v690
    %v742 = vrot.slane %v741, 4
    %v743 = vadd.f32 %v741, %v742
    %v744 = vrot.slane %v743, 2
    %v745 = vadd.f32 %v743, %v744
    %v746 = vrot.slane %v745, 1
    %v747 = vadd.f32 %v745, %v746
    %v748 = vadd.f32 %v682, %v691
    %v749 = vrot.slane %v748, 4
    %v750 = vadd.f32 %v748, %v749
    %v751 = vrot.slane %v750, 2
    %v752 = vadd.f32 %v750, %v751
    %v753 = vrot.slane %v752, 1
    %v754 = vadd.f32 %v752, %v753
    %v755 = vmul.f32 %v674, %v674
    %v756 = vmul.f32 %v675, %v675
    %v757 = vmul.f32 %v676, %v676
    %v758 = vmul.f32 %v677, %v677
    %v759 = vmul.f32 %v678, %v678
    %v760 = vmul.f32 %v679, %v679
    %v761 = vmul.f32 %v680, %v680
    %v762 = vmul.f32 %v681, %v681
    %v763 = vmul.f32 %v682, %v682
    %v764 = vmul.f32 %v683, %v683
    %v765 = vmul.f32 %v684, %v684
    %v766 = vmul.f32 %v685, %v685
    %v767 = vmul.f32 %v686, %v686
    %v768 = vmul.f32 %v687, %v687
    %v769 = vmul.f32 %v688, %v688
    %v770 = vmul.f32 %v689, %v689
    %v771 = vmul.f32 %v690, %v690
    %v772 = vmul.f32 %v691, %v691
    %v773 = vadd.f32 %v755, %v764
    %v774 = vrot.slane %v773, 4
    %v775 = vadd.f32 %v773, %v774
    %v776 = vrot.slane %v775, 2
    %v777 = vadd.f32 %v775, %v776
    %v778 = vrot.slane %v777, 1
    %v779 = vadd.f32 %v777, %v778
    %v780 = vadd.f32 %v756, %v765
    %v781 = vrot.slane %v780, 4
    %v782 = vadd.f32 %v780, %v781
    %v783 = vrot.slane %v782, 2
    %v784 = vadd.f32 %v782, %v783
    %v785 = vrot.slane %v784, 1
    %v786 = vadd.f32 %v784, %v785
    %v787 = vadd.f32 %v757, %v766
    %v788 = vrot.slane %v787, 4
    %v789 = vadd.f32 %v787, %v788
    %v790 = vrot.slane %v789, 2
    %v791 = vadd.f32 %v789, %v790
    %v792 = vrot.slane %v791, 1
    %v793 = vadd.f32 %v791, %v792
    %v794 = vadd.f32 %v758, %v767
    %v795 = vrot.slane %v794, 4
    %v796 = vadd.f32 %v794, %v795
    %v797 = vrot.slane %v796, 2
    %v798 = vadd.f32 %v796, %v797
    %v799 = vrot.slane %v798, 1
    %v800 = vadd.f32 %v798, %v799
    %v801 = vadd.f32 %v759, %v768
    %v802 = vrot.slane %v801, 4
    %v803 = vadd.f32 %v801, %v802
    %v804 = vrot.slane %v803, 2
    %v805 = vadd.f32 %v803, %v804
    %v806 = vrot.slane %v805, 1
    %v807 = vadd.f32 %v805, %v806
    %v808 = vadd.f32 %v760, %v769
    %v809 = vrot.slane %v808, 4
    %v810 = vadd.f32 %v808, %v809
    %v811 = vrot.slane %v810, 2
    %v812 = vadd.f32 %v810, %v811
    %v813 = vrot.slane %v812, 1
    %v814 = vadd.f32 %v812, %v813
    %v815 = vadd.f32 %v761, %v770
    %v816 = vrot.slane %v815, 4
    %v817 = vadd.f32 %v815, %v816
    %v818 = vrot.slane %v817, 2
    %v819 = vadd.f32 %v817, %v818
    %v820 = vrot.slane %v819, 1
    %v821 = vadd.f32 %v819, %v820
    %v822 = vadd.f32 %v762, %v771
    %v823 = vrot.slane %v822, 4
    %v824 = vadd.f32 %v822, %v823
    %v825 = vrot.slane %v824, 2
    %v826 = vadd.f32 %v824, %v825
    %v827 = vrot.slane %v826, 1
    %v828 = vadd.f32 %v826, %v827
    %v829 = vadd.f32 %v763, %v772
    %v830 = vrot.slane %v829, 4
    %v831 = vadd.f32 %v829, %v830
    %v832 = vrot.slane %v831, 2
    %v833 = vadd.f32 %v831, %v832
    %v834 = vrot.slane %v833, 1
    %v835 = vadd.f32 %v833, %v834
    %vm836 = vcmask 1040384
    %v837 = vsel %vm836, %v698, %v779
    %v838 = vsel %vm836, %v705, %v786
    %v839 = vsel %vm836, %v712, %v793
    %v840 = vsel %vm836, %v719, %v800
    %v841 = vsel %vm836, %v726, %v807
    %v842 = vsel %vm836, %v733, %v814
    %v843 = vsel %vm836, %v740, %v821
    %v844 = vsel %vm836, %v747, %v828
    %v845 = vsel %vm836, %v754, %v835
    %v854 = vrot.slane %v838, 6
    %v855 = vrot.slane %v839, 4
    %v856 = vrot.slane %v840, 2
    %v857 = vrot.slane %v842, 6
    %v858 = vrot.slane %v843, 4
    %v859 = vrot.slane %v844, 2
    %vm860 = vcmask 1041408
    %v861 = vsel %vm860, %v837, %v854
    %vm862 = vcmask 1045508
    %v863 = vsel %vm862, %v855, %v856
    %vm864 = vcmask 1043456
    %v865 = vsel %vm864, %v861, %v863
    %v866 = vsel %vm860, %v841, %v857
    %v867 = vsel %vm862, %v858, %v859
    %v868 = vsel %vm864, %v866, %v867
    %871 = vst [vmem:[%s3] sm:$0xff] %v865
    %872 = vst [vmem:[%s3 + $0x8] sm:$0xff] %v868
    %873 = vst [vmem:[%s3 + $0x10] sm:$0x3] %v845
  $region17: #{_generator_forward.9} parent=0 // pred_fallthru
    _
  // Predicated region
  $region18: #{_generator_forward.9} parent=0 // pred_check
    _
  $region19: #{_generator_forward.9} parent=0 // pred_check_branch
    %875 = sbr.rel (0) target = $region21
  $region20: #{_generator_forward.9} parent=0 // pred_region
    _
  $region21: #{_generator_forward.9} parent=0 // pred_fallthru
    _
  // Predicated region
  $region22: #{_generator_forward.9} parent=0 // pred_check
    _
  $region23: #{_generator_forward.9} parent=0 // pred_check_branch
    %877 = sbr.rel (0) target = $region25
  $region24: #{_generator_forward.9} parent=0 // pred_region
    _
  $region25: #{_generator_forward.9} parent=0 // pred_fallthru
    _
  // Predicated region
  $region26: #{_generator_forward.9} parent=0 // pred_check
    _
  $region27: #{_generator_forward.9} parent=0 // pred_check_branch
    %879 = sbr.rel (0) target = $region29
  $region28: #{_generator_forward.9} parent=0 // pred_region
    _
  $region29: #{_generator_forward.9} parent=0 // pred_fallthru
    _
  // Predicated region
  $region30: #{_generator_forward.9} parent=0 // pred_check
    _
  $region31: #{_generator_forward.9} parent=0 // pred_check_branch
    %881 = sbr.rel (0) target = $region33
  $region32: #{_generator_forward.9} parent=0 // pred_region
    _
  $region33: #{_generator_forward.9} parent=0 // pred_fallthru
    _

// kernel: _generator_forward.11
$region0: #{_generator_forward.11}
  #allocation0 [shape = 'u32[]', space=smem, size = 0x4, offset = 0x4, fixed_abs, tag = 'smem constant byte address 0x4 - core index']
  #allocation1 [shape = 'u32[72,128]{1,0:T(1,128)}', space=vmem, size = 0x9000, scoped, tag = 'internal scratch']
  %s0 = inlined_call_operand.vmem [shape: bf16[4,32,512], index: 0, kind: input, shape index: {}]
  %s1 = inlined_call_operand.vmem [shape: bf16[4,512,64], index: 1, kind: input, shape index: {}]
  %s2 = inlined_call_operand.vmem [shape: f32[4,32,64], index: 2, kind: output, shape index: {0}]
  %s3 = inlined_call_operand.vmem [shape: f32[4,1,2,64], index: 3, kind: output, shape index: {1}]
  %4 = xla_tuple %s2, %s3
  %s5 = sld [smem:[#allocation0]]
  $region57: #{_generator_forward.11} parent=0
    _
  %s7 = ssub.s32 1, %s5
  %s8 = scalar_select 0, %s7, %s5
  loop: start=0, step=1, limit=6
  $region2: #{_generator_forward.11} parent=0 // loop_pre_header
    _
  $region3: #{_generator_forward.11} parent=0 // loop_header
    %s10 = sphi 0, %s14
    %p11 = scmp.ge.s32.totalorder %s10, 6
    %s17 = sphi 0, %s36
    %s18 = sphi 0, %s32
    %s19 = sphi 0, %s28
    %s20 = sphi 0, %s17
    %s21 = sphi 0, %s18
    %s22 = sphi 0, %s19
    %s23 = sphi 0, %s20
    %s24 = sphi 0, %s21
    %s25 = sphi 0, %s22
    %s43 = sphi 0, %s45
    %s46 = sphi 0, %s43
    %s47 = sphi 0, %s46
    %s63 = sphi 0, %s47
    %s71 = sphi 0, %s73
    %s74 = sphi 0, %s71
    %s75 = sphi 0, %s74
    %s91 = sphi 0, %s75
    %s99 = sphi 0, %s101
    %s102 = sphi 0, %s99
    %s103 = sphi 0, %s102
    %s119 = sphi 0, %s103
    %s127 = sphi 0, %s129
    %s130 = sphi 0, %s127
    %s131 = sphi 0, %s130
    %s147 = sphi 0, %s131
  $region4: #{_generator_forward.11} parent=0 // loop_header_branch
    %13 = sbr.rel (%p11) target = $region8
  $region5: #{_generator_forward.11} parent=0 // loop_body
    %s15 = ssub.s32 %s10, 1
    %s16 = ssub.s32 %s10, 2
    %s26 = sadd.s32 1, %s19
    %p27 = scmp.ge.s32.totalorder %s26, 1
    %s28 = scalar_select %p27, 0, %s26
    %s29 = sadd.s32 1, %s18
    %s30 = scalar_select %p27, %s29, %s18
    %p31 = scmp.ge.s32.totalorder %s30, 1
    %s32 = scalar_select %p31, 0, %s30
    %s33 = sadd.s32 1, %s17
    %s34 = scalar_select %p31, %s33, %s17
    %p35 = scmp.ge.s32.totalorder %s34, 4
    %s36 = scalar_select %p35, 0, %s34
    %s37 = ssub.s32 %s17, %s36
    %s38 = ssub.s32 %s18, %s32
    %s39 = sor.u32 %s37, %s38
    %s40 = ssub.s32 %s19, %s28
    %s41 = sor.u32 %s39, %s40
    %p42 = scmp.eq.s32.totalorder %s41, 0
    %s44 = sadd.s32 %s43, 1
    %s45 = scalar_select %p42, %s43, %s44
    %p48 = pneg %p42
    %p49 = scmp.eq.s32.totalorder %s10, 3
    %p50 = por %p48, %p49
    %p51 = scmp.ne.s32.totalorder %s43, %s46
    %p52 = scmp.eq.s32.totalorder %s10, 0
    %p53 = por %p51, %p52
    %p54 = scmp.ne.s32.totalorder %s43, %s46
    %p55 = scmp.eq.s32.totalorder %s15, 3
    %p56 = por %p54, %p55
    %p57 = scmp.ne.s32.totalorder %s46, %s47
    %p58 = scmp.eq.s32.totalorder %s15, 0
    %p59 = por %p57, %p58
    %p60 = scmp.ne.s32.totalorder %s46, %s47
    %p61 = scmp.eq.s32.totalorder %s16, 3
    %p62 = por %p60, %p61
    %p64 = scmp.ne.s32.totalorder %s47, %s63
    %p65 = scmp.eq.s32.totalorder %s16, 0
    %p66 = por %p64, %p65
    %s67 = ssub.s32 %s17, %s36
    %s68 = ssub.s32 %s19, %s28
    %s69 = sor.u32 %s67, %s68
    %p70 = scmp.eq.s32.totalorder %s69, 0
    %s72 = sadd.s32 %s71, 1
    %s73 = scalar_select %p70, %s71, %s72
    %p76 = pneg %p70
    %p77 = scmp.eq.s32.totalorder %s10, 3
    %p78 = por %p76, %p77
    %p79 = scmp.ne.s32.totalorder %s71, %s74
    %p80 = scmp.eq.s32.totalorder %s10, 0
    %p81 = por %p79, %p80
    %p82 = scmp.ne.s32.totalorder %s71, %s74
    %p83 = scmp.eq.s32.totalorder %s15, 3
    %p84 = por %p82, %p83
    %p85 = scmp.ne.s32.totalorder %s74, %s75
    %p86 = scmp.eq.s32.totalorder %s15, 0
    %p87 = por %p85, %p86
    %p88 = scmp.ne.s32.totalorder %s74, %s75
    %p89 = scmp.eq.s32.totalorder %s16, 3
    %p90 = por %p88, %p89
    %p92 = scmp.ne.s32.totalorder %s75, %s91
    %p93 = scmp.eq.s32.totalorder %s16, 0
    %p94 = por %p92, %p93
    %s95 = ssub.s32 %s17, %s36
    %s96 = ssub.s32 %s18, %s32
    %s97 = sor.u32 %s95, %s96
    %p98 = scmp.eq.s32.totalorder %s97, 0
    %s100 = sadd.s32 %s99, 1
    %s101 = scalar_select %p98, %s99, %s100
    %p104 = pneg %p98
    %p105 = scmp.eq.s32.totalorder %s10, 3
    %p106 = por %p104, %p105
    %p107 = scmp.ne.s32.totalorder %s99, %s102
    %p108 = scmp.eq.s32.totalorder %s10, 0
    %p109 = por %p107, %p108
    %p110 = scmp.ne.s32.totalorder %s99, %s102
    %p111 = scmp.eq.s32.totalorder %s15, 3
    %p112 = por %p110, %p111
    %p113 = scmp.ne.s32.totalorder %s102, %s103
    %p114 = scmp.eq.s32.totalorder %s15, 0
    %p115 = por %p113, %p114
    %p116 = scmp.ne.s32.totalorder %s102, %s103
    %p117 = scmp.eq.s32.totalorder %s16, 3
    %p118 = por %p116, %p117
    %p120 = scmp.ne.s32.totalorder %s103, %s119
    %p121 = scmp.eq.s32.totalorder %s16, 0
    %p122 = por %p120, %p121
    %s123 = ssub.s32 %s17, %s36
    %s124 = ssub.s32 %s18, %s32
    %s125 = sor.u32 %s123, %s124
    %p126 = scmp.eq.s32.totalorder %s125, 0
    %s128 = sadd.s32 %s127, 1
    %s129 = scalar_select %p126, %s127, %s128
    %p132 = pneg %p126
    %p133 = scmp.eq.s32.totalorder %s10, 3
    %p134 = por %p132, %p133
    %p135 = scmp.ne.s32.totalorder %s127, %s130
    %p136 = scmp.eq.s32.totalorder %s10, 0
    %p137 = por %p135, %p136
    %p138 = scmp.ne.s32.totalorder %s127, %s130
    %p139 = scmp.eq.s32.totalorder %s15, 3
    %p140 = por %p138, %p139
    %p141 = scmp.ne.s32.totalorder %s130, %s131
    %p142 = scmp.eq.s32.totalorder %s15, 0
    %p143 = por %p141, %p142
    %p144 = scmp.ne.s32.totalorder %s130, %s131
    %p145 = scmp.eq.s32.totalorder %s16, 3
    %p146 = por %p144, %p145
    %p148 = scmp.ne.s32.totalorder %s131, %s147
    %p149 = scmp.eq.s32.totalorder %s16, 0
    %p150 = por %p148, %p149
    %p151 = scmp.le.s32.totalorder 1, %s10
    %p152 = scmp.lt.s32.totalorder %s10, 5
    %p153 = pnand %p151, %p152
    %p154 = pneg %p153
    // Predicated region
    $region9: #{_generator_forward.11} parent=5 // pred_check
      _
    $region10: #{_generator_forward.11} parent=5 // pred_check_branch
      %156 = sbr.rel (%p153) target = $region12
    $region11: #{_generator_forward.11} parent=5 // pred_region
      %s157 = ssub.s32 %s10, 1
    $region12: #{_generator_forward.11} parent=5 // pred_fallthru
      _
    %p158 = scmp.lt.s32.totalorder %s10, 4
    // Predicated region
    $region13: #{_generator_forward.11} parent=5 // pred_check
      %p159 = pneg %p158
    $region14: #{_generator_forward.11} parent=5 // pred_check_branch
      %161 = sbr.rel (%p159) target = $region16
    $region15: #{_generator_forward.11} parent=5 // pred_region
      // Predicated region
      $region17: #{_generator_forward.11} parent=15 // pred_check
        %p162 = pneg %p53
      $region18: #{_generator_forward.11} parent=15 // pred_check_branch
        %164 = sbr.rel (%p162) target = $region20
      $region19: #{_generator_forward.11} parent=15 // pred_region
        %s165 = smul.u32 4, %s18
        %s166 = smul.u32 4, %s19
        %p167 = scmp.lt.s32.totalorder %s17, 3
        %s168 = scalar_select %p167, %s17, 3
        %p169 = scmp.lt.s32.totalorder %s165, 3
        %s170 = scalar_select %p169, %s165, 3
        %p171 = scmp.lt.s32.totalorder %s166, 3
        %s172 = scalar_select %p171, %s166, 3
        %s173 = smul.addr %s170, 4
        %s174 = sadd.s32 %s172, %s173
        %s175 = smul.addr %s168, 16
        %s176 = sadd.s32 %s174, %s175
        %s177 = smul.addr %s176, 4
        %s178 = scalar_lea.vmem %s0, %s177
        %s179 = smul.u32 4, %s18
        %s180 = smul.u32 4, %s19
      $region20: #{_generator_forward.11} parent=15 // pred_fallthru
        _
      // Predicated region
      $region21: #{_generator_forward.11} parent=15 // pred_check
        %p181 = pneg %p81
      $region22: #{_generator_forward.11} parent=15 // pred_check_branch
        %183 = sbr.rel (%p181) target = $region24
      $region23: #{_generator_forward.11} parent=15 // pred_region
        %s184 = smul.u32 64, %s19
        %p185 = scmp.lt.s32.totalorder %s17, 3
        %s186 = scalar_select %p185, %s17, 3
        %p187 = scmp.lt.s32.totalorder %s184, 63
        %s188 = scalar_select %p187, %s184, 63
        %s189 = smul.addr %s186, 64
        %s190 = sadd.s32 %s188, %s189
        %s191 = smul.addr %s190, 4
        %s192 = scalar_lea.vmem %s1, %s191
        %s193 = smul.u32 64, %s19
      $region24: #{_generator_forward.11} parent=15 // pred_fallthru
        _
    $region16: #{_generator_forward.11} parent=5 // pred_fallthru
      _
    %p194 = scmp.le.s32.totalorder 1, %s10
    %p195 = scmp.lt.s32.totalorder %s10, 5
    %p196 = pnand %p194, %p195
    %p197 = pneg %p196
    // Predicated region
    $region25: #{_generator_forward.11} parent=5 // pred_check
      _
    $region26: #{_generator_forward.11} parent=5 // pred_check_branch
      %199 = sbr.rel (%p196) target = $region28
    $region27: #{_generator_forward.11} parent=5 // pred_region
      %s200 = ssub.s32 %s10, 1
      %s201 = smul.u32 4, %s21
      %s202 = smul.u32 4, %s22
      %p203 = scmp.lt.s32.totalorder %s20, 3
      %s204 = scalar_select %p203, %s20, 3
      %p205 = scmp.lt.s32.totalorder %s201, 3
      %s206 = scalar_select %p205, %s201, 3
      %p207 = scmp.lt.s32.totalorder %s202, 3
      %s208 = scalar_select %p207, %s202, 3
      %s209 = smul.addr %s206, 4
      %s210 = sadd.s32 %s208, %s209
      %s211 = smul.addr %s204, 16
      %s212 = sadd.s32 %s210, %s211
      %s213 = smul.addr %s212, 4
      %s214 = scalar_lea.vmem %s0, %s213
      %p215 = pneg %p59
      %p216 = pneg %p56
      %s217 = smul.u32 64, %s22
      %p218 = scmp.lt.s32.totalorder %s20, 3
      %s219 = scalar_select %p218, %s20, 3
      %p220 = scmp.lt.s32.totalorder %s217, 63
      %s221 = scalar_select %p220, %s217, 63
      %s222 = smul.addr %s219, 64
      %s223 = sadd.s32 %s221, %s222
      %s224 = smul.addr %s223, 4
      %s225 = scalar_lea.vmem %s1, %s224
      %p226 = pneg %p87
      %p227 = pneg %p84
      %p228 = pneg %p115
      %p229 = pneg %p112
      %s230 = smul.u32 4, %s21
      %p231 = scmp.lt.s32.totalorder %s20, 3
      %s232 = scalar_select %p231, %s20, 3
      %p233 = scmp.lt.s32.totalorder %s230, 3
      %s234 = scalar_select %p233, %s230, 3
      %s235 = smul.addr %s232, 4
      %s236 = sadd.s32 %s234, %s235
      %s237 = smul.addr %s236, 8
      %s238 = scalar_lea.vmem %s2, %s237
      %p239 = pneg %p143
      %p240 = pneg %p140
      %p241 = scmp.lt.s32.totalorder %s20, 3
      %s242 = scalar_select %p241, %s20, 3
      %p243 = scmp.lt.s32.totalorder %s21, 0
      %s244 = scalar_select %p243, %s21, 0
      %s245 = sadd.s32 %s244, %s242
      %s246 = smul.addr %s245, 2
      %s247 = scalar_lea.vmem %s3, %s246
      %s248 = smul.u32 4, %s21
      %s249 = smul.u32 4, %s22
      %p250 = scmp.lt.s32.totalorder %s20, 3
      %s251 = scalar_select %p250, %s20, 3
      %p252 = scmp.lt.s32.totalorder %s248, 3
      %s253 = scalar_select %p252, %s248, 3
      %p254 = scmp.lt.s32.totalorder %s249, 3
      %s255 = scalar_select %p254, %s249, 3
      %s256 = smul.addr %s253, 4
      %s257 = sadd.s32 %s255, %s256
      %s258 = smul.addr %s251, 16
      %s259 = sadd.s32 %s257, %s258
      %s260 = smul.addr %s259, 4
      %s261 = scalar_lea.vmem %s0, %s260
      %s262 = smul.u32 4, %s21
      %s263 = smul.u32 4, %s22
      %s264 = smul.u32 64, %s22
      %p265 = scmp.lt.s32.totalorder %s20, 3
      %s266 = scalar_select %p265, %s20, 3
      %p267 = scmp.lt.s32.totalorder %s264, 63
      %s268 = scalar_select %p267, %s264, 63
      %s269 = smul.addr %s266, 64
      %s270 = sadd.s32 %s268, %s269
      %s271 = smul.addr %s270, 4
      %s272 = scalar_lea.vmem %s1, %s271
      %s273 = smul.u32 64, %s22
      %s274 = smul.u32 4, %s21
      %p275 = scmp.lt.s32.totalorder %s20, 3
      %s276 = scalar_select %p275, %s20, 3
      %p277 = scmp.lt.s32.totalorder %s274, 3
      %s278 = scalar_select %p277, %s274, 3
      %s279 = smul.addr %s276, 4
      %s280 = sadd.s32 %s278, %s279
      %s281 = smul.addr %s280, 8
      %s282 = scalar_lea.vmem %s2, %s281
      %s283 = smul.u32 4, %s21
      %p284 = scmp.lt.s32.totalorder %s20, 3
      %s285 = scalar_select %p284, %s20, 3
      %p286 = scmp.lt.s32.totalorder %s21, 0
      %s287 = scalar_select %p286, %s21, 0
      %s288 = sadd.s32 %s287, %s285
      %s289 = smul.addr %s288, 2
      %s290 = scalar_lea.vmem %s3, %s289
      %p291 = scmp.eq.s32.totalorder %s22, 0
      // Predicated region
      $region29: #{_generator_forward.11} parent=27 // pred_check
        %p292 = pneg %p291
      $region30: #{_generator_forward.11} parent=27 // pred_check_branch
        %294 = sbr.rel (%p292) target = $region32
      $region31: #{_generator_forward.11} parent=27 // pred_region
        %vm295 = vcmask 523264
        %296 = vst.msk [vmem:[%s282] sm:$0xff] %vm295, 0.0
        %297 = vst.msk [vmem:[%s282 + $0x8] sm:$0xff] %vm295, 0.0
        %298 = vst.msk [vmem:[%s282 + $0x10] sm:$0xff] %vm295, 0.0
        %299 = vst.msk [vmem:[%s282 + $0x18] sm:$0xff] %vm295, 0.0
      $region32: #{_generator_forward.11} parent=27 // pred_fallthru
        _
      %v300 = vld [vmem:[%s282] sm:$0xff]
      %v301 = vld [vmem:[%s282 + $0x8] sm:$0xff]
      %v302 = vld [vmem:[%s282 + $0x10] sm:$0xff]
      %v303 = vld [vmem:[%s282 + $0x18] sm:$0xff]
      %v304 = vld [vmem:[%s261] sm:$0xff]
      %v305 = vld [vmem:[%s261 + $0x8] sm:$0xff]
      %v306 = vld [vmem:[%s261 + $0x10] sm:$0xff]
      %v307 = vld [vmem:[%s261 + $0x18] sm:$0xff]
      %v308 = vld [vmem:[%s261 + $0x20] sm:$0xff]
      %v309 = vld [vmem:[%s261 + $0x28] sm:$0xff]
      %v310 = vld [vmem:[%s261 + $0x30] sm:$0xff]
      %v311 = vld [vmem:[%s261 + $0x38] sm:$0xff]
      %v312 = vld [vmem:[%s272] sm:$0xf]
      %v313 = vld [vmem:[%s272 + $0x4] sm:$0xf]
      %v314 = vld [vmem:[%s272 + $0x8] sm:$0xf]
      %v315 = vld [vmem:[%s272 + $0xc] sm:$0xf]
      %v316 = vld [vmem:[%s272 + $0x10] sm:$0xf]
      %v317 = vld [vmem:[%s272 + $0x14] sm:$0xf]
      %v318 = vld [vmem:[%s272 + $0x18] sm:$0xf]
      %v319 = vld [vmem:[%s272 + $0x1c] sm:$0xf]
      %v320 = vld [vmem:[%s272 + $0x20] sm:$0xf]
      %v321 = vld [vmem:[%s272 + $0x24] sm:$0xf]
      %v322 = vld [vmem:[%s272 + $0x28] sm:$0xf]
      %v323 = vld [vmem:[%s272 + $0x2c] sm:$0xf]
      %v324 = vld [vmem:[%s272 + $0x30] sm:$0xf]
      %v325 = vld [vmem:[%s272 + $0x34] sm:$0xf]
      %v326 = vld [vmem:[%s272 + $0x38] sm:$0xf]
      %v327 = vld [vmem:[%s272 + $0x3c] sm:$0xf]
      %v328 = vld [vmem:[%s272 + $0x40] sm:$0xf]
      %v329 = vld [vmem:[%s272 + $0x44] sm:$0xf]
      %v330 = vld [vmem:[%s272 + $0x48] sm:$0xf]
      %v331 = vld [vmem:[%s272 + $0x4c] sm:$0xf]
      %v332 = vld [vmem:[%s272 + $0x50] sm:$0xf]
      %v333 = vld [vmem:[%s272 + $0x54] sm:$0xf]
      %v334 = vld [vmem:[%s272 + $0x58] sm:$0xf]
      %v335 = vld [vmem:[%s272 + $0x5c] sm:$0xf]
      %v336 = vld [vmem:[%s272 + $0x60] sm:$0xf]
      %v337 = vld [vmem:[%s272 + $0x64] sm:$0xf]
      %v338 = vld [vmem:[%s272 + $0x68] sm:$0xf]
      %v339 = vld [vmem:[%s272 + $0x6c] sm:$0xf]
      %v340 = vld [vmem:[%s272 + $0x70] sm:$0xf]
      %v341 = vld [vmem:[%s272 + $0x74] sm:$0xf]
      %v342 = vld [vmem:[%s272 + $0x78] sm:$0xf]
      %v343 = vld [vmem:[%s272 + $0x7c] sm:$0xf]
      %v344 = vld [vmem:[%s272 + $0x80] sm:$0xf]
      %v345 = vld [vmem:[%s272 + $0x84] sm:$0xf]
      %v346 = vld [vmem:[%s272 + $0x88] sm:$0xf]
      %v347 = vld [vmem:[%s272 + $0x8c] sm:$0xf]
      %v348 = vld [vmem:[%s272 + $0x90] sm:$0xf]
      %v349 = vld [vmem:[%s272 + $0x94] sm:$0xf]
      %v350 = vld [vmem:[%s272 + $0x98] sm:$0xf]
      %v351 = vld [vmem:[%s272 + $0x9c] sm:$0xf]
      %v352 = vld [vmem:[%s272 + $0xa0] sm:$0xf]
      %v353 = vld [vmem:[%s272 + $0xa4] sm:$0xf]
      %v354 = vld [vmem:[%s272 + $0xa8] sm:$0xf]
      %v355 = vld [vmem:[%s272 + $0xac] sm:$0xf]
      %v356 = vld [vmem:[%s272 + $0xb0] sm:$0xf]
      %v357 = vld [vmem:[%s272 + $0xb4] sm:$0xf]
      %v358 = vld [vmem:[%s272 + $0xb8] sm:$0xf]
      %v359 = vld [vmem:[%s272 + $0xbc] sm:$0xf]
      %v360 = vld [vmem:[%s272 + $0xc0] sm:$0xf]
      %v361 = vld [vmem:[%s272 + $0xc4] sm:$0xf]
      %v362 = vld [vmem:[%s272 + $0xc8] sm:$0xf]
      %v363 = vld [vmem:[%s272 + $0xcc] sm:$0xf]
      %v364 = vld [vmem:[%s272 + $0xd0] sm:$0xf]
      %v365 = vld [vmem:[%s272 + $0xd4] sm:$0xf]
      %v366 = vld [vmem:[%s272 + $0xd8] sm:$0xf]
      %v367 = vld [vmem:[%s272 + $0xdc] sm:$0xf]
      %v368 = vld [vmem:[%s272 + $0xe0] sm:$0xf]
      %v369 = vld [vmem:[%s272 + $0xe4] sm:$0xf]
      %v370 = vld [vmem:[%s272 + $0xe8] sm:$0xf]
      %v371 = vld [vmem:[%s272 + $0xec] sm:$0xf]
      %v372 = vld [vmem:[%s272 + $0xf0] sm:$0xf]
      %v373 = vld [vmem:[%s272 + $0xf4] sm:$0xf]
      %v374 = vld [vmem:[%s272 + $0xf8] sm:$0xf]
      %v375 = vld [vmem:[%s272 + $0xfc] sm:$0xf]
      %v384 = vunpack.c.l.b16 %v304
      %v385 = vunpack.c.h.b16 %v304
      %v386 = vunpack.c.l.b16 %v305
      %v387 = vunpack.c.h.b16 %v305
      %v388 = vunpack.c.l.b16 %v306
      %v389 = vunpack.c.h.b16 %v306
      %v390 = vunpack.c.l.b16 %v307
      %v391 = vunpack.c.h.b16 %v307
      %v392 = vunpack.c.l.b16 %v308
      %v393 = vunpack.c.h.b16 %v308
      %v394 = vunpack.c.l.b16 %v309
      %v395 = vunpack.c.h.b16 %v309
      %v396 = vunpack.c.l.b16 %v310
      %v397 = vunpack.c.h.b16 %v310
      %v398 = vunpack.c.l.b16 %v311
      %v399 = vunpack.c.h.b16 %v311
      %v400 = vpack.c.b16 %v388, %v384
      %v401 = vpack.c.b16 %v389, %v385
      %v402 = vpack.c.b16 %v390, %v386
      %v403 = vpack.c.b16 %v391, %v387
      %v404 = vpack.c.b16 %v396, %v392
      %v405 = vpack.c.b16 %v397, %v393
      %v406 = vpack.c.b16 %v398, %v394
      %v407 = vpack.c.b16 %v399, %v395
      %v480 = vunpack.c.l.b16 %v312
      %v481 = vunpack.c.l.b16 %v313
      %v482 = vunpack.c.l.b16 %v314
      %v483 = vunpack.c.l.b16 %v315
      %v484 = vunpack.c.l.b16 %v316
      %v485 = vunpack.c.l.b16 %v317
      %v486 = vunpack.c.l.b16 %v318
      %v487 = vunpack.c.l.b16 %v319
      %v488 = vunpack.c.l.b16 %v320
      %v489 = vunpack.c.l.b16 %v321
      %v490 = vunpack.c.l.b16 %v322
      %v491 = vunpack.c.l.b16 %v323
      %v492 = vunpack.c.l.b16 %v324
      %v493 = vunpack.c.l.b16 %v325
      %v494 = vunpack.c.l.b16 %v326
      %v495 = vunpack.c.l.b16 %v327
      %v496 = vunpack.c.l.b16 %v328
      %v497 = vunpack.c.l.b16 %v329
      %v498 = vunpack.c.l.b16 %v330
      %v499 = vunpack.c.l.b16 %v331
      %v500 = vunpack.c.l.b16 %v332
      %v501 = vunpack.c.l.b16 %v333
      %v502 = vunpack.c.l.b16 %v334
      %v503 = vunpack.c.l.b16 %v335
      %v504 = vunpack.c.l.b16 %v336
      %v505 = vunpack.c.l.b16 %v337
      %v506 = vunpack.c.l.b16 %v338
      %v507 = vunpack.c.l.b16 %v339
      %v508 = vunpack.c.l.b16 %v340
      %v509 = vunpack.c.l.b16 %v341
      %v510 = vunpack.c.l.b16 %v342
      %v511 = vunpack.c.l.b16 %v343
      %v512 = vunpack.c.l.b16 %v344
      %v513 = vunpack.c.l.b16 %v345
      %v514 = vunpack.c.l.b16 %v346
      %v515 = vunpack.c.l.b16 %v347
      %v516 = vunpack.c.l.b16 %v348
      %v517 = vunpack.c.l.b16 %v349
      %v518 = vunpack.c.l.b16 %v350
      %v519 = vunpack.c.l.b16 %v351
      %v520 = vunpack.c.l.b16 %v352
      %v521 = vunpack.c.l.b16 %v353
      %v522 = vunpack.c.l.b16 %v354
      %v523 = vunpack.c.l.b16 %v355
      %v524 = vunpack.c.l.b16 %v356
      %v525 = vunpack.c.l.b16 %v357
      %v526 = vunpack.c.l.b16 %v358
      %v527 = vunpack.c.l.b16 %v359
      %v528 = vunpack.c.l.b16 %v360
      %v529 = vunpack.c.l.b16 %v361
      %v530 = vunpack.c.l.b16 %v362
      %v531 = vunpack.c.l.b16 %v363
      %v532 = vunpack.c.l.b16 %v364
      %v533 = vunpack.c.l.b16 %v365
      %v534 = vunpack.c.l.b16 %v366
      %v535 = vunpack.c.l.b16 %v367
      %v536 = vunpack.c.l.b16 %v368
      %v537 = vunpack.c.l.b16 %v369
      %v538 = vunpack.c.l.b16 %v370
      %v539 = vunpack.c.l.b16 %v371
      %v540 = vunpack.c.l.b16 %v372
      %v541 = vunpack.c.l.b16 %v373
      %v542 = vunpack.c.l.b16 %v374
      %v543 = vunpack.c.l.b16 %v375
      %v544 = vpack.c.b16 %v481, %v480
      %v545 = vpack.c.b16 %v483, %v482
      %v546 = vpack.c.b16 %v485, %v484
      %v547 = vpack.c.b16 %v487, %v486
      %v548 = vpack.c.b16 %v489, %v488
      %v549 = vpack.c.b16 %v491, %v490
      %v550 = vpack.c.b16 %v493, %v492
      %v551 = vpack.c.b16 %v495, %v494
      %v552 = vpack.c.b16 %v497, %v496
      %v553 = vpack.c.b16 %v499, %v498
      %v554 = vpack.c.b16 %v501, %v500
      %v555 = vpack.c.b16 %v503, %v502
      %v556 = vpack.c.b16 %v505, %v504
      %v557 = vpack.c.b16 %v507, %v506
      %v558 = vpack.c.b16 %v509, %v508
      %v559 = vpack.c.b16 %v511, %v510
      %v560 = vpack.c.b16 %v513, %v512
      %v561 = vpack.c.b16 %v515, %v514
      %v562 = vpack.c.b16 %v517, %v516
      %v563 = vpack.c.b16 %v519, %v518
      %v564 = vpack.c.b16 %v521, %v520
      %v565 = vpack.c.b16 %v523, %v522
      %v566 = vpack.c.b16 %v525, %v524
      %v567 = vpack.c.b16 %v527, %v526
      %v568 = vpack.c.b16 %v529, %v528
      %v569 = vpack.c.b16 %v531, %v530
      %v570 = vpack.c.b16 %v533, %v532
      %v571 = vpack.c.b16 %v535, %v534
      %v572 = vpack.c.b16 %v537, %v536
      %v573 = vpack.c.b16 %v539, %v538
      %v574 = vpack.c.b16 %v541, %v540
      %v575 = vpack.c.b16 %v543, %v542
      %608 = vmatpush.bf16.msra.mxu0 %v551
      %609 = vmatpush.bf16.msra.mxu0 %v550
      %610 = vmatpush.bf16.msra.mxu0 %v549
      %611 = vmatpush.bf16.msra.mxu0 %v548
      %612 = vmatpush.bf16.msra.mxu0 %v547
      %613 = vmatpush.bf16.msra.mxu0 %v546
      %614 = vmatpush.bf16.msra.mxu0 %v545
      %615 = vmatpush.bf16.msra.mxu0 %v544
      %616 = vmatmul.bf16.gmra.mxu0 %v400
      %v617 = vpop.f32.mrf.mxu0
      %v618 = vadd.f32 0.0, %v617
      %v619 = vpop.f32.mrf.mxu0
      %v620 = vadd.f32 0.0, %v619
      %621 = vmatmul.bf16.gmra.mxu0 %v404
      %v622 = vpop.f32.mrf.mxu0
      %v623 = vadd.f32 0.0, %v622
      %v624 = vpop.f32.mrf.mxu0
      %v625 = vadd.f32 0.0, %v624
      %626 = vdwg.mxu0
      %627 = vmatpush.bf16.msra.mxu0 %v559
      %628 = vmatpush.bf16.msra.mxu0 %v558
      %629 = vmatpush.bf16.msra.mxu0 %v557
      %630 = vmatpush.bf16.msra.mxu0 %v556
      %631 = vmatpush.bf16.msra.mxu0 %v555
      %632 = vmatpush.bf16.msra.mxu0 %v554
      %633 = vmatpush.bf16.msra.mxu0 %v553
      %634 = vmatpush.bf16.msra.mxu0 %v552
      %635 = vmatmul.bf16.gmra.mxu0 %v401
      %v636 = vpop.f32.mrf.mxu0
      %v637 = vadd.f32 %v618, %v636
      %v638 = vpop.f32.mrf.mxu0
      %v639 = vadd.f32 %v620, %v638
      %640 = vmatmul.bf16.gmra.mxu0 %v405
      %v641 = vpop.f32.mrf.mxu0
      %v642 = vadd.f32 %v623, %v641
      %v643 = vpop.f32.mrf.mxu0
      %v644 = vadd.f32 %v625, %v643
      %645 = vdwg.mxu0
      %646 = vmatpush.bf16.msra.mxu0 %v567
      %647 = vmatpush.bf16.msra.mxu0 %v566
      %648 = vmatpush.bf16.msra.mxu0 %v565
      %649 = vmatpush.bf16.msra.mxu0 %v564
      %650 = vmatpush.bf16.msra.mxu0 %v563
      %651 = vmatpush.bf16.msra.mxu0 %v562
      %652 = vmatpush.bf16.msra.mxu0 %v561
      %653 = vmatpush.bf16.msra.mxu0 %v560
      %654 = vmatmul.bf16.gmra.mxu0 %v402
      %v655 = vpop.f32.mrf.mxu0
      %v656 = vadd.f32 %v637, %v655
      %v657 = vpop.f32.mrf.mxu0
      %v658 = vadd.f32 %v639, %v657
      %659 = vmatmul.bf16.gmra.mxu0 %v406
      %v660 = vpop.f32.mrf.mxu0
      %v661 = vadd.f32 %v642, %v660
      %v662 = vpop.f32.mrf.mxu0
      %v663 = vadd.f32 %v644, %v662
      %664 = vdwg.mxu0
      %665 = vmatpush.bf16.msra.mxu0 %v575
      %666 = vmatpush.bf16.msra.mxu0 %v574
      %667 = vmatpush.bf16.msra.mxu0 %v573
      %668 = vmatpush.bf16.msra.mxu0 %v572
      %669 = vmatpush.bf16.msra.mxu0 %v571
      %670 = vmatpush.bf16.msra.mxu0 %v570
      %671 = vmatpush.bf16.msra.mxu0 %v569
      %672 = vmatpush.bf16.msra.mxu0 %v568
      %673 = vmatmul.bf16.gmra.mxu0 %v403
      %v674 = vpop.f32.mrf.mxu0
      %v675 = vadd.f32 %v656, %v674
      %v676 = vpop.f32.mrf.mxu0
      %v677 = vadd.f32 %v658, %v676
      %678 = vmatmul.bf16.gmra.mxu0 %v407
      %v679 = vpop.f32.mrf.mxu0
      %v680 = vadd.f32 %v661, %v679
      %v681 = vpop.f32.mrf.mxu0
      %v682 = vadd.f32 %v663, %v681
      %683 = vdwg.mxu0
      %v684 = vadd.f32 %v300, %v675
      %v685 = vadd.f32 %v301, %v677
      %v686 = vadd.f32 %v302, %v680
      %v687 = vadd.f32 %v303, %v682
      %vm688 = vcmask 523264
      %689 = vst.msk [vmem:[%s282] sm:$0xff] %vm688, %v684
      %690 = vst.msk [vmem:[%s282 + $0x8] sm:$0xff] %vm688, %v685
      %691 = vst.msk [vmem:[%s282 + $0x10] sm:$0xff] %vm688, %v686
      %692 = vst.msk [vmem:[%s282 + $0x18] sm:$0xff] %vm688, %v687
      // Predicated region
      $region33: #{_generator_forward.11} parent=27 // pred_check
        %p693 = pneg %p291
      $region34: #{_generator_forward.11} parent=27 // pred_check_branch
        %695 = sbr.rel (%p693) target = $region36
      $region35: #{_generator_forward.11} parent=27 // pred_region
        %v696 = vld [vmem:[%s282] sm:$0xff]
        %v697 = vld [vmem:[%s282 + $0x8] sm:$0xff]
        %v698 = vld [vmem:[%s282 + $0x10] sm:$0xff]
        %v699 = vld [vmem:[%s282 + $0x18] sm:$0xff]
        %v700 = vsel %vm688, %v696, 0.0
        %v701 = vsel %vm688, %v697, 0.0
        %v702 = vadd.f32 %v700, %v701
        %v703 = vsel %vm688, %v698, 0.0
        %v704 = vadd.f32 %v702, %v703
        %v705 = vsel %vm688, %v699, 0.0
        %v706 = vadd.f32 %v704, %v705
        %v707 = vrot.slane %v706, 4
        %v708 = vadd.f32 %v706, %v707
        %v709 = vrot.slane %v708, 2
        %v710 = vadd.f32 %v708, %v709
        %v711 = vrot.slane %v710, 1
        %v712 = vadd.f32 %v710, %v711
        %v713 = vmul.f32 %v696, %v696
        %v714 = vmul.f32 %v697, %v697
        %v715 = vmul.f32 %v698, %v698
        %v716 = vmul.f32 %v699, %v699
        %v717 = vsel %vm688, %v713, 0.0
        %v718 = vsel %vm688, %v714, 0.0
        %v719 = vadd.f32 %v717, %v718
        %v720 = vsel %vm688, %v715, 0.0
        %v721 = vadd.f32 %v719, %v720
        %v722 = vsel %vm688, %v716, 0.0
        %v723 = vadd.f32 %v721, %v722
        %v724 = vrot.slane %v723, 4
        %v725 = vadd.f32 %v723, %v724
        %v726 = vrot.slane %v725, 2
        %v727 = vadd.f32 %v725, %v726
        %v728 = vrot.slane %v727, 1
        %v729 = vadd.f32 %v727, %v728
        %vm730 = vcmask 1040384
        %v731 = vsel %vm730, %v712, %v729
        %vm732 = vcmask 517120
        %733 = vst.msk [vmem:[%s290] sm:$0x3] %vm732, %v731
      $region36: #{_generator_forward.11} parent=27 // pred_fallthru
        _
      %s734 = smul.u32 4, %s21
      %p735 = scmp.lt.s32.totalorder %s20, 3
      %s736 = scalar_select %p735, %s20, 3
      %p737 = scmp.lt.s32.totalorder %s734, 3
      %s738 = scalar_select %p737, %s734, 3
      %s739 = smul.addr %s736, 4
      %s740 = sadd.s32 %s738, %s739
      %s741 = smul.addr %s740, 8
      %s742 = scalar_lea.vmem %s2, %s741
      %p743 = scmp.lt.s32.totalorder %s20, 3
      %s744 = scalar_select %p743, %s20, 3
      %p745 = scmp.lt.s32.totalorder %s21, 0
      %s746 = scalar_select %p745, %s21, 0
      %s747 = sadd.s32 %s746, %s744
      %s748 = smul.addr %s747, 2
      %s749 = scalar_lea.vmem %s3, %s748
      // Predicated region
      $region37: #{_generator_forward.11} parent=27 // pred_check
        %p750 = pneg %p112
      $region38: #{_generator_forward.11} parent=27 // pred_check_branch
        %752 = sbr.rel (%p750) target = $region40
      $region39: #{_generator_forward.11} parent=27 // pred_region
        %s753 = smul.u32 4, %s21
      $region40: #{_generator_forward.11} parent=27 // pred_fallthru
        _
      // Predicated region
      $region41: #{_generator_forward.11} parent=27 // pred_check
        %p754 = pneg %p140
      $region42: #{_generator_forward.11} parent=27 // pred_check_branch
        %756 = sbr.rel (%p754) target = $region44
      $region43: #{_generator_forward.11} parent=27 // pred_region
        _
      $region44: #{_generator_forward.11} parent=27 // pred_fallthru
        _
    $region28: #{_generator_forward.11} parent=5 // pred_fallthru
      _
    %p757 = scmp.le.s32.totalorder 2, %s10
    // Predicated region
    $region45: #{_generator_forward.11} parent=5 // pred_check
      %p758 = pneg %p757
    $region46: #{_generator_forward.11} parent=5 // pred_check_branch
      %760 = sbr.rel (%p758) target = $region48
    $region47: #{_generator_forward.11} parent=5 // pred_region
      %s761 = ssub.s32 %s10, 2
      // Predicated region
      $region49: #{_generator_forward.11} parent=47 // pred_check
        %p762 = pneg %p118
      $region50: #{_generator_forward.11} parent=47 // pred_check_branch
        %764 = sbr.rel (%p762) target = $region52
      $region51: #{_generator_forward.11} parent=47 // pred_region
        %s765 = smul.u32 4, %s24
        %p766 = scmp.lt.s32.totalorder %s23, 3
        %s767 = scalar_select %p766, %s23, 3
        %p768 = scmp.lt.s32.totalorder %s765, 3
        %s769 = scalar_select %p768, %s765, 3
        %s770 = smul.addr %s767, 4
        %s771 = sadd.s32 %s769, %s770
        %s772 = smul.addr %s771, 8
        %s773 = scalar_lea.vmem %s2, %s772
      $region52: #{_generator_forward.11} parent=47 // pred_fallthru
        _
      // Predicated region
      $region53: #{_generator_forward.11} parent=47 // pred_check
        %p774 = pneg %p146
      $region54: #{_generator_forward.11} parent=47 // pred_check_branch
        %776 = sbr.rel (%p774) target = $region56
      $region55: #{_generator_forward.11} parent=47 // pred_region
        %p777 = scmp.lt.s32.totalorder %s23, 3
        %s778 = scalar_select %p777, %s23, 3
        %p779 = scmp.lt.s32.totalorder %s24, 0
        %s780 = scalar_select %p779, %s24, 0
        %s781 = sadd.s32 %s780, %s778
        %s782 = smul.addr %s781, 2
        %s783 = scalar_lea.vmem %s3, %s782
      $region56: #{_generator_forward.11} parent=47 // pred_fallthru
        _
    $region48: #{_generator_forward.11} parent=5 // pred_fallthru
      _
  $region6: #{_generator_forward.11} parent=0 // loop_footer
    %s14 = sadd.s32 1, %s10
  $region7: #{_generator_forward.11} parent=0 // loop_footer_branch
    %9 = sbr.rel target = $region3
  $region8: #{_generator_forward.11} parent=0 // loop_exit
    _

// kernel: _generator_forward.12
$region0: #{_generator_forward.12}
  #allocation0 [shape = 'u32[]', space=smem, size = 0x4, offset = 0x4, fixed_abs, tag = 'smem constant byte address 0x4 - core index']
  #allocation1 [shape = 'u32[72,128]{1,0:T(1,128)}', space=vmem, size = 0x9000, scoped, tag = 'internal scratch']
  %s0 = inlined_call_operand.vmem [shape: f32[128,64], index: 0, kind: input, shape index: {}]
  %s1 = inlined_call_operand.vmem [shape: f32[1,64], index: 1, kind: input, shape index: {}]
  %s2 = inlined_call_operand.vmem [shape: f32[1,64], index: 2, kind: input, shape index: {}]
  %s3 = inlined_call_operand.vmem [shape: bf16[128,64], index: 3, kind: output, shape index: {}]
  %s4 = sld [smem:[#allocation0]]
  $region22: #{_generator_forward.12} parent=0
    _
  %s6 = ssub.s32 1, %s4
  %s7 = scalar_select 0, %s6, %s4
  // Predicated region
  $region2: #{_generator_forward.12} parent=0 // pred_check
    _
  $region3: #{_generator_forward.12} parent=0 // pred_check_branch
    %9 = sbr.rel (0) target = $region5
  $region4: #{_generator_forward.12} parent=0 // pred_region
    _
  $region5: #{_generator_forward.12} parent=0 // pred_fallthru
    _
  // Predicated region
  $region6: #{_generator_forward.12} parent=0 // pred_check
    _
  $region7: #{_generator_forward.12} parent=0 // pred_check_branch
    %11 = sbr.rel (0) target = $region9
  $region8: #{_generator_forward.12} parent=0 // pred_region
    _
  $region9: #{_generator_forward.12} parent=0 // pred_fallthru
    _
  // Predicated region
  $region10: #{_generator_forward.12} parent=0 // pred_check
    _
  $region11: #{_generator_forward.12} parent=0 // pred_check_branch
    %13 = sbr.rel (0) target = $region13
  $region12: #{_generator_forward.12} parent=0 // pred_region
    _
  $region13: #{_generator_forward.12} parent=0 // pred_fallthru
    _
  %v14 = vld [vmem:[%s0] sm:$0xff]
  %v15 = vld [vmem:[%s0 + $0x8] sm:$0xff]
  %v16 = vld [vmem:[%s0 + $0x10] sm:$0xff]
  %v17 = vld [vmem:[%s0 + $0x18] sm:$0xff]
  %v18 = vld [vmem:[%s0 + $0x20] sm:$0xff]
  %v19 = vld [vmem:[%s0 + $0x28] sm:$0xff]
  %v20 = vld [vmem:[%s0 + $0x30] sm:$0xff]
  %v21 = vld [vmem:[%s0 + $0x38] sm:$0xff]
  %v22 = vld [vmem:[%s0 + $0x40] sm:$0xff]
  %v23 = vld [vmem:[%s0 + $0x48] sm:$0xff]
  %v24 = vld [vmem:[%s0 + $0x50] sm:$0xff]
  %v25 = vld [vmem:[%s0 + $0x58] sm:$0xff]
  %v26 = vld [vmem:[%s0 + $0x60] sm:$0xff]
  %v27 = vld [vmem:[%s0 + $0x68] sm:$0xff]
  %v28 = vld [vmem:[%s0 + $0x70] sm:$0xff]
  %v29 = vld [vmem:[%s0 + $0x78] sm:$0xff]
  %v30 = vld [vmem:[%s1] sm:$0x1]
  %v32 = vperm.slane %v30, 0
  %v34 = vmul.f32 %v14, %v32
  %v35 = vmul.f32 %v15, %v32
  %v36 = vmul.f32 %v16, %v32
  %v37 = vmul.f32 %v17, %v32
  %v38 = vmul.f32 %v18, %v32
  %v39 = vmul.f32 %v19, %v32
  %v40 = vmul.f32 %v20, %v32
  %v41 = vmul.f32 %v21, %v32
  %v42 = vmul.f32 %v22, %v32
  %v43 = vmul.f32 %v23, %v32
  %v44 = vmul.f32 %v24, %v32
  %v45 = vmul.f32 %v25, %v32
  %v46 = vmul.f32 %v26, %v32
  %v47 = vmul.f32 %v27, %v32
  %v48 = vmul.f32 %v28, %v32
  %v49 = vmul.f32 %v29, %v32
  %v50 = vld [vmem:[%s2] sm:$0x1]
  %v52 = vperm.slane %v50, 0
  %v54 = vadd.f32 %v34, %v52
  %v55 = vadd.f32 %v35, %v52
  %v56 = vadd.f32 %v36, %v52
  %v57 = vadd.f32 %v37, %v52
  %v58 = vadd.f32 %v38, %v52
  %v59 = vadd.f32 %v39, %v52
  %v60 = vadd.f32 %v40, %v52
  %v61 = vadd.f32 %v41, %v52
  %v62 = vadd.f32 %v42, %v52
  %v63 = vadd.f32 %v43, %v52
  %v64 = vadd.f32 %v44, %v52
  %v65 = vadd.f32 %v45, %v52
  %v66 = vadd.f32 %v46, %v52
  %v67 = vadd.f32 %v47, %v52
  %v68 = vadd.f32 %v48, %v52
  %v69 = vadd.f32 %v49, %v52
  %vm70 = vcmp.ge.f32.partialorder %v54, 0.0
  %vm71 = vcmp.ge.f32.partialorder %v55, 0.0
  %vm72 = vcmp.ge.f32.partialorder %v56, 0.0
  %vm73 = vcmp.ge.f32.partialorder %v57, 0.0
  %vm74 = vcmp.ge.f32.partialorder %v58, 0.0
  %vm75 = vcmp.ge.f32.partialorder %v59, 0.0
  %vm76 = vcmp.ge.f32.partialorder %v60, 0.0
  %vm77 = vcmp.ge.f32.partialorder %v61, 0.0
  %vm78 = vcmp.ge.f32.partialorder %v62, 0.0
  %vm79 = vcmp.ge.f32.partialorder %v63, 0.0
  %vm80 = vcmp.ge.f32.partialorder %v64, 0.0
  %vm81 = vcmp.ge.f32.partialorder %v65, 0.0
  %vm82 = vcmp.ge.f32.partialorder %v66, 0.0
  %vm83 = vcmp.ge.f32.partialorder %v67, 0.0
  %vm84 = vcmp.ge.f32.partialorder %v68, 0.0
  %vm85 = vcmp.ge.f32.partialorder %v69, 0.0
  %v86 = vmul.f32 %v54, 0.2
  %v87 = vmul.f32 %v55, 0.2
  %v88 = vmul.f32 %v56, 0.2
  %v89 = vmul.f32 %v57, 0.2
  %v90 = vmul.f32 %v58, 0.2
  %v91 = vmul.f32 %v59, 0.2
  %v92 = vmul.f32 %v60, 0.2
  %v93 = vmul.f32 %v61, 0.2
  %v94 = vmul.f32 %v62, 0.2
  %v95 = vmul.f32 %v63, 0.2
  %v96 = vmul.f32 %v64, 0.2
  %v97 = vmul.f32 %v65, 0.2
  %v98 = vmul.f32 %v66, 0.2
  %v99 = vmul.f32 %v67, 0.2
  %v100 = vmul.f32 %v68, 0.2
  %v101 = vmul.f32 %v69, 0.2
  %v102 = vsel %vm70, %v54, %v86
  %v103 = vsel %vm71, %v55, %v87
  %v104 = vsel %vm72, %v56, %v88
  %v105 = vsel %vm73, %v57, %v89
  %v106 = vsel %vm74, %v58, %v90
  %v107 = vsel %vm75, %v59, %v91
  %v108 = vsel %vm76, %v60, %v92
  %v109 = vsel %vm77, %v61, %v93
  %v110 = vsel %vm78, %v62, %v94
  %v111 = vsel %vm79, %v63, %v95
  %v112 = vsel %vm80, %v64, %v96
  %v113 = vsel %vm81, %v65, %v97
  %v114 = vsel %vm82, %v66, %v98
  %v115 = vsel %vm83, %v67, %v99
  %v116 = vsel %vm84, %v68, %v100
  %v117 = vsel %vm85, %v69, %v101
  %v118 = vpack.c.bf16 %v102, %v102
  %v119 = vpack.c.bf16 %v103, %v103
  %v120 = vpack.c.bf16 %v104, %v104
  %v121 = vpack.c.bf16 %v105, %v105
  %v122 = vpack.c.bf16 %v106, %v106
  %v123 = vpack.c.bf16 %v107, %v107
  %v124 = vpack.c.bf16 %v108, %v108
  %v125 = vpack.c.bf16 %v109, %v109
  %v126 = vpack.c.bf16 %v110, %v110
  %v127 = vpack.c.bf16 %v111, %v111
  %v128 = vpack.c.bf16 %v112, %v112
  %v129 = vpack.c.bf16 %v113, %v113
  %v130 = vpack.c.bf16 %v114, %v114
  %v131 = vpack.c.bf16 %v115, %v115
  %v132 = vpack.c.bf16 %v116, %v116
  %v133 = vpack.c.bf16 %v117, %v117
  %vm134 = vcmask 519168
  %135 = vst.msk [vmem:[%s3] sm:$0xf] %vm134, %v118
  %136 = vst.msk [vmem:[%s3 + $0x4] sm:$0xf] %vm134, %v119
  %137 = vst.msk [vmem:[%s3 + $0x8] sm:$0xf] %vm134, %v120
  %138 = vst.msk [vmem:[%s3 + $0xc] sm:$0xf] %vm134, %v121
  %139 = vst.msk [vmem:[%s3 + $0x10] sm:$0xf] %vm134, %v122
  %140 = vst.msk [vmem:[%s3 + $0x14] sm:$0xf] %vm134, %v123
  %141 = vst.msk [vmem:[%s3 + $0x18] sm:$0xf] %vm134, %v124
  %142 = vst.msk [vmem:[%s3 + $0x1c] sm:$0xf] %vm134, %v125
  %143 = vst.msk [vmem:[%s3 + $0x20] sm:$0xf] %vm134, %v126
  %144 = vst.msk [vmem:[%s3 + $0x24] sm:$0xf] %vm134, %v127
  %145 = vst.msk [vmem:[%s3 + $0x28] sm:$0xf] %vm134, %v128
  %146 = vst.msk [vmem:[%s3 + $0x2c] sm:$0xf] %vm134, %v129
  %147 = vst.msk [vmem:[%s3 + $0x30] sm:$0xf] %vm134, %v130
  %148 = vst.msk [vmem:[%s3 + $0x34] sm:$0xf] %vm134, %v131
  %149 = vst.msk [vmem:[%s3 + $0x38] sm:$0xf] %vm134, %v132
  %150 = vst.msk [vmem:[%s3 + $0x3c] sm:$0xf] %vm134, %v133
  // Predicated region
  $region14: #{_generator_forward.12} parent=0 // pred_check
    _
  $region15: #{_generator_forward.12} parent=0 // pred_check_branch
    %152 = sbr.rel (0) target = $region17
  $region16: #{_generator_forward.12} parent=0 // pred_region
    _
  $region17: #{_generator_forward.12} parent=0 // pred_fallthru
    _
  // Predicated region
  $region18: #{_generator_forward.12} parent=0 // pred_check
    _
  $region19: #{_generator_forward.12} parent=0 // pred_check_branch
    %154 = sbr.rel (0) target = $region21
  $region20: #{_generator_forward.12} parent=0 // pred_region
    _
  $region21: #{_generator_forward.12} parent=0 // pred_fallthru
    _

// kernel: _generator_forward.13
$region0: #{_generator_forward.13}
  #allocation0 [shape = 'u32[]', space=smem, size = 0x4, offset = 0x4, fixed_abs, tag = 'smem constant byte address 0x4 - core index']
  #allocation1 [shape = 'u32[72,128]{1,0:T(1,128)}', space=vmem, size = 0x9000, scoped, tag = 'internal scratch']
  %s0 = inlined_call_operand.vmem [shape: bf16[4,112,640], index: 0, kind: input, shape index: {}]
  %s1 = inlined_call_operand.vmem [shape: bf16[4,640,32], index: 1, kind: input, shape index: {}]
  %s2 = inlined_call_operand.vmem [shape: f32[4,112,32], index: 2, kind: output, shape index: {0}]
  %s3 = inlined_call_operand.vmem [shape: f32[4,1,2,32], index: 3, kind: output, shape index: {1}]
  %4 = xla_tuple %s2, %s3
  %s5 = sld [smem:[#allocation0]]
  $region57: #{_generator_forward.13} parent=0
    _
  %s7 = ssub.s32 1, %s5
  %s8 = scalar_select 0, %s7, %s5
  loop: start=0, step=1, limit=6
  $region2: #{_generator_forward.13} parent=0 // loop_pre_header
    _
  $region3: #{_generator_forward.13} parent=0 // loop_header
    %s10 = sphi 0, %s14
    %p11 = scmp.ge.s32.totalorder %s10, 6
    %s17 = sphi 0, %s36
    %s18 = sphi 0, %s32
    %s19 = sphi 0, %s28
    %s20 = sphi 0, %s17
    %s21 = sphi 0, %s18
    %s22 = sphi 0, %s19
    %s23 = sphi 0, %s20
    %s24 = sphi 0, %s21
    %s25 = sphi 0, %s22
    %s43 = sphi 0, %s45
    %s46 = sphi 0, %s43
    %s47 = sphi 0, %s46
    %s63 = sphi 0, %s47
    %s71 = sphi 0, %s73
    %s74 = sphi 0, %s71
    %s75 = sphi 0, %s74
    %s91 = sphi 0, %s75
    %s99 = sphi 0, %s101
    %s102 = sphi 0, %s99
    %s103 = sphi 0, %s102
    %s119 = sphi 0, %s103
    %s127 = sphi 0, %s129
    %s130 = sphi 0, %s127
    %s131 = sphi 0, %s130
    %s147 = sphi 0, %s131
  $region4: #{_generator_forward.13} parent=0 // loop_header_branch
    %13 = sbr.rel (%p11) target = $region8
  $region5: #{_generator_forward.13} parent=0 // loop_body
    %s15 = ssub.s32 %s10, 1
    %s16 = ssub.s32 %s10, 2
    %s26 = sadd.s32 1, %s19
    %p27 = scmp.ge.s32.totalorder %s26, 1
    %s28 = scalar_select %p27, 0, %s26
    %s29 = sadd.s32 1, %s18
    %s30 = scalar_select %p27, %s29, %s18
    %p31 = scmp.ge.s32.totalorder %s30, 1
    %s32 = scalar_select %p31, 0, %s30
    %s33 = sadd.s32 1, %s17
    %s34 = scalar_select %p31, %s33, %s17
    %p35 = scmp.ge.s32.totalorder %s34, 4
    %s36 = scalar_select %p35, 0, %s34
    %s37 = ssub.s32 %s17, %s36
    %s38 = ssub.s32 %s18, %s32
    %s39 = sor.u32 %s37, %s38
    %s40 = ssub.s32 %s19, %s28
    %s41 = sor.u32 %s39, %s40
    %p42 = scmp.eq.s32.totalorder %s41, 0
    %s44 = sadd.s32 %s43, 1
    %s45 = scalar_select %p42, %s43, %s44
    %p48 = pneg %p42
    %p49 = scmp.eq.s32.totalorder %s10, 3
    %p50 = por %p48, %p49
    %p51 = scmp.ne.s32.totalorder %s43, %s46
    %p52 = scmp.eq.s32.totalorder %s10, 0
    %p53 = por %p51, %p52
    %p54 = scmp.ne.s32.totalorder %s43, %s46
    %p55 = scmp.eq.s32.totalorder %s15, 3
    %p56 = por %p54, %p55
    %p57 = scmp.ne.s32.totalorder %s46, %s47
    %p58 = scmp.eq.s32.totalorder %s15, 0
    %p59 = por %p57, %p58
    %p60 = scmp.ne.s32.totalorder %s46, %s47
    %p61 = scmp.eq.s32.totalorder %s16, 3
    %p62 = por %p60, %p61
    %p64 = scmp.ne.s32.totalorder %s47, %s63
    %p65 = scmp.eq.s32.totalorder %s16, 0
    %p66 = por %p64, %p65
    %s67 = ssub.s32 %s17, %s36
    %s68 = ssub.s32 %s19, %s28
    %s69 = sor.u32 %s67, %s68
    %p70 = scmp.eq.s32.totalorder %s69, 0
    %s72 = sadd.s32 %s71, 1
    %s73 = scalar_select %p70, %s71, %s72
    %p76 = pneg %p70
    %p77 = scmp.eq.s32.totalorder %s10, 3
    %p78 = por %p76, %p77
    %p79 = scmp.ne.s32.totalorder %s71, %s74
    %p80 = scmp.eq.s32.totalorder %s10, 0
    %p81 = por %p79, %p80
    %p82 = scmp.ne.s32.totalorder %s71, %s74
    %p83 = scmp.eq.s32.totalorder %s15, 3
    %p84 = por %p82, %p83
    %p85 = scmp.ne.s32.totalorder %s74, %s75
    %p86 = scmp.eq.s32.totalorder %s15, 0
    %p87 = por %p85, %p86
    %p88 = scmp.ne.s32.totalorder %s74, %s75
    %p89 = scmp.eq.s32.totalorder %s16, 3
    %p90 = por %p88, %p89
    %p92 = scmp.ne.s32.totalorder %s75, %s91
    %p93 = scmp.eq.s32.totalorder %s16, 0
    %p94 = por %p92, %p93
    %s95 = ssub.s32 %s17, %s36
    %s96 = ssub.s32 %s18, %s32
    %s97 = sor.u32 %s95, %s96
    %p98 = scmp.eq.s32.totalorder %s97, 0
    %s100 = sadd.s32 %s99, 1
    %s101 = scalar_select %p98, %s99, %s100
    %p104 = pneg %p98
    %p105 = scmp.eq.s32.totalorder %s10, 3
    %p106 = por %p104, %p105
    %p107 = scmp.ne.s32.totalorder %s99, %s102
    %p108 = scmp.eq.s32.totalorder %s10, 0
    %p109 = por %p107, %p108
    %p110 = scmp.ne.s32.totalorder %s99, %s102
    %p111 = scmp.eq.s32.totalorder %s15, 3
    %p112 = por %p110, %p111
    %p113 = scmp.ne.s32.totalorder %s102, %s103
    %p114 = scmp.eq.s32.totalorder %s15, 0
    %p115 = por %p113, %p114
    %p116 = scmp.ne.s32.totalorder %s102, %s103
    %p117 = scmp.eq.s32.totalorder %s16, 3
    %p118 = por %p116, %p117
    %p120 = scmp.ne.s32.totalorder %s103, %s119
    %p121 = scmp.eq.s32.totalorder %s16, 0
    %p122 = por %p120, %p121
    %s123 = ssub.s32 %s17, %s36
    %s124 = ssub.s32 %s18, %s32
    %s125 = sor.u32 %s123, %s124
    %p126 = scmp.eq.s32.totalorder %s125, 0
    %s128 = sadd.s32 %s127, 1
    %s129 = scalar_select %p126, %s127, %s128
    %p132 = pneg %p126
    %p133 = scmp.eq.s32.totalorder %s10, 3
    %p134 = por %p132, %p133
    %p135 = scmp.ne.s32.totalorder %s127, %s130
    %p136 = scmp.eq.s32.totalorder %s10, 0
    %p137 = por %p135, %p136
    %p138 = scmp.ne.s32.totalorder %s127, %s130
    %p139 = scmp.eq.s32.totalorder %s15, 3
    %p140 = por %p138, %p139
    %p141 = scmp.ne.s32.totalorder %s130, %s131
    %p142 = scmp.eq.s32.totalorder %s15, 0
    %p143 = por %p141, %p142
    %p144 = scmp.ne.s32.totalorder %s130, %s131
    %p145 = scmp.eq.s32.totalorder %s16, 3
    %p146 = por %p144, %p145
    %p148 = scmp.ne.s32.totalorder %s131, %s147
    %p149 = scmp.eq.s32.totalorder %s16, 0
    %p150 = por %p148, %p149
    %p151 = scmp.le.s32.totalorder 1, %s10
    %p152 = scmp.lt.s32.totalorder %s10, 5
    %p153 = pnand %p151, %p152
    %p154 = pneg %p153
    // Predicated region
    $region9: #{_generator_forward.13} parent=5 // pred_check
      _
    $region10: #{_generator_forward.13} parent=5 // pred_check_branch
      %156 = sbr.rel (%p153) target = $region12
    $region11: #{_generator_forward.13} parent=5 // pred_region
      %s157 = ssub.s32 %s10, 1
    $region12: #{_generator_forward.13} parent=5 // pred_fallthru
      _
    %p158 = scmp.lt.s32.totalorder %s10, 4
    // Predicated region
    $region13: #{_generator_forward.13} parent=5 // pred_check
      %p159 = pneg %p158
    $region14: #{_generator_forward.13} parent=5 // pred_check_branch
      %161 = sbr.rel (%p159) target = $region16
    $region15: #{_generator_forward.13} parent=5 // pred_region
      // Predicated region
      $region17: #{_generator_forward.13} parent=15 // pred_check
        %p162 = pneg %p53
      $region18: #{_generator_forward.13} parent=15 // pred_check_branch
        %164 = sbr.rel (%p162) target = $region20
      $region19: #{_generator_forward.13} parent=15 // pred_region
        %s165 = smul.u32 14, %s18
        %s166 = smul.u32 5, %s19
        %p167 = scmp.lt.s32.totalorder %s17, 3
        %s168 = scalar_select %p167, %s17, 3
        %p169 = scmp.lt.s32.totalorder %s165, 13
        %s170 = scalar_select %p169, %s165, 13
        %p171 = scmp.lt.s32.totalorder %s166, 4
        %s172 = scalar_select %p171, %s166, 4
        %s173 = smul.addr %s170, 5
        %s174 = sadd.s32 %s172, %s173
        %s175 = smul.addr %s168, 70
        %s176 = sadd.s32 %s174, %s175
        %s177 = smul.addr %s176, 4
        %s178 = scalar_lea.vmem %s0, %s177
        %s179 = smul.u32 14, %s18
        %s180 = smul.u32 5, %s19
      $region20: #{_generator_forward.13} parent=15 // pred_fallthru
        _
      // Predicated region
      $region21: #{_generator_forward.13} parent=15 // pred_check
        %p181 = pneg %p81
      $region22: #{_generator_forward.13} parent=15 // pred_check_branch
        %183 = sbr.rel (%p181) target = $region24
      $region23: #{_generator_forward.13} parent=15 // pred_region
        %s184 = smul.u32 80, %s19
        %p185 = scmp.lt.s32.totalorder %s17, 3
        %s186 = scalar_select %p185, %s17, 3
        %p187 = scmp.lt.s32.totalorder %s184, 79
        %s188 = scalar_select %p187, %s184, 79
        %s189 = smul.addr %s186, 80
        %s190 = sadd.s32 %s188, %s189
        %s191 = smul.addr %s190, 4
        %s192 = scalar_lea.vmem %s1, %s191
        %s193 = smul.u32 80, %s19
      $region24: #{_generator_forward.13} parent=15 // pred_fallthru
        _
    $region16: #{_generator_forward.13} parent=5 // pred_fallthru
      _
    %p194 = scmp.le.s32.totalorder 1, %s10
    %p195 = scmp.lt.s32.totalorder %s10, 5
    %p196 = pnand %p194, %p195
    %p197 = pneg %p196
    // Predicated region
    $region25: #{_generator_forward.13} parent=5 // pred_check
      _
    $region26: #{_generator_forward.13} parent=5 // pred_check_branch
      %199 = sbr.rel (%p196) target = $region28
    $region27: #{_generator_forward.13} parent=5 // pred_region
      %s200 = ssub.s32 %s10, 1
      %s201 = smul.u32 14, %s21
      %s202 = smul.u32 5, %s22
      %p203 = scmp.lt.s32.totalorder %s20, 3
      %s204 = scalar_select %p203, %s20, 3
      %p205 = scmp.lt.s32.totalorder %s201, 13
      %s206 = scalar_select %p205, %s201, 13
      %p207 = scmp.lt.s32.totalorder %s202, 4
      %s208 = scalar_select %p207, %s202, 4
      %s209 = smul.addr %s206, 5
      %s210 = sadd.s32 %s208, %s209
      %s211 = smul.addr %s204, 70
      %s212 = sadd.s32 %s210, %s211
      %s213 = smul.addr %s212, 4
      %s214 = scalar_lea.vmem %s0, %s213
      %p215 = pneg %p59
      %p216 = pneg %p56
      %s217 = smul.u32 80, %s22
      %p218 = scmp.lt.s32.totalorder %s20, 3
      %s219 = scalar_select %p218, %s20, 3
      %p220 = scmp.lt.s32.totalorder %s217, 79
      %s221 = scalar_select %p220, %s217, 79
      %s222 = smul.addr %s219, 80
      %s223 = sadd.s32 %s221, %s222
      %s224 = smul.addr %s223, 4
      %s225 = scalar_lea.vmem %s1, %s224
      %p226 = pneg %p87
      %p227 = pneg %p84
      %p228 = pneg %p115
      %p229 = pneg %p112
      %s230 = smul.u32 14, %s21
      %p231 = scmp.lt.s32.totalorder %s20, 3
      %s232 = scalar_select %p231, %s20, 3
      %p233 = scmp.lt.s32.totalorder %s230, 13
      %s234 = scalar_select %p233, %s230, 13
      %s235 = smul.addr %s232, 14
      %s236 = sadd.s32 %s234, %s235
      %s237 = smul.addr %s236, 8
      %s238 = scalar_lea.vmem %s2, %s237
      %p239 = pneg %p143
      %p240 = pneg %p140
      %p241 = scmp.lt.s32.totalorder %s20, 3
      %s242 = scalar_select %p241, %s20, 3
      %p243 = scmp.lt.s32.totalorder %s21, 0
      %s244 = scalar_select %p243, %s21, 0
      %s245 = sadd.s32 %s244, %s242
      %s246 = smul.addr %s245, 2
      %s247 = scalar_lea.vmem %s3, %s246
      %s248 = smul.u32 14, %s21
      %s249 = smul.u32 5, %s22
      %p250 = scmp.lt.s32.totalorder %s20, 3
      %s251 = scalar_select %p250, %s20, 3
      %p252 = scmp.lt.s32.totalorder %s248, 13
      %s253 = scalar_select %p252, %s248, 13
      %p254 = scmp.lt.s32.totalorder %s249, 4
      %s255 = scalar_select %p254, %s249, 4
      %s256 = smul.addr %s253, 5
      %s257 = sadd.s32 %s255, %s256
      %s258 = smul.addr %s251, 70
      %s259 = sadd.s32 %s257, %s258
      %s260 = smul.addr %s259, 4
      %s261 = scalar_lea.vmem %s0, %s260
      %s262 = smul.u32 14, %s21
      %s263 = smul.u32 5, %s22
      %s264 = smul.u32 80, %s22
      %p265 = scmp.lt.s32.totalorder %s20, 3
      %s266 = scalar_select %p265, %s20, 3
      %p267 = scmp.lt.s32.totalorder %s264, 79
      %s268 = scalar_select %p267, %s264, 79
      %s269 = smul.addr %s266, 80
      %s270 = sadd.s32 %s268, %s269
      %s271 = smul.addr %s270, 4
      %s272 = scalar_lea.vmem %s1, %s271
      %s273 = smul.u32 80, %s22
      %s274 = smul.u32 14, %s21
      %p275 = scmp.lt.s32.totalorder %s20, 3
      %s276 = scalar_select %p275, %s20, 3
      %p277 = scmp.lt.s32.totalorder %s274, 13
      %s278 = scalar_select %p277, %s274, 13
      %s279 = smul.addr %s276, 14
      %s280 = sadd.s32 %s278, %s279
      %s281 = smul.addr %s280, 8
      %s282 = scalar_lea.vmem %s2, %s281
      %s283 = smul.u32 14, %s21
      %p284 = scmp.lt.s32.totalorder %s20, 3
      %s285 = scalar_select %p284, %s20, 3
      %p286 = scmp.lt.s32.totalorder %s21, 0
      %s287 = scalar_select %p286, %s21, 0
      %s288 = sadd.s32 %s287, %s285
      %s289 = smul.addr %s288, 2
      %s290 = scalar_lea.vmem %s3, %s289
      %p291 = scmp.eq.s32.totalorder %s22, 0
      // Predicated region
      $region29: #{_generator_forward.13} parent=27 // pred_check
        %p292 = pneg %p291
      $region30: #{_generator_forward.13} parent=27 // pred_check_branch
        %294 = sbr.rel (%p292) target = $region32
      $region31: #{_generator_forward.13} parent=27 // pred_region
        %vm295 = vcmask 261120
        %296 = vst.msk [vmem:[%s282] sm:$0xff] %vm295, 0.0
        %297 = vst.msk [vmem:[%s282 + $0x8] sm:$0xff] %vm295, 0.0
        %298 = vst.msk [vmem:[%s282 + $0x10] sm:$0xff] %vm295, 0.0
        %299 = vst.msk [vmem:[%s282 + $0x18] sm:$0xff] %vm295, 0.0
        %300 = vst.msk [vmem:[%s282 + $0x20] sm:$0xff] %vm295, 0.0
        %301 = vst.msk [vmem:[%s282 + $0x28] sm:$0xff] %vm295, 0.0
        %302 = vst.msk [vmem:[%s282 + $0x30] sm:$0xff] %vm295, 0.0
        %303 = vst.msk [vmem:[%s282 + $0x38] sm:$0xff] %vm295, 0.0
        %304 = vst.msk [vmem:[%s282 + $0x40] sm:$0xff] %vm295, 0.0
        %305 = vst.msk [vmem:[%s282 + $0x48] sm:$0xff] %vm295, 0.0
        %306 = vst.msk [vmem:[%s282 + $0x50] sm:$0xff] %vm295, 0.0
        %307 = vst.msk [vmem:[%s282 + $0x58] sm:$0xff] %vm295, 0.0
        %308 = vst.msk [vmem:[%s282 + $0x60] sm:$0xff] %vm295, 0.0
        %309 = vst.msk [vmem:[%s282 + $0x68] sm:$0xff] %vm295, 0.0
      $region32: #{_generator_forward.13} parent=27 // pred_fallthru
        _
      %v310 = vld [vmem:[%s282] sm:$0xff]
      %v311 = vld [vmem:[%s282 + $0x8] sm:$0xff]
      %v312 = vld [vmem:[%s282 + $0x10] sm:$0xff]
      %v313 = vld [vmem:[%s282 + $0x18] sm:$0xff]
      %v314 = vld [vmem:[%s282 + $0x20] sm:$0xff]
      %v315 = vld [vmem:[%s282 + $0x28] sm:$0xff]
      %v316 = vld [vmem:[%s282 + $0x30] sm:$0xff]
      %v317 = vld [vmem:[%s282 + $0x38] sm:$0xff]
      %v318 = vld [vmem:[%s282 + $0x40] sm:$0xff]
      %v319 = vld [vmem:[%s282 + $0x48] sm:$0xff]
      %v320 = vld [vmem:[%s282 + $0x50] sm:$0xff]
      %v321 = vld [vmem:[%s282 + $0x58] sm:$0xff]
      %v322 = vld [vmem:[%s282 + $0x60] sm:$0xff]
      %v323 = vld [vmem:[%s282 + $0x68] sm:$0xff]
      %v324 = vld [vmem:[%s261] sm:$0xff]
      %v325 = vld [vmem:[%s261 + $0x8] sm:$0xff]
      %v326 = vld [vmem:[%s261 + $0x10] sm:$0xf]
      %v327 = vld [vmem:[%s261 + $0x14] sm:$0xff]
      %v328 = vld [vmem:[%s261 + $0x1c] sm:$0xff]
      %v329 = vld [vmem:[%s261 + $0x24] sm:$0xf]
      %v330 = vld [vmem:[%s261 + $0x28] sm:$0xff]
      %v331 = vld [vmem:[%s261 + $0x30] sm:$0xff]
      %v332 = vld [vmem:[%s261 + $0x38] sm:$0xf]
      %v333 = vld [vmem:[%s261 + $0x3c] sm:$0xff]
      %v334 = vld [vmem:[%s261 + $0x44] sm:$0xff]
      %v335 = vld [vmem:[%s261 + $0x4c] sm:$0xf]
      %v336 = vld [vmem:[%s261 + $0x50] sm:$0xff]
      %v337 = vld [vmem:[%s261 + $0x58] sm:$0xff]
      %v338 = vld [vmem:[%s261 + $0x60] sm:$0xf]
      %v339 = vld [vmem:[%s261 + $0x64] sm:$0xff]
      %v340 = vld [vmem:[%s261 + $0x6c] sm:$0xff]
      %v341 = vld [vmem:[%s261 + $0x74] sm:$0xf]
      %v342 = vld [vmem:[%s261 + $0x78] sm:$0xff]
      %v343 = vld [vmem:[%s261 + $0x80] sm:$0xff]
      %v344 = vld [vmem:[%s261 + $0x88] sm:$0xf]
      %v345 = vld [vmem:[%s261 + $0x8c] sm:$0xff]
      %v346 = vld [vmem:[%s261 + $0x94] sm:$0xff]
      %v347 = vld [vmem:[%s261 + $0x9c] sm:$0xf]
      %v348 = vld [vmem:[%s261 + $0xa0] sm:$0xff]
      %v349 = vld [vmem:[%s261 + $0xa8] sm:$0xff]
      %v350 = vld [vmem:[%s261 + $0xb0] sm:$0xf]
      %v351 = vld [vmem:[%s261 + $0xb4] sm:$0xff]
      %v352 = vld [vmem:[%s261 + $0xbc] sm:$0xff]
      %v353 = vld [vmem:[%s261 + $0xc4] sm:$0xf]
      %v354 = vld [vmem:[%s261 + $0xc8] sm:$0xff]
      %v355 = vld [vmem:[%s261 + $0xd0] sm:$0xff]
      %v356 = vld [vmem:[%s261 + $0xd8] sm:$0xf]
      %v357 = vld [vmem:[%s261 + $0xdc] sm:$0xff]
      %v358 = vld [vmem:[%s261 + $0xe4] sm:$0xff]
      %v359 = vld [vmem:[%s261 + $0xec] sm:$0xf]
      %v360 = vld [vmem:[%s261 + $0xf0] sm:$0xff]
      %v361 = vld [vmem:[%s261 + $0xf8] sm:$0xff]
      %v362 = vld [vmem:[%s261 + $0x100] sm:$0xf]
      %v363 = vld [vmem:[%s261 + $0x104] sm:$0xff]
      %v364 = vld [vmem:[%s261 + $0x10c] sm:$0xff]
      %v365 = vld [vmem:[%s261 + $0x114] sm:$0xf]
      %v366 = vld [vmem:[%s272] sm:$0xf]
      %v367 = vld [vmem:[%s272 + $0x4] sm:$0xf]
      %v368 = vld [vmem:[%s272 + $0x8] sm:$0xf]
      %v369 = vld [vmem:[%s272 + $0xc] sm:$0xf]
      %v370 = vld [vmem:[%s272 + $0x10] sm:$0xf]
      %v371 = vld [vmem:[%s272 + $0x14] sm:$0xf]
      %v372 = vld [vmem:[%s272 + $0x18] sm:$0xf]
      %v373 = vld [vmem:[%s272 + $0x1c] sm:$0xf]
      %v374 = vld [vmem:[%s272 + $0x20] sm:$0xf]
      %v375 = vld [vmem:[%s272 + $0x24] sm:$0xf]
      %v376 = vld [vmem:[%s272 + $0x28] sm:$0xf]
      %v377 = vld [vmem:[%s272 + $0x2c] sm:$0xf]
      %v378 = vld [vmem:[%s272 + $0x30] sm:$0xf]
      %v379 = vld [vmem:[%s272 + $0x34] sm:$0xf]
      %v380 = vld [vmem:[%s272 + $0x38] sm:$0xf]
      %v381 = vld [vmem:[%s272 + $0x3c] sm:$0xf]
      %v382 = vld [vmem:[%s272 + $0x40] sm:$0xf]
      %v383 = vld [vmem:[%s272 + $0x44] sm:$0xf]
      %v384 = vld [vmem:[%s272 + $0x48] sm:$0xf]
      %v385 = vld [vmem:[%s272 + $0x4c] sm:$0xf]
      %v386 = vld [vmem:[%s272 + $0x50] sm:$0xf]
      %v387 = vld [vmem:[%s272 + $0x54] sm:$0xf]
      %v388 = vld [vmem:[%s272 + $0x58] sm:$0xf]
      %v389 = vld [vmem:[%s272 + $0x5c] sm:$0xf]
      %v390 = vld [vmem:[%s272 + $0x60] sm:$0xf]
      %v391 = vld [vmem:[%s272 + $0x64] sm:$0xf]
      %v392 = vld [vmem:[%s272 + $0x68] sm:$0xf]
      %v393 = vld [vmem:[%s272 + $0x6c] sm:$0xf]
      %v394 = vld [vmem:[%s272 + $0x70] sm:$0xf]
      %v395 = vld [vmem:[%s272 + $0x74] sm:$0xf]
      %v396 = vld [vmem:[%s272 + $0x78] sm:$0xf]
      %v397 = vld [vmem:[%s272 + $0x7c] sm:$0xf]
      %v398 = vld [vmem:[%s272 + $0x80] sm:$0xf]
      %v399 = vld [vmem:[%s272 + $0x84] sm:$0xf]
      %v400 = vld [vmem:[%s272 + $0x88] sm:$0xf]
      %v401 = vld [vmem:[%s272 + $0x8c] sm:$0xf]
      %v402 = vld [vmem:[%s272 + $0x90] sm:$0xf]
      %v403 = vld [vmem:[%s272 + $0x94] sm:$0xf]
      %v404 = vld [vmem:[%s272 + $0x98] sm:$0xf]
      %v405 = vld [vmem:[%s272 + $0x9c] sm:$0xf]
      %v406 = vld [vmem:[%s272 + $0xa0] sm:$0xf]
      %v407 = vld [vmem:[%s272 + $0xa4] sm:$0xf]
      %v408 = vld [vmem:[%s272 + $0xa8] sm:$0xf]
      %v409 = vld [vmem:[%s272 + $0xac] sm:$0xf]
      %v410 = vld [vmem:[%s272 + $0xb0] sm:$0xf]
      %v411 = vld [vmem:[%s272 + $0xb4] sm:$0xf]
      %v412 = vld [vmem:[%s272 + $0xb8] sm:$0xf]
      %v413 = vld [vmem:[%s272 + $0xbc] sm:$0xf]
      %v414 = vld [vmem:[%s272 + $0xc0] sm:$0xf]
      %v415 = vld [vmem:[%s272 + $0xc4] sm:$0xf]
      %v416 = vld [vmem:[%s272 + $0xc8] sm:$0xf]
      %v417 = vld [vmem:[%s272 + $0xcc] sm:$0xf]
      %v418 = vld [vmem:[%s272 + $0xd0] sm:$0xf]
      %v419 = vld [vmem:[%s272 + $0xd4] sm:$0xf]
      %v420 = vld [vmem:[%s272 + $0xd8] sm:$0xf]
      %v421 = vld [vmem:[%s272 + $0xdc] sm:$0xf]
      %v422 = vld [vmem:[%s272 + $0xe0] sm:$0xf]
      %v423 = vld [vmem:[%s272 + $0xe4] sm:$0xf]
      %v424 = vld [vmem:[%s272 + $0xe8] sm:$0xf]
      %v425 = vld [vmem:[%s272 + $0xec] sm:$0xf]
      %v426 = vld [vmem:[%s272 + $0xf0] sm:$0xf]
      %v427 = vld [vmem:[%s272 + $0xf4] sm:$0xf]
      %v428 = vld [vmem:[%s272 + $0xf8] sm:$0xf]
      %v429 = vld [vmem:[%s272 + $0xfc] sm:$0xf]
      %v430 = vld [vmem:[%s272 + $0x100] sm:$0xf]
      %v431 = vld [vmem:[%s272 + $0x104] sm:$0xf]
      %v432 = vld [vmem:[%s272 + $0x108] sm:$0xf]
      %v433 = vld [vmem:[%s272 + $0x10c] sm:$0xf]
      %v434 = vld [vmem:[%s272 + $0x110] sm:$0xf]
      %v435 = vld [vmem:[%s272 + $0x114] sm:$0xf]
      %v436 = vld [vmem:[%s272 + $0x118] sm:$0xf]
      %v437 = vld [vmem:[%s272 + $0x11c] sm:$0xf]
      %v438 = vld [vmem:[%s272 + $0x120] sm:$0xf]
      %v439 = vld [vmem:[%s272 + $0x124] sm:$0xf]
      %v440 = vld [vmem:[%s272 + $0x128] sm:$0xf]
      %v441 = vld [vmem:[%s272 + $0x12c] sm:$0xf]
      %v442 = vld [vmem:[%s272 + $0x130] sm:$0xf]
      %v443 = vld [vmem:[%s272 + $0x134] sm:$0xf]
      %v444 = vld [vmem:[%s272 + $0x138] sm:$0xf]
      %v445 = vld [vmem:[%s272 + $0x13c] sm:$0xf]
      %v488 = vunpack.c.l.b16 %v324
      %v489 = vunpack.c.h.b16 %v324
      %v490 = vunpack.c.l.b16 %v325
      %v491 = vunpack.c.h.b16 %v325
      %v492 = vunpack.c.l.b16 %v326
      %v493 = vunpack.c.l.b16 %v327
      %v494 = vunpack.c.h.b16 %v327
      %v495 = vunpack.c.l.b16 %v328
      %v496 = vunpack.c.h.b16 %v328
      %v497 = vunpack.c.l.b16 %v329
      %v498 = vunpack.c.l.b16 %v330
      %v499 = vunpack.c.h.b16 %v330
      %v500 = vunpack.c.l.b16 %v331
      %v501 = vunpack.c.h.b16 %v331
      %v502 = vunpack.c.l.b16 %v332
      %v503 = vunpack.c.l.b16 %v333
      %v504 = vunpack.c.h.b16 %v333
      %v505 = vunpack.c.l.b16 %v334
      %v506 = vunpack.c.h.b16 %v334
      %v507 = vunpack.c.l.b16 %v335
      %v508 = vunpack.c.l.b16 %v336
      %v509 = vunpack.c.h.b16 %v336
      %v510 = vunpack.c.l.b16 %v337
      %v511 = vunpack.c.h.b16 %v337
      %v512 = vunpack.c.l.b16 %v338
      %v513 = vunpack.c.l.b16 %v339
      %v514 = vunpack.c.h.b16 %v339
      %v515 = vunpack.c.l.b16 %v340
      %v516 = vunpack.c.h.b16 %v340
      %v517 = vunpack.c.l.b16 %v341
      %v518 = vunpack.c.l.b16 %v342
      %v519 = vunpack.c.h.b16 %v342
      %v520 = vunpack.c.l.b16 %v343
      %v521 = vunpack.c.h.b16 %v343
      %v522 = vunpack.c.l.b16 %v344
      %v523 = vunpack.c.l.b16 %v345
      %v524 = vunpack.c.h.b16 %v345
      %v525 = vunpack.c.l.b16 %v346
      %v526 = vunpack.c.h.b16 %v346
      %v527 = vunpack.c.l.b16 %v347
      %v528 = vunpack.c.l.b16 %v348
      %v529 = vunpack.c.h.b16 %v348
      %v530 = vunpack.c.l.b16 %v349
      %v531 = vunpack.c.h.b16 %v349
      %v532 = vunpack.c.l.b16 %v350
      %v533 = vunpack.c.l.b16 %v351
      %v534 = vunpack.c.h.b16 %v351
      %v535 = vunpack.c.l.b16 %v352
      %v536 = vunpack.c.h.b16 %v352
      %v537 = vunpack.c.l.b16 %v353
      %v538 = vunpack.c.l.b16 %v354
      %v539 = vunpack.c.h.b16 %v354
      %v540 = vunpack.c.l.b16 %v355
      %v541 = vunpack.c.h.b16 %v355
      %v542 = vunpack.c.l.b16 %v356
      %v543 = vunpack.c.l.b16 %v357
      %v544 = vunpack.c.h.b16 %v357
      %v545 = vunpack.c.l.b16 %v358
      %v546 = vunpack.c.h.b16 %v358
      %v547 = vunpack.c.l.b16 %v359
      %v548 = vunpack.c.l.b16 %v360
      %v549 = vunpack.c.h.b16 %v360
      %v550 = vunpack.c.l.b16 %v361
      %v551 = vunpack.c.h.b16 %v361
      %v552 = vunpack.c.l.b16 %v362
      %v553 = vunpack.c.l.b16 %v363
      %v554 = vunpack.c.h.b16 %v363
      %v555 = vunpack.c.l.b16 %v364
      %v556 = vunpack.c.h.b16 %v364
      %v557 = vunpack.c.l.b16 %v365
      %v558 = vpack.c.b16 %v493, %v488
      %v559 = vpack.c.b16 %v494, %v489
      %v560 = vpack.c.b16 %v495, %v490
      %v561 = vpack.c.b16 %v496, %v491
      %v562 = vpack.c.b16 %v497, %v492
      %v563 = vpack.c.b16 %v503, %v498
      %v564 = vpack.c.b16 %v504, %v499
      %v565 = vpack.c.b16 %v505, %v500
      %v566 = vpack.c.b16 %v506, %v501
      %v567 = vpack.c.b16 %v507, %v502
      %v568 = vpack.c.b16 %v513, %v508
      %v569 = vpack.c.b16 %v514, %v509
      %v570 = vpack.c.b16 %v515, %v510
      %v571 = vpack.c.b16 %v516, %v511
      %v572 = vpack.c.b16 %v517, %v512
      %v573 = vpack.c.b16 %v523, %v518
      %v574 = vpack.c.b16 %v524, %v519
      %v575 = vpack.c.b16 %v525, %v520
      %v576 = vpack.c.b16 %v526, %v521
      %v577 = vpack.c.b16 %v527, %v522
      %v578 = vpack.c.b16 %v533, %v528
      %v579 = vpack.c.b16 %v534, %v529
      %v580 = vpack.c.b16 %v535, %v530
      %v581 = vpack.c.b16 %v536, %v531
      %v582 = vpack.c.b16 %v537, %v532
      %v583 = vpack.c.b16 %v543, %v538
      %v584 = vpack.c.b16 %v544, %v539
      %v585 = vpack.c.b16 %v545, %v540
      %v586 = vpack.c.b16 %v546, %v541
      %v587 = vpack.c.b16 %v547, %v542
      %v588 = vpack.c.b16 %v553, %v548
      %v589 = vpack.c.b16 %v554, %v549
      %v590 = vpack.c.b16 %v555, %v550
      %v591 = vpack.c.b16 %v556, %v551
      %v592 = vpack.c.b16 %v557, %v552
      %v708 = vunpack.c.l.b16 %v366
      %v709 = vunpack.c.l.b16 %v367
      %v710 = vunpack.c.l.b16 %v368
      %v711 = vunpack.c.l.b16 %v369
      %v712 = vunpack.c.l.b16 %v370
      %v713 = vunpack.c.l.b16 %v371
      %v714 = vunpack.c.l.b16 %v372
      %v715 = vunpack.c.l.b16 %v373
      %v716 = vunpack.c.l.b16 %v374
      %v717 = vunpack.c.l.b16 %v375
      %v718 = vunpack.c.l.b16 %v376
      %v719 = vunpack.c.l.b16 %v377
      %v720 = vunpack.c.l.b16 %v378
      %v721 = vunpack.c.l.b16 %v379
      %v722 = vunpack.c.l.b16 %v380
      %v723 = vunpack.c.l.b16 %v381
      %v724 = vunpack.c.l.b16 %v382
      %v725 = vunpack.c.l.b16 %v383
      %v726 = vunpack.c.l.b16 %v384
      %v727 = vunpack.c.l.b16 %v385
      %v728 = vunpack.c.l.b16 %v386
      %v729 = vunpack.c.l.b16 %v387
      %v730 = vunpack.c.l.b16 %v388
      %v731 = vunpack.c.l.b16 %v389
      %v732 = vunpack.c.l.b16 %v390
      %v733 = vunpack.c.l.b16 %v391
      %v734 = vunpack.c.l.b16 %v392
      %v735 = vunpack.c.l.b16 %v393
      %v736 = vunpack.c.l.b16 %v394
      %v737 = vunpack.c.l.b16 %v395
      %v738 = vunpack.c.l.b16 %v396
      %v739 = vunpack.c.l.b16 %v397
      %v740 = vunpack.c.l.b16 %v398
      %v741 = vunpack.c.l.b16 %v399
      %v742 = vunpack.c.l.b16 %v400
      %v743 = vunpack.c.l.b16 %v401
      %v744 = vunpack.c.l.b16 %v402
      %v745 = vunpack.c.l.b16 %v403
      %v746 = vunpack.c.l.b16 %v404
      %v747 = vunpack.c.l.b16 %v405
      %v748 = vunpack.c.l.b16 %v406
      %v749 = vunpack.c.l.b16 %v407
      %v750 = vunpack.c.l.b16 %v408
      %v751 = vunpack.c.l.b16 %v409
      %v752 = vunpack.c.l.b16 %v410
      %v753 = vunpack.c.l.b16 %v411
      %v754 = vunpack.c.l.b16 %v412
      %v755 = vunpack.c.l.b16 %v413
      %v756 = vunpack.c.l.b16 %v414
      %v757 = vunpack.c.l.b16 %v415
      %v758 = vunpack.c.l.b16 %v416
      %v759 = vunpack.c.l.b16 %v417
      %v760 = vunpack.c.l.b16 %v418
      %v761 = vunpack.c.l.b16 %v419
      %v762 = vunpack.c.l.b16 %v420
      %v763 = vunpack.c.l.b16 %v421
      %v764 = vunpack.c.l.b16 %v422
      %v765 = vunpack.c.l.b16 %v423
      %v766 = vunpack.c.l.b16 %v424
      %v767 = vunpack.c.l.b16 %v425
      %v768 = vunpack.c.l.b16 %v426
      %v769 = vunpack.c.l.b16 %v427
      %v770 = vunpack.c.l.b16 %v428
      %v771 = vunpack.c.l.b16 %v429
      %v772 = vunpack.c.l.b16 %v430
      %v773 = vunpack.c.l.b16 %v431
      %v774 = vunpack.c.l.b16 %v432
      %v775 = vunpack.c.l.b16 %v433
      %v776 = vunpack.c.l.b16 %v434
      %v777 = vunpack.c.l.b16 %v435
      %v778 = vunpack.c.l.b16 %v436
      %v779 = vunpack.c.l.b16 %v437
      %v780 = vunpack.c.l.b16 %v438
      %v781 = vunpack.c.l.b16 %v439
      %v782 = vunpack.c.l.b16 %v440
      %v783 = vunpack.c.l.b16 %v441
      %v784 = vunpack.c.l.b16 %v442
      %v785 = vunpack.c.l.b16 %v443
      %v786 = vunpack.c.l.b16 %v444
      %v787 = vunpack.c.l.b16 %v445
      %v788 = vpack.c.b16 %v709, %v708
      %v789 = vpack.c.b16 %v711, %v710
      %v790 = vpack.c.b16 %v713, %v712
      %v791 = vpack.c.b16 %v715, %v714
      %v792 = vpack.c.b16 %v717, %v716
      %v793 = vpack.c.b16 %v719, %v718
      %v794 = vpack.c.b16 %v721, %v720
      %v795 = vpack.c.b16 %v723, %v722
      %v796 = vpack.c.b16 %v725, %v724
      %v797 = vpack.c.b16 %v727, %v726
      %v798 = vpack.c.b16 %v729, %v728
      %v799 = vpack.c.b16 %v731, %v730
      %v800 = vpack.c.b16 %v733, %v732
      %v801 = vpack.c.b16 %v735, %v734
      %v802 = vpack.c.b16 %v737, %v736
      %v803 = vpack.c.b16 %v739, %v738
      %v804 = vpack.c.b16 %v741, %v740
      %v805 = vpack.c.b16 %v743, %v742
      %v806 = vpack.c.b16 %v745, %v744
      %v807 = vpack.c.b16 %v747, %v746
      %v808 = vpack.c.b16 %v749, %v748
      %v809 = vpack.c.b16 %v751, %v750
      %v810 = vpack.c.b16 %v753, %v752
      %v811 = vpack.c.b16 %v755, %v754
      %v812 = vpack.c.b16 %v757, %v756
      %v813 = vpack.c.b16 %v759, %v758
      %v814 = vpack.c.b16 %v761, %v760
      %v815 = vpack.c.b16 %v763, %v762
      %v816 = vpack.c.b16 %v765, %v764
      %v817 = vpack.c.b16 %v767, %v766
      %v818 = vpack.c.b16 %v769, %v768
      %v819 = vpack.c.b16 %v771, %v770
      %v820 = vpack.c.b16 %v773, %v772
      %v821 = vpack.c.b16 %v775, %v774
      %v822 = vpack.c.b16 %v777, %v776
      %v823 = vpack.c.b16 %v779, %v778
      %v824 = vpack.c.b16 %v781, %v780
      %v825 = vpack.c.b16 %v783, %v782
      %v826 = vpack.c.b16 %v785, %v784
      %v827 = vpack.c.b16 %v787, %v786
      %868 = vmatpush.bf16.msra.mxu0 %v795
      %869 = vmatpush.bf16.msra.mxu0 %v794
      %870 = vmatpush.bf16.msra.mxu0 %v793
      %871 = vmatpush.bf16.msra.mxu0 %v792
      %872 = vmatpush.bf16.msra.mxu0 %v791
      %873 = vmatpush.bf16.msra.mxu0 %v790
      %874 = vmatpush.bf16.msra.mxu0 %v789
      %875 = vmatpush.bf16.msra.mxu0 %v788
      %876 = vmatmul.bf16.gmra.mxu0 %v558
      %v877 = vpop.f32.mrf.mxu0
      %v878 = vadd.f32 0.0, %v877
      %v879 = vpop.f32.mrf.mxu0
      %v880 = vadd.f32 0.0, %v879
      %881 = vmatmul.bf16.gmra.mxu0 %v563
      %v882 = vpop.f32.mrf.mxu0
      %v883 = vadd.f32 0.0, %v882
      %v884 = vpop.f32.mrf.mxu0
      %v885 = vadd.f32 0.0, %v884
      %886 = vmatmul.bf16.gmra.mxu0 %v568
      %v887 = vpop.f32.mrf.mxu0
      %v888 = vadd.f32 0.0, %v887
      %v889 = vpop.f32.mrf.mxu0
      %v890 = vadd.f32 0.0, %v889
      %891 = vmatmul.bf16.gmra.mxu0 %v573
      %v892 = vpop.f32.mrf.mxu0
      %v893 = vadd.f32 0.0, %v892
      %v894 = vpop.f32.mrf.mxu0
      %v895 = vadd.f32 0.0, %v894
      %896 = vmatmul.bf16.gmra.mxu0 %v578
      %v897 = vpop.f32.mrf.mxu0
      %v898 = vadd.f32 0.0, %v897
      %v899 = vpop.f32.mrf.mxu0
      %v900 = vadd.f32 0.0, %v899
      %901 = vmatmul.bf16.gmra.mxu0 %v583
      %v902 = vpop.f32.mrf.mxu0
      %v903 = vadd.f32 0.0, %v902
      %v904 = vpop.f32.mrf.mxu0
      %v905 = vadd.f32 0.0, %v904
      %906 = vmatmul.bf16.gmra.mxu0 %v588
      %v907 = vpop.f32.mrf.mxu0
      %v908 = vadd.f32 0.0, %v907
      %v909 = vpop.f32.mrf.mxu0
      %v910 = vadd.f32 0.0, %v909
      %911 = vdwg.mxu0
      %912 = vmatpush.bf16.msra.mxu0 %v803
      %913 = vmatpush.bf16.msra.mxu0 %v802
      %914 = vmatpush.bf16.msra.mxu0 %v801
      %915 = vmatpush.bf16.msra.mxu0 %v800
      %916 = vmatpush.bf16.msra.mxu0 %v799
      %917 = vmatpush.bf16.msra.mxu0 %v798
      %918 = vmatpush.bf16.msra.mxu0 %v797
      %919 = vmatpush.bf16.msra.mxu0 %v796
      %920 = vmatmul.bf16.gmra.mxu0 %v559
      %v921 = vpop.f32.mrf.mxu0
      %v922 = vadd.f32 %v878, %v921
      %v923 = vpop.f32.mrf.mxu0
      %v924 = vadd.f32 %v880, %v923
      %925 = vmatmul.bf16.gmra.mxu0 %v564
      %v926 = vpop.f32.mrf.mxu0
      %v927 = vadd.f32 %v883, %v926
      %v928 = vpop.f32.mrf.mxu0
      %v929 = vadd.f32 %v885, %v928
      %930 = vmatmul.bf16.gmra.mxu0 %v569
      %v931 = vpop.f32.mrf.mxu0
      %v932 = vadd.f32 %v888, %v931
      %v933 = vpop.f32.mrf.mxu0
      %v934 = vadd.f32 %v890, %v933
      %935 = vmatmul.bf16.gmra.mxu0 %v574
      %v936 = vpop.f32.mrf.mxu0
      %v937 = vadd.f32 %v893, %v936
      %v938 = vpop.f32.mrf.mxu0
      %v939 = vadd.f32 %v895, %v938
      %940 = vmatmul.bf16.gmra.mxu0 %v579
      %v941 = vpop.f32.mrf.mxu0
      %v942 = vadd.f32 %v898, %v941
      %v943 = vpop.f32.mrf.mxu0
      %v944 = vadd.f32 %v900, %v943
      %945 = vmatmul.bf16.gmra.mxu0 %v584
      %v946 = vpop.f32.mrf.mxu0
      %v947 = vadd.f32 %v903, %v946
      %v948 = vpop.f32.mrf.mxu0
      %v949 = vadd.f32 %v905, %v948
      %950 = vmatmul.bf16.gmra.mxu0 %v589
      %v951 = vpop.f32.mrf.mxu0
      %v952 = vadd.f32 %v908, %v951
      %v953 = vpop.f32.mrf.mxu0
      %v954 = vadd.f32 %v910, %v953
      %955 = vdwg.mxu0
      %956 = vmatpush.bf16.msra.mxu0 %v811
      %957 = vmatpush.bf16.msra.mxu0 %v810
      %958 = vmatpush.bf16.msra.mxu0 %v809
      %959 = vmatpush.bf16.msra.mxu0 %v808
      %960 = vmatpush.bf16.msra.mxu0 %v807
      %961 = vmatpush.bf16.msra.mxu0 %v806
      %962 = vmatpush.bf16.msra.mxu0 %v805
      %963 = vmatpush.bf16.msra.mxu0 %v804
      %964 = vmatmul.bf16.gmra.mxu0 %v560
      %v965 = vpop.f32.mrf.mxu0
      %v966 = vadd.f32 %v922, %v965
      %v967 = vpop.f32.mrf.mxu0
      %v968 = vadd.f32 %v924, %v967
      %969 = vmatmul.bf16.gmra.mxu0 %v565
      %v970 = vpop.f32.mrf.mxu0
      %v971 = vadd.f32 %v927, %v970
      %v972 = vpop.f32.mrf.mxu0
      %v973 = vadd.f32 %v929, %v972
      %974 = vmatmul.bf16.gmra.mxu0 %v570
      %v975 = vpop.f32.mrf.mxu0
      %v976 = vadd.f32 %v932, %v975
      %v977 = vpop.f32.mrf.mxu0
      %v978 = vadd.f32 %v934, %v977
      %979 = vmatmul.bf16.gmra.mxu0 %v575
      %v980 = vpop.f32.mrf.mxu0
      %v981 = vadd.f32 %v937, %v980
      %v982 = vpop.f32.mrf.mxu0
      %v983 = vadd.f32 %v939, %v982
      %984 = vmatmul.bf16.gmra.mxu0 %v580
      %v985 = vpop.f32.mrf.mxu0
      %v986 = vadd.f32 %v942, %v985
      %v987 = vpop.f32.mrf.mxu0
      %v988 = vadd.f32 %v944, %v987
      %989 = vmatmul.bf16.gmra.mxu0 %v585
      %v990 = vpop.f32.mrf.mxu0
      %v991 = vadd.f32 %v947, %v990
      %v992 = vpop.f32.mrf.mxu0
      %v993 = vadd.f32 %v949, %v992
      %994 = vmatmul.bf16.gmra.mxu0 %v590
      %v995 = vpop.f32.mrf.mxu0
      %v996 = vadd.f32 %v952, %v995
      %v997 = vpop.f32.mrf.mxu0
      %v998 = vadd.f32 %v954, %v997
      %999 = vdwg.mxu0
      %1000 = vmatpush.bf16.msra.mxu0 %v819
      %1001 = vmatpush.bf16.msra.mxu0 %v818
      %1002 = vmatpush.bf16.msra.mxu0 %v817
      %1003 = vmatpush.bf16.msra.mxu0 %v816
      %1004 = vmatpush.bf16.msra.mxu0 %v815
      %1005 = vmatpush.bf16.msra.mxu0 %v814
      %1006 = vmatpush.bf16.msra.mxu0 %v813
      %1007 = vmatpush.bf16.msra.mxu0 %v812
      %1008 = vmatmul.bf16.gmra.mxu0 %v561
      %v1009 = vpop.f32.mrf.mxu0
      %v1010 = vadd.f32 %v966, %v1009
      %v1011 = vpop.f32.mrf.mxu0
      %v1012 = vadd.f32 %v968, %v1011
      %1013 = vmatmul.bf16.gmra.mxu0 %v566
      %v1014 = vpop.f32.mrf.mxu0
      %v1015 = vadd.f32 %v971, %v1014
      %v1016 = vpop.f32.mrf.mxu0
      %v1017 = vadd.f32 %v973, %v1016
      %1018 = vmatmul.bf16.gmra.mxu0 %v571
      %v1019 = vpop.f32.mrf.mxu0
      %v1020 = vadd.f32 %v976, %v1019
      %v1021 = vpop.f32.mrf.mxu0
      %v1022 = vadd.f32 %v978, %v1021
      %1023 = vmatmul.bf16.gmra.mxu0 %v576
      %v1024 = vpop.f32.mrf.mxu0
      %v1025 = vadd.f32 %v981, %v1024
      %v1026 = vpop.f32.mrf.mxu0
      %v1027 = vadd.f32 %v983, %v1026
      %1028 = vmatmul.bf16.gmra.mxu0 %v581
      %v1029 = vpop.f32.mrf.mxu0
      %v1030 = vadd.f32 %v986, %v1029
      %v1031 = vpop.f32.mrf.mxu0
      %v1032 = vadd.f32 %v988, %v1031
      %1033 = vmatmul.bf16.gmra.mxu0 %v586
      %v1034 = vpop.f32.mrf.mxu0
      %v1035 = vadd.f32 %v991, %v1034
      %v1036 = vpop.f32.mrf.mxu0
      %v1037 = vadd.f32 %v993, %v1036
      %1038 = vmatmul.bf16.gmra.mxu0 %v591
      %v1039 = vpop.f32.mrf.mxu0
      %v1040 = vadd.f32 %v996, %v1039
      %v1041 = vpop.f32.mrf.mxu0
      %v1042 = vadd.f32 %v998, %v1041
      %1043 = vdwg.mxu0
      %1044 = vmatpush.bf16.msra.mxu0 %v827
      %1045 = vmatpush.bf16.msra.mxu0 %v826
      %1046 = vmatpush.bf16.msra.mxu0 %v825
      %1047 = vmatpush.bf16.msra.mxu0 %v824
      %1048 = vmatpush.bf16.msra.mxu0 %v823
      %1049 = vmatpush.bf16.msra.mxu0 %v822
      %1050 = vmatpush.bf16.msra.mxu0 %v821
      %1051 = vmatpush.bf16.msra.mxu0 %v820
      %1052 = vmatmul.bf16.gmra.mxu0 %v562
      %v1053 = vpop.f32.mrf.mxu0
      %v1054 = vadd.f32 %v1010, %v1053
      %v1055 = vpop.f32.mrf.mxu0
      %v1056 = vadd.f32 %v1012, %v1055
      %1057 = vmatmul.bf16.gmra.mxu0 %v567
      %v1058 = vpop.f32.mrf.mxu0
      %v1059 = vadd.f32 %v1015, %v1058
      %v1060 = vpop.f32.mrf.mxu0
      %v1061 = vadd.f32 %v1017, %v1060
      %1062 = vmatmul.bf16.gmra.mxu0 %v572
      %v1063 = vpop.f32.mrf.mxu0
      %v1064 = vadd.f32 %v1020, %v1063
      %v1065 = vpop.f32.mrf.mxu0
      %v1066 = vadd.f32 %v1022, %v1065
      %1067 = vmatmul.bf16.gmra.mxu0 %v577
      %v1068 = vpop.f32.mrf.mxu0
      %v1069 = vadd.f32 %v1025, %v1068
      %v1070 = vpop.f32.mrf.mxu0
      %v1071 = vadd.f32 %v1027, %v1070
      %1072 = vmatmul.bf16.gmra.mxu0 %v582
      %v1073 = vpop.f32.mrf.mxu0
      %v1074 = vadd.f32 %v1030, %v1073
      %v1075 = vpop.f32.mrf.mxu0
      %v1076 = vadd.f32 %v1032, %v1075
      %1077 = vmatmul.bf16.gmra.mxu0 %v587
      %v1078 = vpop.f32.mrf.mxu0
      %v1079 = vadd.f32 %v1035, %v1078
      %v1080 = vpop.f32.mrf.mxu0
      %v1081 = vadd.f32 %v1037, %v1080
      %1082 = vmatmul.bf16.gmra.mxu0 %v592
      %v1083 = vpop.f32.mrf.mxu0
      %v1084 = vadd.f32 %v1040, %v1083
      %v1085 = vpop.f32.mrf.mxu0
      %v1086 = vadd.f32 %v1042, %v1085
      %1087 = vdwg.mxu0
      %v1088 = vadd.f32 %v310, %v1054
      %v1089 = vadd.f32 %v311, %v1056
      %v1090 = vadd.f32 %v312, %v1059
      %v1091 = vadd.f32 %v313, %v1061
      %v1092 = vadd.f32 %v314, %v1064
      %v1093 = vadd.f32 %v315, %v1066
      %v1094 = vadd.f32 %v316, %v1069
      %v1095 = vadd.f32 %v317, %v1071
      %v1096 = vadd.f32 %v318, %v1074
      %v1097 = vadd.f32 %v319, %v1076
      %v1098 = vadd.f32 %v320, %v1079
      %v1099 = vadd.f32 %v321, %v1081
      %v1100 = vadd.f32 %v322, %v1084
      %v1101 = vadd.f32 %v323, %v1086
      %vm1102 = vcmask 261120
      %1103 = vst.msk [vmem:[%s282] sm:$0xff] %vm1102, %v1088
      %1104 = vst.msk [vmem:[%s282 + $0x8] sm:$0xff] %vm1102, %v1089
      %1105 = vst.msk [vmem:[%s282 + $0x10] sm:$0xff] %vm1102, %v1090
      %1106 = vst.msk [vmem:[%s282 + $0x18] sm:$0xff] %vm1102, %v1091
      %1107 = vst.msk [vmem:[%s282 + $0x20] sm:$0xff] %vm1102, %v1092
      %1108 = vst.msk [vmem:[%s282 + $0x28] sm:$0xff] %vm1102, %v1093
      %1109 = vst.msk [vmem:[%s282 + $0x30] sm:$0xff] %vm1102, %v1094
      %1110 = vst.msk [vmem:[%s282 + $0x38] sm:$0xff] %vm1102, %v1095
      %1111 = vst.msk [vmem:[%s282 + $0x40] sm:$0xff] %vm1102, %v1096
      %1112 = vst.msk [vmem:[%s282 + $0x48] sm:$0xff] %vm1102, %v1097
      %1113 = vst.msk [vmem:[%s282 + $0x50] sm:$0xff] %vm1102, %v1098
      %1114 = vst.msk [vmem:[%s282 + $0x58] sm:$0xff] %vm1102, %v1099
      %1115 = vst.msk [vmem:[%s282 + $0x60] sm:$0xff] %vm1102, %v1100
      %1116 = vst.msk [vmem:[%s282 + $0x68] sm:$0xff] %vm1102, %v1101
      // Predicated region
      $region33: #{_generator_forward.13} parent=27 // pred_check
        %p1117 = pneg %p291
      $region34: #{_generator_forward.13} parent=27 // pred_check_branch
        %1119 = sbr.rel (%p1117) target = $region36
      $region35: #{_generator_forward.13} parent=27 // pred_region
        %v1120 = vld [vmem:[%s282] sm:$0xff]
        %v1121 = vld [vmem:[%s282 + $0x8] sm:$0xff]
        %v1122 = vld [vmem:[%s282 + $0x10] sm:$0xff]
        %v1123 = vld [vmem:[%s282 + $0x18] sm:$0xff]
        %v1124 = vld [vmem:[%s282 + $0x20] sm:$0xff]
        %v1125 = vld [vmem:[%s282 + $0x28] sm:$0xff]
        %v1126 = vld [vmem:[%s282 + $0x30] sm:$0xff]
        %v1127 = vld [vmem:[%s282 + $0x38] sm:$0xff]
        %v1128 = vld [vmem:[%s282 + $0x40] sm:$0xff]
        %v1129 = vld [vmem:[%s282 + $0x48] sm:$0xff]
        %v1130 = vld [vmem:[%s282 + $0x50] sm:$0xff]
        %v1131 = vld [vmem:[%s282 + $0x58] sm:$0xff]
        %v1132 = vld [vmem:[%s282 + $0x60] sm:$0xff]
        %v1133 = vld [vmem:[%s282 + $0x68] sm:$0xff]
        %v1134 = vsel %vm1102, %v1120, 0.0
        %v1135 = vsel %vm1102, %v1121, 0.0
        %v1136 = vadd.f32 %v1134, %v1135
        %v1137 = vsel %vm1102, %v1122, 0.0
        %v1138 = vadd.f32 %v1136, %v1137
        %v1139 = vsel %vm1102, %v1123, 0.0
        %v1140 = vadd.f32 %v1138, %v1139
        %v1141 = vsel %vm1102, %v1124, 0.0
        %v1142 = vadd.f32 %v1140, %v1141
        %v1143 = vsel %vm1102, %v1125, 0.0
        %v1144 = vadd.f32 %v1142, %v1143
        %v1145 = vsel %vm1102, %v1126, 0.0
        %v1146 = vadd.f32 %v1144, %v1145
        %v1147 = vsel %vm1102, %v1127, 0.0
        %v1148 = vadd.f32 %v1146, %v1147
        %v1149 = vsel %vm1102, %v1128, 0.0
        %v1150 = vadd.f32 %v1148, %v1149
        %v1151 = vsel %vm1102, %v1129, 0.0
        %v1152 = vadd.f32 %v1150, %v1151
        %v1153 = vsel %vm1102, %v1130, 0.0
        %v1154 = vadd.f32 %v1152, %v1153
        %v1155 = vsel %vm1102, %v1131, 0.0
        %v1156 = vadd.f32 %v1154, %v1155
        %v1157 = vsel %vm1102, %v1132, 0.0
        %v1158 = vadd.f32 %v1156, %v1157
        %v1159 = vsel %vm1102, %v1133, 0.0
        %v1160 = vadd.f32 %v1158, %v1159
        %v1161 = vrot.slane %v1160, 4
        %v1162 = vadd.f32 %v1160, %v1161
        %v1163 = vrot.slane %v1162, 2
        %v1164 = vadd.f32 %v1162, %v1163
        %v1165 = vrot.slane %v1164, 1
        %v1166 = vadd.f32 %v1164, %v1165
        %v1167 = vmul.f32 %v1120, %v1120
        %v1168 = vmul.f32 %v1121, %v1121
        %v1169 = vmul.f32 %v1122, %v1122
        %v1170 = vmul.f32 %v1123, %v1123
        %v1171 = vmul.f32 %v1124, %v1124
        %v1172 = vmul.f32 %v1125, %v1125
        %v1173 = vmul.f32 %v1126, %v1126
        %v1174 = vmul.f32 %v1127, %v1127
        %v1175 = vmul.f32 %v1128, %v1128
        %v1176 = vmul.f32 %v1129, %v1129
        %v1177 = vmul.f32 %v1130, %v1130
        %v1178 = vmul.f32 %v1131, %v1131
        %v1179 = vmul.f32 %v1132, %v1132
        %v1180 = vmul.f32 %v1133, %v1133
        %v1181 = vsel %vm1102, %v1167, 0.0
        %v1182 = vsel %vm1102, %v1168, 0.0
        %v1183 = vadd.f32 %v1181, %v1182
        %v1184 = vsel %vm1102, %v1169, 0.0
        %v1185 = vadd.f32 %v1183, %v1184
        %v1186 = vsel %vm1102, %v1170, 0.0
        %v1187 = vadd.f32 %v1185, %v1186
        %v1188 = vsel %vm1102, %v1171, 0.0
        %v1189 = vadd.f32 %v1187, %v1188
        %v1190 = vsel %vm1102, %v1172, 0.0
        %v1191 = vadd.f32 %v1189, %v1190
        %v1192 = vsel %vm1102, %v1173, 0.0
        %v1193 = vadd.f32 %v1191, %v1192
        %v1194 = vsel %vm1102, %v1174, 0.0
        %v1195 = vadd.f32 %v1193, %v1194
        %v1196 = vsel %vm1102, %v1175, 0.0
        %v1197 = vadd.f32 %v1195, %v1196
        %v1198 = vsel %vm1102, %v1176, 0.0
        %v1199 = vadd.f32 %v1197, %v1198
        %v1200 = vsel %vm1102, %v1177, 0.0
        %v1201 = vadd.f32 %v1199, %v1200
        %v1202 = vsel %vm1102, %v1178, 0.0
        %v1203 = vadd.f32 %v1201, %v1202
        %v1204 = vsel %vm1102, %v1179, 0.0
        %v1205 = vadd.f32 %v1203, %v1204
        %v1206 = vsel %vm1102, %v1180, 0.0
        %v1207 = vadd.f32 %v1205, %v1206
        %v1208 = vrot.slane %v1207, 4
        %v1209 = vadd.f32 %v1207, %v1208
        %v1210 = vrot.slane %v1209, 2
        %v1211 = vadd.f32 %v1209, %v1210
        %v1212 = vrot.slane %v1211, 1
        %v1213 = vadd.f32 %v1211, %v1212
        %vm1214 = vcmask 1040384
        %v1215 = vsel %vm1214, %v1166, %v1213
        %vm1216 = vcmask 254976
        %1217 = vst.msk [vmem:[%s290] sm:$0x3] %vm1216, %v1215
      $region36: #{_generator_forward.13} parent=27 // pred_fallthru
        _
      %s1218 = smul.u32 14, %s21
      %p1219 = scmp.lt.s32.totalorder %s20, 3
      %s1220 = scalar_select %p1219, %s20, 3
      %p1221 = scmp.lt.s32.totalorder %s1218, 13
      %s1222 = scalar_select %p1221, %s1218, 13
      %s1223 = smul.addr %s1220, 14
      %s1224 = sadd.s32 %s1222, %s1223
      %s1225 = smul.addr %s1224, 8
      %s1226 = scalar_lea.vmem %s2, %s1225
      %p1227 = scmp.lt.s32.totalorder %s20, 3
      %s1228 = scalar_select %p1227, %s20, 3
      %p1229 = scmp.lt.s32.totalorder %s21, 0
      %s1230 = scalar_select %p1229, %s21, 0
      %s1231 = sadd.s32 %s1230, %s1228
      %s1232 = smul.addr %s1231, 2
      %s1233 = scalar_lea.vmem %s3, %s1232
      // Predicated region
      $region37: #{_generator_forward.13} parent=27 // pred_check
        %p1234 = pneg %p112
      $region38: #{_generator_forward.13} parent=27 // pred_check_branch
        %1236 = sbr.rel (%p1234) target = $region40
      $region39: #{_generator_forward.13} parent=27 // pred_region
        %s1237 = smul.u32 14, %s21
      $region40: #{_generator_forward.13} parent=27 // pred_fallthru
        _
      // Predicated region
      $region41: #{_generator_forward.13} parent=27 // pred_check
        %p1238 = pneg %p140
      $region42: #{_generator_forward.13} parent=27 // pred_check_branch
        %1240 = sbr.rel (%p1238) target = $region44
      $region43: #{_generator_forward.13} parent=27 // pred_region
        _
      $region44: #{_generator_forward.13} parent=27 // pred_fallthru
        _
    $region28: #{_generator_forward.13} parent=5 // pred_fallthru
      _
    %p1241 = scmp.le.s32.totalorder 2, %s10
    // Predicated region
    $region45: #{_generator_forward.13} parent=5 // pred_check
      %p1242 = pneg %p1241
    $region46: #{_generator_forward.13} parent=5 // pred_check_branch
      %1244 = sbr.rel (%p1242) target = $region48
    $region47: #{_generator_forward.13} parent=5 // pred_region
      %s1245 = ssub.s32 %s10, 2
      // Predicated region
      $region49: #{_generator_forward.13} parent=47 // pred_check
        %p1246 = pneg %p118
      $region50: #{_generator_forward.13} parent=47 // pred_check_branch
        %1248 = sbr.rel (%p1246) target = $region52
      $region51: #{_generator_forward.13} parent=47 // pred_region
        %s1249 = smul.u32 14, %s24
        %p1250 = scmp.lt.s32.totalorder %s23, 3
        %s1251 = scalar_select %p1250, %s23, 3
        %p1252 = scmp.lt.s32.totalorder %s1249, 13
        %s1253 = scalar_select %p1252, %s1249, 13
        %s1254 = smul.addr %s1251, 14
        %s1255 = sadd.s32 %s1253, %s1254
        %s1256 = smul.addr %s1255, 8
        %s1257 = scalar_lea.vmem %s2, %s1256
      $region52: #{_generator_forward.13} parent=47 // pred_fallthru
        _
      // Predicated region
      $region53: #{_generator_forward.13} parent=47 // pred_check
        %p1258 = pneg %p146
      $region54: #{_generator_forward.13} parent=47 // pred_check_branch
        %1260 = sbr.rel (%p1258) target = $region56
      $region55: #{_generator_forward.13} parent=47 // pred_region
        %p1261 = scmp.lt.s32.totalorder %s23, 3
        %s1262 = scalar_select %p1261, %s23, 3
        %p1263 = scmp.lt.s32.totalorder %s24, 0
        %s1264 = scalar_select %p1263, %s24, 0
        %s1265 = sadd.s32 %s1264, %s1262
        %s1266 = smul.addr %s1265, 2
        %s1267 = scalar_lea.vmem %s3, %s1266
      $region56: #{_generator_forward.13} parent=47 // pred_fallthru
        _
    $region48: #{_generator_forward.13} parent=5 // pred_fallthru
      _
  $region6: #{_generator_forward.13} parent=0 // loop_footer
    %s14 = sadd.s32 1, %s10
  $region7: #{_generator_forward.13} parent=0 // loop_footer_branch
    %9 = sbr.rel target = $region3
  $region8: #{_generator_forward.13} parent=0 // loop_exit
    _

// kernel: _generator_forward.14
$region0: #{_generator_forward.14}
  #allocation0 [shape = 'u32[]', space=smem, size = 0x4, offset = 0x4, fixed_abs, tag = 'smem constant byte address 0x4 - core index']
  #allocation1 [shape = 'u32[72,128]{1,0:T(1,128)}', space=vmem, size = 0x9000, scoped, tag = 'internal scratch']
  %s0 = inlined_call_operand.vmem [shape: f32[448,32], index: 0, kind: input, shape index: {}]
  %s1 = inlined_call_operand.vmem [shape: f32[1,32], index: 1, kind: input, shape index: {}]
  %s2 = inlined_call_operand.vmem [shape: f32[1,32], index: 2, kind: input, shape index: {}]
  %s3 = inlined_call_operand.vmem [shape: bf16[448,32], index: 3, kind: output, shape index: {}]
  %s4 = sld [smem:[#allocation0]]
  $region45: #{_generator_forward.14} parent=0
    _
  %s6 = ssub.s32 1, %s4
  %s7 = scalar_select 0, %s6, %s4
  loop: start=0, step=1, limit=4
  $region2: #{_generator_forward.14} parent=0 // loop_pre_header
    _
  $region3: #{_generator_forward.14} parent=0 // loop_header
    %s9 = sphi 0, %s13
    %p10 = scmp.ge.s32.totalorder %s9, 4
    %s19 = sphi 0, %s21
    %s22 = sphi 0, %s19
    %s23 = sphi 0, %s22
    %s39 = sphi 0, %s23
    %s43 = sphi 0, %s43
    %s45 = sphi 0, %s43
    %s46 = sphi 0, %s45
    %s60 = sphi 0, %s46
    %s64 = sphi 0, %s64
    %s66 = sphi 0, %s64
    %s67 = sphi 0, %s66
    %s81 = sphi 0, %s67
    %s87 = sphi 0, %s89
    %s90 = sphi 0, %s87
    %s91 = sphi 0, %s90
    %s107 = sphi 0, %s91
  $region4: #{_generator_forward.14} parent=0 // loop_header_branch
    %12 = sbr.rel (%p10) target = $region8
  $region5: #{_generator_forward.14} parent=0 // loop_body
    %s14 = ssub.s32 %s9, 1
    %s15 = ssub.s32 %s9, 2
    %s16 = sadd.s32 %s9, 1
    %s17 = ssub.s32 %s9, %s16
    %p18 = scmp.eq.s32.totalorder %s17, 0
    %s20 = sadd.s32 %s19, 1
    %s21 = scalar_select %p18, %s19, %s20
    %p24 = pneg %p18
    %p25 = scmp.eq.s32.totalorder %s9, 1
    %p26 = por %p24, %p25
    %p27 = scmp.ne.s32.totalorder %s19, %s22
    %p28 = scmp.eq.s32.totalorder %s9, 0
    %p29 = por %p27, %p28
    %p30 = scmp.ne.s32.totalorder %s19, %s22
    %p31 = scmp.eq.s32.totalorder %s14, 1
    %p32 = por %p30, %p31
    %p33 = scmp.ne.s32.totalorder %s22, %s23
    %p34 = scmp.eq.s32.totalorder %s14, 0
    %p35 = por %p33, %p34
    %p36 = scmp.ne.s32.totalorder %s22, %s23
    %p37 = scmp.eq.s32.totalorder %s15, 1
    %p38 = por %p36, %p37
    %p40 = scmp.ne.s32.totalorder %s23, %s39
    %p41 = scmp.eq.s32.totalorder %s15, 0
    %p42 = por %p40, %p41
    %s44 = sadd.s32 %s43, 1
    %p47 = scmp.eq.s32.totalorder %s9, 1
    %p48 = scmp.ne.s32.totalorder %s43, %s45
    %p49 = scmp.eq.s32.totalorder %s9, 0
    %p50 = por %p48, %p49
    %p51 = scmp.ne.s32.totalorder %s43, %s45
    %p52 = scmp.eq.s32.totalorder %s14, 1
    %p53 = por %p51, %p52
    %p54 = scmp.ne.s32.totalorder %s45, %s46
    %p55 = scmp.eq.s32.totalorder %s14, 0
    %p56 = por %p54, %p55
    %p57 = scmp.ne.s32.totalorder %s45, %s46
    %p58 = scmp.eq.s32.totalorder %s15, 1
    %p59 = por %p57, %p58
    %p61 = scmp.ne.s32.totalorder %s46, %s60
    %p62 = scmp.eq.s32.totalorder %s15, 0
    %p63 = por %p61, %p62
    %s65 = sadd.s32 %s64, 1
    %p68 = scmp.eq.s32.totalorder %s9, 1
    %p69 = scmp.ne.s32.totalorder %s64, %s66
    %p70 = scmp.eq.s32.totalorder %s9, 0
    %p71 = por %p69, %p70
    %p72 = scmp.ne.s32.totalorder %s64, %s66
    %p73 = scmp.eq.s32.totalorder %s14, 1
    %p74 = por %p72, %p73
    %p75 = scmp.ne.s32.totalorder %s66, %s67
    %p76 = scmp.eq.s32.totalorder %s14, 0
    %p77 = por %p75, %p76
    %p78 = scmp.ne.s32.totalorder %s66, %s67
    %p79 = scmp.eq.s32.totalorder %s15, 1
    %p80 = por %p78, %p79
    %p82 = scmp.ne.s32.totalorder %s67, %s81
    %p83 = scmp.eq.s32.totalorder %s15, 0
    %p84 = por %p82, %p83
    %s85 = ssub.s32 %s9, %s16
    %p86 = scmp.eq.s32.totalorder %s85, 0
    %s88 = sadd.s32 %s87, 1
    %s89 = scalar_select %p86, %s87, %s88
    %p92 = pneg %p86
    %p93 = scmp.eq.s32.totalorder %s9, 1
    %p94 = por %p92, %p93
    %p95 = scmp.ne.s32.totalorder %s87, %s90
    %p96 = scmp.eq.s32.totalorder %s9, 0
    %p97 = por %p95, %p96
    %p98 = scmp.ne.s32.totalorder %s87, %s90
    %p99 = scmp.eq.s32.totalorder %s14, 1
    %p100 = por %p98, %p99
    %p101 = scmp.ne.s32.totalorder %s90, %s91
    %p102 = scmp.eq.s32.totalorder %s14, 0
    %p103 = por %p101, %p102
    %p104 = scmp.ne.s32.totalorder %s90, %s91
    %p105 = scmp.eq.s32.totalorder %s15, 1
    %p106 = por %p104, %p105
    %p108 = scmp.ne.s32.totalorder %s91, %s107
    %p109 = scmp.eq.s32.totalorder %s15, 0
    %p110 = por %p108, %p109
    %p111 = scmp.le.s32.totalorder 1, %s9
    %p112 = scmp.lt.s32.totalorder %s9, 3
    %p113 = pnand %p111, %p112
    %p114 = pneg %p113
    // Predicated region
    $region9: #{_generator_forward.14} parent=5 // pred_check
      _
    $region10: #{_generator_forward.14} parent=5 // pred_check_branch
      %116 = sbr.rel (%p113) target = $region12
    $region11: #{_generator_forward.14} parent=5 // pred_region
      %s117 = ssub.s32 %s9, 1
      // Predicated region
      $region13: #{_generator_forward.14} parent=11 // pred_check
        %p118 = pneg %p56
      $region14: #{_generator_forward.14} parent=11 // pred_check_branch
        %120 = sbr.rel (%p118) target = $region16
      $region15: #{_generator_forward.14} parent=11 // pred_region
        _
      $region16: #{_generator_forward.14} parent=11 // pred_fallthru
        _
      // Predicated region
      $region17: #{_generator_forward.14} parent=11 // pred_check
        %p121 = pneg %p77
      $region18: #{_generator_forward.14} parent=11 // pred_check_branch
        %123 = sbr.rel (%p121) target = $region20
      $region19: #{_generator_forward.14} parent=11 // pred_region
        _
      $region20: #{_generator_forward.14} parent=11 // pred_fallthru
        _
    $region12: #{_generator_forward.14} parent=5 // pred_fallthru
      _
    %p124 = scmp.lt.s32.totalorder %s9, 2
    // Predicated region
    $region21: #{_generator_forward.14} parent=5 // pred_check
      %p125 = pneg %p124
    $region22: #{_generator_forward.14} parent=5 // pred_check_branch
      %127 = sbr.rel (%p125) target = $region24
    $region23: #{_generator_forward.14} parent=5 // pred_region
      // Predicated region
      $region25: #{_generator_forward.14} parent=23 // pred_check
        %p128 = pneg %p29
      $region26: #{_generator_forward.14} parent=23 // pred_check_branch
        %130 = sbr.rel (%p128) target = $region28
      $region27: #{_generator_forward.14} parent=23 // pred_region
        %s131 = smul.u32 28, %s9
        %p132 = scmp.lt.s32.totalorder %s131, 55
        %s133 = scalar_select %p132, %s131, 55
        %s134 = smul.addr %s133, 8
        %s135 = scalar_lea.vmem %s0, %s134
        %s136 = smul.u32 28, %s9
      $region28: #{_generator_forward.14} parent=23 // pred_fallthru
        _
    $region24: #{_generator_forward.14} parent=5 // pred_fallthru
      _
    %p137 = scmp.le.s32.totalorder 1, %s9
    %p138 = scmp.lt.s32.totalorder %s9, 3
    %p139 = pnand %p137, %p138
    %p140 = pneg %p139
    // Predicated region
    $region29: #{_generator_forward.14} parent=5 // pred_check
      _
    $region30: #{_generator_forward.14} parent=5 // pred_check_branch
      %142 = sbr.rel (%p139) target = $region32
    $region31: #{_generator_forward.14} parent=5 // pred_region
      %s143 = ssub.s32 %s9, 1
      %s144 = smul.u32 28, %s14
      %p145 = scmp.lt.s32.totalorder %s144, 55
      %s146 = scalar_select %p145, %s144, 55
      %s147 = smul.addr %s146, 8
      %s148 = scalar_lea.vmem %s0, %s147
      %p149 = pneg %p35
      %p150 = pneg %p32
      %p151 = pneg %p56
      %p152 = pneg %p53
      %p153 = pneg %p77
      %p154 = pneg %p74
      %p155 = pneg %p103
      %p156 = pneg %p100
      %s157 = smul.u32 28, %s14
      %p158 = scmp.lt.s32.totalorder %s157, 55
      %s159 = scalar_select %p158, %s157, 55
      %s160 = smul.addr %s159, 4
      %s161 = scalar_lea.vmem %s3, %s160
      %s162 = smul.u32 28, %s14
      %p163 = scmp.lt.s32.totalorder %s162, 55
      %s164 = scalar_select %p163, %s162, 55
      %s165 = smul.addr %s164, 8
      %s166 = scalar_lea.vmem %s0, %s165
      %s167 = smul.u32 28, %s14
      %s168 = smul.u32 28, %s14
      %p169 = scmp.lt.s32.totalorder %s168, 55
      %s170 = scalar_select %p169, %s168, 55
      %s171 = smul.addr %s170, 4
      %s172 = scalar_lea.vmem %s3, %s171
      %s173 = smul.u32 28, %s14
      %v174 = vld [vmem:[%s166] sm:$0xff]
      %v175 = vld [vmem:[%s166 + $0x8] sm:$0xff]
      %v176 = vld [vmem:[%s166 + $0x10] sm:$0xff]
      %v177 = vld [vmem:[%s166 + $0x18] sm:$0xff]
      %v178 = vld [vmem:[%s166 + $0x20] sm:$0xff]
      %v179 = vld [vmem:[%s166 + $0x28] sm:$0xff]
      %v180 = vld [vmem:[%s166 + $0x30] sm:$0xff]
      %v181 = vld [vmem:[%s166 + $0x38] sm:$0xff]
      %v182 = vld [vmem:[%s166 + $0x40] sm:$0xff]
      %v183 = vld [vmem:[%s166 + $0x48] sm:$0xff]
      %v184 = vld [vmem:[%s166 + $0x50] sm:$0xff]
      %v185 = vld [vmem:[%s166 + $0x58] sm:$0xff]
      %v186 = vld [vmem:[%s166 + $0x60] sm:$0xff]
      %v187 = vld [vmem:[%s166 + $0x68] sm:$0xff]
      %v188 = vld [vmem:[%s166 + $0x70] sm:$0xff]
      %v189 = vld [vmem:[%s166 + $0x78] sm:$0xff]
      %v190 = vld [vmem:[%s166 + $0x80] sm:$0xff]
      %v191 = vld [vmem:[%s166 + $0x88] sm:$0xff]
      %v192 = vld [vmem:[%s166 + $0x90] sm:$0xff]
      %v193 = vld [vmem:[%s166 + $0x98] sm:$0xff]
      %v194 = vld [vmem:[%s166 + $0xa0] sm:$0xff]
      %v195 = vld [vmem:[%s166 + $0xa8] sm:$0xff]
      %v196 = vld [vmem:[%s166 + $0xb0] sm:$0xff]
      %v197 = vld [vmem:[%s166 + $0xb8] sm:$0xff]
      %v198 = vld [vmem:[%s166 + $0xc0] sm:$0xff]
      %v199 = vld [vmem:[%s166 + $0xc8] sm:$0xff]
      %v200 = vld [vmem:[%s166 + $0xd0] sm:$0xff]
      %v201 = vld [vmem:[%s166 + $0xd8] sm:$0xff]
      %v202 = vld [vmem:[%s1] sm:$0x1]
      %v204 = vperm.slane %v202, 0
      %v206 = vmul.f32 %v174, %v204
      %v207 = vmul.f32 %v175, %v204
      %v208 = vmul.f32 %v176, %v204
      %v209 = vmul.f32 %v177, %v204
      %v210 = vmul.f32 %v178, %v204
      %v211 = vmul.f32 %v179, %v204
      %v212 = vmul.f32 %v180, %v204
      %v213 = vmul.f32 %v181, %v204
      %v214 = vmul.f32 %v182, %v204
      %v215 = vmul.f32 %v183, %v204
      %v216 = vmul.f32 %v184, %v204
      %v217 = vmul.f32 %v185, %v204
      %v218 = vmul.f32 %v186, %v204
      %v219 = vmul.f32 %v187, %v204
      %v220 = vmul.f32 %v188, %v204
      %v221 = vmul.f32 %v189, %v204
      %v222 = vmul.f32 %v190, %v204
      %v223 = vmul.f32 %v191, %v204
      %v224 = vmul.f32 %v192, %v204
      %v225 = vmul.f32 %v193, %v204
      %v226 = vmul.f32 %v194, %v204
      %v227 = vmul.f32 %v195, %v204
      %v228 = vmul.f32 %v196, %v204
      %v229 = vmul.f32 %v197, %v204
      %v230 = vmul.f32 %v198, %v204
      %v231 = vmul.f32 %v199, %v204
      %v232 = vmul.f32 %v200, %v204
      %v233 = vmul.f32 %v201, %v204
      %v234 = vld [vmem:[%s2] sm:$0x1]
      %v236 = vperm.slane %v234, 0
      %v238 = vadd.f32 %v206, %v236
      %v239 = vadd.f32 %v207, %v236
      %v240 = vadd.f32 %v208, %v236
      %v241 = vadd.f32 %v209, %v236
      %v242 = vadd.f32 %v210, %v236
      %v243 = vadd.f32 %v211, %v236
      %v244 = vadd.f32 %v212, %v236
      %v245 = vadd.f32 %v213, %v236
      %v246 = vadd.f32 %v214, %v236
      %v247 = vadd.f32 %v215, %v236
      %v248 = vadd.f32 %v216, %v236
      %v249 = vadd.f32 %v217, %v236
      %v250 = vadd.f32 %v218, %v236
      %v251 = vadd.f32 %v219, %v236
      %v252 = vadd.f32 %v220, %v236
      %v253 = vadd.f32 %v221, %v236
      %v254 = vadd.f32 %v222, %v236
      %v255 = vadd.f32 %v223, %v236
      %v256 = vadd.f32 %v224, %v236
      %v257 = vadd.f32 %v225, %v236
      %v258 = vadd.f32 %v226, %v236
      %v259 = vadd.f32 %v227, %v236
      %v260 = vadd.f32 %v228, %v236
      %v261 = vadd.f32 %v229, %v236
      %v262 = vadd.f32 %v230, %v236
      %v263 = vadd.f32 %v231, %v236
      %v264 = vadd.f32 %v232, %v236
      %v265 = vadd.f32 %v233, %v236
      %vm266 = vcmp.ge.f32.partialorder %v238, 0.0
      %vm267 = vcmp.ge.f32.partialorder %v239, 0.0
      %vm268 = vcmp.ge.f32.partialorder %v240, 0.0
      %vm269 = vcmp.ge.f32.partialorder %v241, 0.0
      %vm270 = vcmp.ge.f32.partialorder %v242, 0.0
      %vm271 = vcmp.ge.f32.partialorder %v243, 0.0
      %vm272 = vcmp.ge.f32.partialorder %v244, 0.0
      %vm273 = vcmp.ge.f32.partialorder %v245, 0.0
      %vm274 = vcmp.ge.f32.partialorder %v246, 0.0
      %vm275 = vcmp.ge.f32.partialorder %v247, 0.0
      %vm276 = vcmp.ge.f32.partialorder %v248, 0.0
      %vm277 = vcmp.ge.f32.partialorder %v249, 0.0
      %vm278 = vcmp.ge.f32.partialorder %v250, 0.0
      %vm279 = vcmp.ge.f32.partialorder %v251, 0.0
      %vm280 = vcmp.ge.f32.partialorder %v252, 0.0
      %vm281 = vcmp.ge.f32.partialorder %v253, 0.0
      %vm282 = vcmp.ge.f32.partialorder %v254, 0.0
      %vm283 = vcmp.ge.f32.partialorder %v255, 0.0
      %vm284 = vcmp.ge.f32.partialorder %v256, 0.0
      %vm285 = vcmp.ge.f32.partialorder %v257, 0.0
      %vm286 = vcmp.ge.f32.partialorder %v258, 0.0
      %vm287 = vcmp.ge.f32.partialorder %v259, 0.0
      %vm288 = vcmp.ge.f32.partialorder %v260, 0.0
      %vm289 = vcmp.ge.f32.partialorder %v261, 0.0
      %vm290 = vcmp.ge.f32.partialorder %v262, 0.0
      %vm291 = vcmp.ge.f32.partialorder %v263, 0.0
      %vm292 = vcmp.ge.f32.partialorder %v264, 0.0
      %vm293 = vcmp.ge.f32.partialorder %v265, 0.0
      %v294 = vmul.f32 %v238, 0.2
      %v295 = vmul.f32 %v239, 0.2
      %v296 = vmul.f32 %v240, 0.2
      %v297 = vmul.f32 %v241, 0.2
      %v298 = vmul.f32 %v242, 0.2
      %v299 = vmul.f32 %v243, 0.2
      %v300 = vmul.f32 %v244, 0.2
      %v301 = vmul.f32 %v245, 0.2
      %v302 = vmul.f32 %v246, 0.2
      %v303 = vmul.f32 %v247, 0.2
      %v304 = vmul.f32 %v248, 0.2
      %v305 = vmul.f32 %v249, 0.2
      %v306 = vmul.f32 %v250, 0.2
      %v307 = vmul.f32 %v251, 0.2
      %v308 = vmul.f32 %v252, 0.2
      %v309 = vmul.f32 %v253, 0.2
      %v310 = vmul.f32 %v254, 0.2
      %v311 = vmul.f32 %v255, 0.2
      %v312 = vmul.f32 %v256, 0.2
      %v313 = vmul.f32 %v257, 0.2
      %v314 = vmul.f32 %v258, 0.2
      %v315 = vmul.f32 %v259, 0.2
      %v316 = vmul.f32 %v260, 0.2
      %v317 = vmul.f32 %v261, 0.2
      %v318 = vmul.f32 %v262, 0.2
      %v319 = vmul.f32 %v263, 0.2
      %v320 = vmul.f32 %v264, 0.2
      %v321 = vmul.f32 %v265, 0.2
      %v322 = vsel %vm266, %v238, %v294
      %v323 = vsel %vm267, %v239, %v295
      %v324 = vsel %vm268, %v240, %v296
      %v325 = vsel %vm269, %v241, %v297
      %v326 = vsel %vm270, %v242, %v298
      %v327 = vsel %vm271, %v243, %v299
      %v328 = vsel %vm272, %v244, %v300
      %v329 = vsel %vm273, %v245, %v301
      %v330 = vsel %vm274, %v246, %v302
      %v331 = vsel %vm275, %v247, %v303
      %v332 = vsel %vm276, %v248, %v304
      %v333 = vsel %vm277, %v249, %v305
      %v334 = vsel %vm278, %v250, %v306
      %v335 = vsel %vm279, %v251, %v307
      %v336 = vsel %vm280, %v252, %v308
      %v337 = vsel %vm281, %v253, %v309
      %v338 = vsel %vm282, %v254, %v310
      %v339 = vsel %vm283, %v255, %v311
      %v340 = vsel %vm284, %v256, %v312
      %v341 = vsel %vm285, %v257, %v313
      %v342 = vsel %vm286, %v258, %v314
      %v343 = vsel %vm287, %v259, %v315
      %v344 = vsel %vm288, %v260, %v316
      %v345 = vsel %vm289, %v261, %v317
      %v346 = vsel %vm290, %v262, %v318
      %v347 = vsel %vm291, %v263, %v319
      %v348 = vsel %vm292, %v264, %v320
      %v349 = vsel %vm293, %v265, %v321
      %v350 = vpack.c.bf16 %v322, %v322
      %v351 = vpack.c.bf16 %v323, %v323
      %v352 = vpack.c.bf16 %v324, %v324
      %v353 = vpack.c.bf16 %v325, %v325
      %v354 = vpack.c.bf16 %v326, %v326
      %v355 = vpack.c.bf16 %v327, %v327
      %v356 = vpack.c.bf16 %v328, %v328
      %v357 = vpack.c.bf16 %v329, %v329
      %v358 = vpack.c.bf16 %v330, %v330
      %v359 = vpack.c.bf16 %v331, %v331
      %v360 = vpack.c.bf16 %v332, %v332
      %v361 = vpack.c.bf16 %v333, %v333
      %v362 = vpack.c.bf16 %v334, %v334
      %v363 = vpack.c.bf16 %v335, %v335
      %v364 = vpack.c.bf16 %v336, %v336
      %v365 = vpack.c.bf16 %v337, %v337
      %v366 = vpack.c.bf16 %v338, %v338
      %v367 = vpack.c.bf16 %v339, %v339
      %v368 = vpack.c.bf16 %v340, %v340
      %v369 = vpack.c.bf16 %v341, %v341
      %v370 = vpack.c.bf16 %v342, %v342
      %v371 = vpack.c.bf16 %v343, %v343
      %v372 = vpack.c.bf16 %v344, %v344
      %v373 = vpack.c.bf16 %v345, %v345
      %v374 = vpack.c.bf16 %v346, %v346
      %v375 = vpack.c.bf16 %v347, %v347
      %v376 = vpack.c.bf16 %v348, %v348
      %v377 = vpack.c.bf16 %v349, %v349
      %vm378 = vcmask 257024
      %379 = vst.msk [vmem:[%s172] sm:$0xf] %vm378, %v350
      %380 = vst.msk [vmem:[%s172 + $0x4] sm:$0xf] %vm378, %v351
      %381 = vst.msk [vmem:[%s172 + $0x8] sm:$0xf] %vm378, %v352
      %382 = vst.msk [vmem:[%s172 + $0xc] sm:$0xf] %vm378, %v353
      %383 = vst.msk [vmem:[%s172 + $0x10] sm:$0xf] %vm378, %v354
      %384 = vst.msk [vmem:[%s172 + $0x14] sm:$0xf] %vm378, %v355
      %385 = vst.msk [vmem:[%s172 + $0x18] sm:$0xf] %vm378, %v356
      %386 = vst.msk [vmem:[%s172 + $0x1c] sm:$0xf] %vm378, %v357
      %387 = vst.msk [vmem:[%s172 + $0x20] sm:$0xf] %vm378, %v358
      %388 = vst.msk [vmem:[%s172 + $0x24] sm:$0xf] %vm378, %v359
      %389 = vst.msk [vmem:[%s172 + $0x28] sm:$0xf] %vm378, %v360
      %390 = vst.msk [vmem:[%s172 + $0x2c] sm:$0xf] %vm378, %v361
      %391 = vst.msk [vmem:[%s172 + $0x30] sm:$0xf] %vm378, %v362
      %392 = vst.msk [vmem:[%s172 + $0x34] sm:$0xf] %vm378, %v363
      %393 = vst.msk [vmem:[%s172 + $0x38] sm:$0xf] %vm378, %v364
      %394 = vst.msk [vmem:[%s172 + $0x3c] sm:$0xf] %vm378, %v365
      %395 = vst.msk [vmem:[%s172 + $0x40] sm:$0xf] %vm378, %v366
      %396 = vst.msk [vmem:[%s172 + $0x44] sm:$0xf] %vm378, %v367
      %397 = vst.msk [vmem:[%s172 + $0x48] sm:$0xf] %vm378, %v368
      %398 = vst.msk [vmem:[%s172 + $0x4c] sm:$0xf] %vm378, %v369
      %399 = vst.msk [vmem:[%s172 + $0x50] sm:$0xf] %vm378, %v370
      %400 = vst.msk [vmem:[%s172 + $0x54] sm:$0xf] %vm378, %v371
      %401 = vst.msk [vmem:[%s172 + $0x58] sm:$0xf] %vm378, %v372
      %402 = vst.msk [vmem:[%s172 + $0x5c] sm:$0xf] %vm378, %v373
      %403 = vst.msk [vmem:[%s172 + $0x60] sm:$0xf] %vm378, %v374
      %404 = vst.msk [vmem:[%s172 + $0x64] sm:$0xf] %vm378, %v375
      %405 = vst.msk [vmem:[%s172 + $0x68] sm:$0xf] %vm378, %v376
      %406 = vst.msk [vmem:[%s172 + $0x6c] sm:$0xf] %vm378, %v377
      %s407 = smul.u32 28, %s14
      %p408 = scmp.lt.s32.totalorder %s407, 55
      %s409 = scalar_select %p408, %s407, 55
      %s410 = smul.addr %s409, 4
      %s411 = scalar_lea.vmem %s3, %s410
      // Predicated region
      $region33: #{_generator_forward.14} parent=31 // pred_check
        %p412 = pneg %p100
      $region34: #{_generator_forward.14} parent=31 // pred_check_branch
        %414 = sbr.rel (%p412) target = $region36
      $region35: #{_generator_forward.14} parent=31 // pred_region
        %s415 = smul.u32 28, %s14
      $region36: #{_generator_forward.14} parent=31 // pred_fallthru
        _
    $region32: #{_generator_forward.14} parent=5 // pred_fallthru
      _
    %p416 = scmp.le.s32.totalorder 2, %s9
    // Predicated region
    $region37: #{_generator_forward.14} parent=5 // pred_check
      %p417 = pneg %p416
    $region38: #{_generator_forward.14} parent=5 // pred_check_branch
      %419 = sbr.rel (%p417) target = $region40
    $region39: #{_generator_forward.14} parent=5 // pred_region
      %s420 = ssub.s32 %s9, 2
      // Predicated region
      $region41: #{_generator_forward.14} parent=39 // pred_check
        %p421 = pneg %p106
      $region42: #{_generator_forward.14} parent=39 // pred_check_branch
        %423 = sbr.rel (%p421) target = $region44
      $region43: #{_generator_forward.14} parent=39 // pred_region
        %s424 = smul.u32 28, %s15
        %p425 = scmp.lt.s32.totalorder %s424, 55
        %s426 = scalar_select %p425, %s424, 55
        %s427 = smul.addr %s426, 4
        %s428 = scalar_lea.vmem %s3, %s427
      $region44: #{_generator_forward.14} parent=39 // pred_fallthru
        _
    $region40: #{_generator_forward.14} parent=5 // pred_fallthru
      _
  $region6: #{_generator_forward.14} parent=0 // loop_footer
    %s13 = sadd.s32 1, %s9
  $region7: #{_generator_forward.14} parent=0 // loop_footer_branch
    %8 = sbr.rel target = $region3
  $region8: #{_generator_forward.14} parent=0 // loop_exit
    _

// kernel: _generator_forward.15
$region0: #{_generator_forward.15}
  #allocation0 [shape = 'u32[]', space=smem, size = 0x4, offset = 0x4, fixed_abs, tag = 'smem constant byte address 0x4 - core index']
  #allocation1 [shape = 'u32[72,128]{1,0:T(1,128)}', space=vmem, size = 0x9000, scoped, tag = 'internal scratch']
  %s0 = inlined_call_operand.vmem [shape: bf16[4,416,128], index: 0, kind: input, shape index: {}]
  %s1 = inlined_call_operand.vmem [shape: bf16[4,128,16], index: 1, kind: input, shape index: {}]
  %s2 = inlined_call_operand.vmem [shape: f32[4,416,16], index: 2, kind: output, shape index: {0}]
  %s3 = inlined_call_operand.vmem [shape: f32[4,2,2,16], index: 3, kind: output, shape index: {1}]
  %4 = xla_tuple %s2, %s3
  %s5 = sld [smem:[#allocation0]]
  $region57: #{_generator_forward.15} parent=0
    _
  %s7 = ssub.s32 1, %s5
  %s8 = scalar_select 0, %s7, %s5
  loop: start=0, step=1, limit=10
  $region2: #{_generator_forward.15} parent=0 // loop_pre_header
    _
  $region3: #{_generator_forward.15} parent=0 // loop_header
    %s10 = sphi 0, %s14
    %p11 = scmp.ge.s32.totalorder %s10, 10
    %s17 = sphi 0, %s36
    %s18 = sphi 0, %s32
    %s19 = sphi 0, %s28
    %s20 = sphi 0, %s17
    %s21 = sphi 0, %s18
    %s22 = sphi 0, %s19
    %s23 = sphi 0, %s20
    %s24 = sphi 0, %s21
    %s25 = sphi 0, %s22
    %s43 = sphi 0, %s45
    %s46 = sphi 0, %s43
    %s47 = sphi 0, %s46
    %s63 = sphi 0, %s47
    %s71 = sphi 0, %s73
    %s74 = sphi 0, %s71
    %s75 = sphi 0, %s74
    %s91 = sphi 0, %s75
    %s99 = sphi 0, %s101
    %s102 = sphi 0, %s99
    %s103 = sphi 0, %s102
    %s119 = sphi 0, %s103
    %s127 = sphi 0, %s129
    %s130 = sphi 0, %s127
    %s131 = sphi 0, %s130
    %s147 = sphi 0, %s131
  $region4: #{_generator_forward.15} parent=0 // loop_header_branch
    %13 = sbr.rel (%p11) target = $region8
  $region5: #{_generator_forward.15} parent=0 // loop_body
    %s15 = ssub.s32 %s10, 1
    %s16 = ssub.s32 %s10, 2
    %s26 = sadd.s32 1, %s19
    %p27 = scmp.ge.s32.totalorder %s26, 1
    %s28 = scalar_select %p27, 0, %s26
    %s29 = sadd.s32 1, %s18
    %s30 = scalar_select %p27, %s29, %s18
    %p31 = scmp.ge.s32.totalorder %s30, 2
    %s32 = scalar_select %p31, 0, %s30
    %s33 = sadd.s32 1, %s17
    %s34 = scalar_select %p31, %s33, %s17
    %p35 = scmp.ge.s32.totalorder %s34, 4
    %s36 = scalar_select %p35, 0, %s34
    %s37 = ssub.s32 %s17, %s36
    %s38 = ssub.s32 %s18, %s32
    %s39 = sor.u32 %s37, %s38
    %s40 = ssub.s32 %s19, %s28
    %s41 = sor.u32 %s39, %s40
    %p42 = scmp.eq.s32.totalorder %s41, 0
    %s44 = sadd.s32 %s43, 1
    %s45 = scalar_select %p42, %s43, %s44
    %p48 = pneg %p42
    %p49 = scmp.eq.s32.totalorder %s10, 7
    %p50 = por %p48, %p49
    %p51 = scmp.ne.s32.totalorder %s43, %s46
    %p52 = scmp.eq.s32.totalorder %s10, 0
    %p53 = por %p51, %p52
    %p54 = scmp.ne.s32.totalorder %s43, %s46
    %p55 = scmp.eq.s32.totalorder %s15, 7
    %p56 = por %p54, %p55
    %p57 = scmp.ne.s32.totalorder %s46, %s47
    %p58 = scmp.eq.s32.totalorder %s15, 0
    %p59 = por %p57, %p58
    %p60 = scmp.ne.s32.totalorder %s46, %s47
    %p61 = scmp.eq.s32.totalorder %s16, 7
    %p62 = por %p60, %p61
    %p64 = scmp.ne.s32.totalorder %s47, %s63
    %p65 = scmp.eq.s32.totalorder %s16, 0
    %p66 = por %p64, %p65
    %s67 = ssub.s32 %s17, %s36
    %s68 = ssub.s32 %s19, %s28
    %s69 = sor.u32 %s67, %s68
    %p70 = scmp.eq.s32.totalorder %s69, 0
    %s72 = sadd.s32 %s71, 1
    %s73 = scalar_select %p70, %s71, %s72
    %p76 = pneg %p70
    %p77 = scmp.eq.s32.totalorder %s10, 7
    %p78 = por %p76, %p77
    %p79 = scmp.ne.s32.totalorder %s71, %s74
    %p80 = scmp.eq.s32.totalorder %s10, 0
    %p81 = por %p79, %p80
    %p82 = scmp.ne.s32.totalorder %s71, %s74
    %p83 = scmp.eq.s32.totalorder %s15, 7
    %p84 = por %p82, %p83
    %p85 = scmp.ne.s32.totalorder %s74, %s75
    %p86 = scmp.eq.s32.totalorder %s15, 0
    %p87 = por %p85, %p86
    %p88 = scmp.ne.s32.totalorder %s74, %s75
    %p89 = scmp.eq.s32.totalorder %s16, 7
    %p90 = por %p88, %p89
    %p92 = scmp.ne.s32.totalorder %s75, %s91
    %p93 = scmp.eq.s32.totalorder %s16, 0
    %p94 = por %p92, %p93
    %s95 = ssub.s32 %s17, %s36
    %s96 = ssub.s32 %s18, %s32
    %s97 = sor.u32 %s95, %s96
    %p98 = scmp.eq.s32.totalorder %s97, 0
    %s100 = sadd.s32 %s99, 1
    %s101 = scalar_select %p98, %s99, %s100
    %p104 = pneg %p98
    %p105 = scmp.eq.s32.totalorder %s10, 7
    %p106 = por %p104, %p105
    %p107 = scmp.ne.s32.totalorder %s99, %s102
    %p108 = scmp.eq.s32.totalorder %s10, 0
    %p109 = por %p107, %p108
    %p110 = scmp.ne.s32.totalorder %s99, %s102
    %p111 = scmp.eq.s32.totalorder %s15, 7
    %p112 = por %p110, %p111
    %p113 = scmp.ne.s32.totalorder %s102, %s103
    %p114 = scmp.eq.s32.totalorder %s15, 0
    %p115 = por %p113, %p114
    %p116 = scmp.ne.s32.totalorder %s102, %s103
    %p117 = scmp.eq.s32.totalorder %s16, 7
    %p118 = por %p116, %p117
    %p120 = scmp.ne.s32.totalorder %s103, %s119
    %p121 = scmp.eq.s32.totalorder %s16, 0
    %p122 = por %p120, %p121
    %s123 = ssub.s32 %s17, %s36
    %s124 = ssub.s32 %s18, %s32
    %s125 = sor.u32 %s123, %s124
    %p126 = scmp.eq.s32.totalorder %s125, 0
    %s128 = sadd.s32 %s127, 1
    %s129 = scalar_select %p126, %s127, %s128
    %p132 = pneg %p126
    %p133 = scmp.eq.s32.totalorder %s10, 7
    %p134 = por %p132, %p133
    %p135 = scmp.ne.s32.totalorder %s127, %s130
    %p136 = scmp.eq.s32.totalorder %s10, 0
    %p137 = por %p135, %p136
    %p138 = scmp.ne.s32.totalorder %s127, %s130
    %p139 = scmp.eq.s32.totalorder %s15, 7
    %p140 = por %p138, %p139
    %p141 = scmp.ne.s32.totalorder %s130, %s131
    %p142 = scmp.eq.s32.totalorder %s15, 0
    %p143 = por %p141, %p142
    %p144 = scmp.ne.s32.totalorder %s130, %s131
    %p145 = scmp.eq.s32.totalorder %s16, 7
    %p146 = por %p144, %p145
    %p148 = scmp.ne.s32.totalorder %s131, %s147
    %p149 = scmp.eq.s32.totalorder %s16, 0
    %p150 = por %p148, %p149
    %p151 = scmp.le.s32.totalorder 1, %s10
    %p152 = scmp.lt.s32.totalorder %s10, 9
    %p153 = pnand %p151, %p152
    %p154 = pneg %p153
    // Predicated region
    $region9: #{_generator_forward.15} parent=5 // pred_check
      _
    $region10: #{_generator_forward.15} parent=5 // pred_check_branch
      %156 = sbr.rel (%p153) target = $region12
    $region11: #{_generator_forward.15} parent=5 // pred_region
      %s157 = ssub.s32 %s10, 1
    $region12: #{_generator_forward.15} parent=5 // pred_fallthru
      _
    %p158 = scmp.lt.s32.totalorder %s10, 8
    // Predicated region
    $region13: #{_generator_forward.15} parent=5 // pred_check
      %p159 = pneg %p158
    $region14: #{_generator_forward.15} parent=5 // pred_check_branch
      %161 = sbr.rel (%p159) target = $region16
    $region15: #{_generator_forward.15} parent=5 // pred_region
      // Predicated region
      $region17: #{_generator_forward.15} parent=15 // pred_check
        %p162 = pneg %p53
      $region18: #{_generator_forward.15} parent=15 // pred_check_branch
        %164 = sbr.rel (%p162) target = $region20
      $region19: #{_generator_forward.15} parent=15 // pred_region
        %s165 = smul.u32 26, %s18
        %p166 = scmp.lt.s32.totalorder %s17, 3
        %s167 = scalar_select %p166, %s17, 3
        %p168 = scmp.lt.s32.totalorder %s165, 51
        %s169 = scalar_select %p168, %s165, 51
        %p170 = scmp.lt.s32.totalorder %s19, 0
        %s171 = scalar_select %p170, %s19, 0
        %s172 = sadd.s32 %s171, %s169
        %s173 = smul.addr %s167, 52
        %s174 = sadd.s32 %s172, %s173
        %s175 = smul.addr %s174, 4
        %s176 = scalar_lea.vmem %s0, %s175
        %s177 = smul.u32 26, %s18
      $region20: #{_generator_forward.15} parent=15 // pred_fallthru
        _
      // Predicated region
      $region21: #{_generator_forward.15} parent=15 // pred_check
        %p178 = pneg %p81
      $region22: #{_generator_forward.15} parent=15 // pred_check_branch
        %180 = sbr.rel (%p178) target = $region24
      $region23: #{_generator_forward.15} parent=15 // pred_region
        %s181 = smul.u32 16, %s19
        %p182 = scmp.lt.s32.totalorder %s17, 3
        %s183 = scalar_select %p182, %s17, 3
        %p184 = scmp.lt.s32.totalorder %s181, 15
        %s185 = scalar_select %p184, %s181, 15
        %s186 = smul.addr %s183, 16
        %s187 = sadd.s32 %s185, %s186
        %s188 = smul.addr %s187, 4
        %s189 = scalar_lea.vmem %s1, %s188
        %s190 = smul.u32 16, %s19
      $region24: #{_generator_forward.15} parent=15 // pred_fallthru
        _
    $region16: #{_generator_forward.15} parent=5 // pred_fallthru
      _
    %p191 = scmp.le.s32.totalorder 1, %s10
    %p192 = scmp.lt.s32.totalorder %s10, 9
    %p193 = pnand %p191, %p192
    %p194 = pneg %p193
    // Predicated region
    $region25: #{_generator_forward.15} parent=5 // pred_check
      _
    $region26: #{_generator_forward.15} parent=5 // pred_check_branch
      %196 = sbr.rel (%p193) target = $region28
    $region27: #{_generator_forward.15} parent=5 // pred_region
      %s197 = ssub.s32 %s10, 1
      %s198 = smul.u32 26, %s21
      %p199 = scmp.lt.s32.totalorder %s20, 3
      %s200 = scalar_select %p199, %s20, 3
      %p201 = scmp.lt.s32.totalorder %s198, 51
      %s202 = scalar_select %p201, %s198, 51
      %p203 = scmp.lt.s32.totalorder %s22, 0
      %s204 = scalar_select %p203, %s22, 0
      %s205 = sadd.s32 %s204, %s202
      %s206 = smul.addr %s200, 52
      %s207 = sadd.s32 %s205, %s206
      %s208 = smul.addr %s207, 4
      %s209 = scalar_lea.vmem %s0, %s208
      %p210 = pneg %p59
      %p211 = pneg %p56
      %s212 = smul.u32 16, %s22
      %p213 = scmp.lt.s32.totalorder %s20, 3
      %s214 = scalar_select %p213, %s20, 3
      %p215 = scmp.lt.s32.totalorder %s212, 15
      %s216 = scalar_select %p215, %s212, 15
      %s217 = smul.addr %s214, 16
      %s218 = sadd.s32 %s216, %s217
      %s219 = smul.addr %s218, 4
      %s220 = scalar_lea.vmem %s1, %s219
      %p221 = pneg %p87
      %p222 = pneg %p84
      %p223 = pneg %p115
      %p224 = pneg %p112
      %s225 = smul.u32 26, %s21
      %p226 = scmp.lt.s32.totalorder %s20, 3
      %s227 = scalar_select %p226, %s20, 3
      %p228 = scmp.lt.s32.totalorder %s225, 51
      %s229 = scalar_select %p228, %s225, 51
      %s230 = smul.addr %s227, 52
      %s231 = sadd.s32 %s229, %s230
      %s232 = smul.addr %s231, 8
      %s233 = scalar_lea.vmem %s2, %s232
      %p234 = pneg %p143
      %p235 = pneg %p140
      %p236 = scmp.lt.s32.totalorder %s20, 3
      %s237 = scalar_select %p236, %s20, 3
      %p238 = scmp.lt.s32.totalorder %s21, 1
      %s239 = scalar_select %p238, %s21, 1
      %s240 = smul.addr %s237, 2
      %s241 = sadd.s32 %s239, %s240
      %s242 = smul.addr %s241, 2
      %s243 = scalar_lea.vmem %s3, %s242
      %s244 = smul.u32 26, %s21
      %p245 = scmp.lt.s32.totalorder %s20, 3
      %s246 = scalar_select %p245, %s20, 3
      %p247 = scmp.lt.s32.totalorder %s244, 51
      %s248 = scalar_select %p247, %s244, 51
      %p249 = scmp.lt.s32.totalorder %s22, 0
      %s250 = scalar_select %p249, %s22, 0
      %s251 = sadd.s32 %s250, %s248
      %s252 = smul.addr %s246, 52
      %s253 = sadd.s32 %s251, %s252
      %s254 = smul.addr %s253, 4
      %s255 = scalar_lea.vmem %s0, %s254
      %s256 = smul.u32 26, %s21
      %s257 = smul.u32 16, %s22
      %p258 = scmp.lt.s32.totalorder %s20, 3
      %s259 = scalar_select %p258, %s20, 3
      %p260 = scmp.lt.s32.totalorder %s257, 15
      %s261 = scalar_select %p260, %s257, 15
      %s262 = smul.addr %s259, 16
      %s263 = sadd.s32 %s261, %s262
      %s264 = smul.addr %s263, 4
      %s265 = scalar_lea.vmem %s1, %s264
      %s266 = smul.u32 16, %s22
      %s267 = smul.u32 26, %s21
      %p268 = scmp.lt.s32.totalorder %s20, 3
      %s269 = scalar_select %p268, %s20, 3
      %p270 = scmp.lt.s32.totalorder %s267, 51
      %s271 = scalar_select %p270, %s267, 51
      %s272 = smul.addr %s269, 52
      %s273 = sadd.s32 %s271, %s272
      %s274 = smul.addr %s273, 8
      %s275 = scalar_lea.vmem %s2, %s274
      %s276 = smul.u32 26, %s21
      %p277 = scmp.lt.s32.totalorder %s20, 3
      %s278 = scalar_select %p277, %s20, 3
      %p279 = scmp.lt.s32.totalorder %s21, 1
      %s280 = scalar_select %p279, %s21, 1
      %s281 = smul.addr %s278, 2
      %s282 = sadd.s32 %s280, %s281
      %s283 = smul.addr %s282, 2
      %s284 = scalar_lea.vmem %s3, %s283
      %p285 = scmp.eq.s32.totalorder %s22, 0
      // Predicated region
      $region29: #{_generator_forward.15} parent=27 // pred_check
        %p286 = pneg %p285
      $region30: #{_generator_forward.15} parent=27 // pred_check_branch
        %288 = sbr.rel (%p286) target = $region32
      $region31: #{_generator_forward.15} parent=27 // pred_region
        %vm289 = vcmask 130048
        %290 = vst.msk [vmem:[%s275] sm:$0xff] %vm289, 0.0
        %291 = vst.msk [vmem:[%s275 + $0x8] sm:$0xff] %vm289, 0.0
        %292 = vst.msk [vmem:[%s275 + $0x10] sm:$0xff] %vm289, 0.0
        %293 = vst.msk [vmem:[%s275 + $0x18] sm:$0xff] %vm289, 0.0
        %294 = vst.msk [vmem:[%s275 + $0x20] sm:$0xff] %vm289, 0.0
        %295 = vst.msk [vmem:[%s275 + $0x28] sm:$0xff] %vm289, 0.0
        %296 = vst.msk [vmem:[%s275 + $0x30] sm:$0xff] %vm289, 0.0
        %297 = vst.msk [vmem:[%s275 + $0x38] sm:$0xff] %vm289, 0.0
        %298 = vst.msk [vmem:[%s275 + $0x40] sm:$0xff] %vm289, 0.0
        %299 = vst.msk [vmem:[%s275 + $0x48] sm:$0xff] %vm289, 0.0
        %300 = vst.msk [vmem:[%s275 + $0x50] sm:$0xff] %vm289, 0.0
        %301 = vst.msk [vmem:[%s275 + $0x58] sm:$0xff] %vm289, 0.0
        %302 = vst.msk [vmem:[%s275 + $0x60] sm:$0xff] %vm289, 0.0
        %303 = vst.msk [vmem:[%s275 + $0x68] sm:$0xff] %vm289, 0.0
        %304 = vst.msk [vmem:[%s275 + $0x70] sm:$0xff] %vm289, 0.0
        %305 = vst.msk [vmem:[%s275 + $0x78] sm:$0xff] %vm289, 0.0
        %306 = vst.msk [vmem:[%s275 + $0x80] sm:$0xff] %vm289, 0.0
        %307 = vst.msk [vmem:[%s275 + $0x88] sm:$0xff] %vm289, 0.0
        %308 = vst.msk [vmem:[%s275 + $0x90] sm:$0xff] %vm289, 0.0
        %309 = vst.msk [vmem:[%s275 + $0x98] sm:$0xff] %vm289, 0.0
        %310 = vst.msk [vmem:[%s275 + $0xa0] sm:$0xff] %vm289, 0.0
        %311 = vst.msk [vmem:[%s275 + $0xa8] sm:$0xff] %vm289, 0.0
        %312 = vst.msk [vmem:[%s275 + $0xb0] sm:$0xff] %vm289, 0.0
        %313 = vst.msk [vmem:[%s275 + $0xb8] sm:$0xff] %vm289, 0.0
        %314 = vst.msk [vmem:[%s275 + $0xc0] sm:$0xff] %vm289, 0.0
        %315 = vst.msk [vmem:[%s275 + $0xc8] sm:$0xff] %vm289, 0.0
      $region32: #{_generator_forward.15} parent=27 // pred_fallthru
        _
      %v316 = vld [vmem:[%s275] sm:$0xff]
      %v317 = vld [vmem:[%s275 + $0x8] sm:$0xff]
      %v318 = vld [vmem:[%s275 + $0x10] sm:$0xff]
      %v319 = vld [vmem:[%s275 + $0x18] sm:$0xff]
      %v320 = vld [vmem:[%s275 + $0x20] sm:$0xff]
      %v321 = vld [vmem:[%s275 + $0x28] sm:$0xff]
      %v322 = vld [vmem:[%s275 + $0x30] sm:$0xff]
      %v323 = vld [vmem:[%s275 + $0x38] sm:$0xff]
      %v324 = vld [vmem:[%s275 + $0x40] sm:$0xff]
      %v325 = vld [vmem:[%s275 + $0x48] sm:$0xff]
      %v326 = vld [vmem:[%s275 + $0x50] sm:$0xff]
      %v327 = vld [vmem:[%s275 + $0x58] sm:$0xff]
      %v328 = vld [vmem:[%s275 + $0x60] sm:$0xff]
      %v329 = vld [vmem:[%s275 + $0x68] sm:$0xff]
      %v330 = vld [vmem:[%s275 + $0x70] sm:$0xff]
      %v331 = vld [vmem:[%s275 + $0x78] sm:$0xff]
      %v332 = vld [vmem:[%s275 + $0x80] sm:$0xff]
      %v333 = vld [vmem:[%s275 + $0x88] sm:$0xff]
      %v334 = vld [vmem:[%s275 + $0x90] sm:$0xff]
      %v335 = vld [vmem:[%s275 + $0x98] sm:$0xff]
      %v336 = vld [vmem:[%s275 + $0xa0] sm:$0xff]
      %v337 = vld [vmem:[%s275 + $0xa8] sm:$0xff]
      %v338 = vld [vmem:[%s275 + $0xb0] sm:$0xff]
      %v339 = vld [vmem:[%s275 + $0xb8] sm:$0xff]
      %v340 = vld [vmem:[%s275 + $0xc0] sm:$0xff]
      %v341 = vld [vmem:[%s275 + $0xc8] sm:$0xff]
      %v342 = vld [vmem:[%s255] sm:$0xf]
      %v343 = vld [vmem:[%s255 + $0x4] sm:$0xf]
      %v344 = vld [vmem:[%s255 + $0x8] sm:$0xf]
      %v345 = vld [vmem:[%s255 + $0xc] sm:$0xf]
      %v346 = vld [vmem:[%s255 + $0x10] sm:$0xf]
      %v347 = vld [vmem:[%s255 + $0x14] sm:$0xf]
      %v348 = vld [vmem:[%s255 + $0x18] sm:$0xf]
      %v349 = vld [vmem:[%s255 + $0x1c] sm:$0xf]
      %v350 = vld [vmem:[%s255 + $0x20] sm:$0xf]
      %v351 = vld [vmem:[%s255 + $0x24] sm:$0xf]
      %v352 = vld [vmem:[%s255 + $0x28] sm:$0xf]
      %v353 = vld [vmem:[%s255 + $0x2c] sm:$0xf]
      %v354 = vld [vmem:[%s255 + $0x30] sm:$0xf]
      %v355 = vld [vmem:[%s255 + $0x34] sm:$0xf]
      %v356 = vld [vmem:[%s255 + $0x38] sm:$0xf]
      %v357 = vld [vmem:[%s255 + $0x3c] sm:$0xf]
      %v358 = vld [vmem:[%s255 + $0x40] sm:$0xf]
      %v359 = vld [vmem:[%s255 + $0x44] sm:$0xf]
      %v360 = vld [vmem:[%s255 + $0x48] sm:$0xf]
      %v361 = vld [vmem:[%s255 + $0x4c] sm:$0xf]
      %v362 = vld [vmem:[%s255 + $0x50] sm:$0xf]
      %v363 = vld [vmem:[%s255 + $0x54] sm:$0xf]
      %v364 = vld [vmem:[%s255 + $0x58] sm:$0xf]
      %v365 = vld [vmem:[%s255 + $0x5c] sm:$0xf]
      %v366 = vld [vmem:[%s255 + $0x60] sm:$0xf]
      %v367 = vld [vmem:[%s255 + $0x64] sm:$0xf]
      %v368 = vld [vmem:[%s265] sm:$0xf]
      %v369 = vld [vmem:[%s265 + $0x4] sm:$0xf]
      %v370 = vld [vmem:[%s265 + $0x8] sm:$0xf]
      %v371 = vld [vmem:[%s265 + $0xc] sm:$0xf]
      %v372 = vld [vmem:[%s265 + $0x10] sm:$0xf]
      %v373 = vld [vmem:[%s265 + $0x14] sm:$0xf]
      %v374 = vld [vmem:[%s265 + $0x18] sm:$0xf]
      %v375 = vld [vmem:[%s265 + $0x1c] sm:$0xf]
      %v376 = vld [vmem:[%s265 + $0x20] sm:$0xf]
      %v377 = vld [vmem:[%s265 + $0x24] sm:$0xf]
      %v378 = vld [vmem:[%s265 + $0x28] sm:$0xf]
      %v379 = vld [vmem:[%s265 + $0x2c] sm:$0xf]
      %v380 = vld [vmem:[%s265 + $0x30] sm:$0xf]
      %v381 = vld [vmem:[%s265 + $0x34] sm:$0xf]
      %v382 = vld [vmem:[%s265 + $0x38] sm:$0xf]
      %v383 = vld [vmem:[%s265 + $0x3c] sm:$0xf]
      %v410 = vunpack.c.l.b16 %v342
      %v411 = vunpack.c.l.b16 %v343
      %v412 = vunpack.c.l.b16 %v344
      %v413 = vunpack.c.l.b16 %v345
      %v414 = vunpack.c.l.b16 %v346
      %v415 = vunpack.c.l.b16 %v347
      %v416 = vunpack.c.l.b16 %v348
      %v417 = vunpack.c.l.b16 %v349
      %v418 = vunpack.c.l.b16 %v350
      %v419 = vunpack.c.l.b16 %v351
      %v420 = vunpack.c.l.b16 %v352
      %v421 = vunpack.c.l.b16 %v353
      %v422 = vunpack.c.l.b16 %v354
      %v423 = vunpack.c.l.b16 %v355
      %v424 = vunpack.c.l.b16 %v356
      %v425 = vunpack.c.l.b16 %v357
      %v426 = vunpack.c.l.b16 %v358
      %v427 = vunpack.c.l.b16 %v359
      %v428 = vunpack.c.l.b16 %v360
      %v429 = vunpack.c.l.b16 %v361
      %v430 = vunpack.c.l.b16 %v362
      %v431 = vunpack.c.l.b16 %v363
      %v432 = vunpack.c.l.b16 %v364
      %v433 = vunpack.c.l.b16 %v365
      %v434 = vunpack.c.l.b16 %v366
      %v435 = vunpack.c.l.b16 %v367
      %v436 = vpack.c.b16 %v411, %v410
      %v437 = vpack.c.b16 %v413, %v412
      %v438 = vpack.c.b16 %v415, %v414
      %v439 = vpack.c.b16 %v417, %v416
      %v440 = vpack.c.b16 %v419, %v418
      %v441 = vpack.c.b16 %v421, %v420
      %v442 = vpack.c.b16 %v423, %v422
      %v443 = vpack.c.b16 %v425, %v424
      %v444 = vpack.c.b16 %v427, %v426
      %v445 = vpack.c.b16 %v429, %v428
      %v446 = vpack.c.b16 %v431, %v430
      %v447 = vpack.c.b16 %v433, %v432
      %v448 = vpack.c.b16 %v435, %v434
      %v478 = vunpack.c.l.b16 %v368
      %v479 = vunpack.c.l.b16 %v369
      %v480 = vunpack.c.l.b16 %v370
      %v481 = vunpack.c.l.b16 %v371
      %v482 = vunpack.c.l.b16 %v372
      %v483 = vunpack.c.l.b16 %v373
      %v484 = vunpack.c.l.b16 %v374
      %v485 = vunpack.c.l.b16 %v375
      %v486 = vunpack.c.l.b16 %v376
      %v487 = vunpack.c.l.b16 %v377
      %v488 = vunpack.c.l.b16 %v378
      %v489 = vunpack.c.l.b16 %v379
      %v490 = vunpack.c.l.b16 %v380
      %v491 = vunpack.c.l.b16 %v381
      %v492 = vunpack.c.l.b16 %v382
      %v493 = vunpack.c.l.b16 %v383
      %v494 = vpack.c.b16 %v479, %v478
      %v495 = vpack.c.b16 %v481, %v480
      %v496 = vpack.c.b16 %v483, %v482
      %v497 = vpack.c.b16 %v485, %v484
      %v498 = vpack.c.b16 %v487, %v486
      %v499 = vpack.c.b16 %v489, %v488
      %v500 = vpack.c.b16 %v491, %v490
      %v501 = vpack.c.b16 %v493, %v492
      %510 = vmatpush.bf16.msra.mxu0 %v501
      %511 = vmatpush.bf16.msra.mxu0 %v500
      %512 = vmatpush.bf16.msra.mxu0 %v499
      %513 = vmatpush.bf16.msra.mxu0 %v498
      %514 = vmatpush.bf16.msra.mxu0 %v497
      %515 = vmatpush.bf16.msra.mxu0 %v496
      %516 = vmatpush.bf16.msra.mxu0 %v495
      %517 = vmatpush.bf16.msra.mxu0 %v494
      %518 = vmatmul.bf16.gmra.mxu0 %v436
      %v519 = vpop.f32.mrf.mxu0
      %v520 = vadd.f32 0.0, %v519
      %v521 = vpop.f32.mrf.mxu0
      %v522 = vadd.f32 0.0, %v521
      %523 = vmatmul.bf16.gmra.mxu0 %v437
      %v524 = vpop.f32.mrf.mxu0
      %v525 = vadd.f32 0.0, %v524
      %v526 = vpop.f32.mrf.mxu0
      %v527 = vadd.f32 0.0, %v526
      %528 = vmatmul.bf16.gmra.mxu0 %v438
      %v529 = vpop.f32.mrf.mxu0
      %v530 = vadd.f32 0.0, %v529
      %v531 = vpop.f32.mrf.mxu0
      %v532 = vadd.f32 0.0, %v531
      %533 = vmatmul.bf16.gmra.mxu0 %v439
      %v534 = vpop.f32.mrf.mxu0
      %v535 = vadd.f32 0.0, %v534
      %v536 = vpop.f32.mrf.mxu0
      %v537 = vadd.f32 0.0, %v536
      %538 = vmatmul.bf16.gmra.mxu0 %v440
      %v539 = vpop.f32.mrf.mxu0
      %v540 = vadd.f32 0.0, %v539
      %v541 = vpop.f32.mrf.mxu0
      %v542 = vadd.f32 0.0, %v541
      %543 = vmatmul.bf16.gmra.mxu0 %v441
      %v544 = vpop.f32.mrf.mxu0
      %v545 = vadd.f32 0.0, %v544
      %v546 = vpop.f32.mrf.mxu0
      %v547 = vadd.f32 0.0, %v546
      %548 = vmatmul.bf16.gmra.mxu0 %v442
      %v549 = vpop.f32.mrf.mxu0
      %v550 = vadd.f32 0.0, %v549
      %v551 = vpop.f32.mrf.mxu0
      %v552 = vadd.f32 0.0, %v551
      %553 = vmatmul.bf16.gmra.mxu0 %v443
      %v554 = vpop.f32.mrf.mxu0
      %v555 = vadd.f32 0.0, %v554
      %v556 = vpop.f32.mrf.mxu0
      %v557 = vadd.f32 0.0, %v556
      %558 = vmatmul.bf16.gmra.mxu0 %v444
      %v559 = vpop.f32.mrf.mxu0
      %v560 = vadd.f32 0.0, %v559
      %v561 = vpop.f32.mrf.mxu0
      %v562 = vadd.f32 0.0, %v561
      %563 = vmatmul.bf16.gmra.mxu0 %v445
      %v564 = vpop.f32.mrf.mxu0
      %v565 = vadd.f32 0.0, %v564
      %v566 = vpop.f32.mrf.mxu0
      %v567 = vadd.f32 0.0, %v566
      %568 = vmatmul.bf16.gmra.mxu0 %v446
      %v569 = vpop.f32.mrf.mxu0
      %v570 = vadd.f32 0.0, %v569
      %v571 = vpop.f32.mrf.mxu0
      %v572 = vadd.f32 0.0, %v571
      %573 = vmatmul.bf16.gmra.mxu0 %v447
      %v574 = vpop.f32.mrf.mxu0
      %v575 = vadd.f32 0.0, %v574
      %v576 = vpop.f32.mrf.mxu0
      %v577 = vadd.f32 0.0, %v576
      %578 = vmatmul.bf16.gmra.mxu0 %v448
      %v579 = vpop.f32.mrf.mxu0
      %v580 = vadd.f32 0.0, %v579
      %v581 = vpop.f32.mrf.mxu0
      %v582 = vadd.f32 0.0, %v581
      %583 = vdwg.mxu0
      %v584 = vadd.f32 %v316, %v520
      %v585 = vadd.f32 %v317, %v522
      %v586 = vadd.f32 %v318, %v525
      %v587 = vadd.f32 %v319, %v527
      %v588 = vadd.f32 %v320, %v530
      %v589 = vadd.f32 %v321, %v532
      %v590 = vadd.f32 %v322, %v535
      %v591 = vadd.f32 %v323, %v537
      %v592 = vadd.f32 %v324, %v540
      %v593 = vadd.f32 %v325, %v542
      %v594 = vadd.f32 %v326, %v545
      %v595 = vadd.f32 %v327, %v547
      %v596 = vadd.f32 %v328, %v550
      %v597 = vadd.f32 %v329, %v552
      %v598 = vadd.f32 %v330, %v555
      %v599 = vadd.f32 %v331, %v557
      %v600 = vadd.f32 %v332, %v560
      %v601 = vadd.f32 %v333, %v562
      %v602 = vadd.f32 %v334, %v565
      %v603 = vadd.f32 %v335, %v567
      %v604 = vadd.f32 %v336, %v570
      %v605 = vadd.f32 %v337, %v572
      %v606 = vadd.f32 %v338, %v575
      %v607 = vadd.f32 %v339, %v577
      %v608 = vadd.f32 %v340, %v580
      %v609 = vadd.f32 %v341, %v582
      %vm610 = vcmask 130048
      %611 = vst.msk [vmem:[%s275] sm:$0xff] %vm610, %v584
      %612 = vst.msk [vmem:[%s275 + $0x8] sm:$0xff] %vm610, %v585
      %613 = vst.msk [vmem:[%s275 + $0x10] sm:$0xff] %vm610, %v586
      %614 = vst.msk [vmem:[%s275 + $0x18] sm:$0xff] %vm610, %v587
      %615 = vst.msk [vmem:[%s275 + $0x20] sm:$0xff] %vm610, %v588
      %616 = vst.msk [vmem:[%s275 + $0x28] sm:$0xff] %vm610, %v589
      %617 = vst.msk [vmem:[%s275 + $0x30] sm:$0xff] %vm610, %v590
      %618 = vst.msk [vmem:[%s275 + $0x38] sm:$0xff] %vm610, %v591
      %619 = vst.msk [vmem:[%s275 + $0x40] sm:$0xff] %vm610, %v592
      %620 = vst.msk [vmem:[%s275 + $0x48] sm:$0xff] %vm610, %v593
      %621 = vst.msk [vmem:[%s275 + $0x50] sm:$0xff] %vm610, %v594
      %622 = vst.msk [vmem:[%s275 + $0x58] sm:$0xff] %vm610, %v595
      %623 = vst.msk [vmem:[%s275 + $0x60] sm:$0xff] %vm610, %v596
      %624 = vst.msk [vmem:[%s275 + $0x68] sm:$0xff] %vm610, %v597
      %625 = vst.msk [vmem:[%s275 + $0x70] sm:$0xff] %vm610, %v598
      %626 = vst.msk [vmem:[%s275 + $0x78] sm:$0xff] %vm610, %v599
      %627 = vst.msk [vmem:[%s275 + $0x80] sm:$0xff] %vm610, %v600
      %628 = vst.msk [vmem:[%s275 + $0x88] sm:$0xff] %vm610, %v601
      %629 = vst.msk [vmem:[%s275 + $0x90] sm:$0xff] %vm610, %v602
      %630 = vst.msk [vmem:[%s275 + $0x98] sm:$0xff] %vm610, %v603
      %631 = vst.msk [vmem:[%s275 + $0xa0] sm:$0xff] %vm610, %v604
      %632 = vst.msk [vmem:[%s275 + $0xa8] sm:$0xff] %vm610, %v605
      %633 = vst.msk [vmem:[%s275 + $0xb0] sm:$0xff] %vm610, %v606
      %634 = vst.msk [vmem:[%s275 + $0xb8] sm:$0xff] %vm610, %v607
      %635 = vst.msk [vmem:[%s275 + $0xc0] sm:$0xff] %vm610, %v608
      %636 = vst.msk [vmem:[%s275 + $0xc8] sm:$0xff] %vm610, %v609
      // Predicated region
      $region33: #{_generator_forward.15} parent=27 // pred_check
        %p637 = pneg %p285
      $region34: #{_generator_forward.15} parent=27 // pred_check_branch
        %639 = sbr.rel (%p637) target = $region36
      $region35: #{_generator_forward.15} parent=27 // pred_region
        %v640 = vld [vmem:[%s275] sm:$0xff]
        %v641 = vld [vmem:[%s275 + $0x8] sm:$0xff]
        %v642 = vld [vmem:[%s275 + $0x10] sm:$0xff]
        %v643 = vld [vmem:[%s275 + $0x18] sm:$0xff]
        %v644 = vld [vmem:[%s275 + $0x20] sm:$0xff]
        %v645 = vld [vmem:[%s275 + $0x28] sm:$0xff]
        %v646 = vld [vmem:[%s275 + $0x30] sm:$0xff]
        %v647 = vld [vmem:[%s275 + $0x38] sm:$0xff]
        %v648 = vld [vmem:[%s275 + $0x40] sm:$0xff]
        %v649 = vld [vmem:[%s275 + $0x48] sm:$0xff]
        %v650 = vld [vmem:[%s275 + $0x50] sm:$0xff]
        %v651 = vld [vmem:[%s275 + $0x58] sm:$0xff]
        %v652 = vld [vmem:[%s275 + $0x60] sm:$0xff]
        %v653 = vld [vmem:[%s275 + $0x68] sm:$0xff]
        %v654 = vld [vmem:[%s275 + $0x70] sm:$0xff]
        %v655 = vld [vmem:[%s275 + $0x78] sm:$0xff]
        %v656 = vld [vmem:[%s275 + $0x80] sm:$0xff]
        %v657 = vld [vmem:[%s275 + $0x88] sm:$0xff]
        %v658 = vld [vmem:[%s275 + $0x90] sm:$0xff]
        %v659 = vld [vmem:[%s275 + $0x98] sm:$0xff]
        %v660 = vld [vmem:[%s275 + $0xa0] sm:$0xff]
        %v661 = vld [vmem:[%s275 + $0xa8] sm:$0xff]
        %v662 = vld [vmem:[%s275 + $0xb0] sm:$0xff]
        %v663 = vld [vmem:[%s275 + $0xb8] sm:$0xff]
        %v664 = vld [vmem:[%s275 + $0xc0] sm:$0xff]
        %v665 = vld [vmem:[%s275 + $0xc8] sm:$0xff]
        %v666 = vsel %vm610, %v640, 0.0
        %v667 = vsel %vm610, %v641, 0.0
        %v668 = vadd.f32 %v666, %v667
        %v669 = vsel %vm610, %v642, 0.0
        %v670 = vadd.f32 %v668, %v669
        %v671 = vsel %vm610, %v643, 0.0
        %v672 = vadd.f32 %v670, %v671
        %v673 = vsel %vm610, %v644, 0.0
        %v674 = vadd.f32 %v672, %v673
        %v675 = vsel %vm610, %v645, 0.0
        %v676 = vadd.f32 %v674, %v675
        %v677 = vsel %vm610, %v646, 0.0
        %v678 = vadd.f32 %v676, %v677
        %v679 = vsel %vm610, %v647, 0.0
        %v680 = vadd.f32 %v678, %v679
        %v681 = vsel %vm610, %v648, 0.0
        %v682 = vadd.f32 %v680, %v681
        %v683 = vsel %vm610, %v649, 0.0
        %v684 = vadd.f32 %v682, %v683
        %v685 = vsel %vm610, %v650, 0.0
        %v686 = vadd.f32 %v684, %v685
        %v687 = vsel %vm610, %v651, 0.0
        %v688 = vadd.f32 %v686, %v687
        %v689 = vsel %vm610, %v652, 0.0
        %v690 = vadd.f32 %v688, %v689
        %v691 = vsel %vm610, %v653, 0.0
        %v692 = vadd.f32 %v690, %v691
        %v693 = vsel %vm610, %v654, 0.0
        %v694 = vadd.f32 %v692, %v693
        %v695 = vsel %vm610, %v655, 0.0
        %v696 = vadd.f32 %v694, %v695
        %v697 = vsel %vm610, %v656, 0.0
        %v698 = vadd.f32 %v696, %v697
        %v699 = vsel %vm610, %v657, 0.0
        %v700 = vadd.f32 %v698, %v699
        %v701 = vsel %vm610, %v658, 0.0
        %v702 = vadd.f32 %v700, %v701
        %v703 = vsel %vm610, %v659, 0.0
        %v704 = vadd.f32 %v702, %v703
        %v705 = vsel %vm610, %v660, 0.0
        %v706 = vadd.f32 %v704, %v705
        %v707 = vsel %vm610, %v661, 0.0
        %v708 = vadd.f32 %v706, %v707
        %v709 = vsel %vm610, %v662, 0.0
        %v710 = vadd.f32 %v708, %v709
        %v711 = vsel %vm610, %v663, 0.0
        %v712 = vadd.f32 %v710, %v711
        %v713 = vsel %vm610, %v664, 0.0
        %v714 = vadd.f32 %v712, %v713
        %v715 = vsel %vm610, %v665, 0.0
        %v716 = vadd.f32 %v714, %v715
        %v717 = vrot.slane %v716, 4
        %v718 = vadd.f32 %v716, %v717
        %v719 = vrot.slane %v718, 2
        %v720 = vadd.f32 %v718, %v719
        %v721 = vrot.slane %v720, 1
        %v722 = vadd.f32 %v720, %v721
        %v723 = vmul.f32 %v640, %v640
        %v724 = vmul.f32 %v641, %v641
        %v725 = vmul.f32 %v642, %v642
        %v726 = vmul.f32 %v643, %v643
        %v727 = vmul.f32 %v644, %v644
        %v728 = vmul.f32 %v645, %v645
        %v729 = vmul.f32 %v646, %v646
        %v730 = vmul.f32 %v647, %v647
        %v731 = vmul.f32 %v648, %v648
        %v732 = vmul.f32 %v649, %v649
        %v733 = vmul.f32 %v650, %v650
        %v734 = vmul.f32 %v651, %v651
        %v735 = vmul.f32 %v652, %v652
        %v736 = vmul.f32 %v653, %v653
        %v737 = vmul.f32 %v654, %v654
        %v738 = vmul.f32 %v655, %v655
        %v739 = vmul.f32 %v656, %v656
        %v740 = vmul.f32 %v657, %v657
        %v741 = vmul.f32 %v658, %v658
        %v742 = vmul.f32 %v659, %v659
        %v743 = vmul.f32 %v660, %v660
        %v744 = vmul.f32 %v661, %v661
        %v745 = vmul.f32 %v662, %v662
        %v746 = vmul.f32 %v663, %v663
        %v747 = vmul.f32 %v664, %v664
        %v748 = vmul.f32 %v665, %v665
        %v749 = vsel %vm610, %v723, 0.0
        %v750 = vsel %vm610, %v724, 0.0
        %v751 = vadd.f32 %v749, %v750
        %v752 = vsel %vm610, %v725, 0.0
        %v753 = vadd.f32 %v751, %v752
        %v754 = vsel %vm610, %v726, 0.0
        %v755 = vadd.f32 %v753, %v754
        %v756 = vsel %vm610, %v727, 0.0
        %v757 = vadd.f32 %v755, %v756
        %v758 = vsel %vm610, %v728, 0.0
        %v759 = vadd.f32 %v757, %v758
        %v760 = vsel %vm610, %v729, 0.0
        %v761 = vadd.f32 %v759, %v760
        %v762 = vsel %vm610, %v730, 0.0
        %v763 = vadd.f32 %v761, %v762
        %v764 = vsel %vm610, %v731, 0.0
        %v765 = vadd.f32 %v763, %v764
        %v766 = vsel %vm610, %v732, 0.0
        %v767 = vadd.f32 %v765, %v766
        %v768 = vsel %vm610, %v733, 0.0
        %v769 = vadd.f32 %v767, %v768
        %v770 = vsel %vm610, %v734, 0.0
        %v771 = vadd.f32 %v769, %v770
        %v772 = vsel %vm610, %v735, 0.0
        %v773 = vadd.f32 %v771, %v772
        %v774 = vsel %vm610, %v736, 0.0
        %v775 = vadd.f32 %v773, %v774
        %v776 = vsel %vm610, %v737, 0.0
        %v777 = vadd.f32 %v775, %v776
        %v778 = vsel %vm610, %v738, 0.0
        %v779 = vadd.f32 %v777, %v778
        %v780 = vsel %vm610, %v739, 0.0
        %v781 = vadd.f32 %v779, %v780
        %v782 = vsel %vm610, %v740, 0.0
        %v783 = vadd.f32 %v781, %v782
        %v784 = vsel %vm610, %v741, 0.0
        %v785 = vadd.f32 %v783, %v784
        %v786 = vsel %vm610, %v742, 0.0
        %v787 = vadd.f32 %v785, %v786
        %v788 = vsel %vm610, %v743, 0.0
        %v789 = vadd.f32 %v787, %v788
        %v790 = vsel %vm610, %v744, 0.0
        %v791 = vadd.f32 %v789, %v790
        %v792 = vsel %vm610, %v745, 0.0
        %v793 = vadd.f32 %v791, %v792
        %v794 = vsel %vm610, %v746, 0.0
        %v795 = vadd.f32 %v793, %v794
        %v796 = vsel %vm610, %v747, 0.0
        %v797 = vadd.f32 %v795, %v796
        %v798 = vsel %vm610, %v748, 0.0
        %v799 = vadd.f32 %v797, %v798
        %v800 = vrot.slane %v799, 4
        %v801 = vadd.f32 %v799, %v800
        %v802 = vrot.slane %v801, 2
        %v803 = vadd.f32 %v801, %v802
        %v804 = vrot.slane %v803, 1
        %v805 = vadd.f32 %v803, %v804
        %vm806 = vcmask 1040384
        %v807 = vsel %vm806, %v722, %v805
        %vm808 = vcmask 123904
        %809 = vst.msk [vmem:[%s284] sm:$0x3] %vm808, %v807
      $region36: #{_generator_forward.15} parent=27 // pred_fallthru
        _
      %s810 = smul.u32 26, %s21
      %p811 = scmp.lt.s32.totalorder %s20, 3
      %s812 = scalar_select %p811, %s20, 3
      %p813 = scmp.lt.s32.totalorder %s810, 51
      %s814 = scalar_select %p813, %s810, 51
      %s815 = smul.addr %s812, 52
      %s816 = sadd.s32 %s814, %s815
      %s817 = smul.addr %s816, 8
      %s818 = scalar_lea.vmem %s2, %s817
      %p819 = scmp.lt.s32.totalorder %s20, 3
      %s820 = scalar_select %p819, %s20, 3
      %p821 = scmp.lt.s32.totalorder %s21, 1
      %s822 = scalar_select %p821, %s21, 1
      %s823 = smul.addr %s820, 2
      %s824 = sadd.s32 %s822, %s823
      %s825 = smul.addr %s824, 2
      %s826 = scalar_lea.vmem %s3, %s825
      // Predicated region
      $region37: #{_generator_forward.15} parent=27 // pred_check
        %p827 = pneg %p112
      $region38: #{_generator_forward.15} parent=27 // pred_check_branch
        %829 = sbr.rel (%p827) target = $region40
      $region39: #{_generator_forward.15} parent=27 // pred_region
        %s830 = smul.u32 26, %s21
      $region40: #{_generator_forward.15} parent=27 // pred_fallthru
        _
      // Predicated region
      $region41: #{_generator_forward.15} parent=27 // pred_check
        %p831 = pneg %p140
      $region42: #{_generator_forward.15} parent=27 // pred_check_branch
        %833 = sbr.rel (%p831) target = $region44
      $region43: #{_generator_forward.15} parent=27 // pred_region
        _
      $region44: #{_generator_forward.15} parent=27 // pred_fallthru
        _
    $region28: #{_generator_forward.15} parent=5 // pred_fallthru
      _
    %p834 = scmp.le.s32.totalorder 2, %s10
    // Predicated region
    $region45: #{_generator_forward.15} parent=5 // pred_check
      %p835 = pneg %p834
    $region46: #{_generator_forward.15} parent=5 // pred_check_branch
      %837 = sbr.rel (%p835) target = $region48
    $region47: #{_generator_forward.15} parent=5 // pred_region
      %s838 = ssub.s32 %s10, 2
      // Predicated region
      $region49: #{_generator_forward.15} parent=47 // pred_check
        %p839 = pneg %p118
      $region50: #{_generator_forward.15} parent=47 // pred_check_branch
        %841 = sbr.rel (%p839) target = $region52
      $region51: #{_generator_forward.15} parent=47 // pred_region
        %s842 = smul.u32 26, %s24
        %p843 = scmp.lt.s32.totalorder %s23, 3
        %s844 = scalar_select %p843, %s23, 3
        %p845 = scmp.lt.s32.totalorder %s842, 51
        %s846 = scalar_select %p845, %s842, 51
        %s847 = smul.addr %s844, 52
        %s848 = sadd.s32 %s846, %s847
        %s849 = smul.addr %s848, 8
        %s850 = scalar_lea.vmem %s2, %s849
      $region52: #{_generator_forward.15} parent=47 // pred_fallthru
        _
      // Predicated region
      $region53: #{_generator_forward.15} parent=47 // pred_check
        %p851 = pneg %p146
      $region54: #{_generator_forward.15} parent=47 // pred_check_branch
        %853 = sbr.rel (%p851) target = $region56
      $region55: #{_generator_forward.15} parent=47 // pred_region
        %p854 = scmp.lt.s32.totalorder %s23, 3
        %s855 = scalar_select %p854, %s23, 3
        %p856 = scmp.lt.s32.totalorder %s24, 1
        %s857 = scalar_select %p856, %s24, 1
        %s858 = smul.addr %s855, 2
        %s859 = sadd.s32 %s857, %s858
        %s860 = smul.addr %s859, 2
        %s861 = scalar_lea.vmem %s3, %s860
      $region56: #{_generator_forward.15} parent=47 // pred_fallthru
        _
    $region48: #{_generator_forward.15} parent=5 // pred_fallthru
      _
  $region6: #{_generator_forward.15} parent=0 // loop_footer
    %s14 = sadd.s32 1, %s10
  $region7: #{_generator_forward.15} parent=0 // loop_footer_branch
    %9 = sbr.rel target = $region3
  $region8: #{_generator_forward.15} parent=0 // loop_exit
    _

// kernel: _generator_forward.16
$region0: #{_generator_forward.16}
  #allocation0 [shape = 'u32[]', space=smem, size = 0x4, offset = 0x4, fixed_abs, tag = 'smem constant byte address 0x4 - core index']
  #allocation1 [shape = 'u32[72,128]{1,0:T(1,128)}', space=vmem, size = 0x9000, scoped, tag = 'internal scratch']
  %s0 = inlined_call_operand.vmem [shape: f32[1680,16], index: 0, kind: input, shape index: {}]
  %s1 = inlined_call_operand.vmem [shape: f32[1,16], index: 1, kind: input, shape index: {}]
  %s2 = inlined_call_operand.vmem [shape: f32[1,16], index: 2, kind: input, shape index: {}]
  %s3 = inlined_call_operand.vmem [shape: bf16[1680,16], index: 3, kind: output, shape index: {}]
  %s4 = sld [smem:[#allocation0]]
  $region45: #{_generator_forward.16} parent=0
    _
  %s6 = ssub.s32 1, %s4
  %s7 = scalar_select 0, %s6, %s4
  loop: start=0, step=1, limit=9
  $region2: #{_generator_forward.16} parent=0 // loop_pre_header
    _
  $region3: #{_generator_forward.16} parent=0 // loop_header
    %s9 = sphi 0, %s13
    %p10 = scmp.ge.s32.totalorder %s9, 9
    %s19 = sphi 0, %s21
    %s22 = sphi 0, %s19
    %s23 = sphi 0, %s22
    %s39 = sphi 0, %s23
    %s43 = sphi 0, %s43
    %s45 = sphi 0, %s43
    %s46 = sphi 0, %s45
    %s60 = sphi 0, %s46
    %s64 = sphi 0, %s64
    %s66 = sphi 0, %s64
    %s67 = sphi 0, %s66
    %s81 = sphi 0, %s67
    %s87 = sphi 0, %s89
    %s90 = sphi 0, %s87
    %s91 = sphi 0, %s90
    %s107 = sphi 0, %s91
  $region4: #{_generator_forward.16} parent=0 // loop_header_branch
    %12 = sbr.rel (%p10) target = $region8
  $region5: #{_generator_forward.16} parent=0 // loop_body
    %s14 = ssub.s32 %s9, 1
    %s15 = ssub.s32 %s9, 2
    %s16 = sadd.s32 %s9, 1
    %s17 = ssub.s32 %s9, %s16
    %p18 = scmp.eq.s32.totalorder %s17, 0
    %s20 = sadd.s32 %s19, 1
    %s21 = scalar_select %p18, %s19, %s20
    %p24 = pneg %p18
    %p25 = scmp.eq.s32.totalorder %s9, 6
    %p26 = por %p24, %p25
    %p27 = scmp.ne.s32.totalorder %s19, %s22
    %p28 = scmp.eq.s32.totalorder %s9, 0
    %p29 = por %p27, %p28
    %p30 = scmp.ne.s32.totalorder %s19, %s22
    %p31 = scmp.eq.s32.totalorder %s14, 6
    %p32 = por %p30, %p31
    %p33 = scmp.ne.s32.totalorder %s22, %s23
    %p34 = scmp.eq.s32.totalorder %s14, 0
    %p35 = por %p33, %p34
    %p36 = scmp.ne.s32.totalorder %s22, %s23
    %p37 = scmp.eq.s32.totalorder %s15, 6
    %p38 = por %p36, %p37
    %p40 = scmp.ne.s32.totalorder %s23, %s39
    %p41 = scmp.eq.s32.totalorder %s15, 0
    %p42 = por %p40, %p41
    %s44 = sadd.s32 %s43, 1
    %p47 = scmp.eq.s32.totalorder %s9, 6
    %p48 = scmp.ne.s32.totalorder %s43, %s45
    %p49 = scmp.eq.s32.totalorder %s9, 0
    %p50 = por %p48, %p49
    %p51 = scmp.ne.s32.totalorder %s43, %s45
    %p52 = scmp.eq.s32.totalorder %s14, 6
    %p53 = por %p51, %p52
    %p54 = scmp.ne.s32.totalorder %s45, %s46
    %p55 = scmp.eq.s32.totalorder %s14, 0
    %p56 = por %p54, %p55
    %p57 = scmp.ne.s32.totalorder %s45, %s46
    %p58 = scmp.eq.s32.totalorder %s15, 6
    %p59 = por %p57, %p58
    %p61 = scmp.ne.s32.totalorder %s46, %s60
    %p62 = scmp.eq.s32.totalorder %s15, 0
    %p63 = por %p61, %p62
    %s65 = sadd.s32 %s64, 1
    %p68 = scmp.eq.s32.totalorder %s9, 6
    %p69 = scmp.ne.s32.totalorder %s64, %s66
    %p70 = scmp.eq.s32.totalorder %s9, 0
    %p71 = por %p69, %p70
    %p72 = scmp.ne.s32.totalorder %s64, %s66
    %p73 = scmp.eq.s32.totalorder %s14, 6
    %p74 = por %p72, %p73
    %p75 = scmp.ne.s32.totalorder %s66, %s67
    %p76 = scmp.eq.s32.totalorder %s14, 0
    %p77 = por %p75, %p76
    %p78 = scmp.ne.s32.totalorder %s66, %s67
    %p79 = scmp.eq.s32.totalorder %s15, 6
    %p80 = por %p78, %p79
    %p82 = scmp.ne.s32.totalorder %s67, %s81
    %p83 = scmp.eq.s32.totalorder %s15, 0
    %p84 = por %p82, %p83
    %s85 = ssub.s32 %s9, %s16
    %p86 = scmp.eq.s32.totalorder %s85, 0
    %s88 = sadd.s32 %s87, 1
    %s89 = scalar_select %p86, %s87, %s88
    %p92 = pneg %p86
    %p93 = scmp.eq.s32.totalorder %s9, 6
    %p94 = por %p92, %p93
    %p95 = scmp.ne.s32.totalorder %s87, %s90
    %p96 = scmp.eq.s32.totalorder %s9, 0
    %p97 = por %p95, %p96
    %p98 = scmp.ne.s32.totalorder %s87, %s90
    %p99 = scmp.eq.s32.totalorder %s14, 6
    %p100 = por %p98, %p99
    %p101 = scmp.ne.s32.totalorder %s90, %s91
    %p102 = scmp.eq.s32.totalorder %s14, 0
    %p103 = por %p101, %p102
    %p104 = scmp.ne.s32.totalorder %s90, %s91
    %p105 = scmp.eq.s32.totalorder %s15, 6
    %p106 = por %p104, %p105
    %p108 = scmp.ne.s32.totalorder %s91, %s107
    %p109 = scmp.eq.s32.totalorder %s15, 0
    %p110 = por %p108, %p109
    %p111 = scmp.le.s32.totalorder 1, %s9
    %p112 = scmp.lt.s32.totalorder %s9, 8
    %p113 = pnand %p111, %p112
    %p114 = pneg %p113
    // Predicated region
    $region9: #{_generator_forward.16} parent=5 // pred_check
      _
    $region10: #{_generator_forward.16} parent=5 // pred_check_branch
      %116 = sbr.rel (%p113) target = $region12
    $region11: #{_generator_forward.16} parent=5 // pred_region
      %s117 = ssub.s32 %s9, 1
      // Predicated region
      $region13: #{_generator_forward.16} parent=11 // pred_check
        %p118 = pneg %p56
      $region14: #{_generator_forward.16} parent=11 // pred_check_branch
        %120 = sbr.rel (%p118) target = $region16
      $region15: #{_generator_forward.16} parent=11 // pred_region
        _
      $region16: #{_generator_forward.16} parent=11 // pred_fallthru
        _
      // Predicated region
      $region17: #{_generator_forward.16} parent=11 // pred_check
        %p121 = pneg %p77
      $region18: #{_generator_forward.16} parent=11 // pred_check_branch
        %123 = sbr.rel (%p121) target = $region20
      $region19: #{_generator_forward.16} parent=11 // pred_region
        _
      $region20: #{_generator_forward.16} parent=11 // pred_fallthru
        _
    $region12: #{_generator_forward.16} parent=5 // pred_fallthru
      _
    %p124 = scmp.lt.s32.totalorder %s9, 7
    // Predicated region
    $region21: #{_generator_forward.16} parent=5 // pred_check
      %p125 = pneg %p124
    $region22: #{_generator_forward.16} parent=5 // pred_check_branch
      %127 = sbr.rel (%p125) target = $region24
    $region23: #{_generator_forward.16} parent=5 // pred_region
      // Predicated region
      $region25: #{_generator_forward.16} parent=23 // pred_check
        %p128 = pneg %p29
      $region26: #{_generator_forward.16} parent=23 // pred_check_branch
        %130 = sbr.rel (%p128) target = $region28
      $region27: #{_generator_forward.16} parent=23 // pred_region
        %s131 = smul.u32 30, %s9
        %p132 = scmp.lt.s32.totalorder %s131, 209
        %s133 = scalar_select %p132, %s131, 209
        %s134 = smul.addr %s133, 8
        %s135 = scalar_lea.vmem %s0, %s134
        %s136 = smul.u32 30, %s9
      $region28: #{_generator_forward.16} parent=23 // pred_fallthru
        _
    $region24: #{_generator_forward.16} parent=5 // pred_fallthru
      _
    %p137 = scmp.le.s32.totalorder 1, %s9
    %p138 = scmp.lt.s32.totalorder %s9, 8
    %p139 = pnand %p137, %p138
    %p140 = pneg %p139
    // Predicated region
    $region29: #{_generator_forward.16} parent=5 // pred_check
      _
    $region30: #{_generator_forward.16} parent=5 // pred_check_branch
      %142 = sbr.rel (%p139) target = $region32
    $region31: #{_generator_forward.16} parent=5 // pred_region
      %s143 = ssub.s32 %s9, 1
      %s144 = smul.u32 30, %s14
      %p145 = scmp.lt.s32.totalorder %s144, 209
      %s146 = scalar_select %p145, %s144, 209
      %s147 = smul.addr %s146, 8
      %s148 = scalar_lea.vmem %s0, %s147
      %p149 = pneg %p35
      %p150 = pneg %p32
      %p151 = pneg %p56
      %p152 = pneg %p53
      %p153 = pneg %p77
      %p154 = pneg %p74
      %p155 = pneg %p103
      %p156 = pneg %p100
      %s157 = smul.u32 30, %s14
      %p158 = scmp.lt.s32.totalorder %s157, 209
      %s159 = scalar_select %p158, %s157, 209
      %s160 = smul.addr %s159, 4
      %s161 = scalar_lea.vmem %s3, %s160
      %s162 = smul.u32 30, %s14
      %p163 = scmp.lt.s32.totalorder %s162, 209
      %s164 = scalar_select %p163, %s162, 209
      %s165 = smul.addr %s164, 8
      %s166 = scalar_lea.vmem %s0, %s165
      %s167 = smul.u32 30, %s14
      %s168 = smul.u32 30, %s14
      %p169 = scmp.lt.s32.totalorder %s168, 209
      %s170 = scalar_select %p169, %s168, 209
      %s171 = smul.addr %s170, 4
      %s172 = scalar_lea.vmem %s3, %s171
      %s173 = smul.u32 30, %s14
      %v174 = vld [vmem:[%s166] sm:$0xff]
      %v175 = vld [vmem:[%s166 + $0x8] sm:$0xff]
      %v176 = vld [vmem:[%s166 + $0x10] sm:$0xff]
      %v177 = vld [vmem:[%s166 + $0x18] sm:$0xff]
      %v178 = vld [vmem:[%s166 + $0x20] sm:$0xff]
      %v179 = vld [vmem:[%s166 + $0x28] sm:$0xff]
      %v180 = vld [vmem:[%s166 + $0x30] sm:$0xff]
      %v181 = vld [vmem:[%s166 + $0x38] sm:$0xff]
      %v182 = vld [vmem:[%s166 + $0x40] sm:$0xff]
      %v183 = vld [vmem:[%s166 + $0x48] sm:$0xff]
      %v184 = vld [vmem:[%s166 + $0x50] sm:$0xff]
      %v185 = vld [vmem:[%s166 + $0x58] sm:$0xff]
      %v186 = vld [vmem:[%s166 + $0x60] sm:$0xff]
      %v187 = vld [vmem:[%s166 + $0x68] sm:$0xff]
      %v188 = vld [vmem:[%s166 + $0x70] sm:$0xff]
      %v189 = vld [vmem:[%s166 + $0x78] sm:$0xff]
      %v190 = vld [vmem:[%s166 + $0x80] sm:$0xff]
      %v191 = vld [vmem:[%s166 + $0x88] sm:$0xff]
      %v192 = vld [vmem:[%s166 + $0x90] sm:$0xff]
      %v193 = vld [vmem:[%s166 + $0x98] sm:$0xff]
      %v194 = vld [vmem:[%s166 + $0xa0] sm:$0xff]
      %v195 = vld [vmem:[%s166 + $0xa8] sm:$0xff]
      %v196 = vld [vmem:[%s166 + $0xb0] sm:$0xff]
      %v197 = vld [vmem:[%s166 + $0xb8] sm:$0xff]
      %v198 = vld [vmem:[%s166 + $0xc0] sm:$0xff]
      %v199 = vld [vmem:[%s166 + $0xc8] sm:$0xff]
      %v200 = vld [vmem:[%s166 + $0xd0] sm:$0xff]
      %v201 = vld [vmem:[%s166 + $0xd8] sm:$0xff]
      %v202 = vld [vmem:[%s166 + $0xe0] sm:$0xff]
      %v203 = vld [vmem:[%s166 + $0xe8] sm:$0xff]
      %v204 = vld [vmem:[%s1] sm:$0x1]
      %v206 = vperm.slane %v204, 0
      %v208 = vmul.f32 %v174, %v206
      %v209 = vmul.f32 %v175, %v206
      %v210 = vmul.f32 %v176, %v206
      %v211 = vmul.f32 %v177, %v206
      %v212 = vmul.f32 %v178, %v206
      %v213 = vmul.f32 %v179, %v206
      %v214 = vmul.f32 %v180, %v206
      %v215 = vmul.f32 %v181, %v206
      %v216 = vmul.f32 %v182, %v206
      %v217 = vmul.f32 %v183, %v206
      %v218 = vmul.f32 %v184, %v206
      %v219 = vmul.f32 %v185, %v206
      %v220 = vmul.f32 %v186, %v206
      %v221 = vmul.f32 %v187, %v206
      %v222 = vmul.f32 %v188, %v206
      %v223 = vmul.f32 %v189, %v206
      %v224 = vmul.f32 %v190, %v206
      %v225 = vmul.f32 %v191, %v206
      %v226 = vmul.f32 %v192, %v206
      %v227 = vmul.f32 %v193, %v206
      %v228 = vmul.f32 %v194, %v206
      %v229 = vmul.f32 %v195, %v206
      %v230 = vmul.f32 %v196, %v206
      %v231 = vmul.f32 %v197, %v206
      %v232 = vmul.f32 %v198, %v206
      %v233 = vmul.f32 %v199, %v206
      %v234 = vmul.f32 %v200, %v206
      %v235 = vmul.f32 %v201, %v206
      %v236 = vmul.f32 %v202, %v206
      %v237 = vmul.f32 %v203, %v206
      %v238 = vld [vmem:[%s2] sm:$0x1]
      %v240 = vperm.slane %v238, 0
      %v242 = vadd.f32 %v208, %v240
      %v243 = vadd.f32 %v209, %v240
      %v244 = vadd.f32 %v210, %v240
      %v245 = vadd.f32 %v211, %v240
      %v246 = vadd.f32 %v212, %v240
      %v247 = vadd.f32 %v213, %v240
      %v248 = vadd.f32 %v214, %v240
      %v249 = vadd.f32 %v215, %v240
      %v250 = vadd.f32 %v216, %v240
      %v251 = vadd.f32 %v217, %v240
      %v252 = vadd.f32 %v218, %v240
      %v253 = vadd.f32 %v219, %v240
      %v254 = vadd.f32 %v220, %v240
      %v255 = vadd.f32 %v221, %v240
      %v256 = vadd.f32 %v222, %v240
      %v257 = vadd.f32 %v223, %v240
      %v258 = vadd.f32 %v224, %v240
      %v259 = vadd.f32 %v225, %v240
      %v260 = vadd.f32 %v226, %v240
      %v261 = vadd.f32 %v227, %v240
      %v262 = vadd.f32 %v228, %v240
      %v263 = vadd.f32 %v229, %v240
      %v264 = vadd.f32 %v230, %v240
      %v265 = vadd.f32 %v231, %v240
      %v266 = vadd.f32 %v232, %v240
      %v267 = vadd.f32 %v233, %v240
      %v268 = vadd.f32 %v234, %v240
      %v269 = vadd.f32 %v235, %v240
      %v270 = vadd.f32 %v236, %v240
      %v271 = vadd.f32 %v237, %v240
      %vm272 = vcmp.ge.f32.partialorder %v242, 0.0
      %vm273 = vcmp.ge.f32.partialorder %v243, 0.0
      %vm274 = vcmp.ge.f32.partialorder %v244, 0.0
      %vm275 = vcmp.ge.f32.partialorder %v245, 0.0
      %vm276 = vcmp.ge.f32.partialorder %v246, 0.0
      %vm277 = vcmp.ge.f32.partialorder %v247, 0.0
      %vm278 = vcmp.ge.f32.partialorder %v248, 0.0
      %vm279 = vcmp.ge.f32.partialorder %v249, 0.0
      %vm280 = vcmp.ge.f32.partialorder %v250, 0.0
      %vm281 = vcmp.ge.f32.partialorder %v251, 0.0
      %vm282 = vcmp.ge.f32.partialorder %v252, 0.0
      %vm283 = vcmp.ge.f32.partialorder %v253, 0.0
      %vm284 = vcmp.ge.f32.partialorder %v254, 0.0
      %vm285 = vcmp.ge.f32.partialorder %v255, 0.0
      %vm286 = vcmp.ge.f32.partialorder %v256, 0.0
      %vm287 = vcmp.ge.f32.partialorder %v257, 0.0
      %vm288 = vcmp.ge.f32.partialorder %v258, 0.0
      %vm289 = vcmp.ge.f32.partialorder %v259, 0.0
      %vm290 = vcmp.ge.f32.partialorder %v260, 0.0
      %vm291 = vcmp.ge.f32.partialorder %v261, 0.0
      %vm292 = vcmp.ge.f32.partialorder %v262, 0.0
      %vm293 = vcmp.ge.f32.partialorder %v263, 0.0
      %vm294 = vcmp.ge.f32.partialorder %v264, 0.0
      %vm295 = vcmp.ge.f32.partialorder %v265, 0.0
      %vm296 = vcmp.ge.f32.partialorder %v266, 0.0
      %vm297 = vcmp.ge.f32.partialorder %v267, 0.0
      %vm298 = vcmp.ge.f32.partialorder %v268, 0.0
      %vm299 = vcmp.ge.f32.partialorder %v269, 0.0
      %vm300 = vcmp.ge.f32.partialorder %v270, 0.0
      %vm301 = vcmp.ge.f32.partialorder %v271, 0.0
      %v302 = vmul.f32 %v242, 0.2
      %v303 = vmul.f32 %v243, 0.2
      %v304 = vmul.f32 %v244, 0.2
      %v305 = vmul.f32 %v245, 0.2
      %v306 = vmul.f32 %v246, 0.2
      %v307 = vmul.f32 %v247, 0.2
      %v308 = vmul.f32 %v248, 0.2
      %v309 = vmul.f32 %v249, 0.2
      %v310 = vmul.f32 %v250, 0.2
      %v311 = vmul.f32 %v251, 0.2
      %v312 = vmul.f32 %v252, 0.2
      %v313 = vmul.f32 %v253, 0.2
      %v314 = vmul.f32 %v254, 0.2
      %v315 = vmul.f32 %v255, 0.2
      %v316 = vmul.f32 %v256, 0.2
      %v317 = vmul.f32 %v257, 0.2
      %v318 = vmul.f32 %v258, 0.2
      %v319 = vmul.f32 %v259, 0.2
      %v320 = vmul.f32 %v260, 0.2
      %v321 = vmul.f32 %v261, 0.2
      %v322 = vmul.f32 %v262, 0.2
      %v323 = vmul.f32 %v263, 0.2
      %v324 = vmul.f32 %v264, 0.2
      %v325 = vmul.f32 %v265, 0.2
      %v326 = vmul.f32 %v266, 0.2
      %v327 = vmul.f32 %v267, 0.2
      %v328 = vmul.f32 %v268, 0.2
      %v329 = vmul.f32 %v269, 0.2
      %v330 = vmul.f32 %v270, 0.2
      %v331 = vmul.f32 %v271, 0.2
      %v332 = vsel %vm272, %v242, %v302
      %v333 = vsel %vm273, %v243, %v303
      %v334 = vsel %vm274, %v244, %v304
      %v335 = vsel %vm275, %v245, %v305
      %v336 = vsel %vm276, %v246, %v306
      %v337 = vsel %vm277, %v247, %v307
      %v338 = vsel %vm278, %v248, %v308
      %v339 = vsel %vm279, %v249, %v309
      %v340 = vsel %vm280, %v250, %v310
      %v341 = vsel %vm281, %v251, %v311
      %v342 = vsel %vm282, %v252, %v312
      %v343 = vsel %vm283, %v253, %v313
      %v344 = vsel %vm284, %v254, %v314
      %v345 = vsel %vm285, %v255, %v315
      %v346 = vsel %vm286, %v256, %v316
      %v347 = vsel %vm287, %v257, %v317
      %v348 = vsel %vm288, %v258, %v318
      %v349 = vsel %vm289, %v259, %v319
      %v350 = vsel %vm290, %v260, %v320
      %v351 = vsel %vm291, %v261, %v321
      %v352 = vsel %vm292, %v262, %v322
      %v353 = vsel %vm293, %v263, %v323
      %v354 = vsel %vm294, %v264, %v324
      %v355 = vsel %vm295, %v265, %v325
      %v356 = vsel %vm296, %v266, %v326
      %v357 = vsel %vm297, %v267, %v327
      %v358 = vsel %vm298, %v268, %v328
      %v359 = vsel %vm299, %v269, %v329
      %v360 = vsel %vm300, %v270, %v330
      %v361 = vsel %vm301, %v271, %v331
      %v362 = vpack.c.bf16 %v332, %v332
      %v363 = vpack.c.bf16 %v333, %v333
      %v364 = vpack.c.bf16 %v334, %v334
      %v365 = vpack.c.bf16 %v335, %v335
      %v366 = vpack.c.bf16 %v336, %v336
      %v367 = vpack.c.bf16 %v337, %v337
      %v368 = vpack.c.bf16 %v338, %v338
      %v369 = vpack.c.bf16 %v339, %v339
      %v370 = vpack.c.bf16 %v340, %v340
      %v371 = vpack.c.bf16 %v341, %v341
      %v372 = vpack.c.bf16 %v342, %v342
      %v373 = vpack.c.bf16 %v343, %v343
      %v374 = vpack.c.bf16 %v344, %v344
      %v375 = vpack.c.bf16 %v345, %v345
      %v376 = vpack.c.bf16 %v346, %v346
      %v377 = vpack.c.bf16 %v347, %v347
      %v378 = vpack.c.bf16 %v348, %v348
      %v379 = vpack.c.bf16 %v349, %v349
      %v380 = vpack.c.bf16 %v350, %v350
      %v381 = vpack.c.bf16 %v351, %v351
      %v382 = vpack.c.bf16 %v352, %v352
      %v383 = vpack.c.bf16 %v353, %v353
      %v384 = vpack.c.bf16 %v354, %v354
      %v385 = vpack.c.bf16 %v355, %v355
      %v386 = vpack.c.bf16 %v356, %v356
      %v387 = vpack.c.bf16 %v357, %v357
      %v388 = vpack.c.bf16 %v358, %v358
      %v389 = vpack.c.bf16 %v359, %v359
      %v390 = vpack.c.bf16 %v360, %v360
      %v391 = vpack.c.bf16 %v361, %v361
      %vm392 = vcmask 125952
      %393 = vst.msk [vmem:[%s172] sm:$0xf] %vm392, %v362
      %394 = vst.msk [vmem:[%s172 + $0x4] sm:$0xf] %vm392, %v363
      %395 = vst.msk [vmem:[%s172 + $0x8] sm:$0xf] %vm392, %v364
      %396 = vst.msk [vmem:[%s172 + $0xc] sm:$0xf] %vm392, %v365
      %397 = vst.msk [vmem:[%s172 + $0x10] sm:$0xf] %vm392, %v366
      %398 = vst.msk [vmem:[%s172 + $0x14] sm:$0xf] %vm392, %v367
      %399 = vst.msk [vmem:[%s172 + $0x18] sm:$0xf] %vm392, %v368
      %400 = vst.msk [vmem:[%s172 + $0x1c] sm:$0xf] %vm392, %v369
      %401 = vst.msk [vmem:[%s172 + $0x20] sm:$0xf] %vm392, %v370
      %402 = vst.msk [vmem:[%s172 + $0x24] sm:$0xf] %vm392, %v371
      %403 = vst.msk [vmem:[%s172 + $0x28] sm:$0xf] %vm392, %v372
      %404 = vst.msk [vmem:[%s172 + $0x2c] sm:$0xf] %vm392, %v373
      %405 = vst.msk [vmem:[%s172 + $0x30] sm:$0xf] %vm392, %v374
      %406 = vst.msk [vmem:[%s172 + $0x34] sm:$0xf] %vm392, %v375
      %407 = vst.msk [vmem:[%s172 + $0x38] sm:$0xf] %vm392, %v376
      %408 = vst.msk [vmem:[%s172 + $0x3c] sm:$0xf] %vm392, %v377
      %409 = vst.msk [vmem:[%s172 + $0x40] sm:$0xf] %vm392, %v378
      %410 = vst.msk [vmem:[%s172 + $0x44] sm:$0xf] %vm392, %v379
      %411 = vst.msk [vmem:[%s172 + $0x48] sm:$0xf] %vm392, %v380
      %412 = vst.msk [vmem:[%s172 + $0x4c] sm:$0xf] %vm392, %v381
      %413 = vst.msk [vmem:[%s172 + $0x50] sm:$0xf] %vm392, %v382
      %414 = vst.msk [vmem:[%s172 + $0x54] sm:$0xf] %vm392, %v383
      %415 = vst.msk [vmem:[%s172 + $0x58] sm:$0xf] %vm392, %v384
      %416 = vst.msk [vmem:[%s172 + $0x5c] sm:$0xf] %vm392, %v385
      %417 = vst.msk [vmem:[%s172 + $0x60] sm:$0xf] %vm392, %v386
      %418 = vst.msk [vmem:[%s172 + $0x64] sm:$0xf] %vm392, %v387
      %419 = vst.msk [vmem:[%s172 + $0x68] sm:$0xf] %vm392, %v388
      %420 = vst.msk [vmem:[%s172 + $0x6c] sm:$0xf] %vm392, %v389
      %421 = vst.msk [vmem:[%s172 + $0x70] sm:$0xf] %vm392, %v390
      %422 = vst.msk [vmem:[%s172 + $0x74] sm:$0xf] %vm392, %v391
      %s423 = smul.u32 30, %s14
      %p424 = scmp.lt.s32.totalorder %s423, 209
      %s425 = scalar_select %p424, %s423, 209
      %s426 = smul.addr %s425, 4
      %s427 = scalar_lea.vmem %s3, %s426
      // Predicated region
      $region33: #{_generator_forward.16} parent=31 // pred_check
        %p428 = pneg %p100
      $region34: #{_generator_forward.16} parent=31 // pred_check_branch
        %430 = sbr.rel (%p428) target = $region36
      $region35: #{_generator_forward.16} parent=31 // pred_region
        %s431 = smul.u32 30, %s14
      $region36: #{_generator_forward.16} parent=31 // pred_fallthru
        _
    $region32: #{_generator_forward.16} parent=5 // pred_fallthru
      _
    %p432 = scmp.le.s32.totalorder 2, %s9
    // Predicated region
    $region37: #{_generator_forward.16} parent=5 // pred_check
      %p433 = pneg %p432
    $region38: #{_generator_forward.16} parent=5 // pred_check_branch
      %435 = sbr.rel (%p433) target = $region40
    $region39: #{_generator_forward.16} parent=5 // pred_region
      %s436 = ssub.s32 %s9, 2
      // Predicated region
      $region41: #{_generator_forward.16} parent=39 // pred_check
        %p437 = pneg %p106
      $region42: #{_generator_forward.16} parent=39 // pred_check_branch
        %439 = sbr.rel (%p437) target = $region44
      $region43: #{_generator_forward.16} parent=39 // pred_region
        %s440 = smul.u32 30, %s15
        %p441 = scmp.lt.s32.totalorder %s440, 209
        %s442 = scalar_select %p441, %s440, 209
        %s443 = smul.addr %s442, 4
        %s444 = scalar_lea.vmem %s3, %s443
      $region44: #{_generator_forward.16} parent=39 // pred_fallthru
        _
    $region40: #{_generator_forward.16} parent=5 // pred_fallthru
      _
  $region6: #{_generator_forward.16} parent=0 // loop_footer
    %s13 = sadd.s32 1, %s9
  $region7: #{_generator_forward.16} parent=0 // loop_footer_branch
    %8 = sbr.rel target = $region3
  $region8: #{_generator_forward.16} parent=0 // loop_exit
    _

// kernel: _generator_forward.17
$region0: #{_generator_forward.17}
  #allocation0 [shape = 'u32[]', space=smem, size = 0x4, offset = 0x4, fixed_abs, tag = 'smem constant byte address 0x4 - core index']
  #allocation1 [shape = 'u32[72,128]{1,0:T(1,128)}', space=vmem, size = 0x9000, scoped, tag = 'internal scratch']
  %s0 = inlined_call_operand.vmem [shape: bf16[2048,256], index: 0, kind: input, shape index: {}]
  %s1 = inlined_call_operand.vmem [shape: bf16[256,128], index: 1, kind: input, shape index: {}]
  %s2 = inlined_call_operand.vmem [shape: f32[1,128], index: 2, kind: input, shape index: {}]
  %s3 = inlined_call_operand.vmem [shape: f32[2048,128], index: 3, kind: output, shape index: {}]
  %s4 = sld [smem:[#allocation0]]
  $region53: #{_generator_forward.17} parent=0
    _
  %s6 = ssub.s32 1, %s4
  %s7 = scalar_select 0, %s6, %s4
  loop: start=0, step=1, limit=10
  $region2: #{_generator_forward.17} parent=0 // loop_pre_header
    _
  $region3: #{_generator_forward.17} parent=0 // loop_header
    %s9 = sphi 0, %s13
    %p10 = scmp.ge.s32.totalorder %s9, 10
    %s16 = sphi 0, %s28
    %s17 = sphi 0, %s24
    %s18 = sphi 0, %s16
    %s19 = sphi 0, %s17
    %s20 = sphi 0, %s18
    %s21 = sphi 0, %s19
    %s33 = sphi 0, %s35
    %s36 = sphi 0, %s33
    %s37 = sphi 0, %s36
    %s53 = sphi 0, %s37
    %s59 = sphi 0, %s61
    %s62 = sphi 0, %s59
    %s63 = sphi 0, %s62
    %s79 = sphi 0, %s63
    %s83 = sphi 0, %s83
    %s85 = sphi 0, %s83
    %s86 = sphi 0, %s85
    %s100 = sphi 0, %s86
    %s106 = sphi 0, %s108
    %s109 = sphi 0, %s106
    %s110 = sphi 0, %s109
    %s126 = sphi 0, %s110
  $region4: #{_generator_forward.17} parent=0 // loop_header_branch
    %12 = sbr.rel (%p10) target = $region8
  $region5: #{_generator_forward.17} parent=0 // loop_body
    %s14 = ssub.s32 %s9, 1
    %s15 = ssub.s32 %s9, 2
    %s22 = sadd.s32 1, %s17
    %p23 = scmp.ge.s32.totalorder %s22, 1
    %s24 = scalar_select %p23, 0, %s22
    %s25 = sadd.s32 1, %s16
    %s26 = scalar_select %p23, %s25, %s16
    %p27 = scmp.ge.s32.totalorder %s26, 8
    %s28 = scalar_select %p27, 0, %s26
    %s29 = ssub.s32 %s16, %s28
    %s30 = ssub.s32 %s17, %s24
    %s31 = sor.u32 %s29, %s30
    %p32 = scmp.eq.s32.totalorder %s31, 0
    %s34 = sadd.s32 %s33, 1
    %s35 = scalar_select %p32, %s33, %s34
    %p38 = pneg %p32
    %p39 = scmp.eq.s32.totalorder %s9, 7
    %p40 = por %p38, %p39
    %p41 = scmp.ne.s32.totalorder %s33, %s36
    %p42 = scmp.eq.s32.totalorder %s9, 0
    %p43 = por %p41, %p42
    %p44 = scmp.ne.s32.totalorder %s33, %s36
    %p45 = scmp.eq.s32.totalorder %s14, 7
    %p46 = por %p44, %p45
    %p47 = scmp.ne.s32.totalorder %s36, %s37
    %p48 = scmp.eq.s32.totalorder %s14, 0
    %p49 = por %p47, %p48
    %p50 = scmp.ne.s32.totalorder %s36, %s37
    %p51 = scmp.eq.s32.totalorder %s15, 7
    %p52 = por %p50, %p51
    %p54 = scmp.ne.s32.totalorder %s37, %s53
    %p55 = scmp.eq.s32.totalorder %s15, 0
    %p56 = por %p54, %p55
    %s57 = ssub.s32 %s17, %s24
    %p58 = scmp.eq.s32.totalorder %s57, 0
    %s60 = sadd.s32 %s59, 1
    %s61 = scalar_select %p58, %s59, %s60
    %p64 = pneg %p58
    %p65 = scmp.eq.s32.totalorder %s9, 7
    %p66 = por %p64, %p65
    %p67 = scmp.ne.s32.totalorder %s59, %s62
    %p68 = scmp.eq.s32.totalorder %s9, 0
    %p69 = por %p67, %p68
    %p70 = scmp.ne.s32.totalorder %s59, %s62
    %p71 = scmp.eq.s32.totalorder %s14, 7
    %p72 = por %p70, %p71
    %p73 = scmp.ne.s32.totalorder %s62, %s63
    %p74 = scmp.eq.s32.totalorder %s14, 0
    %p75 = por %p73, %p74
    %p76 = scmp.ne.s32.totalorder %s62, %s63
    %p77 = scmp.eq.s32.totalorder %s15, 7
    %p78 = por %p76, %p77
    %p80 = scmp.ne.s32.totalorder %s63, %s79
    %p81 = scmp.eq.s32.totalorder %s15, 0
    %p82 = por %p80, %p81
    %s84 = sadd.s32 %s83, 1
    %p87 = scmp.eq.s32.totalorder %s9, 7
    %p88 = scmp.ne.s32.totalorder %s83, %s85
    %p89 = scmp.eq.s32.totalorder %s9, 0
    %p90 = por %p88, %p89
    %p91 = scmp.ne.s32.totalorder %s83, %s85
    %p92 = scmp.eq.s32.totalorder %s14, 7
    %p93 = por %p91, %p92
    %p94 = scmp.ne.s32.totalorder %s85, %s86
    %p95 = scmp.eq.s32.totalorder %s14, 0
    %p96 = por %p94, %p95
    %p97 = scmp.ne.s32.totalorder %s85, %s86
    %p98 = scmp.eq.s32.totalorder %s15, 7
    %p99 = por %p97, %p98
    %p101 = scmp.ne.s32.totalorder %s86, %s100
    %p102 = scmp.eq.s32.totalorder %s15, 0
    %p103 = por %p101, %p102
    %s104 = ssub.s32 %s16, %s28
    %p105 = scmp.eq.s32.totalorder %s104, 0
    %s107 = sadd.s32 %s106, 1
    %s108 = scalar_select %p105, %s106, %s107
    %p111 = pneg %p105
    %p112 = scmp.eq.s32.totalorder %s9, 7
    %p113 = por %p111, %p112
    %p114 = scmp.ne.s32.totalorder %s106, %s109
    %p115 = scmp.eq.s32.totalorder %s9, 0
    %p116 = por %p114, %p115
    %p117 = scmp.ne.s32.totalorder %s106, %s109
    %p118 = scmp.eq.s32.totalorder %s14, 7
    %p119 = por %p117, %p118
    %p120 = scmp.ne.s32.totalorder %s109, %s110
    %p121 = scmp.eq.s32.totalorder %s14, 0
    %p122 = por %p120, %p121
    %p123 = scmp.ne.s32.totalorder %s109, %s110
    %p124 = scmp.eq.s32.totalorder %s15, 7
    %p125 = por %p123, %p124
    %p127 = scmp.ne.s32.totalorder %s110, %s126
    %p128 = scmp.eq.s32.totalorder %s15, 0
    %p129 = por %p127, %p128
    %p130 = scmp.le.s32.totalorder 1, %s9
    %p131 = scmp.lt.s32.totalorder %s9, 9
    %p132 = pnand %p130, %p131
    %p133 = pneg %p132
    // Predicated region
    $region9: #{_generator_forward.17} parent=5 // pred_check
      _
    $region10: #{_generator_forward.17} parent=5 // pred_check_branch
      %135 = sbr.rel (%p132) target = $region12
    $region11: #{_generator_forward.17} parent=5 // pred_region
      %s136 = ssub.s32 %s9, 1
      // Predicated region
      $region13: #{_generator_forward.17} parent=11 // pred_check
        %p137 = pneg %p75
      $region14: #{_generator_forward.17} parent=11 // pred_check_branch
        %139 = sbr.rel (%p137) target = $region16
      $region15: #{_generator_forward.17} parent=11 // pred_region
        %s140 = smul.u32 32, %s19
        %p141 = scmp.lt.s32.totalorder %s140, 31
        %s142 = scalar_select %p141, %s140, 31
        %s143 = smul.addr %s142, 4
        %s144 = scalar_lea.vmem %s1, %s143
        %s145 = smul.u32 32, %s19
      $region16: #{_generator_forward.17} parent=11 // pred_fallthru
        _
      // Predicated region
      $region17: #{_generator_forward.17} parent=11 // pred_check
        %p146 = pneg %p96
      $region18: #{_generator_forward.17} parent=11 // pred_check_branch
        %148 = sbr.rel (%p146) target = $region20
      $region19: #{_generator_forward.17} parent=11 // pred_region
        _
      $region20: #{_generator_forward.17} parent=11 // pred_fallthru
        _
    $region12: #{_generator_forward.17} parent=5 // pred_fallthru
      _
    %p149 = scmp.lt.s32.totalorder %s9, 8
    // Predicated region
    $region21: #{_generator_forward.17} parent=5 // pred_check
      %p150 = pneg %p149
    $region22: #{_generator_forward.17} parent=5 // pred_check_branch
      %152 = sbr.rel (%p150) target = $region24
    $region23: #{_generator_forward.17} parent=5 // pred_region
      // Predicated region
      $region25: #{_generator_forward.17} parent=23 // pred_check
        %p153 = pneg %p43
      $region26: #{_generator_forward.17} parent=23 // pred_check_branch
        %155 = sbr.rel (%p153) target = $region28
      $region27: #{_generator_forward.17} parent=23 // pred_region
        %s156 = smul.u32 32, %s16
        %s157 = smul.u32 2, %s17
        %p158 = scmp.lt.s32.totalorder %s156, 255
        %s159 = scalar_select %p158, %s156, 255
        %p160 = scmp.lt.s32.totalorder %s157, 1
        %s161 = scalar_select %p160, %s157, 1
        %s162 = smul.addr %s159, 2
        %s163 = sadd.s32 %s161, %s162
        %s164 = smul.addr %s163, 4
        %s165 = scalar_lea.vmem %s0, %s164
        %s166 = smul.u32 32, %s16
        %s167 = smul.u32 2, %s17
      $region28: #{_generator_forward.17} parent=23 // pred_fallthru
        _
    $region24: #{_generator_forward.17} parent=5 // pred_fallthru
      _
    %p168 = scmp.le.s32.totalorder 1, %s9
    %p169 = scmp.lt.s32.totalorder %s9, 9
    %p170 = pnand %p168, %p169
    %p171 = pneg %p170
    // Predicated region
    $region29: #{_generator_forward.17} parent=5 // pred_check
      _
    $region30: #{_generator_forward.17} parent=5 // pred_check_branch
      %173 = sbr.rel (%p170) target = $region32
    $region31: #{_generator_forward.17} parent=5 // pred_region
      %s174 = ssub.s32 %s9, 1
      %s175 = smul.u32 32, %s18
      %s176 = smul.u32 2, %s19
      %p177 = scmp.lt.s32.totalorder %s175, 255
      %s178 = scalar_select %p177, %s175, 255
      %p179 = scmp.lt.s32.totalorder %s176, 1
      %s180 = scalar_select %p179, %s176, 1
      %s181 = smul.addr %s178, 2
      %s182 = sadd.s32 %s180, %s181
      %s183 = smul.addr %s182, 4
      %s184 = scalar_lea.vmem %s0, %s183
      %p185 = pneg %p49
      %p186 = pneg %p46
      %s187 = smul.u32 32, %s19
      %p188 = scmp.lt.s32.totalorder %s187, 31
      %s189 = scalar_select %p188, %s187, 31
      %s190 = smul.addr %s189, 4
      %s191 = scalar_lea.vmem %s1, %s190
      %p192 = pneg %p75
      %p193 = pneg %p72
      %p194 = pneg %p96
      %p195 = pneg %p93
      %p196 = pneg %p122
      %p197 = pneg %p119
      %s198 = smul.u32 32, %s18
      %p199 = scmp.lt.s32.totalorder %s198, 255
      %s200 = scalar_select %p199, %s198, 255
      %s201 = smul.addr %s200, 8
      %s202 = scalar_lea.vmem %s3, %s201
      %s203 = smul.u32 32, %s18
      %s204 = smul.u32 2, %s19
      %p205 = scmp.lt.s32.totalorder %s203, 255
      %s206 = scalar_select %p205, %s203, 255
      %p207 = scmp.lt.s32.totalorder %s204, 1
      %s208 = scalar_select %p207, %s204, 1
      %s209 = smul.addr %s206, 2
      %s210 = sadd.s32 %s208, %s209
      %s211 = smul.addr %s210, 4
      %s212 = scalar_lea.vmem %s0, %s211
      %s213 = smul.u32 32, %s18
      %s214 = smul.u32 2, %s19
      %s215 = smul.u32 32, %s19
      %p216 = scmp.lt.s32.totalorder %s215, 31
      %s217 = scalar_select %p216, %s215, 31
      %s218 = smul.addr %s217, 4
      %s219 = scalar_lea.vmem %s1, %s218
      %s220 = smul.u32 32, %s19
      %s221 = smul.u32 32, %s18
      %p222 = scmp.lt.s32.totalorder %s221, 255
      %s223 = scalar_select %p222, %s221, 255
      %s224 = smul.addr %s223, 8
      %s225 = scalar_lea.vmem %s3, %s224
      %s226 = smul.u32 32, %s18
      %p227 = scmp.eq.s32.totalorder %s19, 0
      // Predicated region
      $region33: #{_generator_forward.17} parent=31 // pred_check
        %p228 = pneg %p227
      $region34: #{_generator_forward.17} parent=31 // pred_check_branch
        %230 = sbr.rel (%p228) target = $region36
      $region35: #{_generator_forward.17} parent=31 // pred_region
        %231 = vst [vmem:[%s225] sm:$0xff] 0.0
        %232 = vst [vmem:[%s225 + $0x8] sm:$0xff] 0.0
        %233 = vst [vmem:[%s225 + $0x10] sm:$0xff] 0.0
        %234 = vst [vmem:[%s225 + $0x18] sm:$0xff] 0.0
        %235 = vst [vmem:[%s225 + $0x20] sm:$0xff] 0.0
        %236 = vst [vmem:[%s225 + $0x28] sm:$0xff] 0.0
        %237 = vst [vmem:[%s225 + $0x30] sm:$0xff] 0.0
        %238 = vst [vmem:[%s225 + $0x38] sm:$0xff] 0.0
        %239 = vst [vmem:[%s225 + $0x40] sm:$0xff] 0.0
        %240 = vst [vmem:[%s225 + $0x48] sm:$0xff] 0.0
        %241 = vst [vmem:[%s225 + $0x50] sm:$0xff] 0.0
        %242 = vst [vmem:[%s225 + $0x58] sm:$0xff] 0.0
        %243 = vst [vmem:[%s225 + $0x60] sm:$0xff] 0.0
        %244 = vst [vmem:[%s225 + $0x68] sm:$0xff] 0.0
        %245 = vst [vmem:[%s225 + $0x70] sm:$0xff] 0.0
        %246 = vst [vmem:[%s225 + $0x78] sm:$0xff] 0.0
        %247 = vst [vmem:[%s225 + $0x80] sm:$0xff] 0.0
        %248 = vst [vmem:[%s225 + $0x88] sm:$0xff] 0.0
        %249 = vst [vmem:[%s225 + $0x90] sm:$0xff] 0.0
        %250 = vst [vmem:[%s225 + $0x98] sm:$0xff] 0.0
        %251 = vst [vmem:[%s225 + $0xa0] sm:$0xff] 0.0
        %252 = vst [vmem:[%s225 + $0xa8] sm:$0xff] 0.0
        %253 = vst [vmem:[%s225 + $0xb0] sm:$0xff] 0.0
        %254 = vst [vmem:[%s225 + $0xb8] sm:$0xff] 0.0
        %255 = vst [vmem:[%s225 + $0xc0] sm:$0xff] 0.0
        %256 = vst [vmem:[%s225 + $0xc8] sm:$0xff] 0.0
        %257 = vst [vmem:[%s225 + $0xd0] sm:$0xff] 0.0
        %258 = vst [vmem:[%s225 + $0xd8] sm:$0xff] 0.0
        %259 = vst [vmem:[%s225 + $0xe0] sm:$0xff] 0.0
        %260 = vst [vmem:[%s225 + $0xe8] sm:$0xff] 0.0
        %261 = vst [vmem:[%s225 + $0xf0] sm:$0xff] 0.0
        %262 = vst [vmem:[%s225 + $0xf8] sm:$0xff] 0.0
      $region36: #{_generator_forward.17} parent=31 // pred_fallthru
        _
      %v263 = vld [vmem:[%s225] sm:$0xff]
      %v264 = vld [vmem:[%s225 + $0x8] sm:$0xff]
      %v265 = vld [vmem:[%s225 + $0x10] sm:$0xff]
      %v266 = vld [vmem:[%s225 + $0x18] sm:$0xff]
      %v267 = vld [vmem:[%s225 + $0x20] sm:$0xff]
      %v268 = vld [vmem:[%s225 + $0x28] sm:$0xff]
      %v269 = vld [vmem:[%s225 + $0x30] sm:$0xff]
      %v270 = vld [vmem:[%s225 + $0x38] sm:$0xff]
      %v271 = vld [vmem:[%s225 + $0x40] sm:$0xff]
      %v272 = vld [vmem:[%s225 + $0x48] sm:$0xff]
      %v273 = vld [vmem:[%s225 + $0x50] sm:$0xff]
      %v274 = vld [vmem:[%s225 + $0x58] sm:$0xff]
      %v275 = vld [vmem:[%s225 + $0x60] sm:$0xff]
      %v276 = vld [vmem:[%s225 + $0x68] sm:$0xff]
      %v277 = vld [vmem:[%s225 + $0x70] sm:$0xff]
      %v278 = vld [vmem:[%s225 + $0x78] sm:$0xff]
      %v279 = vld [vmem:[%s225 + $0x80] sm:$0xff]
      %v280 = vld [vmem:[%s225 + $0x88] sm:$0xff]
      %v281 = vld [vmem:[%s225 + $0x90] sm:$0xff]
      %v282 = vld [vmem:[%s225 + $0x98] sm:$0xff]
      %v283 = vld [vmem:[%s225 + $0xa0] sm:$0xff]
      %v284 = vld [vmem:[%s225 + $0xa8] sm:$0xff]
      %v285 = vld [vmem:[%s225 + $0xb0] sm:$0xff]
      %v286 = vld [vmem:[%s225 + $0xb8] sm:$0xff]
      %v287 = vld [vmem:[%s225 + $0xc0] sm:$0xff]
      %v288 = vld [vmem:[%s225 + $0xc8] sm:$0xff]
      %v289 = vld [vmem:[%s225 + $0xd0] sm:$0xff]
      %v290 = vld [vmem:[%s225 + $0xd8] sm:$0xff]
      %v291 = vld [vmem:[%s225 + $0xe0] sm:$0xff]
      %v292 = vld [vmem:[%s225 + $0xe8] sm:$0xff]
      %v293 = vld [vmem:[%s225 + $0xf0] sm:$0xff]
      %v294 = vld [vmem:[%s225 + $0xf8] sm:$0xff]
      %v295 = vld [vmem:[%s212] sm:$0xff]
      %v296 = vld [vmem:[%s212 + $0x8] sm:$0xff]
      %v297 = vld [vmem:[%s212 + $0x10] sm:$0xff]
      %v298 = vld [vmem:[%s212 + $0x18] sm:$0xff]
      %v299 = vld [vmem:[%s212 + $0x20] sm:$0xff]
      %v300 = vld [vmem:[%s212 + $0x28] sm:$0xff]
      %v301 = vld [vmem:[%s212 + $0x30] sm:$0xff]
      %v302 = vld [vmem:[%s212 + $0x38] sm:$0xff]
      %v303 = vld [vmem:[%s212 + $0x40] sm:$0xff]
      %v304 = vld [vmem:[%s212 + $0x48] sm:$0xff]
      %v305 = vld [vmem:[%s212 + $0x50] sm:$0xff]
      %v306 = vld [vmem:[%s212 + $0x58] sm:$0xff]
      %v307 = vld [vmem:[%s212 + $0x60] sm:$0xff]
      %v308 = vld [vmem:[%s212 + $0x68] sm:$0xff]
      %v309 = vld [vmem:[%s212 + $0x70] sm:$0xff]
      %v310 = vld [vmem:[%s212 + $0x78] sm:$0xff]
      %v311 = vld [vmem:[%s212 + $0x80] sm:$0xff]
      %v312 = vld [vmem:[%s212 + $0x88] sm:$0xff]
      %v313 = vld [vmem:[%s212 + $0x90] sm:$0xff]
      %v314 = vld [vmem:[%s212 + $0x98] sm:$0xff]
      %v315 = vld [vmem:[%s212 + $0xa0] sm:$0xff]
      %v316 = vld [vmem:[%s212 + $0xa8] sm:$0xff]
      %v317 = vld [vmem:[%s212 + $0xb0] sm:$0xff]
      %v318 = vld [vmem:[%s212 + $0xb8] sm:$0xff]
      %v319 = vld [vmem:[%s212 + $0xc0] sm:$0xff]
      %v320 = vld [vmem:[%s212 + $0xc8] sm:$0xff]
      %v321 = vld [vmem:[%s212 + $0xd0] sm:$0xff]
      %v322 = vld [vmem:[%s212 + $0xd8] sm:$0xff]
      %v323 = vld [vmem:[%s212 + $0xe0] sm:$0xff]
      %v324 = vld [vmem:[%s212 + $0xe8] sm:$0xff]
      %v325 = vld [vmem:[%s212 + $0xf0] sm:$0xff]
      %v326 = vld [vmem:[%s212 + $0xf8] sm:$0xff]
      %v327 = vld [vmem:[%s219] sm:$0xf]
      %v328 = vld [vmem:[%s219 + $0x4] sm:$0xf]
      %v329 = vld [vmem:[%s219 + $0x8] sm:$0xf]
      %v330 = vld [vmem:[%s219 + $0xc] sm:$0xf]
      %v331 = vld [vmem:[%s219 + $0x10] sm:$0xf]
      %v332 = vld [vmem:[%s219 + $0x14] sm:$0xf]
      %v333 = vld [vmem:[%s219 + $0x18] sm:$0xf]
      %v334 = vld [vmem:[%s219 + $0x1c] sm:$0xf]
      %v335 = vld [vmem:[%s219 + $0x20] sm:$0xf]
      %v336 = vld [vmem:[%s219 + $0x24] sm:$0xf]
      %v337 = vld [vmem:[%s219 + $0x28] sm:$0xf]
      %v338 = vld [vmem:[%s219 + $0x2c] sm:$0xf]
      %v339 = vld [vmem:[%s219 + $0x30] sm:$0xf]
      %v340 = vld [vmem:[%s219 + $0x34] sm:$0xf]
      %v341 = vld [vmem:[%s219 + $0x38] sm:$0xf]
      %v342 = vld [vmem:[%s219 + $0x3c] sm:$0xf]
      %v343 = vld [vmem:[%s219 + $0x40] sm:$0xf]
      %v344 = vld [vmem:[%s219 + $0x44] sm:$0xf]
      %v345 = vld [vmem:[%s219 + $0x48] sm:$0xf]
      %v346 = vld [vmem:[%s219 + $0x4c] sm:$0xf]
      %v347 = vld [vmem:[%s219 + $0x50] sm:$0xf]
      %v348 = vld [vmem:[%s219 + $0x54] sm:$0xf]
      %v349 = vld [vmem:[%s219 + $0x58] sm:$0xf]
      %v350 = vld [vmem:[%s219 + $0x5c] sm:$0xf]
      %v351 = vld [vmem:[%s219 + $0x60] sm:$0xf]
      %v352 = vld [vmem:[%s219 + $0x64] sm:$0xf]
      %v353 = vld [vmem:[%s219 + $0x68] sm:$0xf]
      %v354 = vld [vmem:[%s219 + $0x6c] sm:$0xf]
      %v355 = vld [vmem:[%s219 + $0x70] sm:$0xf]
      %v356 = vld [vmem:[%s219 + $0x74] sm:$0xf]
      %v357 = vld [vmem:[%s219 + $0x78] sm:$0xf]
      %v358 = vld [vmem:[%s219 + $0x7c] sm:$0xf]
      %v391 = vunpack.c.l.b16 %v295
      %v392 = vunpack.c.h.b16 %v295
      %v393 = vunpack.c.l.b16 %v296
      %v394 = vunpack.c.h.b16 %v296
      %v395 = vunpack.c.l.b16 %v297
      %v396 = vunpack.c.h.b16 %v297
      %v397 = vunpack.c.l.b16 %v298
      %v398 = vunpack.c.h.b16 %v298
      %v399 = vunpack.c.l.b16 %v299
      %v400 = vunpack.c.h.b16 %v299
      %v401 = vunpack.c.l.b16 %v300
      %v402 = vunpack.c.h.b16 %v300
      %v403 = vunpack.c.l.b16 %v301
      %v404 = vunpack.c.h.b16 %v301
      %v405 = vunpack.c.l.b16 %v302
      %v406 = vunpack.c.h.b16 %v302
      %v407 = vunpack.c.l.b16 %v303
      %v408 = vunpack.c.h.b16 %v303
      %v409 = vunpack.c.l.b16 %v304
      %v410 = vunpack.c.h.b16 %v304
      %v411 = vunpack.c.l.b16 %v305
      %v412 = vunpack.c.h.b16 %v305
      %v413 = vunpack.c.l.b16 %v306
      %v414 = vunpack.c.h.b16 %v306
      %v415 = vunpack.c.l.b16 %v307
      %v416 = vunpack.c.h.b16 %v307
      %v417 = vunpack.c.l.b16 %v308
      %v418 = vunpack.c.h.b16 %v308
      %v419 = vunpack.c.l.b16 %v309
      %v420 = vunpack.c.h.b16 %v309
      %v421 = vunpack.c.l.b16 %v310
      %v422 = vunpack.c.h.b16 %v310
      %v423 = vunpack.c.l.b16 %v311
      %v424 = vunpack.c.h.b16 %v311
      %v425 = vunpack.c.l.b16 %v312
      %v426 = vunpack.c.h.b16 %v312
      %v427 = vunpack.c.l.b16 %v313
      %v428 = vunpack.c.h.b16 %v313
      %v429 = vunpack.c.l.b16 %v314
      %v430 = vunpack.c.h.b16 %v314
      %v431 = vunpack.c.l.b16 %v315
      %v432 = vunpack.c.h.b16 %v315
      %v433 = vunpack.c.l.b16 %v316
      %v434 = vunpack.c.h.b16 %v316
      %v435 = vunpack.c.l.b16 %v317
      %v436 = vunpack.c.h.b16 %v317
      %v437 = vunpack.c.l.b16 %v318
      %v438 = vunpack.c.h.b16 %v318
      %v439 = vunpack.c.l.b16 %v319
      %v440 = vunpack.c.h.b16 %v319
      %v441 = vunpack.c.l.b16 %v320
      %v442 = vunpack.c.h.b16 %v320
      %v443 = vunpack.c.l.b16 %v321
      %v444 = vunpack.c.h.b16 %v321
      %v445 = vunpack.c.l.b16 %v322
      %v446 = vunpack.c.h.b16 %v322
      %v447 = vunpack.c.l.b16 %v323
      %v448 = vunpack.c.h.b16 %v323
      %v449 = vunpack.c.l.b16 %v324
      %v450 = vunpack.c.h.b16 %v324
      %v451 = vunpack.c.l.b16 %v325
      %v452 = vunpack.c.h.b16 %v325
      %v453 = vunpack.c.l.b16 %v326
      %v454 = vunpack.c.h.b16 %v326
      %v455 = vpack.c.b16 %v393, %v391
      %v456 = vpack.c.b16 %v394, %v392
      %v457 = vpack.c.b16 %v397, %v395
      %v458 = vpack.c.b16 %v398, %v396
      %v459 = vpack.c.b16 %v401, %v399
      %v460 = vpack.c.b16 %v402, %v400
      %v461 = vpack.c.b16 %v405, %v403
      %v462 = vpack.c.b16 %v406, %v404
      %v463 = vpack.c.b16 %v409, %v407
      %v464 = vpack.c.b16 %v410, %v408
      %v465 = vpack.c.b16 %v413, %v411
      %v466 = vpack.c.b16 %v414, %v412
      %v467 = vpack.c.b16 %v417, %v415
      %v468 = vpack.c.b16 %v418, %v416
      %v469 = vpack.c.b16 %v421, %v419
      %v470 = vpack.c.b16 %v422, %v420
      %v471 = vpack.c.b16 %v425, %v423
      %v472 = vpack.c.b16 %v426, %v424
      %v473 = vpack.c.b16 %v429, %v427
      %v474 = vpack.c.b16 %v430, %v428
      %v475 = vpack.c.b16 %v433, %v431
      %v476 = vpack.c.b16 %v434, %v432
      %v477 = vpack.c.b16 %v437, %v435
      %v478 = vpack.c.b16 %v438, %v436
      %v479 = vpack.c.b16 %v441, %v439
      %v480 = vpack.c.b16 %v442, %v440
      %v481 = vpack.c.b16 %v445, %v443
      %v482 = vpack.c.b16 %v446, %v444
      %v483 = vpack.c.b16 %v449, %v447
      %v484 = vpack.c.b16 %v450, %v448
      %v485 = vpack.c.b16 %v453, %v451
      %v486 = vpack.c.b16 %v454, %v452
      %v551 = vunpack.c.l.b16 %v327
      %v552 = vunpack.c.l.b16 %v328
      %v553 = vunpack.c.l.b16 %v329
      %v554 = vunpack.c.l.b16 %v330
      %v555 = vunpack.c.l.b16 %v331
      %v556 = vunpack.c.l.b16 %v332
      %v557 = vunpack.c.l.b16 %v333
      %v558 = vunpack.c.l.b16 %v334
      %v559 = vunpack.c.l.b16 %v335
      %v560 = vunpack.c.l.b16 %v336
      %v561 = vunpack.c.l.b16 %v337
      %v562 = vunpack.c.l.b16 %v338
      %v563 = vunpack.c.l.b16 %v339
      %v564 = vunpack.c.l.b16 %v340
      %v565 = vunpack.c.l.b16 %v341
      %v566 = vunpack.c.l.b16 %v342
      %v567 = vunpack.c.l.b16 %v343
      %v568 = vunpack.c.l.b16 %v344
      %v569 = vunpack.c.l.b16 %v345
      %v570 = vunpack.c.l.b16 %v346
      %v571 = vunpack.c.l.b16 %v347
      %v572 = vunpack.c.l.b16 %v348
      %v573 = vunpack.c.l.b16 %v349
      %v574 = vunpack.c.l.b16 %v350
      %v575 = vunpack.c.l.b16 %v351
      %v576 = vunpack.c.l.b16 %v352
      %v577 = vunpack.c.l.b16 %v353
      %v578 = vunpack.c.l.b16 %v354
      %v579 = vunpack.c.l.b16 %v355
      %v580 = vunpack.c.l.b16 %v356
      %v581 = vunpack.c.l.b16 %v357
      %v582 = vunpack.c.l.b16 %v358
      %v583 = vpack.c.b16 %v552, %v551
      %v584 = vpack.c.b16 %v554, %v553
      %v585 = vpack.c.b16 %v556, %v555
      %v586 = vpack.c.b16 %v558, %v557
      %v587 = vpack.c.b16 %v560, %v559
      %v588 = vpack.c.b16 %v562, %v561
      %v589 = vpack.c.b16 %v564, %v563
      %v590 = vpack.c.b16 %v566, %v565
      %v591 = vpack.c.b16 %v568, %v567
      %v592 = vpack.c.b16 %v570, %v569
      %v593 = vpack.c.b16 %v572, %v571
      %v594 = vpack.c.b16 %v574, %v573
      %v595 = vpack.c.b16 %v576, %v575
      %v596 = vpack.c.b16 %v578, %v577
      %v597 = vpack.c.b16 %v580, %v579
      %v598 = vpack.c.b16 %v582, %v581
      %615 = vmatpush.bf16.msra.mxu0 %v590
      %616 = vmatpush.bf16.msra.mxu0 %v589
      %617 = vmatpush.bf16.msra.mxu0 %v588
      %618 = vmatpush.bf16.msra.mxu0 %v587
      %619 = vmatpush.bf16.msra.mxu0 %v586
      %620 = vmatpush.bf16.msra.mxu0 %v585
      %621 = vmatpush.bf16.msra.mxu0 %v584
      %622 = vmatpush.bf16.msra.mxu0 %v583
      %623 = vmatmul.bf16.gmra.mxu0 %v455
      %v624 = vpop.f32.mrf.mxu0
      %v625 = vadd.f32 0.0, %v624
      %v626 = vpop.f32.mrf.mxu0
      %v627 = vadd.f32 0.0, %v626
      %628 = vmatmul.bf16.gmra.mxu0 %v457
      %v629 = vpop.f32.mrf.mxu0
      %v630 = vadd.f32 0.0, %v629
      %v631 = vpop.f32.mrf.mxu0
      %v632 = vadd.f32 0.0, %v631
      %633 = vmatmul.bf16.gmra.mxu0 %v459
      %v634 = vpop.f32.mrf.mxu0
      %v635 = vadd.f32 0.0, %v634
      %v636 = vpop.f32.mrf.mxu0
      %v637 = vadd.f32 0.0, %v636
      %638 = vmatmul.bf16.gmra.mxu0 %v461
      %v639 = vpop.f32.mrf.mxu0
      %v640 = vadd.f32 0.0, %v639
      %v641 = vpop.f32.mrf.mxu0
      %v642 = vadd.f32 0.0, %v641
      %643 = vmatmul.bf16.gmra.mxu0 %v463
      %v644 = vpop.f32.mrf.mxu0
      %v645 = vadd.f32 0.0, %v644
      %v646 = vpop.f32.mrf.mxu0
      %v647 = vadd.f32 0.0, %v646
      %648 = vmatmul.bf16.gmra.mxu0 %v465
      %v649 = vpop.f32.mrf.mxu0
      %v650 = vadd.f32 0.0, %v649
      %v651 = vpop.f32.mrf.mxu0
      %v652 = vadd.f32 0.0, %v651
      %653 = vmatmul.bf16.gmra.mxu0 %v467
      %v654 = vpop.f32.mrf.mxu0
      %v655 = vadd.f32 0.0, %v654
      %v656 = vpop.f32.mrf.mxu0
      %v657 = vadd.f32 0.0, %v656
      %658 = vmatmul.bf16.gmra.mxu0 %v469
      %v659 = vpop.f32.mrf.mxu0
      %v660 = vadd.f32 0.0, %v659
      %v661 = vpop.f32.mrf.mxu0
      %v662 = vadd.f32 0.0, %v661
      %663 = vmatmul.bf16.gmra.mxu0 %v471
      %v664 = vpop.f32.mrf.mxu0
      %v665 = vadd.f32 0.0, %v664
      %v666 = vpop.f32.mrf.mxu0
      %v667 = vadd.f32 0.0, %v666
      %668 = vmatmul.bf16.gmra.mxu0 %v473
      %v669 = vpop.f32.mrf.mxu0
      %v670 = vadd.f32 0.0, %v669
      %v671 = vpop.f32.mrf.mxu0
      %v672 = vadd.f32 0.0, %v671
      %673 = vmatmul.bf16.gmra.mxu0 %v475
      %v674 = vpop.f32.mrf.mxu0
      %v675 = vadd.f32 0.0, %v674
      %v676 = vpop.f32.mrf.mxu0
      %v677 = vadd.f32 0.0, %v676
      %678 = vmatmul.bf16.gmra.mxu0 %v477
      %v679 = vpop.f32.mrf.mxu0
      %v680 = vadd.f32 0.0, %v679
      %v681 = vpop.f32.mrf.mxu0
      %v682 = vadd.f32 0.0, %v681
      %683 = vmatmul.bf16.gmra.mxu0 %v479
      %v684 = vpop.f32.mrf.mxu0
      %v685 = vadd.f32 0.0, %v684
      %v686 = vpop.f32.mrf.mxu0
      %v687 = vadd.f32 0.0, %v686
      %688 = vmatmul.bf16.gmra.mxu0 %v481
      %v689 = vpop.f32.mrf.mxu0
      %v690 = vadd.f32 0.0, %v689
      %v691 = vpop.f32.mrf.mxu0
      %v692 = vadd.f32 0.0, %v691
      %693 = vmatmul.bf16.gmra.mxu0 %v483
      %v694 = vpop.f32.mrf.mxu0
      %v695 = vadd.f32 0.0, %v694
      %v696 = vpop.f32.mrf.mxu0
      %v697 = vadd.f32 0.0, %v696
      %698 = vmatmul.bf16.gmra.mxu0 %v485
      %v699 = vpop.f32.mrf.mxu0
      %v700 = vadd.f32 0.0, %v699
      %v701 = vpop.f32.mrf.mxu0
      %v702 = vadd.f32 0.0, %v701
      %703 = vdwg.mxu0
      %704 = vmatpush.bf16.msra.mxu0 %v598
      %705 = vmatpush.bf16.msra.mxu0 %v597
      %706 = vmatpush.bf16.msra.mxu0 %v596
      %707 = vmatpush.bf16.msra.mxu0 %v595
      %708 = vmatpush.bf16.msra.mxu0 %v594
      %709 = vmatpush.bf16.msra.mxu0 %v593
      %710 = vmatpush.bf16.msra.mxu0 %v592
      %711 = vmatpush.bf16.msra.mxu0 %v591
      %712 = vmatmul.bf16.gmra.mxu0 %v456
      %v713 = vpop.f32.mrf.mxu0
      %v714 = vadd.f32 %v625, %v713
      %v715 = vpop.f32.mrf.mxu0
      %v716 = vadd.f32 %v627, %v715
      %717 = vmatmul.bf16.gmra.mxu0 %v458
      %v718 = vpop.f32.mrf.mxu0
      %v719 = vadd.f32 %v630, %v718
      %v720 = vpop.f32.mrf.mxu0
      %v721 = vadd.f32 %v632, %v720
      %722 = vmatmul.bf16.gmra.mxu0 %v460
      %v723 = vpop.f32.mrf.mxu0
      %v724 = vadd.f32 %v635, %v723
      %v725 = vpop.f32.mrf.mxu0
      %v726 = vadd.f32 %v637, %v725
      %727 = vmatmul.bf16.gmra.mxu0 %v462
      %v728 = vpop.f32.mrf.mxu0
      %v729 = vadd.f32 %v640, %v728
      %v730 = vpop.f32.mrf.mxu0
      %v731 = vadd.f32 %v642, %v730
      %732 = vmatmul.bf16.gmra.mxu0 %v464
      %v733 = vpop.f32.mrf.mxu0
      %v734 = vadd.f32 %v645, %v733
      %v735 = vpop.f32.mrf.mxu0
      %v736 = vadd.f32 %v647, %v735
      %737 = vmatmul.bf16.gmra.mxu0 %v466
      %v738 = vpop.f32.mrf.mxu0
      %v739 = vadd.f32 %v650, %v738
      %v740 = vpop.f32.mrf.mxu0
      %v741 = vadd.f32 %v652, %v740
      %742 = vmatmul.bf16.gmra.mxu0 %v468
      %v743 = vpop.f32.mrf.mxu0
      %v744 = vadd.f32 %v655, %v743
      %v745 = vpop.f32.mrf.mxu0
      %v746 = vadd.f32 %v657, %v745
      %747 = vmatmul.bf16.gmra.mxu0 %v470
      %v748 = vpop.f32.mrf.mxu0
      %v749 = vadd.f32 %v660, %v748
      %v750 = vpop.f32.mrf.mxu0
      %v751 = vadd.f32 %v662, %v750
      %752 = vmatmul.bf16.gmra.mxu0 %v472
      %v753 = vpop.f32.mrf.mxu0
      %v754 = vadd.f32 %v665, %v753
      %v755 = vpop.f32.mrf.mxu0
      %v756 = vadd.f32 %v667, %v755
      %757 = vmatmul.bf16.gmra.mxu0 %v474
      %v758 = vpop.f32.mrf.mxu0
      %v759 = vadd.f32 %v670, %v758
      %v760 = vpop.f32.mrf.mxu0
      %v761 = vadd.f32 %v672, %v760
      %762 = vmatmul.bf16.gmra.mxu0 %v476
      %v763 = vpop.f32.mrf.mxu0
      %v764 = vadd.f32 %v675, %v763
      %v765 = vpop.f32.mrf.mxu0
      %v766 = vadd.f32 %v677, %v765
      %767 = vmatmul.bf16.gmra.mxu0 %v478
      %v768 = vpop.f32.mrf.mxu0
      %v769 = vadd.f32 %v680, %v768
      %v770 = vpop.f32.mrf.mxu0
      %v771 = vadd.f32 %v682, %v770
      %772 = vmatmul.bf16.gmra.mxu0 %v480
      %v773 = vpop.f32.mrf.mxu0
      %v774 = vadd.f32 %v685, %v773
      %v775 = vpop.f32.mrf.mxu0
      %v776 = vadd.f32 %v687, %v775
      %777 = vmatmul.bf16.gmra.mxu0 %v482
      %v778 = vpop.f32.mrf.mxu0
      %v779 = vadd.f32 %v690, %v778
      %v780 = vpop.f32.mrf.mxu0
      %v781 = vadd.f32 %v692, %v780
      %782 = vmatmul.bf16.gmra.mxu0 %v484
      %v783 = vpop.f32.mrf.mxu0
      %v784 = vadd.f32 %v695, %v783
      %v785 = vpop.f32.mrf.mxu0
      %v786 = vadd.f32 %v697, %v785
      %787 = vmatmul.bf16.gmra.mxu0 %v486
      %v788 = vpop.f32.mrf.mxu0
      %v789 = vadd.f32 %v700, %v788
      %v790 = vpop.f32.mrf.mxu0
      %v791 = vadd.f32 %v702, %v790
      %792 = vdwg.mxu0
      %v793 = vadd.f32 %v263, %v714
      %v794 = vadd.f32 %v264, %v716
      %v795 = vadd.f32 %v265, %v719
      %v796 = vadd.f32 %v266, %v721
      %v797 = vadd.f32 %v267, %v724
      %v798 = vadd.f32 %v268, %v726
      %v799 = vadd.f32 %v269, %v729
      %v800 = vadd.f32 %v270, %v731
      %v801 = vadd.f32 %v271, %v734
      %v802 = vadd.f32 %v272, %v736
      %v803 = vadd.f32 %v273, %v739
      %v804 = vadd.f32 %v274, %v741
      %v805 = vadd.f32 %v275, %v744
      %v806 = vadd.f32 %v276, %v746
      %v807 = vadd.f32 %v277, %v749
      %v808 = vadd.f32 %v278, %v751
      %v809 = vadd.f32 %v279, %v754
      %v810 = vadd.f32 %v280, %v756
      %v811 = vadd.f32 %v281, %v759
      %v812 = vadd.f32 %v282, %v761
      %v813 = vadd.f32 %v283, %v764
      %v814 = vadd.f32 %v284, %v766
      %v815 = vadd.f32 %v285, %v769
      %v816 = vadd.f32 %v286, %v771
      %v817 = vadd.f32 %v287, %v774
      %v818 = vadd.f32 %v288, %v776
      %v819 = vadd.f32 %v289, %v779
      %v820 = vadd.f32 %v290, %v781
      %v821 = vadd.f32 %v291, %v784
      %v822 = vadd.f32 %v292, %v786
      %v823 = vadd.f32 %v293, %v789
      %v824 = vadd.f32 %v294, %v791
      %825 = vst [vmem:[%s225] sm:$0xff] %v793
      %826 = vst [vmem:[%s225 + $0x8] sm:$0xff] %v794
      %827 = vst [vmem:[%s225 + $0x10] sm:$0xff] %v795
      %828 = vst [vmem:[%s225 + $0x18] sm:$0xff] %v796
      %829 = vst [vmem:[%s225 + $0x20] sm:$0xff] %v797
      %830 = vst [vmem:[%s225 + $0x28] sm:$0xff] %v798
      %831 = vst [vmem:[%s225 + $0x30] sm:$0xff] %v799
      %832 = vst [vmem:[%s225 + $0x38] sm:$0xff] %v800
      %833 = vst [vmem:[%s225 + $0x40] sm:$0xff] %v801
      %834 = vst [vmem:[%s225 + $0x48] sm:$0xff] %v802
      %835 = vst [vmem:[%s225 + $0x50] sm:$0xff] %v803
      %836 = vst [vmem:[%s225 + $0x58] sm:$0xff] %v804
      %837 = vst [vmem:[%s225 + $0x60] sm:$0xff] %v805
      %838 = vst [vmem:[%s225 + $0x68] sm:$0xff] %v806
      %839 = vst [vmem:[%s225 + $0x70] sm:$0xff] %v807
      %840 = vst [vmem:[%s225 + $0x78] sm:$0xff] %v808
      %841 = vst [vmem:[%s225 + $0x80] sm:$0xff] %v809
      %842 = vst [vmem:[%s225 + $0x88] sm:$0xff] %v810
      %843 = vst [vmem:[%s225 + $0x90] sm:$0xff] %v811
      %844 = vst [vmem:[%s225 + $0x98] sm:$0xff] %v812
      %845 = vst [vmem:[%s225 + $0xa0] sm:$0xff] %v813
      %846 = vst [vmem:[%s225 + $0xa8] sm:$0xff] %v814
      %847 = vst [vmem:[%s225 + $0xb0] sm:$0xff] %v815
      %848 = vst [vmem:[%s225 + $0xb8] sm:$0xff] %v816
      %849 = vst [vmem:[%s225 + $0xc0] sm:$0xff] %v817
      %850 = vst [vmem:[%s225 + $0xc8] sm:$0xff] %v818
      %851 = vst [vmem:[%s225 + $0xd0] sm:$0xff] %v819
      %852 = vst [vmem:[%s225 + $0xd8] sm:$0xff] %v820
      %853 = vst [vmem:[%s225 + $0xe0] sm:$0xff] %v821
      %854 = vst [vmem:[%s225 + $0xe8] sm:$0xff] %v822
      %855 = vst [vmem:[%s225 + $0xf0] sm:$0xff] %v823
      %856 = vst [vmem:[%s225 + $0xf8] sm:$0xff] %v824
      // Predicated region
      $region37: #{_generator_forward.17} parent=31 // pred_check
        %p857 = pneg %p227
      $region38: #{_generator_forward.17} parent=31 // pred_check_branch
        %859 = sbr.rel (%p857) target = $region40
      $region39: #{_generator_forward.17} parent=31 // pred_region
        %v860 = vld [vmem:[%s225] sm:$0xff]
        %v861 = vld [vmem:[%s225 + $0x8] sm:$0xff]
        %v862 = vld [vmem:[%s225 + $0x10] sm:$0xff]
        %v863 = vld [vmem:[%s225 + $0x18] sm:$0xff]
        %v864 = vld [vmem:[%s225 + $0x20] sm:$0xff]
        %v865 = vld [vmem:[%s225 + $0x28] sm:$0xff]
        %v866 = vld [vmem:[%s225 + $0x30] sm:$0xff]
        %v867 = vld [vmem:[%s225 + $0x38] sm:$0xff]
        %v868 = vld [vmem:[%s225 + $0x40] sm:$0xff]
        %v869 = vld [vmem:[%s225 + $0x48] sm:$0xff]
        %v870 = vld [vmem:[%s225 + $0x50] sm:$0xff]
        %v871 = vld [vmem:[%s225 + $0x58] sm:$0xff]
        %v872 = vld [vmem:[%s225 + $0x60] sm:$0xff]
        %v873 = vld [vmem:[%s225 + $0x68] sm:$0xff]
        %v874 = vld [vmem:[%s225 + $0x70] sm:$0xff]
        %v875 = vld [vmem:[%s225 + $0x78] sm:$0xff]
        %v876 = vld [vmem:[%s225 + $0x80] sm:$0xff]
        %v877 = vld [vmem:[%s225 + $0x88] sm:$0xff]
        %v878 = vld [vmem:[%s225 + $0x90] sm:$0xff]
        %v879 = vld [vmem:[%s225 + $0x98] sm:$0xff]
        %v880 = vld [vmem:[%s225 + $0xa0] sm:$0xff]
        %v881 = vld [vmem:[%s225 + $0xa8] sm:$0xff]
        %v882 = vld [vmem:[%s225 + $0xb0] sm:$0xff]
        %v883 = vld [vmem:[%s225 + $0xb8] sm:$0xff]
        %v884 = vld [vmem:[%s225 + $0xc0] sm:$0xff]
        %v885 = vld [vmem:[%s225 + $0xc8] sm:$0xff]
        %v886 = vld [vmem:[%s225 + $0xd0] sm:$0xff]
        %v887 = vld [vmem:[%s225 + $0xd8] sm:$0xff]
        %v888 = vld [vmem:[%s225 + $0xe0] sm:$0xff]
        %v889 = vld [vmem:[%s225 + $0xe8] sm:$0xff]
        %v890 = vld [vmem:[%s225 + $0xf0] sm:$0xff]
        %v891 = vld [vmem:[%s225 + $0xf8] sm:$0xff]
        %v892 = vld [vmem:[%s2] sm:$0x1]
        %v894 = vperm.slane %v892, 0
        %v896 = vadd.f32 %v860, %v894
        %v897 = vadd.f32 %v861, %v894
        %v898 = vadd.f32 %v862, %v894
        %v899 = vadd.f32 %v863, %v894
        %v900 = vadd.f32 %v864, %v894
        %v901 = vadd.f32 %v865, %v894
        %v902 = vadd.f32 %v866, %v894
        %v903 = vadd.f32 %v867, %v894
        %v904 = vadd.f32 %v868, %v894
        %v905 = vadd.f32 %v869, %v894
        %v906 = vadd.f32 %v870, %v894
        %v907 = vadd.f32 %v871, %v894
        %v908 = vadd.f32 %v872, %v894
        %v909 = vadd.f32 %v873, %v894
        %v910 = vadd.f32 %v874, %v894
        %v911 = vadd.f32 %v875, %v894
        %v912 = vadd.f32 %v876, %v894
        %v913 = vadd.f32 %v877, %v894
        %v914 = vadd.f32 %v878, %v894
        %v915 = vadd.f32 %v879, %v894
        %v916 = vadd.f32 %v880, %v894
        %v917 = vadd.f32 %v881, %v894
        %v918 = vadd.f32 %v882, %v894
        %v919 = vadd.f32 %v883, %v894
        %v920 = vadd.f32 %v884, %v894
        %v921 = vadd.f32 %v885, %v894
        %v922 = vadd.f32 %v886, %v894
        %v923 = vadd.f32 %v887, %v894
        %v924 = vadd.f32 %v888, %v894
        %v925 = vadd.f32 %v889, %v894
        %v926 = vadd.f32 %v890, %v894
        %v927 = vadd.f32 %v891, %v894
        %v928 = vtanh.pop %v896
        %v929 = vtanh.pop %v897
        %v930 = vtanh.pop %v898
        %v931 = vtanh.pop %v899
        %v932 = vtanh.pop %v900
        %v933 = vtanh.pop %v901
        %v934 = vtanh.pop %v902
        %v935 = vtanh.pop %v903
        %v936 = vtanh.pop %v904
        %v937 = vtanh.pop %v905
        %v938 = vtanh.pop %v906
        %v939 = vtanh.pop %v907
        %v940 = vtanh.pop %v908
        %v941 = vtanh.pop %v909
        %v942 = vtanh.pop %v910
        %v943 = vtanh.pop %v911
        %v944 = vtanh.pop %v912
        %v945 = vtanh.pop %v913
        %v946 = vtanh.pop %v914
        %v947 = vtanh.pop %v915
        %v948 = vtanh.pop %v916
        %v949 = vtanh.pop %v917
        %v950 = vtanh.pop %v918
        %v951 = vtanh.pop %v919
        %v952 = vtanh.pop %v920
        %v953 = vtanh.pop %v921
        %v954 = vtanh.pop %v922
        %v955 = vtanh.pop %v923
        %v956 = vtanh.pop %v924
        %v957 = vtanh.pop %v925
        %v958 = vtanh.pop %v926
        %v959 = vtanh.pop %v927
        %960 = vst [vmem:[%s225] sm:$0xff] %v928
        %961 = vst [vmem:[%s225 + $0x8] sm:$0xff] %v929
        %962 = vst [vmem:[%s225 + $0x10] sm:$0xff] %v930
        %963 = vst [vmem:[%s225 + $0x18] sm:$0xff] %v931
        %964 = vst [vmem:[%s225 + $0x20] sm:$0xff] %v932
        %965 = vst [vmem:[%s225 + $0x28] sm:$0xff] %v933
        %966 = vst [vmem:[%s225 + $0x30] sm:$0xff] %v934
        %967 = vst [vmem:[%s225 + $0x38] sm:$0xff] %v935
        %968 = vst [vmem:[%s225 + $0x40] sm:$0xff] %v936
        %969 = vst [vmem:[%s225 + $0x48] sm:$0xff] %v937
        %970 = vst [vmem:[%s225 + $0x50] sm:$0xff] %v938
        %971 = vst [vmem:[%s225 + $0x58] sm:$0xff] %v939
        %972 = vst [vmem:[%s225 + $0x60] sm:$0xff] %v940
        %973 = vst [vmem:[%s225 + $0x68] sm:$0xff] %v941
        %974 = vst [vmem:[%s225 + $0x70] sm:$0xff] %v942
        %975 = vst [vmem:[%s225 + $0x78] sm:$0xff] %v943
        %976 = vst [vmem:[%s225 + $0x80] sm:$0xff] %v944
        %977 = vst [vmem:[%s225 + $0x88] sm:$0xff] %v945
        %978 = vst [vmem:[%s225 + $0x90] sm:$0xff] %v946
        %979 = vst [vmem:[%s225 + $0x98] sm:$0xff] %v947
        %980 = vst [vmem:[%s225 + $0xa0] sm:$0xff] %v948
        %981 = vst [vmem:[%s225 + $0xa8] sm:$0xff] %v949
        %982 = vst [vmem:[%s225 + $0xb0] sm:$0xff] %v950
        %983 = vst [vmem:[%s225 + $0xb8] sm:$0xff] %v951
        %984 = vst [vmem:[%s225 + $0xc0] sm:$0xff] %v952
        %985 = vst [vmem:[%s225 + $0xc8] sm:$0xff] %v953
        %986 = vst [vmem:[%s225 + $0xd0] sm:$0xff] %v954
        %987 = vst [vmem:[%s225 + $0xd8] sm:$0xff] %v955
        %988 = vst [vmem:[%s225 + $0xe0] sm:$0xff] %v956
        %989 = vst [vmem:[%s225 + $0xe8] sm:$0xff] %v957
        %990 = vst [vmem:[%s225 + $0xf0] sm:$0xff] %v958
        %991 = vst [vmem:[%s225 + $0xf8] sm:$0xff] %v959
      $region40: #{_generator_forward.17} parent=31 // pred_fallthru
        _
      %s992 = smul.u32 32, %s18
      %p993 = scmp.lt.s32.totalorder %s992, 255
      %s994 = scalar_select %p993, %s992, 255
      %s995 = smul.addr %s994, 8
      %s996 = scalar_lea.vmem %s3, %s995
      // Predicated region
      $region41: #{_generator_forward.17} parent=31 // pred_check
        %p997 = pneg %p119
      $region42: #{_generator_forward.17} parent=31 // pred_check_branch
        %999 = sbr.rel (%p997) target = $region44
      $region43: #{_generator_forward.17} parent=31 // pred_region
        %s1000 = smul.u32 32, %s18
      $region44: #{_generator_forward.17} parent=31 // pred_fallthru
        _
    $region32: #{_generator_forward.17} parent=5 // pred_fallthru
      _
    %p1001 = scmp.le.s32.totalorder 2, %s9
    // Predicated region
    $region45: #{_generator_forward.17} parent=5 // pred_check
      %p1002 = pneg %p1001
    $region46: #{_generator_forward.17} parent=5 // pred_check_branch
      %1004 = sbr.rel (%p1002) target = $region48
    $region47: #{_generator_forward.17} parent=5 // pred_region
      %s1005 = ssub.s32 %s9, 2
      // Predicated region
      $region49: #{_generator_forward.17} parent=47 // pred_check
        %p1006 = pneg %p125
      $region50: #{_generator_forward.17} parent=47 // pred_check_branch
        %1008 = sbr.rel (%p1006) target = $region52
      $region51: #{_generator_forward.17} parent=47 // pred_region
        %s1009 = smul.u32 32, %s20
        %p1010 = scmp.lt.s32.totalorder %s1009, 255
        %s1011 = scalar_select %p1010, %s1009, 255
        %s1012 = smul.addr %s1011, 8
        %s1013 = scalar_lea.vmem %s3, %s1012
      $region52: #{_generator_forward.17} parent=47 // pred_fallthru
        _
    $region48: #{_generator_forward.17} parent=5 // pred_fallthru
      _
  $region6: #{_generator_forward.17} parent=0 // loop_footer
    %s13 = sadd.s32 1, %s9
  $region7: #{_generator_forward.17} parent=0 // loop_footer_branch
    %8 = sbr.rel target = $region3
  $region8: #{_generator_forward.17} parent=0 // loop_exit
    _

</llo_original>
